<compile_context>
chip_gen: v7x
topology: tpu7x:2x2x1
jax: 0.10.0
libtpu: 0.0.40
codegen_flags: <defaults>
</compile_context>

<pallas_src>
import jax
import jax.numpy as jnp
from jax.experimental import pallas as pl
from jax.experimental.pallas import tpu as pltpu


def _head_kernel(feat_ref, w_ref, b_ref, out_ref):
    # feat_ref: (TB, K)      flat NCHW feature slab, K = C*S, lane-dense
    # w_ref:    (K, N_pad)   bf16 resident weight: both heads fused, avg-pool
    #                        1/S folded in, each channel row repeated S times
    #                        along the contraction axis
    # b_ref:    (1, N_pad)   f32 resident bias
    # out_ref:  (TB, N_pad)  f32 lane-dense output block
    x = jnp.maximum(feat_ref[...], 0)      # F.relu, in the input dtype
    x = x.astype(jnp.bfloat16)             # MXU operand; accumulation is f32
    out_ref[...] = (
        jnp.dot(x, w_ref[...], preferred_element_type=jnp.float32) + b_ref[...]
    )


def _vmem_capacity_bytes():
    """Physical VMEM per TensorCore (generation-aware), with a safe fallback."""
    try:
        info = pltpu.get_tpu_info()
        for name in ("vmem_capacity_bytes", "vmem_bytes"):
            cap = getattr(info, name, None)
            if cap:
                return int(cap)
    except Exception:
        pass
    return 64 * 1024 * 1024   # v7x per-TC size: conservative on v5e/v6e


def multi_task_head(feature_nchw, w0, b0, w1, b1, tb=None):
    """Fused relu -> global avg-pool -> (cls0, cls1) heads.

    feature_nchw: (B, C, F, F) backbone feature map, PyTorch NCHW layout.
                  bf16 features are the recommended (fast) contract; f32 works.
    w0: (N0, C), b0: (N0,)   -- PyTorch nn.Linear convention
    w1: (N1, C), b1: (N1,)
    Returns (out1, out2): (B, N0), (B, N1), float32.
    """
    B, C, Fh, Fw = feature_nchw.shape
    S = Fh * Fw
    K = C * S
    N0, N1 = int(w0.shape[0]), int(w1.shape[0])
    N = N0 + N1
    N_pad = ((N + 127) // 128) * 128

    # NCHW -> (B, C*S): trailing-dim collapse, no HBM data movement.
    feat = feature_nchw.reshape(B, K)

    # Fuse both heads, fold the 1/S avg-pool scale, and repeat each channel's
    # weight row S times so a single MXU matmul over the flat (C*S) axis does
    # pool + both linears with f32 accumulation.  (In a jitted caller this
    # weight prep is constant-folded / cached across steps.)
    w_cat = jnp.concatenate([w0.T, w1.T], axis=1).astype(jnp.float32) * (1.0 / S)
    w_cat = jnp.pad(w_cat, ((0, 0), (0, N_pad - N)))
    w_rep = jnp.repeat(w_cat.astype(jnp.bfloat16), S, axis=0)        # (K, N_pad)
    b_cat = jnp.pad(
        jnp.concatenate([b0, b1]).astype(jnp.float32), (0, N_pad - N)
    ).reshape(1, N_pad)

    # ---- generation-aware batch-tile sizing --------------------------------
    itemsize = jnp.dtype(feature_nchw.dtype).itemsize
    per_sample_in = K * itemsize                  # flat slab: zero layout padding
    per_sample_work = 2 * per_sample_in + 2 * K   # 2 pipeline bufs + bf16 operand
    resident = K * N_pad * 2 + 8 * N_pad * 4      # single-copy weight + bias

    vmem_cap = _vmem_capacity_bytes()
    usable = (vmem_cap * 85) // 100 - resident - (8 << 20)   # out/scratch slack
    max_tb = max(1, usable // per_sample_work)

    if tb is None:
        tb = max_tb
        if B > 8 and B % 8 == 0:
            # Split the batch across >=2 grid steps (keeps both v7x
            # TensorCores busy) whenever that adds no batch padding.
            tb = min(tb, max(8, (B // 2) // 8 * 8))
    tb = max(1, min(int(tb), max_tb, B))          # clamp caller tb vs VMEM too
    if tb < B:
        tb = max(8, (tb // 8) * 8)                # sublane-aligned batch tile

    b_pad = pl.cdiv(B, tb) * tb
    if b_pad != B:
        feat = jnp.pad(feat, ((0, b_pad - B), (0, 0)))

    vmem_limit = (
        tb * per_sample_work                      # feature pipeline + bf16 operand
        + resident                                # resident weight + bias
        + 2 * tb * N_pad * 4                      # double-buffered output block
        + (6 << 20)                               # headroom / internal scratch
    )
    vmem_limit = min(max(int(vmem_limit), 32 << 20), (vmem_cap * 15) // 16)

    cost = pl.CostEstimate(
        flops=int(2 * b_pad * K * N_pad),
        transcendentals=0,
        bytes_accessed=int(
            b_pad * K * itemsize + K * N_pad * 2 + N_pad * 4 + b_pad * N_pad * 4
        ),
    )

    out = pl.pallas_call(
        _head_kernel,
        out_shape=jax.ShapeDtypeStruct((b_pad, N_pad), jnp.float32),
        grid=(b_pad // tb,),
        in_specs=[
            pl.BlockSpec((tb, K), lambda i: (i, 0)),               # streamed batch
            pl.BlockSpec(memory_space=pltpu.MemorySpace.VMEM),     # resident W
            pl.BlockSpec(memory_space=pltpu.MemorySpace.VMEM),     # resident bias
        ],
        out_specs=pl.BlockSpec((tb, N_pad), lambda i: (i, 0)),     # lane-dense out
        compiler_params=pltpu.CompilerParams(
            dimension_semantics=("parallel",),
            vmem_limit_bytes=int(vmem_limit),
        ),
        cost_estimate=cost,
    )(feat, w_rep, b_cat)

    return out[:B, :N0], out[:B, N0:N]


def _reference(feature_nchw, w0, b0, w1, b1):
    """Pure-JAX mirror of the PyTorch forward (for sanity checking)."""
    feat = jnp.maximum(feature_nchw.astype(jnp.float32), 0.0)
    pooled = jnp.mean(feat, axis=(2, 3))          # avg_pool2d(kernel=featmap)
    out1 = pooled @ w0.T + b0
    out2 = pooled @ w1.T + b1
    return out1, out2


if __name__ == "__main__":
    key = jax.random.PRNGKey(0)
    k_feat, k_w0, k_b0, k_w1, k_b1 = jax.random.split(key, 5)

    # Small-scale stand-in for the real sizes (C=2048, featmap=7):
    B, C, F = 2, 256, 8
    classes_multi = (8, 16)

    feature = jax.random.normal(k_feat, (B, C, F, F), dtype=jnp.float32)
    w0 = jax.random.normal(k_w0, (classes_multi[0], C), dtype=jnp.float32) * 0.02
    b0 = jax.random.normal(k_b0, (classes_multi[0],), dtype=jnp.float32) * 0.02
    w1 = jax.random.normal(k_w1, (classes_multi[1], C), dtype=jnp.float32) * 0.02
    b1 = jax.random.normal(k_b1, (classes_multi[1],), dtype=jnp.float32) * 0.02

    # 1) Basic correctness (single tile covers the batch).
    out1, out2 = multi_task_head(feature, w0, b0, w1, b1)
    jax.block_until_ready((out1, out2))
    ref1, ref2 = _reference(feature, w0, b0, w1, b1)
    assert out1.shape == (B, classes_multi[0])
    assert out2.shape == (B, classes_multi[1])
    assert jnp.allclose(out1, ref1, atol=5e-3, rtol=5e-2)
    assert jnp.allclose(out2, ref2, atol=5e-3, rtol=5e-2)

    # 2) Multi-step grid + batch padding path (B not a multiple of the tile).
    B2 = 10
    feature2 = jax.random.normal(k_feat, (B2, C, F, F), dtype=jnp.float32)
    o1b, o2b = multi_task_head(feature2, w0, b0, w1, b1, tb=8)
    jax.block_until_ready((o1b, o2b))
    r1b, r2b = _reference(feature2, w0, b0, w1, b1)
    assert jnp.allclose(o1b, r1b, atol=5e-3, rtol=5e-2)
    assert jnp.allclose(o2b, r2b, atol=5e-3, rtol=5e-2)

    # 3) bf16 feature I/O (recommended contract: halves HBM traffic).
    feature_bf16 = feature.astype(jnp.bfloat16)
    o1c, o2c = multi_task_head(feature_bf16, w0, b0, w1, b1)
    jax.block_until_ready((o1c, o2c))
    r1c, r2c = _reference(feature_bf16.astype(jnp.float32), w0, b0, w1, b1)
    assert jnp.allclose(o1c, r1c, atol=5e-3, rtol=5e-2)
    assert jnp.allclose(o2c, r2c, atol=5e-3, rtol=5e-2)

    print("KERNEL_OK")
</pallas_src>

<mosaic_0001>
module attributes {stable_mosaic.version = 11 : i64} {
  func.func @_head_kernel(%arg0: i32, %arg1: memref<2x16384xf32, #tpu.memory_space<vmem>>, %arg2: memref<16384x128xbf16, #tpu.memory_space<vmem>>, %arg3: memref<1x128xf32, #tpu.memory_space<vmem>>, %arg4: memref<2x128xf32, #tpu.memory_space<vmem>>) attributes {dimension_semantics = [#tpu.dimension_semantics<parallel>], iteration_bounds = array<i64: 1>, scalar_prefetch = 0 : i64, scratch_operands = 0 : i64, tpu.core_type = #tpu.core_type<tc>, window_params = [{transform_indices = @transform_0, window_bounds = array<i64: 2, 16384>}, {pipeline_mode = #tpu.pipeline_mode<synchronous>, transform_indices = @transform_1, window_bounds = array<i64: 16384, 128>}, {pipeline_mode = #tpu.pipeline_mode<synchronous>, transform_indices = @transform_2, window_bounds = array<i64: 1, 128>}, {transform_indices = @transform_3, window_bounds = array<i64: 2, 128>}]} {
    %c0 = arith.constant 0 : index
    %c0_0 = arith.constant 0 : index
    %0 = vector.load %arg1[%c0, %c0_0] : memref<2x16384xf32, #tpu.memory_space<vmem>>, vector<2x16384xf32>
    %cst = arith.constant 0.000000e+00 : f32
    %1 = vector.broadcast %cst : f32 to vector<2x16384xf32>
    %2 = arith.maximumf %0, %1 : vector<2x16384xf32>
    %3 = arith.truncf %2 : vector<2x16384xf32> to vector<2x16384xbf16>
    %c0_1 = arith.constant 0 : index
    %c0_2 = arith.constant 0 : index
    %4 = vector.load %arg2[%c0_1, %c0_2] : memref<16384x128xbf16, #tpu.memory_space<vmem>>, vector<16384x128xbf16>
    %cst_3 = arith.constant dense<0.000000e+00> : vector<2x128xf32>
    %5 = tpu.matmul %3, %4, %cst_3 {dimension_numbers = #tpu.dot_dimension_numbers<[1], [0], [0], [1], [0, 0, 1, 1], [], []>} : vector<2x16384xbf16>, vector<16384x128xbf16>, vector<2x128xf32> -> vector<2x128xf32>
    %c0_4 = arith.constant 0 : index
    %c0_5 = arith.constant 0 : index
    %6 = vector.load %arg3[%c0_4, %c0_5] : memref<1x128xf32, #tpu.memory_space<vmem>>, vector<1x128xf32>
    %7 = vector.broadcast %6 : vector<1x128xf32> to vector<2x128xf32>
    %8 = arith.addf %5, %7 : vector<2x128xf32>
    %c0_6 = arith.constant 0 : index
    %c0_7 = arith.constant 0 : index
    %9 = vector.load %arg4[%c0_6, %c0_7] : memref<2x128xf32, #tpu.memory_space<vmem>>, vector<2x128xf32>
    tpu.vector_store %arg4[%c0_6, %c0_7], %8 {strides = array<i32>} : memref<2x128xf32, #tpu.memory_space<vmem>>, vector<2x128xf32>,
    return
  }
  func.func @transform_0(%arg0: i32) -> (i32, i32) {
    %c0_i32 = arith.constant 0 : i32
    %c0_i32_0 = arith.constant 0 : i32
    return %arg0, %c0_i32 : i32, i32
  }
  func.func @transform_1(%arg0: i32) -> (i32, i32) {
    %c0_i32 = arith.constant 0 : i32
    %c0_i32_0 = arith.constant 0 : i32
    %c0_i32_1 = arith.constant 0 : i32
    return %c0_i32, %c0_i32_0 : i32, i32
  }
  func.func @transform_2(%arg0: i32) -> (i32, i32) {
    %c0_i32 = arith.constant 0 : i32
    %c0_i32_0 = arith.constant 0 : i32
    %c0_i32_1 = arith.constant 0 : i32
    return %c0_i32, %c0_i32_0 : i32, i32
  }
  func.func @transform_3(%arg0: i32) -> (i32, i32) {
    %c0_i32 = arith.constant 0 : i32
    %c0_i32_0 = arith.constant 0 : i32
    return %arg0, %c0_i32 : i32, i32
  }
}

</mosaic_0001>

<llo_original>
// kernel: tpu_custom_call.1
$region0: #{tpu_custom_call.1}
  #allocation0 [shape = 'u32[]', space=smem, size = 0x4, offset = 0x4, fixed_abs, tag = 'smem constant byte address 0x4 - core index']
  #allocation1 [shape = 'u32[144,128]{1,0:T(1,128)}', space=vmem, size = 0x12000, scoped, tag = 'internal scratch']
  %s0 = inlined_call_operand.hbm [shape: f32[2,16384], index: 0, kind: input, shape index: {}]
  %s1 = inlined_call_operand.hbm [shape: bf16[16384,128], index: 1, kind: input, shape index: {}]
  %s2 = inlined_call_operand.hbm [shape: f32[1,128], index: 2, kind: input, shape index: {}]
  %s3 = inlined_call_operand.hbm [shape: f32[2,128], index: 3, kind: output, shape index: {}]
  %s4 = sld [smem:[#allocation0]]
  $region34: #{tpu_custom_call.1} parent=0
    _
  %s6 = ssub.s32 1, %s4
  %s7 = scalar_select 0, %s6, %s4
  $region1: #{tpu_custom_call.1} parent=0
    #allocation2 [shape = 'u8[131072]{0}', space=vmem, size = 0x20000, scoped, tag = 'input window, operand 0, single buffered']
    #allocation3 [shape = 's32[1]{0}', space=sflag, size = 0x4, scoped, tag = 'scoped memory for tpu_custom_call.1']
    #allocation4 [shape = 's32[1]{0}', space=sflag, size = 0x4, scoped, tag = 'scoped memory for tpu_custom_call.1']
    #allocation5 [shape = 'u8[4194304]{0}', space=vmem, size = 0x400000, scoped, tag = 'input window, operand 1, single buffered']
    #allocation6 [shape = 's32[1]{0}', space=sflag, size = 0x4, scoped, tag = 'scoped memory for tpu_custom_call.1']
    #allocation7 [shape = 'u8[512]{0}', space=vmem, size = 0x400, scoped, tag = 'input window, operand 2, single buffered']
    #allocation8 [shape = 'u8[1024]{0}', space=vmem, size = 0x400, scoped, tag = 'output window, operand 0, single buffered']
    %8 = vsyncpa [#allocation3], 0
    %9 = vsyncpa [#allocation6], 0
    %10 = vsyncpa [#allocation4], 0
    // Predicated region
    $region2: #{tpu_custom_call.1} parent=1 // pred_check
      _
    $region3: #{tpu_custom_call.1} parent=1 // pred_check_branch
      %12 = sbr.rel (0) target = $region5
    $region4: #{tpu_custom_call.1} parent=1 // pred_region
      %s14 = ssub.s32 4096, 4096
      %15 = vsyncadd [#allocation3], %s14
      %s17 = sshll.u32 [#allocation2], 4
      %s18 = int_to_ptr.vmem [resolvable:$true] %s17
      %20 = dma.hbm_to_vmem [thread:$0]  %s0, 4096, %s18, [#allocation3]
    $region5: #{tpu_custom_call.1} parent=1 // pred_fallthru
      _
    // Predicated region
    $region6: #{tpu_custom_call.1} parent=1 // pred_check
      _
    $region7: #{tpu_custom_call.1} parent=1 // pred_check_branch
      %22 = sbr.rel (0) target = $region9
    $region8: #{tpu_custom_call.1} parent=1 // pred_region
      %s24 = ssub.s32 131072, 131072
      %25 = vsyncadd [#allocation6], %s24
      %s26 = sshll.u32 [#allocation5], 4
      %s27 = int_to_ptr.vmem [resolvable:$true] %s26
      %32 = dma.hbm_to_vmem [thread:$0]  %s1, 131072, %s27, [#allocation6], 64, 64, 4
    $region9: #{tpu_custom_call.1} parent=1 // pred_fallthru
      _
    // Predicated region
    $region10: #{tpu_custom_call.1} parent=1 // pred_check
      _
    $region11: #{tpu_custom_call.1} parent=1 // pred_check_branch
      %34 = sbr.rel (0) target = $region13
    $region12: #{tpu_custom_call.1} parent=1 // pred_region
      %s36 = ssub.s32 16, 16
      %37 = vsyncadd [#allocation6], %s36
      %s39 = sshll.u32 [#allocation7], 4
      %s40 = int_to_ptr.vmem [resolvable:$true] %s39
      %42 = dma.hbm_to_vmem [thread:$0]  %s2, 16, %s40, [#allocation6]
    $region13: #{tpu_custom_call.1} parent=1 // pred_fallthru
      _
    // Predicated region
    $region14: #{tpu_custom_call.1} parent=1 // pred_check
      _
    $region15: #{tpu_custom_call.1} parent=1 // pred_check_branch
      %44 = sbr.rel (0) target = $region17
    $region16: #{tpu_custom_call.1} parent=1 // pred_region
      %45 = dma.done [#allocation3], 4096
    $region17: #{tpu_custom_call.1} parent=1 // pred_fallthru
      _
    // Predicated region
    $region18: #{tpu_custom_call.1} parent=1 // pred_check
      _
    $region19: #{tpu_custom_call.1} parent=1 // pred_check_branch
      %47 = sbr.rel (0) target = $region21
    $region20: #{tpu_custom_call.1} parent=1 // pred_region
      %48 = dma.done [#allocation6], 131072
    $region21: #{tpu_custom_call.1} parent=1 // pred_fallthru
      _
    // Predicated region
    $region22: #{tpu_custom_call.1} parent=1 // pred_check
      _
    $region23: #{tpu_custom_call.1} parent=1 // pred_check_branch
      %50 = sbr.rel (0) target = $region25
    $region24: #{tpu_custom_call.1} parent=1 // pred_region
      %51 = dma.done [#allocation6], 16
    $region25: #{tpu_custom_call.1} parent=1 // pred_fallthru
      _
    %v53 = vld [vmem:[#allocation2] sm:$0xff]
    %v54 = vld [vmem:[#allocation2 + $0x8] sm:$0xff]
    %v55 = vld [vmem:[#allocation2 + $0x10] sm:$0xff]
    %v56 = vld [vmem:[#allocation2 + $0x18] sm:$0xff]
    %v57 = vld [vmem:[#allocation2 + $0x20] sm:$0xff]
    %v58 = vld [vmem:[#allocation2 + $0x28] sm:$0xff]
    %v59 = vld [vmem:[#allocation2 + $0x30] sm:$0xff]
    %v60 = vld [vmem:[#allocation2 + $0x38] sm:$0xff]
    %v61 = vld [vmem:[#allocation2 + $0x40] sm:$0xff]
    %v62 = vld [vmem:[#allocation2 + $0x48] sm:$0xff]
    %v63 = vld [vmem:[#allocation2 + $0x50] sm:$0xff]
    %v64 = vld [vmem:[#allocation2 + $0x58] sm:$0xff]
    %v65 = vld [vmem:[#allocation2 + $0x60] sm:$0xff]
    %v66 = vld [vmem:[#allocation2 + $0x68] sm:$0xff]
    %v67 = vld [vmem:[#allocation2 + $0x70] sm:$0xff]
    %v68 = vld [vmem:[#allocation2 + $0x78] sm:$0xff]
    %v69 = vld [vmem:[#allocation2 + $0x80] sm:$0xff]
    %v70 = vld [vmem:[#allocation2 + $0x88] sm:$0xff]
    %v71 = vld [vmem:[#allocation2 + $0x90] sm:$0xff]
    %v72 = vld [vmem:[#allocation2 + $0x98] sm:$0xff]
    %v73 = vld [vmem:[#allocation2 + $0xa0] sm:$0xff]
    %v74 = vld [vmem:[#allocation2 + $0xa8] sm:$0xff]
    %v75 = vld [vmem:[#allocation2 + $0xb0] sm:$0xff]
    %v76 = vld [vmem:[#allocation2 + $0xb8] sm:$0xff]
    %v77 = vld [vmem:[#allocation2 + $0xc0] sm:$0xff]
    %v78 = vld [vmem:[#allocation2 + $0xc8] sm:$0xff]
    %v79 = vld [vmem:[#allocation2 + $0xd0] sm:$0xff]
    %v80 = vld [vmem:[#allocation2 + $0xd8] sm:$0xff]
    %v81 = vld [vmem:[#allocation2 + $0xe0] sm:$0xff]
    %v82 = vld [vmem:[#allocation2 + $0xe8] sm:$0xff]
    %v83 = vld [vmem:[#allocation2 + $0xf0] sm:$0xff]
    %v84 = vld [vmem:[#allocation2 + $0xf8] sm:$0xff]
    %v85 = vmax.f32 %v53, 0.0
    %v86 = vmax.f32 %v54, 0.0
    %v87 = vmax.f32 %v55, 0.0
    %v88 = vmax.f32 %v56, 0.0
    %v89 = vmax.f32 %v57, 0.0
    %v90 = vmax.f32 %v58, 0.0
    %v91 = vmax.f32 %v59, 0.0
    %v92 = vmax.f32 %v60, 0.0
    %v93 = vmax.f32 %v61, 0.0
    %v94 = vmax.f32 %v62, 0.0
    %v95 = vmax.f32 %v63, 0.0
    %v96 = vmax.f32 %v64, 0.0
    %v97 = vmax.f32 %v65, 0.0
    %v98 = vmax.f32 %v66, 0.0
    %v99 = vmax.f32 %v67, 0.0
    %v100 = vmax.f32 %v68, 0.0
    %v101 = vmax.f32 %v69, 0.0
    %v102 = vmax.f32 %v70, 0.0
    %v103 = vmax.f32 %v71, 0.0
    %v104 = vmax.f32 %v72, 0.0
    %v105 = vmax.f32 %v73, 0.0
    %v106 = vmax.f32 %v74, 0.0
    %v107 = vmax.f32 %v75, 0.0
    %v108 = vmax.f32 %v76, 0.0
    %v109 = vmax.f32 %v77, 0.0
    %v110 = vmax.f32 %v78, 0.0
    %v111 = vmax.f32 %v79, 0.0
    %v112 = vmax.f32 %v80, 0.0
    %v113 = vmax.f32 %v81, 0.0
    %v114 = vmax.f32 %v82, 0.0
    %v115 = vmax.f32 %v83, 0.0
    %v116 = vmax.f32 %v84, 0.0
    %v149 = vcombine.high %v85, %v85
    %v151 = vunpack.c.l.s4 1983009808
    %v152 = vunpack.c.0.s8 %v151
    %v153 = vlaneseq
    %v154 = vshrl.u32 %v153, 7
    %v155 = vsub.s32 %v152, %v154
    %v156 = vrot.slane %v85, %v155
    %v158 = vunpack.c.l.s4 1983009808
    %v159 = vunpack.c.0.s8 %v158
    %v160 = vlaneseq
    %v161 = vshrl.u32 %v160, 7
    %v162 = vsub.s32 %v159, %v161
    %v163 = vrot.slane %v149, %v162
    %v164 = vcombine.high %v156, %v156
    %v165 = vcombine.high %v163, %v163
    %v166 = vcombine.high %v86, %v86
    %v168 = vunpack.c.l.s4 1983009808
    %v169 = vunpack.c.0.s8 %v168
    %v170 = vlaneseq
    %v171 = vshrl.u32 %v170, 7
    %v172 = vsub.s32 %v169, %v171
    %v173 = vrot.slane %v86, %v172
    %v175 = vunpack.c.l.s4 1983009808
    %v176 = vunpack.c.0.s8 %v175
    %v177 = vlaneseq
    %v178 = vshrl.u32 %v177, 7
    %v179 = vsub.s32 %v176, %v178
    %v180 = vrot.slane %v166, %v179
    %v181 = vcombine.high %v173, %v173
    %v182 = vcombine.high %v180, %v180
    %v183 = vcombine.high %v87, %v87
    %v185 = vunpack.c.l.s4 1983009808
    %v186 = vunpack.c.0.s8 %v185
    %v187 = vlaneseq
    %v188 = vshrl.u32 %v187, 7
    %v189 = vsub.s32 %v186, %v188
    %v190 = vrot.slane %v87, %v189
    %v192 = vunpack.c.l.s4 1983009808
    %v193 = vunpack.c.0.s8 %v192
    %v194 = vlaneseq
    %v195 = vshrl.u32 %v194, 7
    %v196 = vsub.s32 %v193, %v195
    %v197 = vrot.slane %v183, %v196
    %v198 = vcombine.high %v190, %v190
    %v199 = vcombine.high %v197, %v197
    %v200 = vcombine.high %v88, %v88
    %v202 = vunpack.c.l.s4 1983009808
    %v203 = vunpack.c.0.s8 %v202
    %v204 = vlaneseq
    %v205 = vshrl.u32 %v204, 7
    %v206 = vsub.s32 %v203, %v205
    %v207 = vrot.slane %v88, %v206
    %v209 = vunpack.c.l.s4 1983009808
    %v210 = vunpack.c.0.s8 %v209
    %v211 = vlaneseq
    %v212 = vshrl.u32 %v211, 7
    %v213 = vsub.s32 %v210, %v212
    %v214 = vrot.slane %v200, %v213
    %v215 = vcombine.high %v207, %v207
    %v216 = vcombine.high %v214, %v214
    %v217 = vcombine.high %v89, %v89
    %v219 = vunpack.c.l.s4 1983009808
    %v220 = vunpack.c.0.s8 %v219
    %v221 = vlaneseq
    %v222 = vshrl.u32 %v221, 7
    %v223 = vsub.s32 %v220, %v222
    %v224 = vrot.slane %v89, %v223
    %v226 = vunpack.c.l.s4 1983009808
    %v227 = vunpack.c.0.s8 %v226
    %v228 = vlaneseq
    %v229 = vshrl.u32 %v228, 7
    %v230 = vsub.s32 %v227, %v229
    %v231 = vrot.slane %v217, %v230
    %v232 = vcombine.high %v224, %v224
    %v233 = vcombine.high %v231, %v231
    %v234 = vcombine.high %v90, %v90
    %v236 = vunpack.c.l.s4 1983009808
    %v237 = vunpack.c.0.s8 %v236
    %v238 = vlaneseq
    %v239 = vshrl.u32 %v238, 7
    %v240 = vsub.s32 %v237, %v239
    %v241 = vrot.slane %v90, %v240
    %v243 = vunpack.c.l.s4 1983009808
    %v244 = vunpack.c.0.s8 %v243
    %v245 = vlaneseq
    %v246 = vshrl.u32 %v245, 7
    %v247 = vsub.s32 %v244, %v246
    %v248 = vrot.slane %v234, %v247
    %v249 = vcombine.high %v241, %v241
    %v250 = vcombine.high %v248, %v248
    %v251 = vcombine.high %v91, %v91
    %v253 = vunpack.c.l.s4 1983009808
    %v254 = vunpack.c.0.s8 %v253
    %v255 = vlaneseq
    %v256 = vshrl.u32 %v255, 7
    %v257 = vsub.s32 %v254, %v256
    %v258 = vrot.slane %v91, %v257
    %v260 = vunpack.c.l.s4 1983009808
    %v261 = vunpack.c.0.s8 %v260
    %v262 = vlaneseq
    %v263 = vshrl.u32 %v262, 7
    %v264 = vsub.s32 %v261, %v263
    %v265 = vrot.slane %v251, %v264
    %v266 = vcombine.high %v258, %v258
    %v267 = vcombine.high %v265, %v265
    %v268 = vcombine.high %v92, %v92
    %v270 = vunpack.c.l.s4 1983009808
    %v271 = vunpack.c.0.s8 %v270
    %v272 = vlaneseq
    %v273 = vshrl.u32 %v272, 7
    %v274 = vsub.s32 %v271, %v273
    %v275 = vrot.slane %v92, %v274
    %v277 = vunpack.c.l.s4 1983009808
    %v278 = vunpack.c.0.s8 %v277
    %v279 = vlaneseq
    %v280 = vshrl.u32 %v279, 7
    %v281 = vsub.s32 %v278, %v280
    %v282 = vrot.slane %v268, %v281
    %v283 = vcombine.high %v275, %v275
    %v284 = vcombine.high %v282, %v282
    %v285 = vcombine.high %v93, %v93
    %v287 = vunpack.c.l.s4 1983009808
    %v288 = vunpack.c.0.s8 %v287
    %v289 = vlaneseq
    %v290 = vshrl.u32 %v289, 7
    %v291 = vsub.s32 %v288, %v290
    %v292 = vrot.slane %v93, %v291
    %v294 = vunpack.c.l.s4 1983009808
    %v295 = vunpack.c.0.s8 %v294
    %v296 = vlaneseq
    %v297 = vshrl.u32 %v296, 7
    %v298 = vsub.s32 %v295, %v297
    %v299 = vrot.slane %v285, %v298
    %v300 = vcombine.high %v292, %v292
    %v301 = vcombine.high %v299, %v299
    %v302 = vcombine.high %v94, %v94
    %v304 = vunpack.c.l.s4 1983009808
    %v305 = vunpack.c.0.s8 %v304
    %v306 = vlaneseq
    %v307 = vshrl.u32 %v306, 7
    %v308 = vsub.s32 %v305, %v307
    %v309 = vrot.slane %v94, %v308
    %v311 = vunpack.c.l.s4 1983009808
    %v312 = vunpack.c.0.s8 %v311
    %v313 = vlaneseq
    %v314 = vshrl.u32 %v313, 7
    %v315 = vsub.s32 %v312, %v314
    %v316 = vrot.slane %v302, %v315
    %v317 = vcombine.high %v309, %v309
    %v318 = vcombine.high %v316, %v316
    %v319 = vcombine.high %v95, %v95
    %v321 = vunpack.c.l.s4 1983009808
    %v322 = vunpack.c.0.s8 %v321
    %v323 = vlaneseq
    %v324 = vshrl.u32 %v323, 7
    %v325 = vsub.s32 %v322, %v324
    %v326 = vrot.slane %v95, %v325
    %v328 = vunpack.c.l.s4 1983009808
    %v329 = vunpack.c.0.s8 %v328
    %v330 = vlaneseq
    %v331 = vshrl.u32 %v330, 7
    %v332 = vsub.s32 %v329, %v331
    %v333 = vrot.slane %v319, %v332
    %v334 = vcombine.high %v326, %v326
    %v335 = vcombine.high %v333, %v333
    %v336 = vcombine.high %v96, %v96
    %v338 = vunpack.c.l.s4 1983009808
    %v339 = vunpack.c.0.s8 %v338
    %v340 = vlaneseq
    %v341 = vshrl.u32 %v340, 7
    %v342 = vsub.s32 %v339, %v341
    %v343 = vrot.slane %v96, %v342
    %v345 = vunpack.c.l.s4 1983009808
    %v346 = vunpack.c.0.s8 %v345
    %v347 = vlaneseq
    %v348 = vshrl.u32 %v347, 7
    %v349 = vsub.s32 %v346, %v348
    %v350 = vrot.slane %v336, %v349
    %v351 = vcombine.high %v343, %v343
    %v352 = vcombine.high %v350, %v350
    %v353 = vcombine.high %v97, %v97
    %v355 = vunpack.c.l.s4 1983009808
    %v356 = vunpack.c.0.s8 %v355
    %v357 = vlaneseq
    %v358 = vshrl.u32 %v357, 7
    %v359 = vsub.s32 %v356, %v358
    %v360 = vrot.slane %v97, %v359
    %v362 = vunpack.c.l.s4 1983009808
    %v363 = vunpack.c.0.s8 %v362
    %v364 = vlaneseq
    %v365 = vshrl.u32 %v364, 7
    %v366 = vsub.s32 %v363, %v365
    %v367 = vrot.slane %v353, %v366
    %v368 = vcombine.high %v360, %v360
    %v369 = vcombine.high %v367, %v367
    %v370 = vcombine.high %v98, %v98
    %v372 = vunpack.c.l.s4 1983009808
    %v373 = vunpack.c.0.s8 %v372
    %v374 = vlaneseq
    %v375 = vshrl.u32 %v374, 7
    %v376 = vsub.s32 %v373, %v375
    %v377 = vrot.slane %v98, %v376
    %v379 = vunpack.c.l.s4 1983009808
    %v380 = vunpack.c.0.s8 %v379
    %v381 = vlaneseq
    %v382 = vshrl.u32 %v381, 7
    %v383 = vsub.s32 %v380, %v382
    %v384 = vrot.slane %v370, %v383
    %v385 = vcombine.high %v377, %v377
    %v386 = vcombine.high %v384, %v384
    %v387 = vcombine.high %v99, %v99
    %v389 = vunpack.c.l.s4 1983009808
    %v390 = vunpack.c.0.s8 %v389
    %v391 = vlaneseq
    %v392 = vshrl.u32 %v391, 7
    %v393 = vsub.s32 %v390, %v392
    %v394 = vrot.slane %v99, %v393
    %v396 = vunpack.c.l.s4 1983009808
    %v397 = vunpack.c.0.s8 %v396
    %v398 = vlaneseq
    %v399 = vshrl.u32 %v398, 7
    %v400 = vsub.s32 %v397, %v399
    %v401 = vrot.slane %v387, %v400
    %v402 = vcombine.high %v394, %v394
    %v403 = vcombine.high %v401, %v401
    %v404 = vcombine.high %v100, %v100
    %v406 = vunpack.c.l.s4 1983009808
    %v407 = vunpack.c.0.s8 %v406
    %v408 = vlaneseq
    %v409 = vshrl.u32 %v408, 7
    %v410 = vsub.s32 %v407, %v409
    %v411 = vrot.slane %v100, %v410
    %v413 = vunpack.c.l.s4 1983009808
    %v414 = vunpack.c.0.s8 %v413
    %v415 = vlaneseq
    %v416 = vshrl.u32 %v415, 7
    %v417 = vsub.s32 %v414, %v416
    %v418 = vrot.slane %v404, %v417
    %v419 = vcombine.high %v411, %v411
    %v420 = vcombine.high %v418, %v418
    %v421 = vcombine.high %v101, %v101
    %v423 = vunpack.c.l.s4 1983009808
    %v424 = vunpack.c.0.s8 %v423
    %v425 = vlaneseq
    %v426 = vshrl.u32 %v425, 7
    %v427 = vsub.s32 %v424, %v426
    %v428 = vrot.slane %v101, %v427
    %v430 = vunpack.c.l.s4 1983009808
    %v431 = vunpack.c.0.s8 %v430
    %v432 = vlaneseq
    %v433 = vshrl.u32 %v432, 7
    %v434 = vsub.s32 %v431, %v433
    %v435 = vrot.slane %v421, %v434
    %v436 = vcombine.high %v428, %v428
    %v437 = vcombine.high %v435, %v435
    %v438 = vcombine.high %v102, %v102
    %v440 = vunpack.c.l.s4 1983009808
    %v441 = vunpack.c.0.s8 %v440
    %v442 = vlaneseq
    %v443 = vshrl.u32 %v442, 7
    %v444 = vsub.s32 %v441, %v443
    %v445 = vrot.slane %v102, %v444
    %v447 = vunpack.c.l.s4 1983009808
    %v448 = vunpack.c.0.s8 %v447
    %v449 = vlaneseq
    %v450 = vshrl.u32 %v449, 7
    %v451 = vsub.s32 %v448, %v450
    %v452 = vrot.slane %v438, %v451
    %v453 = vcombine.high %v445, %v445
    %v454 = vcombine.high %v452, %v452
    %v455 = vcombine.high %v103, %v103
    %v457 = vunpack.c.l.s4 1983009808
    %v458 = vunpack.c.0.s8 %v457
    %v459 = vlaneseq
    %v460 = vshrl.u32 %v459, 7
    %v461 = vsub.s32 %v458, %v460
    %v462 = vrot.slane %v103, %v461
    %v464 = vunpack.c.l.s4 1983009808
    %v465 = vunpack.c.0.s8 %v464
    %v466 = vlaneseq
    %v467 = vshrl.u32 %v466, 7
    %v468 = vsub.s32 %v465, %v467
    %v469 = vrot.slane %v455, %v468
    %v470 = vcombine.high %v462, %v462
    %v471 = vcombine.high %v469, %v469
    %v472 = vcombine.high %v104, %v104
    %v474 = vunpack.c.l.s4 1983009808
    %v475 = vunpack.c.0.s8 %v474
    %v476 = vlaneseq
    %v477 = vshrl.u32 %v476, 7
    %v478 = vsub.s32 %v475, %v477
    %v479 = vrot.slane %v104, %v478
    %v481 = vunpack.c.l.s4 1983009808
    %v482 = vunpack.c.0.s8 %v481
    %v483 = vlaneseq
    %v484 = vshrl.u32 %v483, 7
    %v485 = vsub.s32 %v482, %v484
    %v486 = vrot.slane %v472, %v485
    %v487 = vcombine.high %v479, %v479
    %v488 = vcombine.high %v486, %v486
    %v489 = vcombine.high %v105, %v105
    %v491 = vunpack.c.l.s4 1983009808
    %v492 = vunpack.c.0.s8 %v491
    %v493 = vlaneseq
    %v494 = vshrl.u32 %v493, 7
    %v495 = vsub.s32 %v492, %v494
    %v496 = vrot.slane %v105, %v495
    %v498 = vunpack.c.l.s4 1983009808
    %v499 = vunpack.c.0.s8 %v498
    %v500 = vlaneseq
    %v501 = vshrl.u32 %v500, 7
    %v502 = vsub.s32 %v499, %v501
    %v503 = vrot.slane %v489, %v502
    %v504 = vcombine.high %v496, %v496
    %v505 = vcombine.high %v503, %v503
    %v506 = vcombine.high %v106, %v106
    %v508 = vunpack.c.l.s4 1983009808
    %v509 = vunpack.c.0.s8 %v508
    %v510 = vlaneseq
    %v511 = vshrl.u32 %v510, 7
    %v512 = vsub.s32 %v509, %v511
    %v513 = vrot.slane %v106, %v512
    %v515 = vunpack.c.l.s4 1983009808
    %v516 = vunpack.c.0.s8 %v515
    %v517 = vlaneseq
    %v518 = vshrl.u32 %v517, 7
    %v519 = vsub.s32 %v516, %v518
    %v520 = vrot.slane %v506, %v519
    %v521 = vcombine.high %v513, %v513
    %v522 = vcombine.high %v520, %v520
    %v523 = vcombine.high %v107, %v107
    %v525 = vunpack.c.l.s4 1983009808
    %v526 = vunpack.c.0.s8 %v525
    %v527 = vlaneseq
    %v528 = vshrl.u32 %v527, 7
    %v529 = vsub.s32 %v526, %v528
    %v530 = vrot.slane %v107, %v529
    %v532 = vunpack.c.l.s4 1983009808
    %v533 = vunpack.c.0.s8 %v532
    %v534 = vlaneseq
    %v535 = vshrl.u32 %v534, 7
    %v536 = vsub.s32 %v533, %v535
    %v537 = vrot.slane %v523, %v536
    %v538 = vcombine.high %v530, %v530
    %v539 = vcombine.high %v537, %v537
    %v540 = vcombine.high %v108, %v108
    %v542 = vunpack.c.l.s4 1983009808
    %v543 = vunpack.c.0.s8 %v542
    %v544 = vlaneseq
    %v545 = vshrl.u32 %v544, 7
    %v546 = vsub.s32 %v543, %v545
    %v547 = vrot.slane %v108, %v546
    %v549 = vunpack.c.l.s4 1983009808
    %v550 = vunpack.c.0.s8 %v549
    %v551 = vlaneseq
    %v552 = vshrl.u32 %v551, 7
    %v553 = vsub.s32 %v550, %v552
    %v554 = vrot.slane %v540, %v553
    %v555 = vcombine.high %v547, %v547
    %v556 = vcombine.high %v554, %v554
    %v557 = vcombine.high %v109, %v109
    %v559 = vunpack.c.l.s4 1983009808
    %v560 = vunpack.c.0.s8 %v559
    %v561 = vlaneseq
    %v562 = vshrl.u32 %v561, 7
    %v563 = vsub.s32 %v560, %v562
    %v564 = vrot.slane %v109, %v563
    %v566 = vunpack.c.l.s4 1983009808
    %v567 = vunpack.c.0.s8 %v566
    %v568 = vlaneseq
    %v569 = vshrl.u32 %v568, 7
    %v570 = vsub.s32 %v567, %v569
    %v571 = vrot.slane %v557, %v570
    %v572 = vcombine.high %v564, %v564
    %v573 = vcombine.high %v571, %v571
    %v574 = vcombine.high %v110, %v110
    %v576 = vunpack.c.l.s4 1983009808
    %v577 = vunpack.c.0.s8 %v576
    %v578 = vlaneseq
    %v579 = vshrl.u32 %v578, 7
    %v580 = vsub.s32 %v577, %v579
    %v581 = vrot.slane %v110, %v580
    %v583 = vunpack.c.l.s4 1983009808
    %v584 = vunpack.c.0.s8 %v583
    %v585 = vlaneseq
    %v586 = vshrl.u32 %v585, 7
    %v587 = vsub.s32 %v584, %v586
    %v588 = vrot.slane %v574, %v587
    %v589 = vcombine.high %v581, %v581
    %v590 = vcombine.high %v588, %v588
    %v591 = vcombine.high %v111, %v111
    %v593 = vunpack.c.l.s4 1983009808
    %v594 = vunpack.c.0.s8 %v593
    %v595 = vlaneseq
    %v596 = vshrl.u32 %v595, 7
    %v597 = vsub.s32 %v594, %v596
    %v598 = vrot.slane %v111, %v597
    %v600 = vunpack.c.l.s4 1983009808
    %v601 = vunpack.c.0.s8 %v600
    %v602 = vlaneseq
    %v603 = vshrl.u32 %v602, 7
    %v604 = vsub.s32 %v601, %v603
    %v605 = vrot.slane %v591, %v604
    %v606 = vcombine.high %v598, %v598
    %v607 = vcombine.high %v605, %v605
    %v608 = vcombine.high %v112, %v112
    %v610 = vunpack.c.l.s4 1983009808
    %v611 = vunpack.c.0.s8 %v610
    %v612 = vlaneseq
    %v613 = vshrl.u32 %v612, 7
    %v614 = vsub.s32 %v611, %v613
    %v615 = vrot.slane %v112, %v614
    %v617 = vunpack.c.l.s4 1983009808
    %v618 = vunpack.c.0.s8 %v617
    %v619 = vlaneseq
    %v620 = vshrl.u32 %v619, 7
    %v621 = vsub.s32 %v618, %v620
    %v622 = vrot.slane %v608, %v621
    %v623 = vcombine.high %v615, %v615
    %v624 = vcombine.high %v622, %v622
    %v625 = vcombine.high %v113, %v113
    %v627 = vunpack.c.l.s4 1983009808
    %v628 = vunpack.c.0.s8 %v627
    %v629 = vlaneseq
    %v630 = vshrl.u32 %v629, 7
    %v631 = vsub.s32 %v628, %v630
    %v632 = vrot.slane %v113, %v631
    %v634 = vunpack.c.l.s4 1983009808
    %v635 = vunpack.c.0.s8 %v634
    %v636 = vlaneseq
    %v637 = vshrl.u32 %v636, 7
    %v638 = vsub.s32 %v635, %v637
    %v639 = vrot.slane %v625, %v638
    %v640 = vcombine.high %v632, %v632
    %v641 = vcombine.high %v639, %v639
    %v642 = vcombine.high %v114, %v114
    %v644 = vunpack.c.l.s4 1983009808
    %v645 = vunpack.c.0.s8 %v644
    %v646 = vlaneseq
    %v647 = vshrl.u32 %v646, 7
    %v648 = vsub.s32 %v645, %v647
    %v649 = vrot.slane %v114, %v648
    %v651 = vunpack.c.l.s4 1983009808
    %v652 = vunpack.c.0.s8 %v651
    %v653 = vlaneseq
    %v654 = vshrl.u32 %v653, 7
    %v655 = vsub.s32 %v652, %v654
    %v656 = vrot.slane %v642, %v655
    %v657 = vcombine.high %v649, %v649
    %v658 = vcombine.high %v656, %v656
    %v659 = vcombine.high %v115, %v115
    %v661 = vunpack.c.l.s4 1983009808
    %v662 = vunpack.c.0.s8 %v661
    %v663 = vlaneseq
    %v664 = vshrl.u32 %v663, 7
    %v665 = vsub.s32 %v662, %v664
    %v666 = vrot.slane %v115, %v665
    %v668 = vunpack.c.l.s4 1983009808
    %v669 = vunpack.c.0.s8 %v668
    %v670 = vlaneseq
    %v671 = vshrl.u32 %v670, 7
    %v672 = vsub.s32 %v669, %v671
    %v673 = vrot.slane %v659, %v672
    %v674 = vcombine.high %v666, %v666
    %v675 = vcombine.high %v673, %v673
    %v676 = vcombine.high %v116, %v116
    %v678 = vunpack.c.l.s4 1983009808
    %v679 = vunpack.c.0.s8 %v678
    %v680 = vlaneseq
    %v681 = vshrl.u32 %v680, 7
    %v682 = vsub.s32 %v679, %v681
    %v683 = vrot.slane %v116, %v682
    %v685 = vunpack.c.l.s4 1983009808
    %v686 = vunpack.c.0.s8 %v685
    %v687 = vlaneseq
    %v688 = vshrl.u32 %v687, 7
    %v689 = vsub.s32 %v686, %v688
    %v690 = vrot.slane %v676, %v689
    %v691 = vcombine.high %v683, %v683
    %v692 = vcombine.high %v690, %v690
    %v821 = vpack.c.bf16 %v156, %v156
    %v822 = vpack.c.bf16 %v164, %v164
    %v823 = vpack.c.bf16 %v163, %v163
    %v824 = vpack.c.bf16 %v165, %v165
    %v825 = vpack.c.bf16 %v173, %v173
    %v826 = vpack.c.bf16 %v181, %v181
    %v827 = vpack.c.bf16 %v180, %v180
    %v828 = vpack.c.bf16 %v182, %v182
    %v829 = vpack.c.bf16 %v190, %v190
    %v830 = vpack.c.bf16 %v198, %v198
    %v831 = vpack.c.bf16 %v197, %v197
    %v832 = vpack.c.bf16 %v199, %v199
    %v833 = vpack.c.bf16 %v207, %v207
    %v834 = vpack.c.bf16 %v215, %v215
    %v835 = vpack.c.bf16 %v214, %v214
    %v836 = vpack.c.bf16 %v216, %v216
    %v837 = vpack.c.bf16 %v224, %v224
    %v838 = vpack.c.bf16 %v232, %v232
    %v839 = vpack.c.bf16 %v231, %v231
    %v840 = vpack.c.bf16 %v233, %v233
    %v841 = vpack.c.bf16 %v241, %v241
    %v842 = vpack.c.bf16 %v249, %v249
    %v843 = vpack.c.bf16 %v248, %v248
    %v844 = vpack.c.bf16 %v250, %v250
    %v845 = vpack.c.bf16 %v258, %v258
    %v846 = vpack.c.bf16 %v266, %v266
    %v847 = vpack.c.bf16 %v265, %v265
    %v848 = vpack.c.bf16 %v267, %v267
    %v849 = vpack.c.bf16 %v275, %v275
    %v850 = vpack.c.bf16 %v283, %v283
    %v851 = vpack.c.bf16 %v282, %v282
    %v852 = vpack.c.bf16 %v284, %v284
    %v853 = vpack.c.bf16 %v292, %v292
    %v854 = vpack.c.bf16 %v300, %v300
    %v855 = vpack.c.bf16 %v299, %v299
    %v856 = vpack.c.bf16 %v301, %v301
    %v857 = vpack.c.bf16 %v309, %v309
    %v858 = vpack.c.bf16 %v317, %v317
    %v859 = vpack.c.bf16 %v316, %v316
    %v860 = vpack.c.bf16 %v318, %v318
    %v861 = vpack.c.bf16 %v326, %v326
    %v862 = vpack.c.bf16 %v334, %v334
    %v863 = vpack.c.bf16 %v333, %v333
    %v864 = vpack.c.bf16 %v335, %v335
    %v865 = vpack.c.bf16 %v343, %v343
    %v866 = vpack.c.bf16 %v351, %v351
    %v867 = vpack.c.bf16 %v350, %v350
    %v868 = vpack.c.bf16 %v352, %v352
    %v869 = vpack.c.bf16 %v360, %v360
    %v870 = vpack.c.bf16 %v368, %v368
    %v871 = vpack.c.bf16 %v367, %v367
    %v872 = vpack.c.bf16 %v369, %v369
    %v873 = vpack.c.bf16 %v377, %v377
    %v874 = vpack.c.bf16 %v385, %v385
    %v875 = vpack.c.bf16 %v384, %v384
    %v876 = vpack.c.bf16 %v386, %v386
    %v877 = vpack.c.bf16 %v394, %v394
    %v878 = vpack.c.bf16 %v402, %v402
    %v879 = vpack.c.bf16 %v401, %v401
    %v880 = vpack.c.bf16 %v403, %v403
    %v881 = vpack.c.bf16 %v411, %v411
    %v882 = vpack.c.bf16 %v419, %v419
    %v883 = vpack.c.bf16 %v418, %v418
    %v884 = vpack.c.bf16 %v420, %v420
    %v885 = vpack.c.bf16 %v428, %v428
    %v886 = vpack.c.bf16 %v436, %v436
    %v887 = vpack.c.bf16 %v435, %v435
    %v888 = vpack.c.bf16 %v437, %v437
    %v889 = vpack.c.bf16 %v445, %v445
    %v890 = vpack.c.bf16 %v453, %v453
    %v891 = vpack.c.bf16 %v452, %v452
    %v892 = vpack.c.bf16 %v454, %v454
    %v893 = vpack.c.bf16 %v462, %v462
    %v894 = vpack.c.bf16 %v470, %v470
    %v895 = vpack.c.bf16 %v469, %v469
    %v896 = vpack.c.bf16 %v471, %v471
    %v897 = vpack.c.bf16 %v479, %v479
    %v898 = vpack.c.bf16 %v487, %v487
    %v899 = vpack.c.bf16 %v486, %v486
    %v900 = vpack.c.bf16 %v488, %v488
    %v901 = vpack.c.bf16 %v496, %v496
    %v902 = vpack.c.bf16 %v504, %v504
    %v903 = vpack.c.bf16 %v503, %v503
    %v904 = vpack.c.bf16 %v505, %v505
    %v905 = vpack.c.bf16 %v513, %v513
    %v906 = vpack.c.bf16 %v521, %v521
    %v907 = vpack.c.bf16 %v520, %v520
    %v908 = vpack.c.bf16 %v522, %v522
    %v909 = vpack.c.bf16 %v530, %v530
    %v910 = vpack.c.bf16 %v538, %v538
    %v911 = vpack.c.bf16 %v537, %v537
    %v912 = vpack.c.bf16 %v539, %v539
    %v913 = vpack.c.bf16 %v547, %v547
    %v914 = vpack.c.bf16 %v555, %v555
    %v915 = vpack.c.bf16 %v554, %v554
    %v916 = vpack.c.bf16 %v556, %v556
    %v917 = vpack.c.bf16 %v564, %v564
    %v918 = vpack.c.bf16 %v572, %v572
    %v919 = vpack.c.bf16 %v571, %v571
    %v920 = vpack.c.bf16 %v573, %v573
    %v921 = vpack.c.bf16 %v581, %v581
    %v922 = vpack.c.bf16 %v589, %v589
    %v923 = vpack.c.bf16 %v588, %v588
    %v924 = vpack.c.bf16 %v590, %v590
    %v925 = vpack.c.bf16 %v598, %v598
    %v926 = vpack.c.bf16 %v606, %v606
    %v927 = vpack.c.bf16 %v605, %v605
    %v928 = vpack.c.bf16 %v607, %v607
    %v929 = vpack.c.bf16 %v615, %v615
    %v930 = vpack.c.bf16 %v623, %v623
    %v931 = vpack.c.bf16 %v622, %v622
    %v932 = vpack.c.bf16 %v624, %v624
    %v933 = vpack.c.bf16 %v632, %v632
    %v934 = vpack.c.bf16 %v640, %v640
    %v935 = vpack.c.bf16 %v639, %v639
    %v936 = vpack.c.bf16 %v641, %v641
    %v937 = vpack.c.bf16 %v649, %v649
    %v938 = vpack.c.bf16 %v657, %v657
    %v939 = vpack.c.bf16 %v656, %v656
    %v940 = vpack.c.bf16 %v658, %v658
    %v941 = vpack.c.bf16 %v666, %v666
    %v942 = vpack.c.bf16 %v674, %v674
    %v943 = vpack.c.bf16 %v673, %v673
    %v944 = vpack.c.bf16 %v675, %v675
    %v945 = vpack.c.bf16 %v683, %v683
    %v946 = vpack.c.bf16 %v691, %v691
    %v947 = vpack.c.bf16 %v690, %v690
    %v948 = vpack.c.bf16 %v692, %v692
    %v949 = vld [vmem:[#allocation5] sm:$0xf]
    %v950 = vld [vmem:[#allocation5 + $0x4] sm:$0xf]
    %v951 = vld [vmem:[#allocation5 + $0x8] sm:$0xf]
    %v952 = vld [vmem:[#allocation5 + $0xc] sm:$0xf]
    %v953 = vld [vmem:[#allocation5 + $0x10] sm:$0xf]
    %v954 = vld [vmem:[#allocation5 + $0x14] sm:$0xf]
    %v955 = vld [vmem:[#allocation5 + $0x18] sm:$0xf]
    %v956 = vld [vmem:[#allocation5 + $0x1c] sm:$0xf]
    %v957 = vld [vmem:[#allocation5 + $0x20] sm:$0xf]
    %v958 = vld [vmem:[#allocation5 + $0x24] sm:$0xf]
    %v959 = vld [vmem:[#allocation5 + $0x28] sm:$0xf]
    %v960 = vld [vmem:[#allocation5 + $0x2c] sm:$0xf]
    %v961 = vld [vmem:[#allocation5 + $0x30] sm:$0xf]
    %v962 = vld [vmem:[#allocation5 + $0x34] sm:$0xf]
    %v963 = vld [vmem:[#allocation5 + $0x38] sm:$0xf]
    %v964 = vld [vmem:[#allocation5 + $0x3c] sm:$0xf]
    %v965 = vld [vmem:[#allocation5 + $0x40] sm:$0xf]
    %v966 = vld [vmem:[#allocation5 + $0x44] sm:$0xf]
    %v967 = vld [vmem:[#allocation5 + $0x48] sm:$0xf]
    %v968 = vld [vmem:[#allocation5 + $0x4c] sm:$0xf]
    %v969 = vld [vmem:[#allocation5 + $0x50] sm:$0xf]
    %v970 = vld [vmem:[#allocation5 + $0x54] sm:$0xf]
    %v971 = vld [vmem:[#allocation5 + $0x58] sm:$0xf]
    %v972 = vld [vmem:[#allocation5 + $0x5c] sm:$0xf]
    %v973 = vld [vmem:[#allocation5 + $0x60] sm:$0xf]
    %v974 = vld [vmem:[#allocation5 + $0x64] sm:$0xf]
    %v975 = vld [vmem:[#allocation5 + $0x68] sm:$0xf]
    %v976 = vld [vmem:[#allocation5 + $0x6c] sm:$0xf]
    %v977 = vld [vmem:[#allocation5 + $0x70] sm:$0xf]
    %v978 = vld [vmem:[#allocation5 + $0x74] sm:$0xf]
    %v979 = vld [vmem:[#allocation5 + $0x78] sm:$0xf]
    %v980 = vld [vmem:[#allocation5 + $0x7c] sm:$0xf]
    %v981 = vld [vmem:[#allocation5 + $0x80] sm:$0xf]
    %v982 = vld [vmem:[#allocation5 + $0x84] sm:$0xf]
    %v983 = vld [vmem:[#allocation5 + $0x88] sm:$0xf]
    %v984 = vld [vmem:[#allocation5 + $0x8c] sm:$0xf]
    %v985 = vld [vmem:[#allocation5 + $0x90] sm:$0xf]
    %v986 = vld [vmem:[#allocation5 + $0x94] sm:$0xf]
    %v987 = vld [vmem:[#allocation5 + $0x98] sm:$0xf]
    %v988 = vld [vmem:[#allocation5 + $0x9c] sm:$0xf]
    %v989 = vld [vmem:[#allocation5 + $0xa0] sm:$0xf]
    %v990 = vld [vmem:[#allocation5 + $0xa4] sm:$0xf]
    %v991 = vld [vmem:[#allocation5 + $0xa8] sm:$0xf]
    %v992 = vld [vmem:[#allocation5 + $0xac] sm:$0xf]
    %v993 = vld [vmem:[#allocation5 + $0xb0] sm:$0xf]
    %v994 = vld [vmem:[#allocation5 + $0xb4] sm:$0xf]
    %v995 = vld [vmem:[#allocation5 + $0xb8] sm:$0xf]
    %v996 = vld [vmem:[#allocation5 + $0xbc] sm:$0xf]
    %v997 = vld [vmem:[#allocation5 + $0xc0] sm:$0xf]
    %v998 = vld [vmem:[#allocation5 + $0xc4] sm:$0xf]
    %v999 = vld [vmem:[#allocation5 + $0xc8] sm:$0xf]
    %v1000 = vld [vmem:[#allocation5 + $0xcc] sm:$0xf]
    %v1001 = vld [vmem:[#allocation5 + $0xd0] sm:$0xf]
    %v1002 = vld [vmem:[#allocation5 + $0xd4] sm:$0xf]
    %v1003 = vld [vmem:[#allocation5 + $0xd8] sm:$0xf]
    %v1004 = vld [vmem:[#allocation5 + $0xdc] sm:$0xf]
    %v1005 = vld [vmem:[#allocation5 + $0xe0] sm:$0xf]
    %v1006 = vld [vmem:[#allocation5 + $0xe4] sm:$0xf]
    %v1007 = vld [vmem:[#allocation5 + $0xe8] sm:$0xf]
    %v1008 = vld [vmem:[#allocation5 + $0xec] sm:$0xf]
    %v1009 = vld [vmem:[#allocation5 + $0xf0] sm:$0xf]
    %v1010 = vld [vmem:[#allocation5 + $0xf4] sm:$0xf]
    %v1011 = vld [vmem:[#allocation5 + $0xf8] sm:$0xf]
    %v1012 = vld [vmem:[#allocation5 + $0xfc] sm:$0xf]
    %v1013 = vld [vmem:[#allocation5 + $0x100] sm:$0xf]
    %v1014 = vld [vmem:[#allocation5 + $0x104] sm:$0xf]
    %v1015 = vld [vmem:[#allocation5 + $0x108] sm:$0xf]
    %v1016 = vld [vmem:[#allocation5 + $0x10c] sm:$0xf]
    %v1017 = vld [vmem:[#allocation5 + $0x110] sm:$0xf]
    %v1018 = vld [vmem:[#allocation5 + $0x114] sm:$0xf]
    %v1019 = vld [vmem:[#allocation5 + $0x118] sm:$0xf]
    %v1020 = vld [vmem:[#allocation5 + $0x11c] sm:$0xf]
    %v1021 = vld [vmem:[#allocation5 + $0x120] sm:$0xf]
    %v1022 = vld [vmem:[#allocation5 + $0x124] sm:$0xf]
    %v1023 = vld [vmem:[#allocation5 + $0x128] sm:$0xf]
    %v1024 = vld [vmem:[#allocation5 + $0x12c] sm:$0xf]
    %v1025 = vld [vmem:[#allocation5 + $0x130] sm:$0xf]
    %v1026 = vld [vmem:[#allocation5 + $0x134] sm:$0xf]
    %v1027 = vld [vmem:[#allocation5 + $0x138] sm:$0xf]
    %v1028 = vld [vmem:[#allocation5 + $0x13c] sm:$0xf]
    %v1029 = vld [vmem:[#allocation5 + $0x140] sm:$0xf]
    %v1030 = vld [vmem:[#allocation5 + $0x144] sm:$0xf]
    %v1031 = vld [vmem:[#allocation5 + $0x148] sm:$0xf]
    %v1032 = vld [vmem:[#allocation5 + $0x14c] sm:$0xf]
    %v1033 = vld [vmem:[#allocation5 + $0x150] sm:$0xf]
    %v1034 = vld [vmem:[#allocation5 + $0x154] sm:$0xf]
    %v1035 = vld [vmem:[#allocation5 + $0x158] sm:$0xf]
    %v1036 = vld [vmem:[#allocation5 + $0x15c] sm:$0xf]
    %v1037 = vld [vmem:[#allocation5 + $0x160] sm:$0xf]
    %v1038 = vld [vmem:[#allocation5 + $0x164] sm:$0xf]
    %v1039 = vld [vmem:[#allocation5 + $0x168] sm:$0xf]
    %v1040 = vld [vmem:[#allocation5 + $0x16c] sm:$0xf]
    %v1041 = vld [vmem:[#allocation5 + $0x170] sm:$0xf]
    %v1042 = vld [vmem:[#allocation5 + $0x174] sm:$0xf]
    %v1043 = vld [vmem:[#allocation5 + $0x178] sm:$0xf]
    %v1044 = vld [vmem:[#allocation5 + $0x17c] sm:$0xf]
    %v1045 = vld [vmem:[#allocation5 + $0x180] sm:$0xf]
    %v1046 = vld [vmem:[#allocation5 + $0x184] sm:$0xf]
    %v1047 = vld [vmem:[#allocation5 + $0x188] sm:$0xf]
    %v1048 = vld [vmem:[#allocation5 + $0x18c] sm:$0xf]
    %v1049 = vld [vmem:[#allocation5 + $0x190] sm:$0xf]
    %v1050 = vld [vmem:[#allocation5 + $0x194] sm:$0xf]
    %v1051 = vld [vmem:[#allocation5 + $0x198] sm:$0xf]
    %v1052 = vld [vmem:[#allocation5 + $0x19c] sm:$0xf]
    %v1053 = vld [vmem:[#allocation5 + $0x1a0] sm:$0xf]
    %v1054 = vld [vmem:[#allocation5 + $0x1a4] sm:$0xf]
    %v1055 = vld [vmem:[#allocation5 + $0x1a8] sm:$0xf]
    %v1056 = vld [vmem:[#allocation5 + $0x1ac] sm:$0xf]
    %v1057 = vld [vmem:[#allocation5 + $0x1b0] sm:$0xf]
    %v1058 = vld [vmem:[#allocation5 + $0x1b4] sm:$0xf]
    %v1059 = vld [vmem:[#allocation5 + $0x1b8] sm:$0xf]
    %v1060 = vld [vmem:[#allocation5 + $0x1bc] sm:$0xf]
    %v1061 = vld [vmem:[#allocation5 + $0x1c0] sm:$0xf]
    %v1062 = vld [vmem:[#allocation5 + $0x1c4] sm:$0xf]
    %v1063 = vld [vmem:[#allocation5 + $0x1c8] sm:$0xf]
    %v1064 = vld [vmem:[#allocation5 + $0x1cc] sm:$0xf]
    %v1065 = vld [vmem:[#allocation5 + $0x1d0] sm:$0xf]
    %v1066 = vld [vmem:[#allocation5 + $0x1d4] sm:$0xf]
    %v1067 = vld [vmem:[#allocation5 + $0x1d8] sm:$0xf]
    %v1068 = vld [vmem:[#allocation5 + $0x1dc] sm:$0xf]
    %v1069 = vld [vmem:[#allocation5 + $0x1e0] sm:$0xf]
    %v1070 = vld [vmem:[#allocation5 + $0x1e4] sm:$0xf]
    %v1071 = vld [vmem:[#allocation5 + $0x1e8] sm:$0xf]
    %v1072 = vld [vmem:[#allocation5 + $0x1ec] sm:$0xf]
    %v1073 = vld [vmem:[#allocation5 + $0x1f0] sm:$0xf]
    %v1074 = vld [vmem:[#allocation5 + $0x1f4] sm:$0xf]
    %v1075 = vld [vmem:[#allocation5 + $0x1f8] sm:$0xf]
    %v1076 = vld [vmem:[#allocation5 + $0x1fc] sm:$0xf]
    %v1077 = vld [vmem:[#allocation5 + $0x200] sm:$0xf]
    %v1078 = vld [vmem:[#allocation5 + $0x204] sm:$0xf]
    %v1079 = vld [vmem:[#allocation5 + $0x208] sm:$0xf]
    %v1080 = vld [vmem:[#allocation5 + $0x20c] sm:$0xf]
    %v1081 = vld [vmem:[#allocation5 + $0x210] sm:$0xf]
    %v1082 = vld [vmem:[#allocation5 + $0x214] sm:$0xf]
    %v1083 = vld [vmem:[#allocation5 + $0x218] sm:$0xf]
    %v1084 = vld [vmem:[#allocation5 + $0x21c] sm:$0xf]
    %v1085 = vld [vmem:[#allocation5 + $0x220] sm:$0xf]
    %v1086 = vld [vmem:[#allocation5 + $0x224] sm:$0xf]
    %v1087 = vld [vmem:[#allocation5 + $0x228] sm:$0xf]
    %v1088 = vld [vmem:[#allocation5 + $0x22c] sm:$0xf]
    %v1089 = vld [vmem:[#allocation5 + $0x230] sm:$0xf]
    %v1090 = vld [vmem:[#allocation5 + $0x234] sm:$0xf]
    %v1091 = vld [vmem:[#allocation5 + $0x238] sm:$0xf]
    %v1092 = vld [vmem:[#allocation5 + $0x23c] sm:$0xf]
    %v1093 = vld [vmem:[#allocation5 + $0x240] sm:$0xf]
    %v1094 = vld [vmem:[#allocation5 + $0x244] sm:$0xf]
    %v1095 = vld [vmem:[#allocation5 + $0x248] sm:$0xf]
    %v1096 = vld [vmem:[#allocation5 + $0x24c] sm:$0xf]
    %v1097 = vld [vmem:[#allocation5 + $0x250] sm:$0xf]
    %v1098 = vld [vmem:[#allocation5 + $0x254] sm:$0xf]
    %v1099 = vld [vmem:[#allocation5 + $0x258] sm:$0xf]
    %v1100 = vld [vmem:[#allocation5 + $0x25c] sm:$0xf]
    %v1101 = vld [vmem:[#allocation5 + $0x260] sm:$0xf]
    %v1102 = vld [vmem:[#allocation5 + $0x264] sm:$0xf]
    %v1103 = vld [vmem:[#allocation5 + $0x268] sm:$0xf]
    %v1104 = vld [vmem:[#allocation5 + $0x26c] sm:$0xf]
    %v1105 = vld [vmem:[#allocation5 + $0x270] sm:$0xf]
    %v1106 = vld [vmem:[#allocation5 + $0x274] sm:$0xf]
    %v1107 = vld [vmem:[#allocation5 + $0x278] sm:$0xf]
    %v1108 = vld [vmem:[#allocation5 + $0x27c] sm:$0xf]
    %v1109 = vld [vmem:[#allocation5 + $0x280] sm:$0xf]
    %v1110 = vld [vmem:[#allocation5 + $0x284] sm:$0xf]
    %v1111 = vld [vmem:[#allocation5 + $0x288] sm:$0xf]
    %v1112 = vld [vmem:[#allocation5 + $0x28c] sm:$0xf]
    %v1113 = vld [vmem:[#allocation5 + $0x290] sm:$0xf]
    %v1114 = vld [vmem:[#allocation5 + $0x294] sm:$0xf]
    %v1115 = vld [vmem:[#allocation5 + $0x298] sm:$0xf]
    %v1116 = vld [vmem:[#allocation5 + $0x29c] sm:$0xf]
    %v1117 = vld [vmem:[#allocation5 + $0x2a0] sm:$0xf]
    %v1118 = vld [vmem:[#allocation5 + $0x2a4] sm:$0xf]
    %v1119 = vld [vmem:[#allocation5 + $0x2a8] sm:$0xf]
    %v1120 = vld [vmem:[#allocation5 + $0x2ac] sm:$0xf]
    %v1121 = vld [vmem:[#allocation5 + $0x2b0] sm:$0xf]
    %v1122 = vld [vmem:[#allocation5 + $0x2b4] sm:$0xf]
    %v1123 = vld [vmem:[#allocation5 + $0x2b8] sm:$0xf]
    %v1124 = vld [vmem:[#allocation5 + $0x2bc] sm:$0xf]
    %v1125 = vld [vmem:[#allocation5 + $0x2c0] sm:$0xf]
    %v1126 = vld [vmem:[#allocation5 + $0x2c4] sm:$0xf]
    %v1127 = vld [vmem:[#allocation5 + $0x2c8] sm:$0xf]
    %v1128 = vld [vmem:[#allocation5 + $0x2cc] sm:$0xf]
    %v1129 = vld [vmem:[#allocation5 + $0x2d0] sm:$0xf]
    %v1130 = vld [vmem:[#allocation5 + $0x2d4] sm:$0xf]
    %v1131 = vld [vmem:[#allocation5 + $0x2d8] sm:$0xf]
    %v1132 = vld [vmem:[#allocation5 + $0x2dc] sm:$0xf]
    %v1133 = vld [vmem:[#allocation5 + $0x2e0] sm:$0xf]
    %v1134 = vld [vmem:[#allocation5 + $0x2e4] sm:$0xf]
    %v1135 = vld [vmem:[#allocation5 + $0x2e8] sm:$0xf]
    %v1136 = vld [vmem:[#allocation5 + $0x2ec] sm:$0xf]
    %v1137 = vld [vmem:[#allocation5 + $0x2f0] sm:$0xf]
    %v1138 = vld [vmem:[#allocation5 + $0x2f4] sm:$0xf]
    %v1139 = vld [vmem:[#allocation5 + $0x2f8] sm:$0xf]
    %v1140 = vld [vmem:[#allocation5 + $0x2fc] sm:$0xf]
    %v1141 = vld [vmem:[#allocation5 + $0x300] sm:$0xf]
    %v1142 = vld [vmem:[#allocation5 + $0x304] sm:$0xf]
    %v1143 = vld [vmem:[#allocation5 + $0x308] sm:$0xf]
    %v1144 = vld [vmem:[#allocation5 + $0x30c] sm:$0xf]
    %v1145 = vld [vmem:[#allocation5 + $0x310] sm:$0xf]
    %v1146 = vld [vmem:[#allocation5 + $0x314] sm:$0xf]
    %v1147 = vld [vmem:[#allocation5 + $0x318] sm:$0xf]
    %v1148 = vld [vmem:[#allocation5 + $0x31c] sm:$0xf]
    %v1149 = vld [vmem:[#allocation5 + $0x320] sm:$0xf]
    %v1150 = vld [vmem:[#allocation5 + $0x324] sm:$0xf]
    %v1151 = vld [vmem:[#allocation5 + $0x328] sm:$0xf]
    %v1152 = vld [vmem:[#allocation5 + $0x32c] sm:$0xf]
    %v1153 = vld [vmem:[#allocation5 + $0x330] sm:$0xf]
    %v1154 = vld [vmem:[#allocation5 + $0x334] sm:$0xf]
    %v1155 = vld [vmem:[#allocation5 + $0x338] sm:$0xf]
    %v1156 = vld [vmem:[#allocation5 + $0x33c] sm:$0xf]
    %v1157 = vld [vmem:[#allocation5 + $0x340] sm:$0xf]
    %v1158 = vld [vmem:[#allocation5 + $0x344] sm:$0xf]
    %v1159 = vld [vmem:[#allocation5 + $0x348] sm:$0xf]
    %v1160 = vld [vmem:[#allocation5 + $0x34c] sm:$0xf]
    %v1161 = vld [vmem:[#allocation5 + $0x350] sm:$0xf]
    %v1162 = vld [vmem:[#allocation5 + $0x354] sm:$0xf]
    %v1163 = vld [vmem:[#allocation5 + $0x358] sm:$0xf]
    %v1164 = vld [vmem:[#allocation5 + $0x35c] sm:$0xf]
    %v1165 = vld [vmem:[#allocation5 + $0x360] sm:$0xf]
    %v1166 = vld [vmem:[#allocation5 + $0x364] sm:$0xf]
    %v1167 = vld [vmem:[#allocation5 + $0x368] sm:$0xf]
    %v1168 = vld [vmem:[#allocation5 + $0x36c] sm:$0xf]
    %v1169 = vld [vmem:[#allocation5 + $0x370] sm:$0xf]
    %v1170 = vld [vmem:[#allocation5 + $0x374] sm:$0xf]
    %v1171 = vld [vmem:[#allocation5 + $0x378] sm:$0xf]
    %v1172 = vld [vmem:[#allocation5 + $0x37c] sm:$0xf]
    %v1173 = vld [vmem:[#allocation5 + $0x380] sm:$0xf]
    %v1174 = vld [vmem:[#allocation5 + $0x384] sm:$0xf]
    %v1175 = vld [vmem:[#allocation5 + $0x388] sm:$0xf]
    %v1176 = vld [vmem:[#allocation5 + $0x38c] sm:$0xf]
    %v1177 = vld [vmem:[#allocation5 + $0x390] sm:$0xf]
    %v1178 = vld [vmem:[#allocation5 + $0x394] sm:$0xf]
    %v1179 = vld [vmem:[#allocation5 + $0x398] sm:$0xf]
    %v1180 = vld [vmem:[#allocation5 + $0x39c] sm:$0xf]
    %v1181 = vld [vmem:[#allocation5 + $0x3a0] sm:$0xf]
    %v1182 = vld [vmem:[#allocation5 + $0x3a4] sm:$0xf]
    %v1183 = vld [vmem:[#allocation5 + $0x3a8] sm:$0xf]
    %v1184 = vld [vmem:[#allocation5 + $0x3ac] sm:$0xf]
    %v1185 = vld [vmem:[#allocation5 + $0x3b0] sm:$0xf]
    %v1186 = vld [vmem:[#allocation5 + $0x3b4] sm:$0xf]
    %v1187 = vld [vmem:[#allocation5 + $0x3b8] sm:$0xf]
    %v1188 = vld [vmem:[#allocation5 + $0x3bc] sm:$0xf]
    %v1189 = vld [vmem:[#allocation5 + $0x3c0] sm:$0xf]
    %v1190 = vld [vmem:[#allocation5 + $0x3c4] sm:$0xf]
    %v1191 = vld [vmem:[#allocation5 + $0x3c8] sm:$0xf]
    %v1192 = vld [vmem:[#allocation5 + $0x3cc] sm:$0xf]
    %v1193 = vld [vmem:[#allocation5 + $0x3d0] sm:$0xf]
    %v1194 = vld [vmem:[#allocation5 + $0x3d4] sm:$0xf]
    %v1195 = vld [vmem:[#allocation5 + $0x3d8] sm:$0xf]
    %v1196 = vld [vmem:[#allocation5 + $0x3dc] sm:$0xf]
    %v1197 = vld [vmem:[#allocation5 + $0x3e0] sm:$0xf]
    %v1198 = vld [vmem:[#allocation5 + $0x3e4] sm:$0xf]
    %v1199 = vld [vmem:[#allocation5 + $0x3e8] sm:$0xf]
    %v1200 = vld [vmem:[#allocation5 + $0x3ec] sm:$0xf]
    %v1201 = vld [vmem:[#allocation5 + $0x3f0] sm:$0xf]
    %v1202 = vld [vmem:[#allocation5 + $0x3f4] sm:$0xf]
    %v1203 = vld [vmem:[#allocation5 + $0x3f8] sm:$0xf]
    %v1204 = vld [vmem:[#allocation5 + $0x3fc] sm:$0xf]
    %v1205 = vld [vmem:[#allocation5 + $0x400] sm:$0xf]
    %v1206 = vld [vmem:[#allocation5 + $0x404] sm:$0xf]
    %v1207 = vld [vmem:[#allocation5 + $0x408] sm:$0xf]
    %v1208 = vld [vmem:[#allocation5 + $0x40c] sm:$0xf]
    %v1209 = vld [vmem:[#allocation5 + $0x410] sm:$0xf]
    %v1210 = vld [vmem:[#allocation5 + $0x414] sm:$0xf]
    %v1211 = vld [vmem:[#allocation5 + $0x418] sm:$0xf]
    %v1212 = vld [vmem:[#allocation5 + $0x41c] sm:$0xf]
    %v1213 = vld [vmem:[#allocation5 + $0x420] sm:$0xf]
    %v1214 = vld [vmem:[#allocation5 + $0x424] sm:$0xf]
    %v1215 = vld [vmem:[#allocation5 + $0x428] sm:$0xf]
    %v1216 = vld [vmem:[#allocation5 + $0x42c] sm:$0xf]
    %v1217 = vld [vmem:[#allocation5 + $0x430] sm:$0xf]
    %v1218 = vld [vmem:[#allocation5 + $0x434] sm:$0xf]
    %v1219 = vld [vmem:[#allocation5 + $0x438] sm:$0xf]
    %v1220 = vld [vmem:[#allocation5 + $0x43c] sm:$0xf]
    %v1221 = vld [vmem:[#allocation5 + $0x440] sm:$0xf]
    %v1222 = vld [vmem:[#allocation5 + $0x444] sm:$0xf]
    %v1223 = vld [vmem:[#allocation5 + $0x448] sm:$0xf]
    %v1224 = vld [vmem:[#allocation5 + $0x44c] sm:$0xf]
    %v1225 = vld [vmem:[#allocation5 + $0x450] sm:$0xf]
    %v1226 = vld [vmem:[#allocation5 + $0x454] sm:$0xf]
    %v1227 = vld [vmem:[#allocation5 + $0x458] sm:$0xf]
    %v1228 = vld [vmem:[#allocation5 + $0x45c] sm:$0xf]
    %v1229 = vld [vmem:[#allocation5 + $0x460] sm:$0xf]
    %v1230 = vld [vmem:[#allocation5 + $0x464] sm:$0xf]
    %v1231 = vld [vmem:[#allocation5 + $0x468] sm:$0xf]
    %v1232 = vld [vmem:[#allocation5 + $0x46c] sm:$0xf]
    %v1233 = vld [vmem:[#allocation5 + $0x470] sm:$0xf]
    %v1234 = vld [vmem:[#allocation5 + $0x474] sm:$0xf]
    %v1235 = vld [vmem:[#allocation5 + $0x478] sm:$0xf]
    %v1236 = vld [vmem:[#allocation5 + $0x47c] sm:$0xf]
    %v1237 = vld [vmem:[#allocation5 + $0x480] sm:$0xf]
    %v1238 = vld [vmem:[#allocation5 + $0x484] sm:$0xf]
    %v1239 = vld [vmem:[#allocation5 + $0x488] sm:$0xf]
    %v1240 = vld [vmem:[#allocation5 + $0x48c] sm:$0xf]
    %v1241 = vld [vmem:[#allocation5 + $0x490] sm:$0xf]
    %v1242 = vld [vmem:[#allocation5 + $0x494] sm:$0xf]
    %v1243 = vld [vmem:[#allocation5 + $0x498] sm:$0xf]
    %v1244 = vld [vmem:[#allocation5 + $0x49c] sm:$0xf]
    %v1245 = vld [vmem:[#allocation5 + $0x4a0] sm:$0xf]
    %v1246 = vld [vmem:[#allocation5 + $0x4a4] sm:$0xf]
    %v1247 = vld [vmem:[#allocation5 + $0x4a8] sm:$0xf]
    %v1248 = vld [vmem:[#allocation5 + $0x4ac] sm:$0xf]
    %v1249 = vld [vmem:[#allocation5 + $0x4b0] sm:$0xf]
    %v1250 = vld [vmem:[#allocation5 + $0x4b4] sm:$0xf]
    %v1251 = vld [vmem:[#allocation5 + $0x4b8] sm:$0xf]
    %v1252 = vld [vmem:[#allocation5 + $0x4bc] sm:$0xf]
    %v1253 = vld [vmem:[#allocation5 + $0x4c0] sm:$0xf]
    %v1254 = vld [vmem:[#allocation5 + $0x4c4] sm:$0xf]
    %v1255 = vld [vmem:[#allocation5 + $0x4c8] sm:$0xf]
    %v1256 = vld [vmem:[#allocation5 + $0x4cc] sm:$0xf]
    %v1257 = vld [vmem:[#allocation5 + $0x4d0] sm:$0xf]
    %v1258 = vld [vmem:[#allocation5 + $0x4d4] sm:$0xf]
    %v1259 = vld [vmem:[#allocation5 + $0x4d8] sm:$0xf]
    %v1260 = vld [vmem:[#allocation5 + $0x4dc] sm:$0xf]
    %v1261 = vld [vmem:[#allocation5 + $0x4e0] sm:$0xf]
    %v1262 = vld [vmem:[#allocation5 + $0x4e4] sm:$0xf]
    %v1263 = vld [vmem:[#allocation5 + $0x4e8] sm:$0xf]
    %v1264 = vld [vmem:[#allocation5 + $0x4ec] sm:$0xf]
    %v1265 = vld [vmem:[#allocation5 + $0x4f0] sm:$0xf]
    %v1266 = vld [vmem:[#allocation5 + $0x4f4] sm:$0xf]
    %v1267 = vld [vmem:[#allocation5 + $0x4f8] sm:$0xf]
    %v1268 = vld [vmem:[#allocation5 + $0x4fc] sm:$0xf]
    %v1269 = vld [vmem:[#allocation5 + $0x500] sm:$0xf]
    %v1270 = vld [vmem:[#allocation5 + $0x504] sm:$0xf]
    %v1271 = vld [vmem:[#allocation5 + $0x508] sm:$0xf]
    %v1272 = vld [vmem:[#allocation5 + $0x50c] sm:$0xf]
    %v1273 = vld [vmem:[#allocation5 + $0x510] sm:$0xf]
    %v1274 = vld [vmem:[#allocation5 + $0x514] sm:$0xf]
    %v1275 = vld [vmem:[#allocation5 + $0x518] sm:$0xf]
    %v1276 = vld [vmem:[#allocation5 + $0x51c] sm:$0xf]
    %v1277 = vld [vmem:[#allocation5 + $0x520] sm:$0xf]
    %v1278 = vld [vmem:[#allocation5 + $0x524] sm:$0xf]
    %v1279 = vld [vmem:[#allocation5 + $0x528] sm:$0xf]
    %v1280 = vld [vmem:[#allocation5 + $0x52c] sm:$0xf]
    %v1281 = vld [vmem:[#allocation5 + $0x530] sm:$0xf]
    %v1282 = vld [vmem:[#allocation5 + $0x534] sm:$0xf]
    %v1283 = vld [vmem:[#allocation5 + $0x538] sm:$0xf]
    %v1284 = vld [vmem:[#allocation5 + $0x53c] sm:$0xf]
    %v1285 = vld [vmem:[#allocation5 + $0x540] sm:$0xf]
    %v1286 = vld [vmem:[#allocation5 + $0x544] sm:$0xf]
    %v1287 = vld [vmem:[#allocation5 + $0x548] sm:$0xf]
    %v1288 = vld [vmem:[#allocation5 + $0x54c] sm:$0xf]
    %v1289 = vld [vmem:[#allocation5 + $0x550] sm:$0xf]
    %v1290 = vld [vmem:[#allocation5 + $0x554] sm:$0xf]
    %v1291 = vld [vmem:[#allocation5 + $0x558] sm:$0xf]
    %v1292 = vld [vmem:[#allocation5 + $0x55c] sm:$0xf]
    %v1293 = vld [vmem:[#allocation5 + $0x560] sm:$0xf]
    %v1294 = vld [vmem:[#allocation5 + $0x564] sm:$0xf]
    %v1295 = vld [vmem:[#allocation5 + $0x568] sm:$0xf]
    %v1296 = vld [vmem:[#allocation5 + $0x56c] sm:$0xf]
    %v1297 = vld [vmem:[#allocation5 + $0x570] sm:$0xf]
    %v1298 = vld [vmem:[#allocation5 + $0x574] sm:$0xf]
    %v1299 = vld [vmem:[#allocation5 + $0x578] sm:$0xf]
    %v1300 = vld [vmem:[#allocation5 + $0x57c] sm:$0xf]
    %v1301 = vld [vmem:[#allocation5 + $0x580] sm:$0xf]
    %v1302 = vld [vmem:[#allocation5 + $0x584] sm:$0xf]
    %v1303 = vld [vmem:[#allocation5 + $0x588] sm:$0xf]
    %v1304 = vld [vmem:[#allocation5 + $0x58c] sm:$0xf]
    %v1305 = vld [vmem:[#allocation5 + $0x590] sm:$0xf]
    %v1306 = vld [vmem:[#allocation5 + $0x594] sm:$0xf]
    %v1307 = vld [vmem:[#allocation5 + $0x598] sm:$0xf]
    %v1308 = vld [vmem:[#allocation5 + $0x59c] sm:$0xf]
    %v1309 = vld [vmem:[#allocation5 + $0x5a0] sm:$0xf]
    %v1310 = vld [vmem:[#allocation5 + $0x5a4] sm:$0xf]
    %v1311 = vld [vmem:[#allocation5 + $0x5a8] sm:$0xf]
    %v1312 = vld [vmem:[#allocation5 + $0x5ac] sm:$0xf]
    %v1313 = vld [vmem:[#allocation5 + $0x5b0] sm:$0xf]
    %v1314 = vld [vmem:[#allocation5 + $0x5b4] sm:$0xf]
    %v1315 = vld [vmem:[#allocation5 + $0x5b8] sm:$0xf]
    %v1316 = vld [vmem:[#allocation5 + $0x5bc] sm:$0xf]
    %v1317 = vld [vmem:[#allocation5 + $0x5c0] sm:$0xf]
    %v1318 = vld [vmem:[#allocation5 + $0x5c4] sm:$0xf]
    %v1319 = vld [vmem:[#allocation5 + $0x5c8] sm:$0xf]
    %v1320 = vld [vmem:[#allocation5 + $0x5cc] sm:$0xf]
    %v1321 = vld [vmem:[#allocation5 + $0x5d0] sm:$0xf]
    %v1322 = vld [vmem:[#allocation5 + $0x5d4] sm:$0xf]
    %v1323 = vld [vmem:[#allocation5 + $0x5d8] sm:$0xf]
    %v1324 = vld [vmem:[#allocation5 + $0x5dc] sm:$0xf]
    %v1325 = vld [vmem:[#allocation5 + $0x5e0] sm:$0xf]
    %v1326 = vld [vmem:[#allocation5 + $0x5e4] sm:$0xf]
    %v1327 = vld [vmem:[#allocation5 + $0x5e8] sm:$0xf]
    %v1328 = vld [vmem:[#allocation5 + $0x5ec] sm:$0xf]
    %v1329 = vld [vmem:[#allocation5 + $0x5f0] sm:$0xf]
    %v1330 = vld [vmem:[#allocation5 + $0x5f4] sm:$0xf]
    %v1331 = vld [vmem:[#allocation5 + $0x5f8] sm:$0xf]
    %v1332 = vld [vmem:[#allocation5 + $0x5fc] sm:$0xf]
    %v1333 = vld [vmem:[#allocation5 + $0x600] sm:$0xf]
    %v1334 = vld [vmem:[#allocation5 + $0x604] sm:$0xf]
    %v1335 = vld [vmem:[#allocation5 + $0x608] sm:$0xf]
    %v1336 = vld [vmem:[#allocation5 + $0x60c] sm:$0xf]
    %v1337 = vld [vmem:[#allocation5 + $0x610] sm:$0xf]
    %v1338 = vld [vmem:[#allocation5 + $0x614] sm:$0xf]
    %v1339 = vld [vmem:[#allocation5 + $0x618] sm:$0xf]
    %v1340 = vld [vmem:[#allocation5 + $0x61c] sm:$0xf]
    %v1341 = vld [vmem:[#allocation5 + $0x620] sm:$0xf]
    %v1342 = vld [vmem:[#allocation5 + $0x624] sm:$0xf]
    %v1343 = vld [vmem:[#allocation5 + $0x628] sm:$0xf]
    %v1344 = vld [vmem:[#allocation5 + $0x62c] sm:$0xf]
    %v1345 = vld [vmem:[#allocation5 + $0x630] sm:$0xf]
    %v1346 = vld [vmem:[#allocation5 + $0x634] sm:$0xf]
    %v1347 = vld [vmem:[#allocation5 + $0x638] sm:$0xf]
    %v1348 = vld [vmem:[#allocation5 + $0x63c] sm:$0xf]
    %v1349 = vld [vmem:[#allocation5 + $0x640] sm:$0xf]
    %v1350 = vld [vmem:[#allocation5 + $0x644] sm:$0xf]
    %v1351 = vld [vmem:[#allocation5 + $0x648] sm:$0xf]
    %v1352 = vld [vmem:[#allocation5 + $0x64c] sm:$0xf]
    %v1353 = vld [vmem:[#allocation5 + $0x650] sm:$0xf]
    %v1354 = vld [vmem:[#allocation5 + $0x654] sm:$0xf]
    %v1355 = vld [vmem:[#allocation5 + $0x658] sm:$0xf]
    %v1356 = vld [vmem:[#allocation5 + $0x65c] sm:$0xf]
    %v1357 = vld [vmem:[#allocation5 + $0x660] sm:$0xf]
    %v1358 = vld [vmem:[#allocation5 + $0x664] sm:$0xf]
    %v1359 = vld [vmem:[#allocation5 + $0x668] sm:$0xf]
    %v1360 = vld [vmem:[#allocation5 + $0x66c] sm:$0xf]
    %v1361 = vld [vmem:[#allocation5 + $0x670] sm:$0xf]
    %v1362 = vld [vmem:[#allocation5 + $0x674] sm:$0xf]
    %v1363 = vld [vmem:[#allocation5 + $0x678] sm:$0xf]
    %v1364 = vld [vmem:[#allocation5 + $0x67c] sm:$0xf]
    %v1365 = vld [vmem:[#allocation5 + $0x680] sm:$0xf]
    %v1366 = vld [vmem:[#allocation5 + $0x684] sm:$0xf]
    %v1367 = vld [vmem:[#allocation5 + $0x688] sm:$0xf]
    %v1368 = vld [vmem:[#allocation5 + $0x68c] sm:$0xf]
    %v1369 = vld [vmem:[#allocation5 + $0x690] sm:$0xf]
    %v1370 = vld [vmem:[#allocation5 + $0x694] sm:$0xf]
    %v1371 = vld [vmem:[#allocation5 + $0x698] sm:$0xf]
    %v1372 = vld [vmem:[#allocation5 + $0x69c] sm:$0xf]
    %v1373 = vld [vmem:[#allocation5 + $0x6a0] sm:$0xf]
    %v1374 = vld [vmem:[#allocation5 + $0x6a4] sm:$0xf]
    %v1375 = vld [vmem:[#allocation5 + $0x6a8] sm:$0xf]
    %v1376 = vld [vmem:[#allocation5 + $0x6ac] sm:$0xf]
    %v1377 = vld [vmem:[#allocation5 + $0x6b0] sm:$0xf]
    %v1378 = vld [vmem:[#allocation5 + $0x6b4] sm:$0xf]
    %v1379 = vld [vmem:[#allocation5 + $0x6b8] sm:$0xf]
    %v1380 = vld [vmem:[#allocation5 + $0x6bc] sm:$0xf]
    %v1381 = vld [vmem:[#allocation5 + $0x6c0] sm:$0xf]
    %v1382 = vld [vmem:[#allocation5 + $0x6c4] sm:$0xf]
    %v1383 = vld [vmem:[#allocation5 + $0x6c8] sm:$0xf]
    %v1384 = vld [vmem:[#allocation5 + $0x6cc] sm:$0xf]
    %v1385 = vld [vmem:[#allocation5 + $0x6d0] sm:$0xf]
    %v1386 = vld [vmem:[#allocation5 + $0x6d4] sm:$0xf]
    %v1387 = vld [vmem:[#allocation5 + $0x6d8] sm:$0xf]
    %v1388 = vld [vmem:[#allocation5 + $0x6dc] sm:$0xf]
    %v1389 = vld [vmem:[#allocation5 + $0x6e0] sm:$0xf]
    %v1390 = vld [vmem:[#allocation5 + $0x6e4] sm:$0xf]
    %v1391 = vld [vmem:[#allocation5 + $0x6e8] sm:$0xf]
    %v1392 = vld [vmem:[#allocation5 + $0x6ec] sm:$0xf]
    %v1393 = vld [vmem:[#allocation5 + $0x6f0] sm:$0xf]
    %v1394 = vld [vmem:[#allocation5 + $0x6f4] sm:$0xf]
    %v1395 = vld [vmem:[#allocation5 + $0x6f8] sm:$0xf]
    %v1396 = vld [vmem:[#allocation5 + $0x6fc] sm:$0xf]
    %v1397 = vld [vmem:[#allocation5 + $0x700] sm:$0xf]
    %v1398 = vld [vmem:[#allocation5 + $0x704] sm:$0xf]
    %v1399 = vld [vmem:[#allocation5 + $0x708] sm:$0xf]
    %v1400 = vld [vmem:[#allocation5 + $0x70c] sm:$0xf]
    %v1401 = vld [vmem:[#allocation5 + $0x710] sm:$0xf]
    %v1402 = vld [vmem:[#allocation5 + $0x714] sm:$0xf]
    %v1403 = vld [vmem:[#allocation5 + $0x718] sm:$0xf]
    %v1404 = vld [vmem:[#allocation5 + $0x71c] sm:$0xf]
    %v1405 = vld [vmem:[#allocation5 + $0x720] sm:$0xf]
    %v1406 = vld [vmem:[#allocation5 + $0x724] sm:$0xf]
    %v1407 = vld [vmem:[#allocation5 + $0x728] sm:$0xf]
    %v1408 = vld [vmem:[#allocation5 + $0x72c] sm:$0xf]
    %v1409 = vld [vmem:[#allocation5 + $0x730] sm:$0xf]
    %v1410 = vld [vmem:[#allocation5 + $0x734] sm:$0xf]
    %v1411 = vld [vmem:[#allocation5 + $0x738] sm:$0xf]
    %v1412 = vld [vmem:[#allocation5 + $0x73c] sm:$0xf]
    %v1413 = vld [vmem:[#allocation5 + $0x740] sm:$0xf]
    %v1414 = vld [vmem:[#allocation5 + $0x744] sm:$0xf]
    %v1415 = vld [vmem:[#allocation5 + $0x748] sm:$0xf]
    %v1416 = vld [vmem:[#allocation5 + $0x74c] sm:$0xf]
    %v1417 = vld [vmem:[#allocation5 + $0x750] sm:$0xf]
    %v1418 = vld [vmem:[#allocation5 + $0x754] sm:$0xf]
    %v1419 = vld [vmem:[#allocation5 + $0x758] sm:$0xf]
    %v1420 = vld [vmem:[#allocation5 + $0x75c] sm:$0xf]
    %v1421 = vld [vmem:[#allocation5 + $0x760] sm:$0xf]
    %v1422 = vld [vmem:[#allocation5 + $0x764] sm:$0xf]
    %v1423 = vld [vmem:[#allocation5 + $0x768] sm:$0xf]
    %v1424 = vld [vmem:[#allocation5 + $0x76c] sm:$0xf]
    %v1425 = vld [vmem:[#allocation5 + $0x770] sm:$0xf]
    %v1426 = vld [vmem:[#allocation5 + $0x774] sm:$0xf]
    %v1427 = vld [vmem:[#allocation5 + $0x778] sm:$0xf]
    %v1428 = vld [vmem:[#allocation5 + $0x77c] sm:$0xf]
    %v1429 = vld [vmem:[#allocation5 + $0x780] sm:$0xf]
    %v1430 = vld [vmem:[#allocation5 + $0x784] sm:$0xf]
    %v1431 = vld [vmem:[#allocation5 + $0x788] sm:$0xf]
    %v1432 = vld [vmem:[#allocation5 + $0x78c] sm:$0xf]
    %v1433 = vld [vmem:[#allocation5 + $0x790] sm:$0xf]
    %v1434 = vld [vmem:[#allocation5 + $0x794] sm:$0xf]
    %v1435 = vld [vmem:[#allocation5 + $0x798] sm:$0xf]
    %v1436 = vld [vmem:[#allocation5 + $0x79c] sm:$0xf]
    %v1437 = vld [vmem:[#allocation5 + $0x7a0] sm:$0xf]
    %v1438 = vld [vmem:[#allocation5 + $0x7a4] sm:$0xf]
    %v1439 = vld [vmem:[#allocation5 + $0x7a8] sm:$0xf]
    %v1440 = vld [vmem:[#allocation5 + $0x7ac] sm:$0xf]
    %v1441 = vld [vmem:[#allocation5 + $0x7b0] sm:$0xf]
    %v1442 = vld [vmem:[#allocation5 + $0x7b4] sm:$0xf]
    %v1443 = vld [vmem:[#allocation5 + $0x7b8] sm:$0xf]
    %v1444 = vld [vmem:[#allocation5 + $0x7bc] sm:$0xf]
    %v1445 = vld [vmem:[#allocation5 + $0x7c0] sm:$0xf]
    %v1446 = vld [vmem:[#allocation5 + $0x7c4] sm:$0xf]
    %v1447 = vld [vmem:[#allocation5 + $0x7c8] sm:$0xf]
    %v1448 = vld [vmem:[#allocation5 + $0x7cc] sm:$0xf]
    %v1449 = vld [vmem:[#allocation5 + $0x7d0] sm:$0xf]
    %v1450 = vld [vmem:[#allocation5 + $0x7d4] sm:$0xf]
    %v1451 = vld [vmem:[#allocation5 + $0x7d8] sm:$0xf]
    %v1452 = vld [vmem:[#allocation5 + $0x7dc] sm:$0xf]
    %v1453 = vld [vmem:[#allocation5 + $0x7e0] sm:$0xf]
    %v1454 = vld [vmem:[#allocation5 + $0x7e4] sm:$0xf]
    %v1455 = vld [vmem:[#allocation5 + $0x7e8] sm:$0xf]
    %v1456 = vld [vmem:[#allocation5 + $0x7ec] sm:$0xf]
    %v1457 = vld [vmem:[#allocation5 + $0x7f0] sm:$0xf]
    %v1458 = vld [vmem:[#allocation5 + $0x7f4] sm:$0xf]
    %v1459 = vld [vmem:[#allocation5 + $0x7f8] sm:$0xf]
    %v1460 = vld [vmem:[#allocation5 + $0x7fc] sm:$0xf]
    %v1461 = vld [vmem:[#allocation5 + $0x800] sm:$0xf]
    %v1462 = vld [vmem:[#allocation5 + $0x804] sm:$0xf]
    %v1463 = vld [vmem:[#allocation5 + $0x808] sm:$0xf]
    %v1464 = vld [vmem:[#allocation5 + $0x80c] sm:$0xf]
    %v1465 = vld [vmem:[#allocation5 + $0x810] sm:$0xf]
    %v1466 = vld [vmem:[#allocation5 + $0x814] sm:$0xf]
    %v1467 = vld [vmem:[#allocation5 + $0x818] sm:$0xf]
    %v1468 = vld [vmem:[#allocation5 + $0x81c] sm:$0xf]
    %v1469 = vld [vmem:[#allocation5 + $0x820] sm:$0xf]
    %v1470 = vld [vmem:[#allocation5 + $0x824] sm:$0xf]
    %v1471 = vld [vmem:[#allocation5 + $0x828] sm:$0xf]
    %v1472 = vld [vmem:[#allocation5 + $0x82c] sm:$0xf]
    %v1473 = vld [vmem:[#allocation5 + $0x830] sm:$0xf]
    %v1474 = vld [vmem:[#allocation5 + $0x834] sm:$0xf]
    %v1475 = vld [vmem:[#allocation5 + $0x838] sm:$0xf]
    %v1476 = vld [vmem:[#allocation5 + $0x83c] sm:$0xf]
    %v1477 = vld [vmem:[#allocation5 + $0x840] sm:$0xf]
    %v1478 = vld [vmem:[#allocation5 + $0x844] sm:$0xf]
    %v1479 = vld [vmem:[#allocation5 + $0x848] sm:$0xf]
    %v1480 = vld [vmem:[#allocation5 + $0x84c] sm:$0xf]
    %v1481 = vld [vmem:[#allocation5 + $0x850] sm:$0xf]
    %v1482 = vld [vmem:[#allocation5 + $0x854] sm:$0xf]
    %v1483 = vld [vmem:[#allocation5 + $0x858] sm:$0xf]
    %v1484 = vld [vmem:[#allocation5 + $0x85c] sm:$0xf]
    %v1485 = vld [vmem:[#allocation5 + $0x860] sm:$0xf]
    %v1486 = vld [vmem:[#allocation5 + $0x864] sm:$0xf]
    %v1487 = vld [vmem:[#allocation5 + $0x868] sm:$0xf]
    %v1488 = vld [vmem:[#allocation5 + $0x86c] sm:$0xf]
    %v1489 = vld [vmem:[#allocation5 + $0x870] sm:$0xf]
    %v1490 = vld [vmem:[#allocation5 + $0x874] sm:$0xf]
    %v1491 = vld [vmem:[#allocation5 + $0x878] sm:$0xf]
    %v1492 = vld [vmem:[#allocation5 + $0x87c] sm:$0xf]
    %v1493 = vld [vmem:[#allocation5 + $0x880] sm:$0xf]
    %v1494 = vld [vmem:[#allocation5 + $0x884] sm:$0xf]
    %v1495 = vld [vmem:[#allocation5 + $0x888] sm:$0xf]
    %v1496 = vld [vmem:[#allocation5 + $0x88c] sm:$0xf]
    %v1497 = vld [vmem:[#allocation5 + $0x890] sm:$0xf]
    %v1498 = vld [vmem:[#allocation5 + $0x894] sm:$0xf]
    %v1499 = vld [vmem:[#allocation5 + $0x898] sm:$0xf]
    %v1500 = vld [vmem:[#allocation5 + $0x89c] sm:$0xf]
    %v1501 = vld [vmem:[#allocation5 + $0x8a0] sm:$0xf]
    %v1502 = vld [vmem:[#allocation5 + $0x8a4] sm:$0xf]
    %v1503 = vld [vmem:[#allocation5 + $0x8a8] sm:$0xf]
    %v1504 = vld [vmem:[#allocation5 + $0x8ac] sm:$0xf]
    %v1505 = vld [vmem:[#allocation5 + $0x8b0] sm:$0xf]
    %v1506 = vld [vmem:[#allocation5 + $0x8b4] sm:$0xf]
    %v1507 = vld [vmem:[#allocation5 + $0x8b8] sm:$0xf]
    %v1508 = vld [vmem:[#allocation5 + $0x8bc] sm:$0xf]
    %v1509 = vld [vmem:[#allocation5 + $0x8c0] sm:$0xf]
    %v1510 = vld [vmem:[#allocation5 + $0x8c4] sm:$0xf]
    %v1511 = vld [vmem:[#allocation5 + $0x8c8] sm:$0xf]
    %v1512 = vld [vmem:[#allocation5 + $0x8cc] sm:$0xf]
    %v1513 = vld [vmem:[#allocation5 + $0x8d0] sm:$0xf]
    %v1514 = vld [vmem:[#allocation5 + $0x8d4] sm:$0xf]
    %v1515 = vld [vmem:[#allocation5 + $0x8d8] sm:$0xf]
    %v1516 = vld [vmem:[#allocation5 + $0x8dc] sm:$0xf]
    %v1517 = vld [vmem:[#allocation5 + $0x8e0] sm:$0xf]
    %v1518 = vld [vmem:[#allocation5 + $0x8e4] sm:$0xf]
    %v1519 = vld [vmem:[#allocation5 + $0x8e8] sm:$0xf]
    %v1520 = vld [vmem:[#allocation5 + $0x8ec] sm:$0xf]
    %v1521 = vld [vmem:[#allocation5 + $0x8f0] sm:$0xf]
    %v1522 = vld [vmem:[#allocation5 + $0x8f4] sm:$0xf]
    %v1523 = vld [vmem:[#allocation5 + $0x8f8] sm:$0xf]
    %v1524 = vld [vmem:[#allocation5 + $0x8fc] sm:$0xf]
    %v1525 = vld [vmem:[#allocation5 + $0x900] sm:$0xf]
    %v1526 = vld [vmem:[#allocation5 + $0x904] sm:$0xf]
    %v1527 = vld [vmem:[#allocation5 + $0x908] sm:$0xf]
    %v1528 = vld [vmem:[#allocation5 + $0x90c] sm:$0xf]
    %v1529 = vld [vmem:[#allocation5 + $0x910] sm:$0xf]
    %v1530 = vld [vmem:[#allocation5 + $0x914] sm:$0xf]
    %v1531 = vld [vmem:[#allocation5 + $0x918] sm:$0xf]
    %v1532 = vld [vmem:[#allocation5 + $0x91c] sm:$0xf]
    %v1533 = vld [vmem:[#allocation5 + $0x920] sm:$0xf]
    %v1534 = vld [vmem:[#allocation5 + $0x924] sm:$0xf]
    %v1535 = vld [vmem:[#allocation5 + $0x928] sm:$0xf]
    %v1536 = vld [vmem:[#allocation5 + $0x92c] sm:$0xf]
    %v1537 = vld [vmem:[#allocation5 + $0x930] sm:$0xf]
    %v1538 = vld [vmem:[#allocation5 + $0x934] sm:$0xf]
    %v1539 = vld [vmem:[#allocation5 + $0x938] sm:$0xf]
    %v1540 = vld [vmem:[#allocation5 + $0x93c] sm:$0xf]
    %v1541 = vld [vmem:[#allocation5 + $0x940] sm:$0xf]
    %v1542 = vld [vmem:[#allocation5 + $0x944] sm:$0xf]
    %v1543 = vld [vmem:[#allocation5 + $0x948] sm:$0xf]
    %v1544 = vld [vmem:[#allocation5 + $0x94c] sm:$0xf]
    %v1545 = vld [vmem:[#allocation5 + $0x950] sm:$0xf]
    %v1546 = vld [vmem:[#allocation5 + $0x954] sm:$0xf]
    %v1547 = vld [vmem:[#allocation5 + $0x958] sm:$0xf]
    %v1548 = vld [vmem:[#allocation5 + $0x95c] sm:$0xf]
    %v1549 = vld [vmem:[#allocation5 + $0x960] sm:$0xf]
    %v1550 = vld [vmem:[#allocation5 + $0x964] sm:$0xf]
    %v1551 = vld [vmem:[#allocation5 + $0x968] sm:$0xf]
    %v1552 = vld [vmem:[#allocation5 + $0x96c] sm:$0xf]
    %v1553 = vld [vmem:[#allocation5 + $0x970] sm:$0xf]
    %v1554 = vld [vmem:[#allocation5 + $0x974] sm:$0xf]
    %v1555 = vld [vmem:[#allocation5 + $0x978] sm:$0xf]
    %v1556 = vld [vmem:[#allocation5 + $0x97c] sm:$0xf]
    %v1557 = vld [vmem:[#allocation5 + $0x980] sm:$0xf]
    %v1558 = vld [vmem:[#allocation5 + $0x984] sm:$0xf]
    %v1559 = vld [vmem:[#allocation5 + $0x988] sm:$0xf]
    %v1560 = vld [vmem:[#allocation5 + $0x98c] sm:$0xf]
    %v1561 = vld [vmem:[#allocation5 + $0x990] sm:$0xf]
    %v1562 = vld [vmem:[#allocation5 + $0x994] sm:$0xf]
    %v1563 = vld [vmem:[#allocation5 + $0x998] sm:$0xf]
    %v1564 = vld [vmem:[#allocation5 + $0x99c] sm:$0xf]
    %v1565 = vld [vmem:[#allocation5 + $0x9a0] sm:$0xf]
    %v1566 = vld [vmem:[#allocation5 + $0x9a4] sm:$0xf]
    %v1567 = vld [vmem:[#allocation5 + $0x9a8] sm:$0xf]
    %v1568 = vld [vmem:[#allocation5 + $0x9ac] sm:$0xf]
    %v1569 = vld [vmem:[#allocation5 + $0x9b0] sm:$0xf]
    %v1570 = vld [vmem:[#allocation5 + $0x9b4] sm:$0xf]
    %v1571 = vld [vmem:[#allocation5 + $0x9b8] sm:$0xf]
    %v1572 = vld [vmem:[#allocation5 + $0x9bc] sm:$0xf]
    %v1573 = vld [vmem:[#allocation5 + $0x9c0] sm:$0xf]
    %v1574 = vld [vmem:[#allocation5 + $0x9c4] sm:$0xf]
    %v1575 = vld [vmem:[#allocation5 + $0x9c8] sm:$0xf]
    %v1576 = vld [vmem:[#allocation5 + $0x9cc] sm:$0xf]
    %v1577 = vld [vmem:[#allocation5 + $0x9d0] sm:$0xf]
    %v1578 = vld [vmem:[#allocation5 + $0x9d4] sm:$0xf]
    %v1579 = vld [vmem:[#allocation5 + $0x9d8] sm:$0xf]
    %v1580 = vld [vmem:[#allocation5 + $0x9dc] sm:$0xf]
    %v1581 = vld [vmem:[#allocation5 + $0x9e0] sm:$0xf]
    %v1582 = vld [vmem:[#allocation5 + $0x9e4] sm:$0xf]
    %v1583 = vld [vmem:[#allocation5 + $0x9e8] sm:$0xf]
    %v1584 = vld [vmem:[#allocation5 + $0x9ec] sm:$0xf]
    %v1585 = vld [vmem:[#allocation5 + $0x9f0] sm:$0xf]
    %v1586 = vld [vmem:[#allocation5 + $0x9f4] sm:$0xf]
    %v1587 = vld [vmem:[#allocation5 + $0x9f8] sm:$0xf]
    %v1588 = vld [vmem:[#allocation5 + $0x9fc] sm:$0xf]
    %v1589 = vld [vmem:[#allocation5 + $0xa00] sm:$0xf]
    %v1590 = vld [vmem:[#allocation5 + $0xa04] sm:$0xf]
    %v1591 = vld [vmem:[#allocation5 + $0xa08] sm:$0xf]
    %v1592 = vld [vmem:[#allocation5 + $0xa0c] sm:$0xf]
    %v1593 = vld [vmem:[#allocation5 + $0xa10] sm:$0xf]
    %v1594 = vld [vmem:[#allocation5 + $0xa14] sm:$0xf]
    %v1595 = vld [vmem:[#allocation5 + $0xa18] sm:$0xf]
    %v1596 = vld [vmem:[#allocation5 + $0xa1c] sm:$0xf]
    %v1597 = vld [vmem:[#allocation5 + $0xa20] sm:$0xf]
    %v1598 = vld [vmem:[#allocation5 + $0xa24] sm:$0xf]
    %v1599 = vld [vmem:[#allocation5 + $0xa28] sm:$0xf]
    %v1600 = vld [vmem:[#allocation5 + $0xa2c] sm:$0xf]
    %v1601 = vld [vmem:[#allocation5 + $0xa30] sm:$0xf]
    %v1602 = vld [vmem:[#allocation5 + $0xa34] sm:$0xf]
    %v1603 = vld [vmem:[#allocation5 + $0xa38] sm:$0xf]
    %v1604 = vld [vmem:[#allocation5 + $0xa3c] sm:$0xf]
    %v1605 = vld [vmem:[#allocation5 + $0xa40] sm:$0xf]
    %v1606 = vld [vmem:[#allocation5 + $0xa44] sm:$0xf]
    %v1607 = vld [vmem:[#allocation5 + $0xa48] sm:$0xf]
    %v1608 = vld [vmem:[#allocation5 + $0xa4c] sm:$0xf]
    %v1609 = vld [vmem:[#allocation5 + $0xa50] sm:$0xf]
    %v1610 = vld [vmem:[#allocation5 + $0xa54] sm:$0xf]
    %v1611 = vld [vmem:[#allocation5 + $0xa58] sm:$0xf]
    %v1612 = vld [vmem:[#allocation5 + $0xa5c] sm:$0xf]
    %v1613 = vld [vmem:[#allocation5 + $0xa60] sm:$0xf]
    %v1614 = vld [vmem:[#allocation5 + $0xa64] sm:$0xf]
    %v1615 = vld [vmem:[#allocation5 + $0xa68] sm:$0xf]
    %v1616 = vld [vmem:[#allocation5 + $0xa6c] sm:$0xf]
    %v1617 = vld [vmem:[#allocation5 + $0xa70] sm:$0xf]
    %v1618 = vld [vmem:[#allocation5 + $0xa74] sm:$0xf]
    %v1619 = vld [vmem:[#allocation5 + $0xa78] sm:$0xf]
    %v1620 = vld [vmem:[#allocation5 + $0xa7c] sm:$0xf]
    %v1621 = vld [vmem:[#allocation5 + $0xa80] sm:$0xf]
    %v1622 = vld [vmem:[#allocation5 + $0xa84] sm:$0xf]
    %v1623 = vld [vmem:[#allocation5 + $0xa88] sm:$0xf]
    %v1624 = vld [vmem:[#allocation5 + $0xa8c] sm:$0xf]
    %v1625 = vld [vmem:[#allocation5 + $0xa90] sm:$0xf]
    %v1626 = vld [vmem:[#allocation5 + $0xa94] sm:$0xf]
    %v1627 = vld [vmem:[#allocation5 + $0xa98] sm:$0xf]
    %v1628 = vld [vmem:[#allocation5 + $0xa9c] sm:$0xf]
    %v1629 = vld [vmem:[#allocation5 + $0xaa0] sm:$0xf]
    %v1630 = vld [vmem:[#allocation5 + $0xaa4] sm:$0xf]
    %v1631 = vld [vmem:[#allocation5 + $0xaa8] sm:$0xf]
    %v1632 = vld [vmem:[#allocation5 + $0xaac] sm:$0xf]
    %v1633 = vld [vmem:[#allocation5 + $0xab0] sm:$0xf]
    %v1634 = vld [vmem:[#allocation5 + $0xab4] sm:$0xf]
    %v1635 = vld [vmem:[#allocation5 + $0xab8] sm:$0xf]
    %v1636 = vld [vmem:[#allocation5 + $0xabc] sm:$0xf]
    %v1637 = vld [vmem:[#allocation5 + $0xac0] sm:$0xf]
    %v1638 = vld [vmem:[#allocation5 + $0xac4] sm:$0xf]
    %v1639 = vld [vmem:[#allocation5 + $0xac8] sm:$0xf]
    %v1640 = vld [vmem:[#allocation5 + $0xacc] sm:$0xf]
    %v1641 = vld [vmem:[#allocation5 + $0xad0] sm:$0xf]
    %v1642 = vld [vmem:[#allocation5 + $0xad4] sm:$0xf]
    %v1643 = vld [vmem:[#allocation5 + $0xad8] sm:$0xf]
    %v1644 = vld [vmem:[#allocation5 + $0xadc] sm:$0xf]
    %v1645 = vld [vmem:[#allocation5 + $0xae0] sm:$0xf]
    %v1646 = vld [vmem:[#allocation5 + $0xae4] sm:$0xf]
    %v1647 = vld [vmem:[#allocation5 + $0xae8] sm:$0xf]
    %v1648 = vld [vmem:[#allocation5 + $0xaec] sm:$0xf]
    %v1649 = vld [vmem:[#allocation5 + $0xaf0] sm:$0xf]
    %v1650 = vld [vmem:[#allocation5 + $0xaf4] sm:$0xf]
    %v1651 = vld [vmem:[#allocation5 + $0xaf8] sm:$0xf]
    %v1652 = vld [vmem:[#allocation5 + $0xafc] sm:$0xf]
    %v1653 = vld [vmem:[#allocation5 + $0xb00] sm:$0xf]
    %v1654 = vld [vmem:[#allocation5 + $0xb04] sm:$0xf]
    %v1655 = vld [vmem:[#allocation5 + $0xb08] sm:$0xf]
    %v1656 = vld [vmem:[#allocation5 + $0xb0c] sm:$0xf]
    %v1657 = vld [vmem:[#allocation5 + $0xb10] sm:$0xf]
    %v1658 = vld [vmem:[#allocation5 + $0xb14] sm:$0xf]
    %v1659 = vld [vmem:[#allocation5 + $0xb18] sm:$0xf]
    %v1660 = vld [vmem:[#allocation5 + $0xb1c] sm:$0xf]
    %v1661 = vld [vmem:[#allocation5 + $0xb20] sm:$0xf]
    %v1662 = vld [vmem:[#allocation5 + $0xb24] sm:$0xf]
    %v1663 = vld [vmem:[#allocation5 + $0xb28] sm:$0xf]
    %v1664 = vld [vmem:[#allocation5 + $0xb2c] sm:$0xf]
    %v1665 = vld [vmem:[#allocation5 + $0xb30] sm:$0xf]
    %v1666 = vld [vmem:[#allocation5 + $0xb34] sm:$0xf]
    %v1667 = vld [vmem:[#allocation5 + $0xb38] sm:$0xf]
    %v1668 = vld [vmem:[#allocation5 + $0xb3c] sm:$0xf]
    %v1669 = vld [vmem:[#allocation5 + $0xb40] sm:$0xf]
    %v1670 = vld [vmem:[#allocation5 + $0xb44] sm:$0xf]
    %v1671 = vld [vmem:[#allocation5 + $0xb48] sm:$0xf]
    %v1672 = vld [vmem:[#allocation5 + $0xb4c] sm:$0xf]
    %v1673 = vld [vmem:[#allocation5 + $0xb50] sm:$0xf]
    %v1674 = vld [vmem:[#allocation5 + $0xb54] sm:$0xf]
    %v1675 = vld [vmem:[#allocation5 + $0xb58] sm:$0xf]
    %v1676 = vld [vmem:[#allocation5 + $0xb5c] sm:$0xf]
    %v1677 = vld [vmem:[#allocation5 + $0xb60] sm:$0xf]
    %v1678 = vld [vmem:[#allocation5 + $0xb64] sm:$0xf]
    %v1679 = vld [vmem:[#allocation5 + $0xb68] sm:$0xf]
    %v1680 = vld [vmem:[#allocation5 + $0xb6c] sm:$0xf]
    %v1681 = vld [vmem:[#allocation5 + $0xb70] sm:$0xf]
    %v1682 = vld [vmem:[#allocation5 + $0xb74] sm:$0xf]
    %v1683 = vld [vmem:[#allocation5 + $0xb78] sm:$0xf]
    %v1684 = vld [vmem:[#allocation5 + $0xb7c] sm:$0xf]
    %v1685 = vld [vmem:[#allocation5 + $0xb80] sm:$0xf]
    %v1686 = vld [vmem:[#allocation5 + $0xb84] sm:$0xf]
    %v1687 = vld [vmem:[#allocation5 + $0xb88] sm:$0xf]
    %v1688 = vld [vmem:[#allocation5 + $0xb8c] sm:$0xf]
    %v1689 = vld [vmem:[#allocation5 + $0xb90] sm:$0xf]
    %v1690 = vld [vmem:[#allocation5 + $0xb94] sm:$0xf]
    %v1691 = vld [vmem:[#allocation5 + $0xb98] sm:$0xf]
    %v1692 = vld [vmem:[#allocation5 + $0xb9c] sm:$0xf]
    %v1693 = vld [vmem:[#allocation5 + $0xba0] sm:$0xf]
    %v1694 = vld [vmem:[#allocation5 + $0xba4] sm:$0xf]
    %v1695 = vld [vmem:[#allocation5 + $0xba8] sm:$0xf]
    %v1696 = vld [vmem:[#allocation5 + $0xbac] sm:$0xf]
    %v1697 = vld [vmem:[#allocation5 + $0xbb0] sm:$0xf]
    %v1698 = vld [vmem:[#allocation5 + $0xbb4] sm:$0xf]
    %v1699 = vld [vmem:[#allocation5 + $0xbb8] sm:$0xf]
    %v1700 = vld [vmem:[#allocation5 + $0xbbc] sm:$0xf]
    %v1701 = vld [vmem:[#allocation5 + $0xbc0] sm:$0xf]
    %v1702 = vld [vmem:[#allocation5 + $0xbc4] sm:$0xf]
    %v1703 = vld [vmem:[#allocation5 + $0xbc8] sm:$0xf]
    %v1704 = vld [vmem:[#allocation5 + $0xbcc] sm:$0xf]
    %v1705 = vld [vmem:[#allocation5 + $0xbd0] sm:$0xf]
    %v1706 = vld [vmem:[#allocation5 + $0xbd4] sm:$0xf]
    %v1707 = vld [vmem:[#allocation5 + $0xbd8] sm:$0xf]
    %v1708 = vld [vmem:[#allocation5 + $0xbdc] sm:$0xf]
    %v1709 = vld [vmem:[#allocation5 + $0xbe0] sm:$0xf]
    %v1710 = vld [vmem:[#allocation5 + $0xbe4] sm:$0xf]
    %v1711 = vld [vmem:[#allocation5 + $0xbe8] sm:$0xf]
    %v1712 = vld [vmem:[#allocation5 + $0xbec] sm:$0xf]
    %v1713 = vld [vmem:[#allocation5 + $0xbf0] sm:$0xf]
    %v1714 = vld [vmem:[#allocation5 + $0xbf4] sm:$0xf]
    %v1715 = vld [vmem:[#allocation5 + $0xbf8] sm:$0xf]
    %v1716 = vld [vmem:[#allocation5 + $0xbfc] sm:$0xf]
    %v1717 = vld [vmem:[#allocation5 + $0xc00] sm:$0xf]
    %v1718 = vld [vmem:[#allocation5 + $0xc04] sm:$0xf]
    %v1719 = vld [vmem:[#allocation5 + $0xc08] sm:$0xf]
    %v1720 = vld [vmem:[#allocation5 + $0xc0c] sm:$0xf]
    %v1721 = vld [vmem:[#allocation5 + $0xc10] sm:$0xf]
    %v1722 = vld [vmem:[#allocation5 + $0xc14] sm:$0xf]
    %v1723 = vld [vmem:[#allocation5 + $0xc18] sm:$0xf]
    %v1724 = vld [vmem:[#allocation5 + $0xc1c] sm:$0xf]
    %v1725 = vld [vmem:[#allocation5 + $0xc20] sm:$0xf]
    %v1726 = vld [vmem:[#allocation5 + $0xc24] sm:$0xf]
    %v1727 = vld [vmem:[#allocation5 + $0xc28] sm:$0xf]
    %v1728 = vld [vmem:[#allocation5 + $0xc2c] sm:$0xf]
    %v1729 = vld [vmem:[#allocation5 + $0xc30] sm:$0xf]
    %v1730 = vld [vmem:[#allocation5 + $0xc34] sm:$0xf]
    %v1731 = vld [vmem:[#allocation5 + $0xc38] sm:$0xf]
    %v1732 = vld [vmem:[#allocation5 + $0xc3c] sm:$0xf]
    %v1733 = vld [vmem:[#allocation5 + $0xc40] sm:$0xf]
    %v1734 = vld [vmem:[#allocation5 + $0xc44] sm:$0xf]
    %v1735 = vld [vmem:[#allocation5 + $0xc48] sm:$0xf]
    %v1736 = vld [vmem:[#allocation5 + $0xc4c] sm:$0xf]
    %v1737 = vld [vmem:[#allocation5 + $0xc50] sm:$0xf]
    %v1738 = vld [vmem:[#allocation5 + $0xc54] sm:$0xf]
    %v1739 = vld [vmem:[#allocation5 + $0xc58] sm:$0xf]
    %v1740 = vld [vmem:[#allocation5 + $0xc5c] sm:$0xf]
    %v1741 = vld [vmem:[#allocation5 + $0xc60] sm:$0xf]
    %v1742 = vld [vmem:[#allocation5 + $0xc64] sm:$0xf]
    %v1743 = vld [vmem:[#allocation5 + $0xc68] sm:$0xf]
    %v1744 = vld [vmem:[#allocation5 + $0xc6c] sm:$0xf]
    %v1745 = vld [vmem:[#allocation5 + $0xc70] sm:$0xf]
    %v1746 = vld [vmem:[#allocation5 + $0xc74] sm:$0xf]
    %v1747 = vld [vmem:[#allocation5 + $0xc78] sm:$0xf]
    %v1748 = vld [vmem:[#allocation5 + $0xc7c] sm:$0xf]
    %v1749 = vld [vmem:[#allocation5 + $0xc80] sm:$0xf]
    %v1750 = vld [vmem:[#allocation5 + $0xc84] sm:$0xf]
    %v1751 = vld [vmem:[#allocation5 + $0xc88] sm:$0xf]
    %v1752 = vld [vmem:[#allocation5 + $0xc8c] sm:$0xf]
    %v1753 = vld [vmem:[#allocation5 + $0xc90] sm:$0xf]
    %v1754 = vld [vmem:[#allocation5 + $0xc94] sm:$0xf]
    %v1755 = vld [vmem:[#allocation5 + $0xc98] sm:$0xf]
    %v1756 = vld [vmem:[#allocation5 + $0xc9c] sm:$0xf]
    %v1757 = vld [vmem:[#allocation5 + $0xca0] sm:$0xf]
    %v1758 = vld [vmem:[#allocation5 + $0xca4] sm:$0xf]
    %v1759 = vld [vmem:[#allocation5 + $0xca8] sm:$0xf]
    %v1760 = vld [vmem:[#allocation5 + $0xcac] sm:$0xf]
    %v1761 = vld [vmem:[#allocation5 + $0xcb0] sm:$0xf]
    %v1762 = vld [vmem:[#allocation5 + $0xcb4] sm:$0xf]
    %v1763 = vld [vmem:[#allocation5 + $0xcb8] sm:$0xf]
    %v1764 = vld [vmem:[#allocation5 + $0xcbc] sm:$0xf]
    %v1765 = vld [vmem:[#allocation5 + $0xcc0] sm:$0xf]
    %v1766 = vld [vmem:[#allocation5 + $0xcc4] sm:$0xf]
    %v1767 = vld [vmem:[#allocation5 + $0xcc8] sm:$0xf]
    %v1768 = vld [vmem:[#allocation5 + $0xccc] sm:$0xf]
    %v1769 = vld [vmem:[#allocation5 + $0xcd0] sm:$0xf]
    %v1770 = vld [vmem:[#allocation5 + $0xcd4] sm:$0xf]
    %v1771 = vld [vmem:[#allocation5 + $0xcd8] sm:$0xf]
    %v1772 = vld [vmem:[#allocation5 + $0xcdc] sm:$0xf]
    %v1773 = vld [vmem:[#allocation5 + $0xce0] sm:$0xf]
    %v1774 = vld [vmem:[#allocation5 + $0xce4] sm:$0xf]
    %v1775 = vld [vmem:[#allocation5 + $0xce8] sm:$0xf]
    %v1776 = vld [vmem:[#allocation5 + $0xcec] sm:$0xf]
    %v1777 = vld [vmem:[#allocation5 + $0xcf0] sm:$0xf]
    %v1778 = vld [vmem:[#allocation5 + $0xcf4] sm:$0xf]
    %v1779 = vld [vmem:[#allocation5 + $0xcf8] sm:$0xf]
    %v1780 = vld [vmem:[#allocation5 + $0xcfc] sm:$0xf]
    %v1781 = vld [vmem:[#allocation5 + $0xd00] sm:$0xf]
    %v1782 = vld [vmem:[#allocation5 + $0xd04] sm:$0xf]
    %v1783 = vld [vmem:[#allocation5 + $0xd08] sm:$0xf]
    %v1784 = vld [vmem:[#allocation5 + $0xd0c] sm:$0xf]
    %v1785 = vld [vmem:[#allocation5 + $0xd10] sm:$0xf]
    %v1786 = vld [vmem:[#allocation5 + $0xd14] sm:$0xf]
    %v1787 = vld [vmem:[#allocation5 + $0xd18] sm:$0xf]
    %v1788 = vld [vmem:[#allocation5 + $0xd1c] sm:$0xf]
    %v1789 = vld [vmem:[#allocation5 + $0xd20] sm:$0xf]
    %v1790 = vld [vmem:[#allocation5 + $0xd24] sm:$0xf]
    %v1791 = vld [vmem:[#allocation5 + $0xd28] sm:$0xf]
    %v1792 = vld [vmem:[#allocation5 + $0xd2c] sm:$0xf]
    %v1793 = vld [vmem:[#allocation5 + $0xd30] sm:$0xf]
    %v1794 = vld [vmem:[#allocation5 + $0xd34] sm:$0xf]
    %v1795 = vld [vmem:[#allocation5 + $0xd38] sm:$0xf]
    %v1796 = vld [vmem:[#allocation5 + $0xd3c] sm:$0xf]
    %v1797 = vld [vmem:[#allocation5 + $0xd40] sm:$0xf]
    %v1798 = vld [vmem:[#allocation5 + $0xd44] sm:$0xf]
    %v1799 = vld [vmem:[#allocation5 + $0xd48] sm:$0xf]
    %v1800 = vld [vmem:[#allocation5 + $0xd4c] sm:$0xf]
    %v1801 = vld [vmem:[#allocation5 + $0xd50] sm:$0xf]
    %v1802 = vld [vmem:[#allocation5 + $0xd54] sm:$0xf]
    %v1803 = vld [vmem:[#allocation5 + $0xd58] sm:$0xf]
    %v1804 = vld [vmem:[#allocation5 + $0xd5c] sm:$0xf]
    %v1805 = vld [vmem:[#allocation5 + $0xd60] sm:$0xf]
    %v1806 = vld [vmem:[#allocation5 + $0xd64] sm:$0xf]
    %v1807 = vld [vmem:[#allocation5 + $0xd68] sm:$0xf]
    %v1808 = vld [vmem:[#allocation5 + $0xd6c] sm:$0xf]
    %v1809 = vld [vmem:[#allocation5 + $0xd70] sm:$0xf]
    %v1810 = vld [vmem:[#allocation5 + $0xd74] sm:$0xf]
    %v1811 = vld [vmem:[#allocation5 + $0xd78] sm:$0xf]
    %v1812 = vld [vmem:[#allocation5 + $0xd7c] sm:$0xf]
    %v1813 = vld [vmem:[#allocation5 + $0xd80] sm:$0xf]
    %v1814 = vld [vmem:[#allocation5 + $0xd84] sm:$0xf]
    %v1815 = vld [vmem:[#allocation5 + $0xd88] sm:$0xf]
    %v1816 = vld [vmem:[#allocation5 + $0xd8c] sm:$0xf]
    %v1817 = vld [vmem:[#allocation5 + $0xd90] sm:$0xf]
    %v1818 = vld [vmem:[#allocation5 + $0xd94] sm:$0xf]
    %v1819 = vld [vmem:[#allocation5 + $0xd98] sm:$0xf]
    %v1820 = vld [vmem:[#allocation5 + $0xd9c] sm:$0xf]
    %v1821 = vld [vmem:[#allocation5 + $0xda0] sm:$0xf]
    %v1822 = vld [vmem:[#allocation5 + $0xda4] sm:$0xf]
    %v1823 = vld [vmem:[#allocation5 + $0xda8] sm:$0xf]
    %v1824 = vld [vmem:[#allocation5 + $0xdac] sm:$0xf]
    %v1825 = vld [vmem:[#allocation5 + $0xdb0] sm:$0xf]
    %v1826 = vld [vmem:[#allocation5 + $0xdb4] sm:$0xf]
    %v1827 = vld [vmem:[#allocation5 + $0xdb8] sm:$0xf]
    %v1828 = vld [vmem:[#allocation5 + $0xdbc] sm:$0xf]
    %v1829 = vld [vmem:[#allocation5 + $0xdc0] sm:$0xf]
    %v1830 = vld [vmem:[#allocation5 + $0xdc4] sm:$0xf]
    %v1831 = vld [vmem:[#allocation5 + $0xdc8] sm:$0xf]
    %v1832 = vld [vmem:[#allocation5 + $0xdcc] sm:$0xf]
    %v1833 = vld [vmem:[#allocation5 + $0xdd0] sm:$0xf]
    %v1834 = vld [vmem:[#allocation5 + $0xdd4] sm:$0xf]
    %v1835 = vld [vmem:[#allocation5 + $0xdd8] sm:$0xf]
    %v1836 = vld [vmem:[#allocation5 + $0xddc] sm:$0xf]
    %v1837 = vld [vmem:[#allocation5 + $0xde0] sm:$0xf]
    %v1838 = vld [vmem:[#allocation5 + $0xde4] sm:$0xf]
    %v1839 = vld [vmem:[#allocation5 + $0xde8] sm:$0xf]
    %v1840 = vld [vmem:[#allocation5 + $0xdec] sm:$0xf]
    %v1841 = vld [vmem:[#allocation5 + $0xdf0] sm:$0xf]
    %v1842 = vld [vmem:[#allocation5 + $0xdf4] sm:$0xf]
    %v1843 = vld [vmem:[#allocation5 + $0xdf8] sm:$0xf]
    %v1844 = vld [vmem:[#allocation5 + $0xdfc] sm:$0xf]
    %v1845 = vld [vmem:[#allocation5 + $0xe00] sm:$0xf]
    %v1846 = vld [vmem:[#allocation5 + $0xe04] sm:$0xf]
    %v1847 = vld [vmem:[#allocation5 + $0xe08] sm:$0xf]
    %v1848 = vld [vmem:[#allocation5 + $0xe0c] sm:$0xf]
    %v1849 = vld [vmem:[#allocation5 + $0xe10] sm:$0xf]
    %v1850 = vld [vmem:[#allocation5 + $0xe14] sm:$0xf]
    %v1851 = vld [vmem:[#allocation5 + $0xe18] sm:$0xf]
    %v1852 = vld [vmem:[#allocation5 + $0xe1c] sm:$0xf]
    %v1853 = vld [vmem:[#allocation5 + $0xe20] sm:$0xf]
    %v1854 = vld [vmem:[#allocation5 + $0xe24] sm:$0xf]
    %v1855 = vld [vmem:[#allocation5 + $0xe28] sm:$0xf]
    %v1856 = vld [vmem:[#allocation5 + $0xe2c] sm:$0xf]
    %v1857 = vld [vmem:[#allocation5 + $0xe30] sm:$0xf]
    %v1858 = vld [vmem:[#allocation5 + $0xe34] sm:$0xf]
    %v1859 = vld [vmem:[#allocation5 + $0xe38] sm:$0xf]
    %v1860 = vld [vmem:[#allocation5 + $0xe3c] sm:$0xf]
    %v1861 = vld [vmem:[#allocation5 + $0xe40] sm:$0xf]
    %v1862 = vld [vmem:[#allocation5 + $0xe44] sm:$0xf]
    %v1863 = vld [vmem:[#allocation5 + $0xe48] sm:$0xf]
    %v1864 = vld [vmem:[#allocation5 + $0xe4c] sm:$0xf]
    %v1865 = vld [vmem:[#allocation5 + $0xe50] sm:$0xf]
    %v1866 = vld [vmem:[#allocation5 + $0xe54] sm:$0xf]
    %v1867 = vld [vmem:[#allocation5 + $0xe58] sm:$0xf]
    %v1868 = vld [vmem:[#allocation5 + $0xe5c] sm:$0xf]
    %v1869 = vld [vmem:[#allocation5 + $0xe60] sm:$0xf]
    %v1870 = vld [vmem:[#allocation5 + $0xe64] sm:$0xf]
    %v1871 = vld [vmem:[#allocation5 + $0xe68] sm:$0xf]
    %v1872 = vld [vmem:[#allocation5 + $0xe6c] sm:$0xf]
    %v1873 = vld [vmem:[#allocation5 + $0xe70] sm:$0xf]
    %v1874 = vld [vmem:[#allocation5 + $0xe74] sm:$0xf]
    %v1875 = vld [vmem:[#allocation5 + $0xe78] sm:$0xf]
    %v1876 = vld [vmem:[#allocation5 + $0xe7c] sm:$0xf]
    %v1877 = vld [vmem:[#allocation5 + $0xe80] sm:$0xf]
    %v1878 = vld [vmem:[#allocation5 + $0xe84] sm:$0xf]
    %v1879 = vld [vmem:[#allocation5 + $0xe88] sm:$0xf]
    %v1880 = vld [vmem:[#allocation5 + $0xe8c] sm:$0xf]
    %v1881 = vld [vmem:[#allocation5 + $0xe90] sm:$0xf]
    %v1882 = vld [vmem:[#allocation5 + $0xe94] sm:$0xf]
    %v1883 = vld [vmem:[#allocation5 + $0xe98] sm:$0xf]
    %v1884 = vld [vmem:[#allocation5 + $0xe9c] sm:$0xf]
    %v1885 = vld [vmem:[#allocation5 + $0xea0] sm:$0xf]
    %v1886 = vld [vmem:[#allocation5 + $0xea4] sm:$0xf]
    %v1887 = vld [vmem:[#allocation5 + $0xea8] sm:$0xf]
    %v1888 = vld [vmem:[#allocation5 + $0xeac] sm:$0xf]
    %v1889 = vld [vmem:[#allocation5 + $0xeb0] sm:$0xf]
    %v1890 = vld [vmem:[#allocation5 + $0xeb4] sm:$0xf]
    %v1891 = vld [vmem:[#allocation5 + $0xeb8] sm:$0xf]
    %v1892 = vld [vmem:[#allocation5 + $0xebc] sm:$0xf]
    %v1893 = vld [vmem:[#allocation5 + $0xec0] sm:$0xf]
    %v1894 = vld [vmem:[#allocation5 + $0xec4] sm:$0xf]
    %v1895 = vld [vmem:[#allocation5 + $0xec8] sm:$0xf]
    %v1896 = vld [vmem:[#allocation5 + $0xecc] sm:$0xf]
    %v1897 = vld [vmem:[#allocation5 + $0xed0] sm:$0xf]
    %v1898 = vld [vmem:[#allocation5 + $0xed4] sm:$0xf]
    %v1899 = vld [vmem:[#allocation5 + $0xed8] sm:$0xf]
    %v1900 = vld [vmem:[#allocation5 + $0xedc] sm:$0xf]
    %v1901 = vld [vmem:[#allocation5 + $0xee0] sm:$0xf]
    %v1902 = vld [vmem:[#allocation5 + $0xee4] sm:$0xf]
    %v1903 = vld [vmem:[#allocation5 + $0xee8] sm:$0xf]
    %v1904 = vld [vmem:[#allocation5 + $0xeec] sm:$0xf]
    %v1905 = vld [vmem:[#allocation5 + $0xef0] sm:$0xf]
    %v1906 = vld [vmem:[#allocation5 + $0xef4] sm:$0xf]
    %v1907 = vld [vmem:[#allocation5 + $0xef8] sm:$0xf]
    %v1908 = vld [vmem:[#allocation5 + $0xefc] sm:$0xf]
    %v1909 = vld [vmem:[#allocation5 + $0xf00] sm:$0xf]
    %v1910 = vld [vmem:[#allocation5 + $0xf04] sm:$0xf]
    %v1911 = vld [vmem:[#allocation5 + $0xf08] sm:$0xf]
    %v1912 = vld [vmem:[#allocation5 + $0xf0c] sm:$0xf]
    %v1913 = vld [vmem:[#allocation5 + $0xf10] sm:$0xf]
    %v1914 = vld [vmem:[#allocation5 + $0xf14] sm:$0xf]
    %v1915 = vld [vmem:[#allocation5 + $0xf18] sm:$0xf]
    %v1916 = vld [vmem:[#allocation5 + $0xf1c] sm:$0xf]
    %v1917 = vld [vmem:[#allocation5 + $0xf20] sm:$0xf]
    %v1918 = vld [vmem:[#allocation5 + $0xf24] sm:$0xf]
    %v1919 = vld [vmem:[#allocation5 + $0xf28] sm:$0xf]
    %v1920 = vld [vmem:[#allocation5 + $0xf2c] sm:$0xf]
    %v1921 = vld [vmem:[#allocation5 + $0xf30] sm:$0xf]
    %v1922 = vld [vmem:[#allocation5 + $0xf34] sm:$0xf]
    %v1923 = vld [vmem:[#allocation5 + $0xf38] sm:$0xf]
    %v1924 = vld [vmem:[#allocation5 + $0xf3c] sm:$0xf]
    %v1925 = vld [vmem:[#allocation5 + $0xf40] sm:$0xf]
    %v1926 = vld [vmem:[#allocation5 + $0xf44] sm:$0xf]
    %v1927 = vld [vmem:[#allocation5 + $0xf48] sm:$0xf]
    %v1928 = vld [vmem:[#allocation5 + $0xf4c] sm:$0xf]
    %v1929 = vld [vmem:[#allocation5 + $0xf50] sm:$0xf]
    %v1930 = vld [vmem:[#allocation5 + $0xf54] sm:$0xf]
    %v1931 = vld [vmem:[#allocation5 + $0xf58] sm:$0xf]
    %v1932 = vld [vmem:[#allocation5 + $0xf5c] sm:$0xf]
    %v1933 = vld [vmem:[#allocation5 + $0xf60] sm:$0xf]
    %v1934 = vld [vmem:[#allocation5 + $0xf64] sm:$0xf]
    %v1935 = vld [vmem:[#allocation5 + $0xf68] sm:$0xf]
    %v1936 = vld [vmem:[#allocation5 + $0xf6c] sm:$0xf]
    %v1937 = vld [vmem:[#allocation5 + $0xf70] sm:$0xf]
    %v1938 = vld [vmem:[#allocation5 + $0xf74] sm:$0xf]
    %v1939 = vld [vmem:[#allocation5 + $0xf78] sm:$0xf]
    %v1940 = vld [vmem:[#allocation5 + $0xf7c] sm:$0xf]
    %v1941 = vld [vmem:[#allocation5 + $0xf80] sm:$0xf]
    %v1942 = vld [vmem:[#allocation5 + $0xf84] sm:$0xf]
    %v1943 = vld [vmem:[#allocation5 + $0xf88] sm:$0xf]
    %v1944 = vld [vmem:[#allocation5 + $0xf8c] sm:$0xf]
    %v1945 = vld [vmem:[#allocation5 + $0xf90] sm:$0xf]
    %v1946 = vld [vmem:[#allocation5 + $0xf94] sm:$0xf]
    %v1947 = vld [vmem:[#allocation5 + $0xf98] sm:$0xf]
    %v1948 = vld [vmem:[#allocation5 + $0xf9c] sm:$0xf]
    %v1949 = vld [vmem:[#allocation5 + $0xfa0] sm:$0xf]
    %v1950 = vld [vmem:[#allocation5 + $0xfa4] sm:$0xf]
    %v1951 = vld [vmem:[#allocation5 + $0xfa8] sm:$0xf]
    %v1952 = vld [vmem:[#allocation5 + $0xfac] sm:$0xf]
    %v1953 = vld [vmem:[#allocation5 + $0xfb0] sm:$0xf]
    %v1954 = vld [vmem:[#allocation5 + $0xfb4] sm:$0xf]
    %v1955 = vld [vmem:[#allocation5 + $0xfb8] sm:$0xf]
    %v1956 = vld [vmem:[#allocation5 + $0xfbc] sm:$0xf]
    %v1957 = vld [vmem:[#allocation5 + $0xfc0] sm:$0xf]
    %v1958 = vld [vmem:[#allocation5 + $0xfc4] sm:$0xf]
    %v1959 = vld [vmem:[#allocation5 + $0xfc8] sm:$0xf]
    %v1960 = vld [vmem:[#allocation5 + $0xfcc] sm:$0xf]
    %v1961 = vld [vmem:[#allocation5 + $0xfd0] sm:$0xf]
    %v1962 = vld [vmem:[#allocation5 + $0xfd4] sm:$0xf]
    %v1963 = vld [vmem:[#allocation5 + $0xfd8] sm:$0xf]
    %v1964 = vld [vmem:[#allocation5 + $0xfdc] sm:$0xf]
    %v1965 = vld [vmem:[#allocation5 + $0xfe0] sm:$0xf]
    %v1966 = vld [vmem:[#allocation5 + $0xfe4] sm:$0xf]
    %v1967 = vld [vmem:[#allocation5 + $0xfe8] sm:$0xf]
    %v1968 = vld [vmem:[#allocation5 + $0xfec] sm:$0xf]
    %v1969 = vld [vmem:[#allocation5 + $0xff0] sm:$0xf]
    %v1970 = vld [vmem:[#allocation5 + $0xff4] sm:$0xf]
    %v1971 = vld [vmem:[#allocation5 + $0xff8] sm:$0xf]
    %v1972 = vld [vmem:[#allocation5 + $0xffc] sm:$0xf]
    %v1973 = vld [vmem:[#allocation5 + $0x1000] sm:$0xf]
    %v1974 = vld [vmem:[#allocation5 + $0x1004] sm:$0xf]
    %v1975 = vld [vmem:[#allocation5 + $0x1008] sm:$0xf]
    %v1976 = vld [vmem:[#allocation5 + $0x100c] sm:$0xf]
    %v1977 = vld [vmem:[#allocation5 + $0x1010] sm:$0xf]
    %v1978 = vld [vmem:[#allocation5 + $0x1014] sm:$0xf]
    %v1979 = vld [vmem:[#allocation5 + $0x1018] sm:$0xf]
    %v1980 = vld [vmem:[#allocation5 + $0x101c] sm:$0xf]
    %v1981 = vld [vmem:[#allocation5 + $0x1020] sm:$0xf]
    %v1982 = vld [vmem:[#allocation5 + $0x1024] sm:$0xf]
    %v1983 = vld [vmem:[#allocation5 + $0x1028] sm:$0xf]
    %v1984 = vld [vmem:[#allocation5 + $0x102c] sm:$0xf]
    %v1985 = vld [vmem:[#allocation5 + $0x1030] sm:$0xf]
    %v1986 = vld [vmem:[#allocation5 + $0x1034] sm:$0xf]
    %v1987 = vld [vmem:[#allocation5 + $0x1038] sm:$0xf]
    %v1988 = vld [vmem:[#allocation5 + $0x103c] sm:$0xf]
    %v1989 = vld [vmem:[#allocation5 + $0x1040] sm:$0xf]
    %v1990 = vld [vmem:[#allocation5 + $0x1044] sm:$0xf]
    %v1991 = vld [vmem:[#allocation5 + $0x1048] sm:$0xf]
    %v1992 = vld [vmem:[#allocation5 + $0x104c] sm:$0xf]
    %v1993 = vld [vmem:[#allocation5 + $0x1050] sm:$0xf]
    %v1994 = vld [vmem:[#allocation5 + $0x1054] sm:$0xf]
    %v1995 = vld [vmem:[#allocation5 + $0x1058] sm:$0xf]
    %v1996 = vld [vmem:[#allocation5 + $0x105c] sm:$0xf]
    %v1997 = vld [vmem:[#allocation5 + $0x1060] sm:$0xf]
    %v1998 = vld [vmem:[#allocation5 + $0x1064] sm:$0xf]
    %v1999 = vld [vmem:[#allocation5 + $0x1068] sm:$0xf]
    %v2000 = vld [vmem:[#allocation5 + $0x106c] sm:$0xf]
    %v2001 = vld [vmem:[#allocation5 + $0x1070] sm:$0xf]
    %v2002 = vld [vmem:[#allocation5 + $0x1074] sm:$0xf]
    %v2003 = vld [vmem:[#allocation5 + $0x1078] sm:$0xf]
    %v2004 = vld [vmem:[#allocation5 + $0x107c] sm:$0xf]
    %v2005 = vld [vmem:[#allocation5 + $0x1080] sm:$0xf]
    %v2006 = vld [vmem:[#allocation5 + $0x1084] sm:$0xf]
    %v2007 = vld [vmem:[#allocation5 + $0x1088] sm:$0xf]
    %v2008 = vld [vmem:[#allocation5 + $0x108c] sm:$0xf]
    %v2009 = vld [vmem:[#allocation5 + $0x1090] sm:$0xf]
    %v2010 = vld [vmem:[#allocation5 + $0x1094] sm:$0xf]
    %v2011 = vld [vmem:[#allocation5 + $0x1098] sm:$0xf]
    %v2012 = vld [vmem:[#allocation5 + $0x109c] sm:$0xf]
    %v2013 = vld [vmem:[#allocation5 + $0x10a0] sm:$0xf]
    %v2014 = vld [vmem:[#allocation5 + $0x10a4] sm:$0xf]
    %v2015 = vld [vmem:[#allocation5 + $0x10a8] sm:$0xf]
    %v2016 = vld [vmem:[#allocation5 + $0x10ac] sm:$0xf]
    %v2017 = vld [vmem:[#allocation5 + $0x10b0] sm:$0xf]
    %v2018 = vld [vmem:[#allocation5 + $0x10b4] sm:$0xf]
    %v2019 = vld [vmem:[#allocation5 + $0x10b8] sm:$0xf]
    %v2020 = vld [vmem:[#allocation5 + $0x10bc] sm:$0xf]
    %v2021 = vld [vmem:[#allocation5 + $0x10c0] sm:$0xf]
    %v2022 = vld [vmem:[#allocation5 + $0x10c4] sm:$0xf]
    %v2023 = vld [vmem:[#allocation5 + $0x10c8] sm:$0xf]
    %v2024 = vld [vmem:[#allocation5 + $0x10cc] sm:$0xf]
    %v2025 = vld [vmem:[#allocation5 + $0x10d0] sm:$0xf]
    %v2026 = vld [vmem:[#allocation5 + $0x10d4] sm:$0xf]
    %v2027 = vld [vmem:[#allocation5 + $0x10d8] sm:$0xf]
    %v2028 = vld [vmem:[#allocation5 + $0x10dc] sm:$0xf]
    %v2029 = vld [vmem:[#allocation5 + $0x10e0] sm:$0xf]
    %v2030 = vld [vmem:[#allocation5 + $0x10e4] sm:$0xf]
    %v2031 = vld [vmem:[#allocation5 + $0x10e8] sm:$0xf]
    %v2032 = vld [vmem:[#allocation5 + $0x10ec] sm:$0xf]
    %v2033 = vld [vmem:[#allocation5 + $0x10f0] sm:$0xf]
    %v2034 = vld [vmem:[#allocation5 + $0x10f4] sm:$0xf]
    %v2035 = vld [vmem:[#allocation5 + $0x10f8] sm:$0xf]
    %v2036 = vld [vmem:[#allocation5 + $0x10fc] sm:$0xf]
    %v2037 = vld [vmem:[#allocation5 + $0x1100] sm:$0xf]
    %v2038 = vld [vmem:[#allocation5 + $0x1104] sm:$0xf]
    %v2039 = vld [vmem:[#allocation5 + $0x1108] sm:$0xf]
    %v2040 = vld [vmem:[#allocation5 + $0x110c] sm:$0xf]
    %v2041 = vld [vmem:[#allocation5 + $0x1110] sm:$0xf]
    %v2042 = vld [vmem:[#allocation5 + $0x1114] sm:$0xf]
    %v2043 = vld [vmem:[#allocation5 + $0x1118] sm:$0xf]
    %v2044 = vld [vmem:[#allocation5 + $0x111c] sm:$0xf]
    %v2045 = vld [vmem:[#allocation5 + $0x1120] sm:$0xf]
    %v2046 = vld [vmem:[#allocation5 + $0x1124] sm:$0xf]
    %v2047 = vld [vmem:[#allocation5 + $0x1128] sm:$0xf]
    %v2048 = vld [vmem:[#allocation5 + $0x112c] sm:$0xf]
    %v2049 = vld [vmem:[#allocation5 + $0x1130] sm:$0xf]
    %v2050 = vld [vmem:[#allocation5 + $0x1134] sm:$0xf]
    %v2051 = vld [vmem:[#allocation5 + $0x1138] sm:$0xf]
    %v2052 = vld [vmem:[#allocation5 + $0x113c] sm:$0xf]
    %v2053 = vld [vmem:[#allocation5 + $0x1140] sm:$0xf]
    %v2054 = vld [vmem:[#allocation5 + $0x1144] sm:$0xf]
    %v2055 = vld [vmem:[#allocation5 + $0x1148] sm:$0xf]
    %v2056 = vld [vmem:[#allocation5 + $0x114c] sm:$0xf]
    %v2057 = vld [vmem:[#allocation5 + $0x1150] sm:$0xf]
    %v2058 = vld [vmem:[#allocation5 + $0x1154] sm:$0xf]
    %v2059 = vld [vmem:[#allocation5 + $0x1158] sm:$0xf]
    %v2060 = vld [vmem:[#allocation5 + $0x115c] sm:$0xf]
    %v2061 = vld [vmem:[#allocation5 + $0x1160] sm:$0xf]
    %v2062 = vld [vmem:[#allocation5 + $0x1164] sm:$0xf]
    %v2063 = vld [vmem:[#allocation5 + $0x1168] sm:$0xf]
    %v2064 = vld [vmem:[#allocation5 + $0x116c] sm:$0xf]
    %v2065 = vld [vmem:[#allocation5 + $0x1170] sm:$0xf]
    %v2066 = vld [vmem:[#allocation5 + $0x1174] sm:$0xf]
    %v2067 = vld [vmem:[#allocation5 + $0x1178] sm:$0xf]
    %v2068 = vld [vmem:[#allocation5 + $0x117c] sm:$0xf]
    %v2069 = vld [vmem:[#allocation5 + $0x1180] sm:$0xf]
    %v2070 = vld [vmem:[#allocation5 + $0x1184] sm:$0xf]
    %v2071 = vld [vmem:[#allocation5 + $0x1188] sm:$0xf]
    %v2072 = vld [vmem:[#allocation5 + $0x118c] sm:$0xf]
    %v2073 = vld [vmem:[#allocation5 + $0x1190] sm:$0xf]
    %v2074 = vld [vmem:[#allocation5 + $0x1194] sm:$0xf]
    %v2075 = vld [vmem:[#allocation5 + $0x1198] sm:$0xf]
    %v2076 = vld [vmem:[#allocation5 + $0x119c] sm:$0xf]
    %v2077 = vld [vmem:[#allocation5 + $0x11a0] sm:$0xf]
    %v2078 = vld [vmem:[#allocation5 + $0x11a4] sm:$0xf]
    %v2079 = vld [vmem:[#allocation5 + $0x11a8] sm:$0xf]
    %v2080 = vld [vmem:[#allocation5 + $0x11ac] sm:$0xf]
    %v2081 = vld [vmem:[#allocation5 + $0x11b0] sm:$0xf]
    %v2082 = vld [vmem:[#allocation5 + $0x11b4] sm:$0xf]
    %v2083 = vld [vmem:[#allocation5 + $0x11b8] sm:$0xf]
    %v2084 = vld [vmem:[#allocation5 + $0x11bc] sm:$0xf]
    %v2085 = vld [vmem:[#allocation5 + $0x11c0] sm:$0xf]
    %v2086 = vld [vmem:[#allocation5 + $0x11c4] sm:$0xf]
    %v2087 = vld [vmem:[#allocation5 + $0x11c8] sm:$0xf]
    %v2088 = vld [vmem:[#allocation5 + $0x11cc] sm:$0xf]
    %v2089 = vld [vmem:[#allocation5 + $0x11d0] sm:$0xf]
    %v2090 = vld [vmem:[#allocation5 + $0x11d4] sm:$0xf]
    %v2091 = vld [vmem:[#allocation5 + $0x11d8] sm:$0xf]
    %v2092 = vld [vmem:[#allocation5 + $0x11dc] sm:$0xf]
    %v2093 = vld [vmem:[#allocation5 + $0x11e0] sm:$0xf]
    %v2094 = vld [vmem:[#allocation5 + $0x11e4] sm:$0xf]
    %v2095 = vld [vmem:[#allocation5 + $0x11e8] sm:$0xf]
    %v2096 = vld [vmem:[#allocation5 + $0x11ec] sm:$0xf]
    %v2097 = vld [vmem:[#allocation5 + $0x11f0] sm:$0xf]
    %v2098 = vld [vmem:[#allocation5 + $0x11f4] sm:$0xf]
    %v2099 = vld [vmem:[#allocation5 + $0x11f8] sm:$0xf]
    %v2100 = vld [vmem:[#allocation5 + $0x11fc] sm:$0xf]
    %v2101 = vld [vmem:[#allocation5 + $0x1200] sm:$0xf]
    %v2102 = vld [vmem:[#allocation5 + $0x1204] sm:$0xf]
    %v2103 = vld [vmem:[#allocation5 + $0x1208] sm:$0xf]
    %v2104 = vld [vmem:[#allocation5 + $0x120c] sm:$0xf]
    %v2105 = vld [vmem:[#allocation5 + $0x1210] sm:$0xf]
    %v2106 = vld [vmem:[#allocation5 + $0x1214] sm:$0xf]
    %v2107 = vld [vmem:[#allocation5 + $0x1218] sm:$0xf]
    %v2108 = vld [vmem:[#allocation5 + $0x121c] sm:$0xf]
    %v2109 = vld [vmem:[#allocation5 + $0x1220] sm:$0xf]
    %v2110 = vld [vmem:[#allocation5 + $0x1224] sm:$0xf]
    %v2111 = vld [vmem:[#allocation5 + $0x1228] sm:$0xf]
    %v2112 = vld [vmem:[#allocation5 + $0x122c] sm:$0xf]
    %v2113 = vld [vmem:[#allocation5 + $0x1230] sm:$0xf]
    %v2114 = vld [vmem:[#allocation5 + $0x1234] sm:$0xf]
    %v2115 = vld [vmem:[#allocation5 + $0x1238] sm:$0xf]
    %v2116 = vld [vmem:[#allocation5 + $0x123c] sm:$0xf]
    %v2117 = vld [vmem:[#allocation5 + $0x1240] sm:$0xf]
    %v2118 = vld [vmem:[#allocation5 + $0x1244] sm:$0xf]
    %v2119 = vld [vmem:[#allocation5 + $0x1248] sm:$0xf]
    %v2120 = vld [vmem:[#allocation5 + $0x124c] sm:$0xf]
    %v2121 = vld [vmem:[#allocation5 + $0x1250] sm:$0xf]
    %v2122 = vld [vmem:[#allocation5 + $0x1254] sm:$0xf]
    %v2123 = vld [vmem:[#allocation5 + $0x1258] sm:$0xf]
    %v2124 = vld [vmem:[#allocation5 + $0x125c] sm:$0xf]
    %v2125 = vld [vmem:[#allocation5 + $0x1260] sm:$0xf]
    %v2126 = vld [vmem:[#allocation5 + $0x1264] sm:$0xf]
    %v2127 = vld [vmem:[#allocation5 + $0x1268] sm:$0xf]
    %v2128 = vld [vmem:[#allocation5 + $0x126c] sm:$0xf]
    %v2129 = vld [vmem:[#allocation5 + $0x1270] sm:$0xf]
    %v2130 = vld [vmem:[#allocation5 + $0x1274] sm:$0xf]
    %v2131 = vld [vmem:[#allocation5 + $0x1278] sm:$0xf]
    %v2132 = vld [vmem:[#allocation5 + $0x127c] sm:$0xf]
    %v2133 = vld [vmem:[#allocation5 + $0x1280] sm:$0xf]
    %v2134 = vld [vmem:[#allocation5 + $0x1284] sm:$0xf]
    %v2135 = vld [vmem:[#allocation5 + $0x1288] sm:$0xf]
    %v2136 = vld [vmem:[#allocation5 + $0x128c] sm:$0xf]
    %v2137 = vld [vmem:[#allocation5 + $0x1290] sm:$0xf]
    %v2138 = vld [vmem:[#allocation5 + $0x1294] sm:$0xf]
    %v2139 = vld [vmem:[#allocation5 + $0x1298] sm:$0xf]
    %v2140 = vld [vmem:[#allocation5 + $0x129c] sm:$0xf]
    %v2141 = vld [vmem:[#allocation5 + $0x12a0] sm:$0xf]
    %v2142 = vld [vmem:[#allocation5 + $0x12a4] sm:$0xf]
    %v2143 = vld [vmem:[#allocation5 + $0x12a8] sm:$0xf]
    %v2144 = vld [vmem:[#allocation5 + $0x12ac] sm:$0xf]
    %v2145 = vld [vmem:[#allocation5 + $0x12b0] sm:$0xf]
    %v2146 = vld [vmem:[#allocation5 + $0x12b4] sm:$0xf]
    %v2147 = vld [vmem:[#allocation5 + $0x12b8] sm:$0xf]
    %v2148 = vld [vmem:[#allocation5 + $0x12bc] sm:$0xf]
    %v2149 = vld [vmem:[#allocation5 + $0x12c0] sm:$0xf]
    %v2150 = vld [vmem:[#allocation5 + $0x12c4] sm:$0xf]
    %v2151 = vld [vmem:[#allocation5 + $0x12c8] sm:$0xf]
    %v2152 = vld [vmem:[#allocation5 + $0x12cc] sm:$0xf]
    %v2153 = vld [vmem:[#allocation5 + $0x12d0] sm:$0xf]
    %v2154 = vld [vmem:[#allocation5 + $0x12d4] sm:$0xf]
    %v2155 = vld [vmem:[#allocation5 + $0x12d8] sm:$0xf]
    %v2156 = vld [vmem:[#allocation5 + $0x12dc] sm:$0xf]
    %v2157 = vld [vmem:[#allocation5 + $0x12e0] sm:$0xf]
    %v2158 = vld [vmem:[#allocation5 + $0x12e4] sm:$0xf]
    %v2159 = vld [vmem:[#allocation5 + $0x12e8] sm:$0xf]
    %v2160 = vld [vmem:[#allocation5 + $0x12ec] sm:$0xf]
    %v2161 = vld [vmem:[#allocation5 + $0x12f0] sm:$0xf]
    %v2162 = vld [vmem:[#allocation5 + $0x12f4] sm:$0xf]
    %v2163 = vld [vmem:[#allocation5 + $0x12f8] sm:$0xf]
    %v2164 = vld [vmem:[#allocation5 + $0x12fc] sm:$0xf]
    %v2165 = vld [vmem:[#allocation5 + $0x1300] sm:$0xf]
    %v2166 = vld [vmem:[#allocation5 + $0x1304] sm:$0xf]
    %v2167 = vld [vmem:[#allocation5 + $0x1308] sm:$0xf]
    %v2168 = vld [vmem:[#allocation5 + $0x130c] sm:$0xf]
    %v2169 = vld [vmem:[#allocation5 + $0x1310] sm:$0xf]
    %v2170 = vld [vmem:[#allocation5 + $0x1314] sm:$0xf]
    %v2171 = vld [vmem:[#allocation5 + $0x1318] sm:$0xf]
    %v2172 = vld [vmem:[#allocation5 + $0x131c] sm:$0xf]
    %v2173 = vld [vmem:[#allocation5 + $0x1320] sm:$0xf]
    %v2174 = vld [vmem:[#allocation5 + $0x1324] sm:$0xf]
    %v2175 = vld [vmem:[#allocation5 + $0x1328] sm:$0xf]
    %v2176 = vld [vmem:[#allocation5 + $0x132c] sm:$0xf]
    %v2177 = vld [vmem:[#allocation5 + $0x1330] sm:$0xf]
    %v2178 = vld [vmem:[#allocation5 + $0x1334] sm:$0xf]
    %v2179 = vld [vmem:[#allocation5 + $0x1338] sm:$0xf]
    %v2180 = vld [vmem:[#allocation5 + $0x133c] sm:$0xf]
    %v2181 = vld [vmem:[#allocation5 + $0x1340] sm:$0xf]
    %v2182 = vld [vmem:[#allocation5 + $0x1344] sm:$0xf]
    %v2183 = vld [vmem:[#allocation5 + $0x1348] sm:$0xf]
    %v2184 = vld [vmem:[#allocation5 + $0x134c] sm:$0xf]
    %v2185 = vld [vmem:[#allocation5 + $0x1350] sm:$0xf]
    %v2186 = vld [vmem:[#allocation5 + $0x1354] sm:$0xf]
    %v2187 = vld [vmem:[#allocation5 + $0x1358] sm:$0xf]
    %v2188 = vld [vmem:[#allocation5 + $0x135c] sm:$0xf]
    %v2189 = vld [vmem:[#allocation5 + $0x1360] sm:$0xf]
    %v2190 = vld [vmem:[#allocation5 + $0x1364] sm:$0xf]
    %v2191 = vld [vmem:[#allocation5 + $0x1368] sm:$0xf]
    %v2192 = vld [vmem:[#allocation5 + $0x136c] sm:$0xf]
    %v2193 = vld [vmem:[#allocation5 + $0x1370] sm:$0xf]
    %v2194 = vld [vmem:[#allocation5 + $0x1374] sm:$0xf]
    %v2195 = vld [vmem:[#allocation5 + $0x1378] sm:$0xf]
    %v2196 = vld [vmem:[#allocation5 + $0x137c] sm:$0xf]
    %v2197 = vld [vmem:[#allocation5 + $0x1380] sm:$0xf]
    %v2198 = vld [vmem:[#allocation5 + $0x1384] sm:$0xf]
    %v2199 = vld [vmem:[#allocation5 + $0x1388] sm:$0xf]
    %v2200 = vld [vmem:[#allocation5 + $0x138c] sm:$0xf]
    %v2201 = vld [vmem:[#allocation5 + $0x1390] sm:$0xf]
    %v2202 = vld [vmem:[#allocation5 + $0x1394] sm:$0xf]
    %v2203 = vld [vmem:[#allocation5 + $0x1398] sm:$0xf]
    %v2204 = vld [vmem:[#allocation5 + $0x139c] sm:$0xf]
    %v2205 = vld [vmem:[#allocation5 + $0x13a0] sm:$0xf]
    %v2206 = vld [vmem:[#allocation5 + $0x13a4] sm:$0xf]
    %v2207 = vld [vmem:[#allocation5 + $0x13a8] sm:$0xf]
    %v2208 = vld [vmem:[#allocation5 + $0x13ac] sm:$0xf]
    %v2209 = vld [vmem:[#allocation5 + $0x13b0] sm:$0xf]
    %v2210 = vld [vmem:[#allocation5 + $0x13b4] sm:$0xf]
    %v2211 = vld [vmem:[#allocation5 + $0x13b8] sm:$0xf]
    %v2212 = vld [vmem:[#allocation5 + $0x13bc] sm:$0xf]
    %v2213 = vld [vmem:[#allocation5 + $0x13c0] sm:$0xf]
    %v2214 = vld [vmem:[#allocation5 + $0x13c4] sm:$0xf]
    %v2215 = vld [vmem:[#allocation5 + $0x13c8] sm:$0xf]
    %v2216 = vld [vmem:[#allocation5 + $0x13cc] sm:$0xf]
    %v2217 = vld [vmem:[#allocation5 + $0x13d0] sm:$0xf]
    %v2218 = vld [vmem:[#allocation5 + $0x13d4] sm:$0xf]
    %v2219 = vld [vmem:[#allocation5 + $0x13d8] sm:$0xf]
    %v2220 = vld [vmem:[#allocation5 + $0x13dc] sm:$0xf]
    %v2221 = vld [vmem:[#allocation5 + $0x13e0] sm:$0xf]
    %v2222 = vld [vmem:[#allocation5 + $0x13e4] sm:$0xf]
    %v2223 = vld [vmem:[#allocation5 + $0x13e8] sm:$0xf]
    %v2224 = vld [vmem:[#allocation5 + $0x13ec] sm:$0xf]
    %v2225 = vld [vmem:[#allocation5 + $0x13f0] sm:$0xf]
    %v2226 = vld [vmem:[#allocation5 + $0x13f4] sm:$0xf]
    %v2227 = vld [vmem:[#allocation5 + $0x13f8] sm:$0xf]
    %v2228 = vld [vmem:[#allocation5 + $0x13fc] sm:$0xf]
    %v2229 = vld [vmem:[#allocation5 + $0x1400] sm:$0xf]
    %v2230 = vld [vmem:[#allocation5 + $0x1404] sm:$0xf]
    %v2231 = vld [vmem:[#allocation5 + $0x1408] sm:$0xf]
    %v2232 = vld [vmem:[#allocation5 + $0x140c] sm:$0xf]
    %v2233 = vld [vmem:[#allocation5 + $0x1410] sm:$0xf]
    %v2234 = vld [vmem:[#allocation5 + $0x1414] sm:$0xf]
    %v2235 = vld [vmem:[#allocation5 + $0x1418] sm:$0xf]
    %v2236 = vld [vmem:[#allocation5 + $0x141c] sm:$0xf]
    %v2237 = vld [vmem:[#allocation5 + $0x1420] sm:$0xf]
    %v2238 = vld [vmem:[#allocation5 + $0x1424] sm:$0xf]
    %v2239 = vld [vmem:[#allocation5 + $0x1428] sm:$0xf]
    %v2240 = vld [vmem:[#allocation5 + $0x142c] sm:$0xf]
    %v2241 = vld [vmem:[#allocation5 + $0x1430] sm:$0xf]
    %v2242 = vld [vmem:[#allocation5 + $0x1434] sm:$0xf]
    %v2243 = vld [vmem:[#allocation5 + $0x1438] sm:$0xf]
    %v2244 = vld [vmem:[#allocation5 + $0x143c] sm:$0xf]
    %v2245 = vld [vmem:[#allocation5 + $0x1440] sm:$0xf]
    %v2246 = vld [vmem:[#allocation5 + $0x1444] sm:$0xf]
    %v2247 = vld [vmem:[#allocation5 + $0x1448] sm:$0xf]
    %v2248 = vld [vmem:[#allocation5 + $0x144c] sm:$0xf]
    %v2249 = vld [vmem:[#allocation5 + $0x1450] sm:$0xf]
    %v2250 = vld [vmem:[#allocation5 + $0x1454] sm:$0xf]
    %v2251 = vld [vmem:[#allocation5 + $0x1458] sm:$0xf]
    %v2252 = vld [vmem:[#allocation5 + $0x145c] sm:$0xf]
    %v2253 = vld [vmem:[#allocation5 + $0x1460] sm:$0xf]
    %v2254 = vld [vmem:[#allocation5 + $0x1464] sm:$0xf]
    %v2255 = vld [vmem:[#allocation5 + $0x1468] sm:$0xf]
    %v2256 = vld [vmem:[#allocation5 + $0x146c] sm:$0xf]
    %v2257 = vld [vmem:[#allocation5 + $0x1470] sm:$0xf]
    %v2258 = vld [vmem:[#allocation5 + $0x1474] sm:$0xf]
    %v2259 = vld [vmem:[#allocation5 + $0x1478] sm:$0xf]
    %v2260 = vld [vmem:[#allocation5 + $0x147c] sm:$0xf]
    %v2261 = vld [vmem:[#allocation5 + $0x1480] sm:$0xf]
    %v2262 = vld [vmem:[#allocation5 + $0x1484] sm:$0xf]
    %v2263 = vld [vmem:[#allocation5 + $0x1488] sm:$0xf]
    %v2264 = vld [vmem:[#allocation5 + $0x148c] sm:$0xf]
    %v2265 = vld [vmem:[#allocation5 + $0x1490] sm:$0xf]
    %v2266 = vld [vmem:[#allocation5 + $0x1494] sm:$0xf]
    %v2267 = vld [vmem:[#allocation5 + $0x1498] sm:$0xf]
    %v2268 = vld [vmem:[#allocation5 + $0x149c] sm:$0xf]
    %v2269 = vld [vmem:[#allocation5 + $0x14a0] sm:$0xf]
    %v2270 = vld [vmem:[#allocation5 + $0x14a4] sm:$0xf]
    %v2271 = vld [vmem:[#allocation5 + $0x14a8] sm:$0xf]
    %v2272 = vld [vmem:[#allocation5 + $0x14ac] sm:$0xf]
    %v2273 = vld [vmem:[#allocation5 + $0x14b0] sm:$0xf]
    %v2274 = vld [vmem:[#allocation5 + $0x14b4] sm:$0xf]
    %v2275 = vld [vmem:[#allocation5 + $0x14b8] sm:$0xf]
    %v2276 = vld [vmem:[#allocation5 + $0x14bc] sm:$0xf]
    %v2277 = vld [vmem:[#allocation5 + $0x14c0] sm:$0xf]
    %v2278 = vld [vmem:[#allocation5 + $0x14c4] sm:$0xf]
    %v2279 = vld [vmem:[#allocation5 + $0x14c8] sm:$0xf]
    %v2280 = vld [vmem:[#allocation5 + $0x14cc] sm:$0xf]
    %v2281 = vld [vmem:[#allocation5 + $0x14d0] sm:$0xf]
    %v2282 = vld [vmem:[#allocation5 + $0x14d4] sm:$0xf]
    %v2283 = vld [vmem:[#allocation5 + $0x14d8] sm:$0xf]
    %v2284 = vld [vmem:[#allocation5 + $0x14dc] sm:$0xf]
    %v2285 = vld [vmem:[#allocation5 + $0x14e0] sm:$0xf]
    %v2286 = vld [vmem:[#allocation5 + $0x14e4] sm:$0xf]
    %v2287 = vld [vmem:[#allocation5 + $0x14e8] sm:$0xf]
    %v2288 = vld [vmem:[#allocation5 + $0x14ec] sm:$0xf]
    %v2289 = vld [vmem:[#allocation5 + $0x14f0] sm:$0xf]
    %v2290 = vld [vmem:[#allocation5 + $0x14f4] sm:$0xf]
    %v2291 = vld [vmem:[#allocation5 + $0x14f8] sm:$0xf]
    %v2292 = vld [vmem:[#allocation5 + $0x14fc] sm:$0xf]
    %v2293 = vld [vmem:[#allocation5 + $0x1500] sm:$0xf]
    %v2294 = vld [vmem:[#allocation5 + $0x1504] sm:$0xf]
    %v2295 = vld [vmem:[#allocation5 + $0x1508] sm:$0xf]
    %v2296 = vld [vmem:[#allocation5 + $0x150c] sm:$0xf]
    %v2297 = vld [vmem:[#allocation5 + $0x1510] sm:$0xf]
    %v2298 = vld [vmem:[#allocation5 + $0x1514] sm:$0xf]
    %v2299 = vld [vmem:[#allocation5 + $0x1518] sm:$0xf]
    %v2300 = vld [vmem:[#allocation5 + $0x151c] sm:$0xf]
    %v2301 = vld [vmem:[#allocation5 + $0x1520] sm:$0xf]
    %v2302 = vld [vmem:[#allocation5 + $0x1524] sm:$0xf]
    %v2303 = vld [vmem:[#allocation5 + $0x1528] sm:$0xf]
    %v2304 = vld [vmem:[#allocation5 + $0x152c] sm:$0xf]
    %v2305 = vld [vmem:[#allocation5 + $0x1530] sm:$0xf]
    %v2306 = vld [vmem:[#allocation5 + $0x1534] sm:$0xf]
    %v2307 = vld [vmem:[#allocation5 + $0x1538] sm:$0xf]
    %v2308 = vld [vmem:[#allocation5 + $0x153c] sm:$0xf]
    %v2309 = vld [vmem:[#allocation5 + $0x1540] sm:$0xf]
    %v2310 = vld [vmem:[#allocation5 + $0x1544] sm:$0xf]
    %v2311 = vld [vmem:[#allocation5 + $0x1548] sm:$0xf]
    %v2312 = vld [vmem:[#allocation5 + $0x154c] sm:$0xf]
    %v2313 = vld [vmem:[#allocation5 + $0x1550] sm:$0xf]
    %v2314 = vld [vmem:[#allocation5 + $0x1554] sm:$0xf]
    %v2315 = vld [vmem:[#allocation5 + $0x1558] sm:$0xf]
    %v2316 = vld [vmem:[#allocation5 + $0x155c] sm:$0xf]
    %v2317 = vld [vmem:[#allocation5 + $0x1560] sm:$0xf]
    %v2318 = vld [vmem:[#allocation5 + $0x1564] sm:$0xf]
    %v2319 = vld [vmem:[#allocation5 + $0x1568] sm:$0xf]
    %v2320 = vld [vmem:[#allocation5 + $0x156c] sm:$0xf]
    %v2321 = vld [vmem:[#allocation5 + $0x1570] sm:$0xf]
    %v2322 = vld [vmem:[#allocation5 + $0x1574] sm:$0xf]
    %v2323 = vld [vmem:[#allocation5 + $0x1578] sm:$0xf]
    %v2324 = vld [vmem:[#allocation5 + $0x157c] sm:$0xf]
    %v2325 = vld [vmem:[#allocation5 + $0x1580] sm:$0xf]
    %v2326 = vld [vmem:[#allocation5 + $0x1584] sm:$0xf]
    %v2327 = vld [vmem:[#allocation5 + $0x1588] sm:$0xf]
    %v2328 = vld [vmem:[#allocation5 + $0x158c] sm:$0xf]
    %v2329 = vld [vmem:[#allocation5 + $0x1590] sm:$0xf]
    %v2330 = vld [vmem:[#allocation5 + $0x1594] sm:$0xf]
    %v2331 = vld [vmem:[#allocation5 + $0x1598] sm:$0xf]
    %v2332 = vld [vmem:[#allocation5 + $0x159c] sm:$0xf]
    %v2333 = vld [vmem:[#allocation5 + $0x15a0] sm:$0xf]
    %v2334 = vld [vmem:[#allocation5 + $0x15a4] sm:$0xf]
    %v2335 = vld [vmem:[#allocation5 + $0x15a8] sm:$0xf]
    %v2336 = vld [vmem:[#allocation5 + $0x15ac] sm:$0xf]
    %v2337 = vld [vmem:[#allocation5 + $0x15b0] sm:$0xf]
    %v2338 = vld [vmem:[#allocation5 + $0x15b4] sm:$0xf]
    %v2339 = vld [vmem:[#allocation5 + $0x15b8] sm:$0xf]
    %v2340 = vld [vmem:[#allocation5 + $0x15bc] sm:$0xf]
    %v2341 = vld [vmem:[#allocation5 + $0x15c0] sm:$0xf]
    %v2342 = vld [vmem:[#allocation5 + $0x15c4] sm:$0xf]
    %v2343 = vld [vmem:[#allocation5 + $0x15c8] sm:$0xf]
    %v2344 = vld [vmem:[#allocation5 + $0x15cc] sm:$0xf]
    %v2345 = vld [vmem:[#allocation5 + $0x15d0] sm:$0xf]
    %v2346 = vld [vmem:[#allocation5 + $0x15d4] sm:$0xf]
    %v2347 = vld [vmem:[#allocation5 + $0x15d8] sm:$0xf]
    %v2348 = vld [vmem:[#allocation5 + $0x15dc] sm:$0xf]
    %v2349 = vld [vmem:[#allocation5 + $0x15e0] sm:$0xf]
    %v2350 = vld [vmem:[#allocation5 + $0x15e4] sm:$0xf]
    %v2351 = vld [vmem:[#allocation5 + $0x15e8] sm:$0xf]
    %v2352 = vld [vmem:[#allocation5 + $0x15ec] sm:$0xf]
    %v2353 = vld [vmem:[#allocation5 + $0x15f0] sm:$0xf]
    %v2354 = vld [vmem:[#allocation5 + $0x15f4] sm:$0xf]
    %v2355 = vld [vmem:[#allocation5 + $0x15f8] sm:$0xf]
    %v2356 = vld [vmem:[#allocation5 + $0x15fc] sm:$0xf]
    %v2357 = vld [vmem:[#allocation5 + $0x1600] sm:$0xf]
    %v2358 = vld [vmem:[#allocation5 + $0x1604] sm:$0xf]
    %v2359 = vld [vmem:[#allocation5 + $0x1608] sm:$0xf]
    %v2360 = vld [vmem:[#allocation5 + $0x160c] sm:$0xf]
    %v2361 = vld [vmem:[#allocation5 + $0x1610] sm:$0xf]
    %v2362 = vld [vmem:[#allocation5 + $0x1614] sm:$0xf]
    %v2363 = vld [vmem:[#allocation5 + $0x1618] sm:$0xf]
    %v2364 = vld [vmem:[#allocation5 + $0x161c] sm:$0xf]
    %v2365 = vld [vmem:[#allocation5 + $0x1620] sm:$0xf]
    %v2366 = vld [vmem:[#allocation5 + $0x1624] sm:$0xf]
    %v2367 = vld [vmem:[#allocation5 + $0x1628] sm:$0xf]
    %v2368 = vld [vmem:[#allocation5 + $0x162c] sm:$0xf]
    %v2369 = vld [vmem:[#allocation5 + $0x1630] sm:$0xf]
    %v2370 = vld [vmem:[#allocation5 + $0x1634] sm:$0xf]
    %v2371 = vld [vmem:[#allocation5 + $0x1638] sm:$0xf]
    %v2372 = vld [vmem:[#allocation5 + $0x163c] sm:$0xf]
    %v2373 = vld [vmem:[#allocation5 + $0x1640] sm:$0xf]
    %v2374 = vld [vmem:[#allocation5 + $0x1644] sm:$0xf]
    %v2375 = vld [vmem:[#allocation5 + $0x1648] sm:$0xf]
    %v2376 = vld [vmem:[#allocation5 + $0x164c] sm:$0xf]
    %v2377 = vld [vmem:[#allocation5 + $0x1650] sm:$0xf]
    %v2378 = vld [vmem:[#allocation5 + $0x1654] sm:$0xf]
    %v2379 = vld [vmem:[#allocation5 + $0x1658] sm:$0xf]
    %v2380 = vld [vmem:[#allocation5 + $0x165c] sm:$0xf]
    %v2381 = vld [vmem:[#allocation5 + $0x1660] sm:$0xf]
    %v2382 = vld [vmem:[#allocation5 + $0x1664] sm:$0xf]
    %v2383 = vld [vmem:[#allocation5 + $0x1668] sm:$0xf]
    %v2384 = vld [vmem:[#allocation5 + $0x166c] sm:$0xf]
    %v2385 = vld [vmem:[#allocation5 + $0x1670] sm:$0xf]
    %v2386 = vld [vmem:[#allocation5 + $0x1674] sm:$0xf]
    %v2387 = vld [vmem:[#allocation5 + $0x1678] sm:$0xf]
    %v2388 = vld [vmem:[#allocation5 + $0x167c] sm:$0xf]
    %v2389 = vld [vmem:[#allocation5 + $0x1680] sm:$0xf]
    %v2390 = vld [vmem:[#allocation5 + $0x1684] sm:$0xf]
    %v2391 = vld [vmem:[#allocation5 + $0x1688] sm:$0xf]
    %v2392 = vld [vmem:[#allocation5 + $0x168c] sm:$0xf]
    %v2393 = vld [vmem:[#allocation5 + $0x1690] sm:$0xf]
    %v2394 = vld [vmem:[#allocation5 + $0x1694] sm:$0xf]
    %v2395 = vld [vmem:[#allocation5 + $0x1698] sm:$0xf]
    %v2396 = vld [vmem:[#allocation5 + $0x169c] sm:$0xf]
    %v2397 = vld [vmem:[#allocation5 + $0x16a0] sm:$0xf]
    %v2398 = vld [vmem:[#allocation5 + $0x16a4] sm:$0xf]
    %v2399 = vld [vmem:[#allocation5 + $0x16a8] sm:$0xf]
    %v2400 = vld [vmem:[#allocation5 + $0x16ac] sm:$0xf]
    %v2401 = vld [vmem:[#allocation5 + $0x16b0] sm:$0xf]
    %v2402 = vld [vmem:[#allocation5 + $0x16b4] sm:$0xf]
    %v2403 = vld [vmem:[#allocation5 + $0x16b8] sm:$0xf]
    %v2404 = vld [vmem:[#allocation5 + $0x16bc] sm:$0xf]
    %v2405 = vld [vmem:[#allocation5 + $0x16c0] sm:$0xf]
    %v2406 = vld [vmem:[#allocation5 + $0x16c4] sm:$0xf]
    %v2407 = vld [vmem:[#allocation5 + $0x16c8] sm:$0xf]
    %v2408 = vld [vmem:[#allocation5 + $0x16cc] sm:$0xf]
    %v2409 = vld [vmem:[#allocation5 + $0x16d0] sm:$0xf]
    %v2410 = vld [vmem:[#allocation5 + $0x16d4] sm:$0xf]
    %v2411 = vld [vmem:[#allocation5 + $0x16d8] sm:$0xf]
    %v2412 = vld [vmem:[#allocation5 + $0x16dc] sm:$0xf]
    %v2413 = vld [vmem:[#allocation5 + $0x16e0] sm:$0xf]
    %v2414 = vld [vmem:[#allocation5 + $0x16e4] sm:$0xf]
    %v2415 = vld [vmem:[#allocation5 + $0x16e8] sm:$0xf]
    %v2416 = vld [vmem:[#allocation5 + $0x16ec] sm:$0xf]
    %v2417 = vld [vmem:[#allocation5 + $0x16f0] sm:$0xf]
    %v2418 = vld [vmem:[#allocation5 + $0x16f4] sm:$0xf]
    %v2419 = vld [vmem:[#allocation5 + $0x16f8] sm:$0xf]
    %v2420 = vld [vmem:[#allocation5 + $0x16fc] sm:$0xf]
    %v2421 = vld [vmem:[#allocation5 + $0x1700] sm:$0xf]
    %v2422 = vld [vmem:[#allocation5 + $0x1704] sm:$0xf]
    %v2423 = vld [vmem:[#allocation5 + $0x1708] sm:$0xf]
    %v2424 = vld [vmem:[#allocation5 + $0x170c] sm:$0xf]
    %v2425 = vld [vmem:[#allocation5 + $0x1710] sm:$0xf]
    %v2426 = vld [vmem:[#allocation5 + $0x1714] sm:$0xf]
    %v2427 = vld [vmem:[#allocation5 + $0x1718] sm:$0xf]
    %v2428 = vld [vmem:[#allocation5 + $0x171c] sm:$0xf]
    %v2429 = vld [vmem:[#allocation5 + $0x1720] sm:$0xf]
    %v2430 = vld [vmem:[#allocation5 + $0x1724] sm:$0xf]
    %v2431 = vld [vmem:[#allocation5 + $0x1728] sm:$0xf]
    %v2432 = vld [vmem:[#allocation5 + $0x172c] sm:$0xf]
    %v2433 = vld [vmem:[#allocation5 + $0x1730] sm:$0xf]
    %v2434 = vld [vmem:[#allocation5 + $0x1734] sm:$0xf]
    %v2435 = vld [vmem:[#allocation5 + $0x1738] sm:$0xf]
    %v2436 = vld [vmem:[#allocation5 + $0x173c] sm:$0xf]
    %v2437 = vld [vmem:[#allocation5 + $0x1740] sm:$0xf]
    %v2438 = vld [vmem:[#allocation5 + $0x1744] sm:$0xf]
    %v2439 = vld [vmem:[#allocation5 + $0x1748] sm:$0xf]
    %v2440 = vld [vmem:[#allocation5 + $0x174c] sm:$0xf]
    %v2441 = vld [vmem:[#allocation5 + $0x1750] sm:$0xf]
    %v2442 = vld [vmem:[#allocation5 + $0x1754] sm:$0xf]
    %v2443 = vld [vmem:[#allocation5 + $0x1758] sm:$0xf]
    %v2444 = vld [vmem:[#allocation5 + $0x175c] sm:$0xf]
    %v2445 = vld [vmem:[#allocation5 + $0x1760] sm:$0xf]
    %v2446 = vld [vmem:[#allocation5 + $0x1764] sm:$0xf]
    %v2447 = vld [vmem:[#allocation5 + $0x1768] sm:$0xf]
    %v2448 = vld [vmem:[#allocation5 + $0x176c] sm:$0xf]
    %v2449 = vld [vmem:[#allocation5 + $0x1770] sm:$0xf]
    %v2450 = vld [vmem:[#allocation5 + $0x1774] sm:$0xf]
    %v2451 = vld [vmem:[#allocation5 + $0x1778] sm:$0xf]
    %v2452 = vld [vmem:[#allocation5 + $0x177c] sm:$0xf]
    %v2453 = vld [vmem:[#allocation5 + $0x1780] sm:$0xf]
    %v2454 = vld [vmem:[#allocation5 + $0x1784] sm:$0xf]
    %v2455 = vld [vmem:[#allocation5 + $0x1788] sm:$0xf]
    %v2456 = vld [vmem:[#allocation5 + $0x178c] sm:$0xf]
    %v2457 = vld [vmem:[#allocation5 + $0x1790] sm:$0xf]
    %v2458 = vld [vmem:[#allocation5 + $0x1794] sm:$0xf]
    %v2459 = vld [vmem:[#allocation5 + $0x1798] sm:$0xf]
    %v2460 = vld [vmem:[#allocation5 + $0x179c] sm:$0xf]
    %v2461 = vld [vmem:[#allocation5 + $0x17a0] sm:$0xf]
    %v2462 = vld [vmem:[#allocation5 + $0x17a4] sm:$0xf]
    %v2463 = vld [vmem:[#allocation5 + $0x17a8] sm:$0xf]
    %v2464 = vld [vmem:[#allocation5 + $0x17ac] sm:$0xf]
    %v2465 = vld [vmem:[#allocation5 + $0x17b0] sm:$0xf]
    %v2466 = vld [vmem:[#allocation5 + $0x17b4] sm:$0xf]
    %v2467 = vld [vmem:[#allocation5 + $0x17b8] sm:$0xf]
    %v2468 = vld [vmem:[#allocation5 + $0x17bc] sm:$0xf]
    %v2469 = vld [vmem:[#allocation5 + $0x17c0] sm:$0xf]
    %v2470 = vld [vmem:[#allocation5 + $0x17c4] sm:$0xf]
    %v2471 = vld [vmem:[#allocation5 + $0x17c8] sm:$0xf]
    %v2472 = vld [vmem:[#allocation5 + $0x17cc] sm:$0xf]
    %v2473 = vld [vmem:[#allocation5 + $0x17d0] sm:$0xf]
    %v2474 = vld [vmem:[#allocation5 + $0x17d4] sm:$0xf]
    %v2475 = vld [vmem:[#allocation5 + $0x17d8] sm:$0xf]
    %v2476 = vld [vmem:[#allocation5 + $0x17dc] sm:$0xf]
    %v2477 = vld [vmem:[#allocation5 + $0x17e0] sm:$0xf]
    %v2478 = vld [vmem:[#allocation5 + $0x17e4] sm:$0xf]
    %v2479 = vld [vmem:[#allocation5 + $0x17e8] sm:$0xf]
    %v2480 = vld [vmem:[#allocation5 + $0x17ec] sm:$0xf]
    %v2481 = vld [vmem:[#allocation5 + $0x17f0] sm:$0xf]
    %v2482 = vld [vmem:[#allocation5 + $0x17f4] sm:$0xf]
    %v2483 = vld [vmem:[#allocation5 + $0x17f8] sm:$0xf]
    %v2484 = vld [vmem:[#allocation5 + $0x17fc] sm:$0xf]
    %v2485 = vld [vmem:[#allocation5 + $0x1800] sm:$0xf]
    %v2486 = vld [vmem:[#allocation5 + $0x1804] sm:$0xf]
    %v2487 = vld [vmem:[#allocation5 + $0x1808] sm:$0xf]
    %v2488 = vld [vmem:[#allocation5 + $0x180c] sm:$0xf]
    %v2489 = vld [vmem:[#allocation5 + $0x1810] sm:$0xf]
    %v2490 = vld [vmem:[#allocation5 + $0x1814] sm:$0xf]
    %v2491 = vld [vmem:[#allocation5 + $0x1818] sm:$0xf]
    %v2492 = vld [vmem:[#allocation5 + $0x181c] sm:$0xf]
    %v2493 = vld [vmem:[#allocation5 + $0x1820] sm:$0xf]
    %v2494 = vld [vmem:[#allocation5 + $0x1824] sm:$0xf]
    %v2495 = vld [vmem:[#allocation5 + $0x1828] sm:$0xf]
    %v2496 = vld [vmem:[#allocation5 + $0x182c] sm:$0xf]
    %v2497 = vld [vmem:[#allocation5 + $0x1830] sm:$0xf]
    %v2498 = vld [vmem:[#allocation5 + $0x1834] sm:$0xf]
    %v2499 = vld [vmem:[#allocation5 + $0x1838] sm:$0xf]
    %v2500 = vld [vmem:[#allocation5 + $0x183c] sm:$0xf]
    %v2501 = vld [vmem:[#allocation5 + $0x1840] sm:$0xf]
    %v2502 = vld [vmem:[#allocation5 + $0x1844] sm:$0xf]
    %v2503 = vld [vmem:[#allocation5 + $0x1848] sm:$0xf]
    %v2504 = vld [vmem:[#allocation5 + $0x184c] sm:$0xf]
    %v2505 = vld [vmem:[#allocation5 + $0x1850] sm:$0xf]
    %v2506 = vld [vmem:[#allocation5 + $0x1854] sm:$0xf]
    %v2507 = vld [vmem:[#allocation5 + $0x1858] sm:$0xf]
    %v2508 = vld [vmem:[#allocation5 + $0x185c] sm:$0xf]
    %v2509 = vld [vmem:[#allocation5 + $0x1860] sm:$0xf]
    %v2510 = vld [vmem:[#allocation5 + $0x1864] sm:$0xf]
    %v2511 = vld [vmem:[#allocation5 + $0x1868] sm:$0xf]
    %v2512 = vld [vmem:[#allocation5 + $0x186c] sm:$0xf]
    %v2513 = vld [vmem:[#allocation5 + $0x1870] sm:$0xf]
    %v2514 = vld [vmem:[#allocation5 + $0x1874] sm:$0xf]
    %v2515 = vld [vmem:[#allocation5 + $0x1878] sm:$0xf]
    %v2516 = vld [vmem:[#allocation5 + $0x187c] sm:$0xf]
    %v2517 = vld [vmem:[#allocation5 + $0x1880] sm:$0xf]
    %v2518 = vld [vmem:[#allocation5 + $0x1884] sm:$0xf]
    %v2519 = vld [vmem:[#allocation5 + $0x1888] sm:$0xf]
    %v2520 = vld [vmem:[#allocation5 + $0x188c] sm:$0xf]
    %v2521 = vld [vmem:[#allocation5 + $0x1890] sm:$0xf]
    %v2522 = vld [vmem:[#allocation5 + $0x1894] sm:$0xf]
    %v2523 = vld [vmem:[#allocation5 + $0x1898] sm:$0xf]
    %v2524 = vld [vmem:[#allocation5 + $0x189c] sm:$0xf]
    %v2525 = vld [vmem:[#allocation5 + $0x18a0] sm:$0xf]
    %v2526 = vld [vmem:[#allocation5 + $0x18a4] sm:$0xf]
    %v2527 = vld [vmem:[#allocation5 + $0x18a8] sm:$0xf]
    %v2528 = vld [vmem:[#allocation5 + $0x18ac] sm:$0xf]
    %v2529 = vld [vmem:[#allocation5 + $0x18b0] sm:$0xf]
    %v2530 = vld [vmem:[#allocation5 + $0x18b4] sm:$0xf]
    %v2531 = vld [vmem:[#allocation5 + $0x18b8] sm:$0xf]
    %v2532 = vld [vmem:[#allocation5 + $0x18bc] sm:$0xf]
    %v2533 = vld [vmem:[#allocation5 + $0x18c0] sm:$0xf]
    %v2534 = vld [vmem:[#allocation5 + $0x18c4] sm:$0xf]
    %v2535 = vld [vmem:[#allocation5 + $0x18c8] sm:$0xf]
    %v2536 = vld [vmem:[#allocation5 + $0x18cc] sm:$0xf]
    %v2537 = vld [vmem:[#allocation5 + $0x18d0] sm:$0xf]
    %v2538 = vld [vmem:[#allocation5 + $0x18d4] sm:$0xf]
    %v2539 = vld [vmem:[#allocation5 + $0x18d8] sm:$0xf]
    %v2540 = vld [vmem:[#allocation5 + $0x18dc] sm:$0xf]
    %v2541 = vld [vmem:[#allocation5 + $0x18e0] sm:$0xf]
    %v2542 = vld [vmem:[#allocation5 + $0x18e4] sm:$0xf]
    %v2543 = vld [vmem:[#allocation5 + $0x18e8] sm:$0xf]
    %v2544 = vld [vmem:[#allocation5 + $0x18ec] sm:$0xf]
    %v2545 = vld [vmem:[#allocation5 + $0x18f0] sm:$0xf]
    %v2546 = vld [vmem:[#allocation5 + $0x18f4] sm:$0xf]
    %v2547 = vld [vmem:[#allocation5 + $0x18f8] sm:$0xf]
    %v2548 = vld [vmem:[#allocation5 + $0x18fc] sm:$0xf]
    %v2549 = vld [vmem:[#allocation5 + $0x1900] sm:$0xf]
    %v2550 = vld [vmem:[#allocation5 + $0x1904] sm:$0xf]
    %v2551 = vld [vmem:[#allocation5 + $0x1908] sm:$0xf]
    %v2552 = vld [vmem:[#allocation5 + $0x190c] sm:$0xf]
    %v2553 = vld [vmem:[#allocation5 + $0x1910] sm:$0xf]
    %v2554 = vld [vmem:[#allocation5 + $0x1914] sm:$0xf]
    %v2555 = vld [vmem:[#allocation5 + $0x1918] sm:$0xf]
    %v2556 = vld [vmem:[#allocation5 + $0x191c] sm:$0xf]
    %v2557 = vld [vmem:[#allocation5 + $0x1920] sm:$0xf]
    %v2558 = vld [vmem:[#allocation5 + $0x1924] sm:$0xf]
    %v2559 = vld [vmem:[#allocation5 + $0x1928] sm:$0xf]
    %v2560 = vld [vmem:[#allocation5 + $0x192c] sm:$0xf]
    %v2561 = vld [vmem:[#allocation5 + $0x1930] sm:$0xf]
    %v2562 = vld [vmem:[#allocation5 + $0x1934] sm:$0xf]
    %v2563 = vld [vmem:[#allocation5 + $0x1938] sm:$0xf]
    %v2564 = vld [vmem:[#allocation5 + $0x193c] sm:$0xf]
    %v2565 = vld [vmem:[#allocation5 + $0x1940] sm:$0xf]
    %v2566 = vld [vmem:[#allocation5 + $0x1944] sm:$0xf]
    %v2567 = vld [vmem:[#allocation5 + $0x1948] sm:$0xf]
    %v2568 = vld [vmem:[#allocation5 + $0x194c] sm:$0xf]
    %v2569 = vld [vmem:[#allocation5 + $0x1950] sm:$0xf]
    %v2570 = vld [vmem:[#allocation5 + $0x1954] sm:$0xf]
    %v2571 = vld [vmem:[#allocation5 + $0x1958] sm:$0xf]
    %v2572 = vld [vmem:[#allocation5 + $0x195c] sm:$0xf]
    %v2573 = vld [vmem:[#allocation5 + $0x1960] sm:$0xf]
    %v2574 = vld [vmem:[#allocation5 + $0x1964] sm:$0xf]
    %v2575 = vld [vmem:[#allocation5 + $0x1968] sm:$0xf]
    %v2576 = vld [vmem:[#allocation5 + $0x196c] sm:$0xf]
    %v2577 = vld [vmem:[#allocation5 + $0x1970] sm:$0xf]
    %v2578 = vld [vmem:[#allocation5 + $0x1974] sm:$0xf]
    %v2579 = vld [vmem:[#allocation5 + $0x1978] sm:$0xf]
    %v2580 = vld [vmem:[#allocation5 + $0x197c] sm:$0xf]
    %v2581 = vld [vmem:[#allocation5 + $0x1980] sm:$0xf]
    %v2582 = vld [vmem:[#allocation5 + $0x1984] sm:$0xf]
    %v2583 = vld [vmem:[#allocation5 + $0x1988] sm:$0xf]
    %v2584 = vld [vmem:[#allocation5 + $0x198c] sm:$0xf]
    %v2585 = vld [vmem:[#allocation5 + $0x1990] sm:$0xf]
    %v2586 = vld [vmem:[#allocation5 + $0x1994] sm:$0xf]
    %v2587 = vld [vmem:[#allocation5 + $0x1998] sm:$0xf]
    %v2588 = vld [vmem:[#allocation5 + $0x199c] sm:$0xf]
    %v2589 = vld [vmem:[#allocation5 + $0x19a0] sm:$0xf]
    %v2590 = vld [vmem:[#allocation5 + $0x19a4] sm:$0xf]
    %v2591 = vld [vmem:[#allocation5 + $0x19a8] sm:$0xf]
    %v2592 = vld [vmem:[#allocation5 + $0x19ac] sm:$0xf]
    %v2593 = vld [vmem:[#allocation5 + $0x19b0] sm:$0xf]
    %v2594 = vld [vmem:[#allocation5 + $0x19b4] sm:$0xf]
    %v2595 = vld [vmem:[#allocation5 + $0x19b8] sm:$0xf]
    %v2596 = vld [vmem:[#allocation5 + $0x19bc] sm:$0xf]
    %v2597 = vld [vmem:[#allocation5 + $0x19c0] sm:$0xf]
    %v2598 = vld [vmem:[#allocation5 + $0x19c4] sm:$0xf]
    %v2599 = vld [vmem:[#allocation5 + $0x19c8] sm:$0xf]
    %v2600 = vld [vmem:[#allocation5 + $0x19cc] sm:$0xf]
    %v2601 = vld [vmem:[#allocation5 + $0x19d0] sm:$0xf]
    %v2602 = vld [vmem:[#allocation5 + $0x19d4] sm:$0xf]
    %v2603 = vld [vmem:[#allocation5 + $0x19d8] sm:$0xf]
    %v2604 = vld [vmem:[#allocation5 + $0x19dc] sm:$0xf]
    %v2605 = vld [vmem:[#allocation5 + $0x19e0] sm:$0xf]
    %v2606 = vld [vmem:[#allocation5 + $0x19e4] sm:$0xf]
    %v2607 = vld [vmem:[#allocation5 + $0x19e8] sm:$0xf]
    %v2608 = vld [vmem:[#allocation5 + $0x19ec] sm:$0xf]
    %v2609 = vld [vmem:[#allocation5 + $0x19f0] sm:$0xf]
    %v2610 = vld [vmem:[#allocation5 + $0x19f4] sm:$0xf]
    %v2611 = vld [vmem:[#allocation5 + $0x19f8] sm:$0xf]
    %v2612 = vld [vmem:[#allocation5 + $0x19fc] sm:$0xf]
    %v2613 = vld [vmem:[#allocation5 + $0x1a00] sm:$0xf]
    %v2614 = vld [vmem:[#allocation5 + $0x1a04] sm:$0xf]
    %v2615 = vld [vmem:[#allocation5 + $0x1a08] sm:$0xf]
    %v2616 = vld [vmem:[#allocation5 + $0x1a0c] sm:$0xf]
    %v2617 = vld [vmem:[#allocation5 + $0x1a10] sm:$0xf]
    %v2618 = vld [vmem:[#allocation5 + $0x1a14] sm:$0xf]
    %v2619 = vld [vmem:[#allocation5 + $0x1a18] sm:$0xf]
    %v2620 = vld [vmem:[#allocation5 + $0x1a1c] sm:$0xf]
    %v2621 = vld [vmem:[#allocation5 + $0x1a20] sm:$0xf]
    %v2622 = vld [vmem:[#allocation5 + $0x1a24] sm:$0xf]
    %v2623 = vld [vmem:[#allocation5 + $0x1a28] sm:$0xf]
    %v2624 = vld [vmem:[#allocation5 + $0x1a2c] sm:$0xf]
    %v2625 = vld [vmem:[#allocation5 + $0x1a30] sm:$0xf]
    %v2626 = vld [vmem:[#allocation5 + $0x1a34] sm:$0xf]
    %v2627 = vld [vmem:[#allocation5 + $0x1a38] sm:$0xf]
    %v2628 = vld [vmem:[#allocation5 + $0x1a3c] sm:$0xf]
    %v2629 = vld [vmem:[#allocation5 + $0x1a40] sm:$0xf]
    %v2630 = vld [vmem:[#allocation5 + $0x1a44] sm:$0xf]
    %v2631 = vld [vmem:[#allocation5 + $0x1a48] sm:$0xf]
    %v2632 = vld [vmem:[#allocation5 + $0x1a4c] sm:$0xf]
    %v2633 = vld [vmem:[#allocation5 + $0x1a50] sm:$0xf]
    %v2634 = vld [vmem:[#allocation5 + $0x1a54] sm:$0xf]
    %v2635 = vld [vmem:[#allocation5 + $0x1a58] sm:$0xf]
    %v2636 = vld [vmem:[#allocation5 + $0x1a5c] sm:$0xf]
    %v2637 = vld [vmem:[#allocation5 + $0x1a60] sm:$0xf]
    %v2638 = vld [vmem:[#allocation5 + $0x1a64] sm:$0xf]
    %v2639 = vld [vmem:[#allocation5 + $0x1a68] sm:$0xf]
    %v2640 = vld [vmem:[#allocation5 + $0x1a6c] sm:$0xf]
    %v2641 = vld [vmem:[#allocation5 + $0x1a70] sm:$0xf]
    %v2642 = vld [vmem:[#allocation5 + $0x1a74] sm:$0xf]
    %v2643 = vld [vmem:[#allocation5 + $0x1a78] sm:$0xf]
    %v2644 = vld [vmem:[#allocation5 + $0x1a7c] sm:$0xf]
    %v2645 = vld [vmem:[#allocation5 + $0x1a80] sm:$0xf]
    %v2646 = vld [vmem:[#allocation5 + $0x1a84] sm:$0xf]
    %v2647 = vld [vmem:[#allocation5 + $0x1a88] sm:$0xf]
    %v2648 = vld [vmem:[#allocation5 + $0x1a8c] sm:$0xf]
    %v2649 = vld [vmem:[#allocation5 + $0x1a90] sm:$0xf]
    %v2650 = vld [vmem:[#allocation5 + $0x1a94] sm:$0xf]
    %v2651 = vld [vmem:[#allocation5 + $0x1a98] sm:$0xf]
    %v2652 = vld [vmem:[#allocation5 + $0x1a9c] sm:$0xf]
    %v2653 = vld [vmem:[#allocation5 + $0x1aa0] sm:$0xf]
    %v2654 = vld [vmem:[#allocation5 + $0x1aa4] sm:$0xf]
    %v2655 = vld [vmem:[#allocation5 + $0x1aa8] sm:$0xf]
    %v2656 = vld [vmem:[#allocation5 + $0x1aac] sm:$0xf]
    %v2657 = vld [vmem:[#allocation5 + $0x1ab0] sm:$0xf]
    %v2658 = vld [vmem:[#allocation5 + $0x1ab4] sm:$0xf]
    %v2659 = vld [vmem:[#allocation5 + $0x1ab8] sm:$0xf]
    %v2660 = vld [vmem:[#allocation5 + $0x1abc] sm:$0xf]
    %v2661 = vld [vmem:[#allocation5 + $0x1ac0] sm:$0xf]
    %v2662 = vld [vmem:[#allocation5 + $0x1ac4] sm:$0xf]
    %v2663 = vld [vmem:[#allocation5 + $0x1ac8] sm:$0xf]
    %v2664 = vld [vmem:[#allocation5 + $0x1acc] sm:$0xf]
    %v2665 = vld [vmem:[#allocation5 + $0x1ad0] sm:$0xf]
    %v2666 = vld [vmem:[#allocation5 + $0x1ad4] sm:$0xf]
    %v2667 = vld [vmem:[#allocation5 + $0x1ad8] sm:$0xf]
    %v2668 = vld [vmem:[#allocation5 + $0x1adc] sm:$0xf]
    %v2669 = vld [vmem:[#allocation5 + $0x1ae0] sm:$0xf]
    %v2670 = vld [vmem:[#allocation5 + $0x1ae4] sm:$0xf]
    %v2671 = vld [vmem:[#allocation5 + $0x1ae8] sm:$0xf]
    %v2672 = vld [vmem:[#allocation5 + $0x1aec] sm:$0xf]
    %v2673 = vld [vmem:[#allocation5 + $0x1af0] sm:$0xf]
    %v2674 = vld [vmem:[#allocation5 + $0x1af4] sm:$0xf]
    %v2675 = vld [vmem:[#allocation5 + $0x1af8] sm:$0xf]
    %v2676 = vld [vmem:[#allocation5 + $0x1afc] sm:$0xf]
    %v2677 = vld [vmem:[#allocation5 + $0x1b00] sm:$0xf]
    %v2678 = vld [vmem:[#allocation5 + $0x1b04] sm:$0xf]
    %v2679 = vld [vmem:[#allocation5 + $0x1b08] sm:$0xf]
    %v2680 = vld [vmem:[#allocation5 + $0x1b0c] sm:$0xf]
    %v2681 = vld [vmem:[#allocation5 + $0x1b10] sm:$0xf]
    %v2682 = vld [vmem:[#allocation5 + $0x1b14] sm:$0xf]
    %v2683 = vld [vmem:[#allocation5 + $0x1b18] sm:$0xf]
    %v2684 = vld [vmem:[#allocation5 + $0x1b1c] sm:$0xf]
    %v2685 = vld [vmem:[#allocation5 + $0x1b20] sm:$0xf]
    %v2686 = vld [vmem:[#allocation5 + $0x1b24] sm:$0xf]
    %v2687 = vld [vmem:[#allocation5 + $0x1b28] sm:$0xf]
    %v2688 = vld [vmem:[#allocation5 + $0x1b2c] sm:$0xf]
    %v2689 = vld [vmem:[#allocation5 + $0x1b30] sm:$0xf]
    %v2690 = vld [vmem:[#allocation5 + $0x1b34] sm:$0xf]
    %v2691 = vld [vmem:[#allocation5 + $0x1b38] sm:$0xf]
    %v2692 = vld [vmem:[#allocation5 + $0x1b3c] sm:$0xf]
    %v2693 = vld [vmem:[#allocation5 + $0x1b40] sm:$0xf]
    %v2694 = vld [vmem:[#allocation5 + $0x1b44] sm:$0xf]
    %v2695 = vld [vmem:[#allocation5 + $0x1b48] sm:$0xf]
    %v2696 = vld [vmem:[#allocation5 + $0x1b4c] sm:$0xf]
    %v2697 = vld [vmem:[#allocation5 + $0x1b50] sm:$0xf]
    %v2698 = vld [vmem:[#allocation5 + $0x1b54] sm:$0xf]
    %v2699 = vld [vmem:[#allocation5 + $0x1b58] sm:$0xf]
    %v2700 = vld [vmem:[#allocation5 + $0x1b5c] sm:$0xf]
    %v2701 = vld [vmem:[#allocation5 + $0x1b60] sm:$0xf]
    %v2702 = vld [vmem:[#allocation5 + $0x1b64] sm:$0xf]
    %v2703 = vld [vmem:[#allocation5 + $0x1b68] sm:$0xf]
    %v2704 = vld [vmem:[#allocation5 + $0x1b6c] sm:$0xf]
    %v2705 = vld [vmem:[#allocation5 + $0x1b70] sm:$0xf]
    %v2706 = vld [vmem:[#allocation5 + $0x1b74] sm:$0xf]
    %v2707 = vld [vmem:[#allocation5 + $0x1b78] sm:$0xf]
    %v2708 = vld [vmem:[#allocation5 + $0x1b7c] sm:$0xf]
    %v2709 = vld [vmem:[#allocation5 + $0x1b80] sm:$0xf]
    %v2710 = vld [vmem:[#allocation5 + $0x1b84] sm:$0xf]
    %v2711 = vld [vmem:[#allocation5 + $0x1b88] sm:$0xf]
    %v2712 = vld [vmem:[#allocation5 + $0x1b8c] sm:$0xf]
    %v2713 = vld [vmem:[#allocation5 + $0x1b90] sm:$0xf]
    %v2714 = vld [vmem:[#allocation5 + $0x1b94] sm:$0xf]
    %v2715 = vld [vmem:[#allocation5 + $0x1b98] sm:$0xf]
    %v2716 = vld [vmem:[#allocation5 + $0x1b9c] sm:$0xf]
    %v2717 = vld [vmem:[#allocation5 + $0x1ba0] sm:$0xf]
    %v2718 = vld [vmem:[#allocation5 + $0x1ba4] sm:$0xf]
    %v2719 = vld [vmem:[#allocation5 + $0x1ba8] sm:$0xf]
    %v2720 = vld [vmem:[#allocation5 + $0x1bac] sm:$0xf]
    %v2721 = vld [vmem:[#allocation5 + $0x1bb0] sm:$0xf]
    %v2722 = vld [vmem:[#allocation5 + $0x1bb4] sm:$0xf]
    %v2723 = vld [vmem:[#allocation5 + $0x1bb8] sm:$0xf]
    %v2724 = vld [vmem:[#allocation5 + $0x1bbc] sm:$0xf]
    %v2725 = vld [vmem:[#allocation5 + $0x1bc0] sm:$0xf]
    %v2726 = vld [vmem:[#allocation5 + $0x1bc4] sm:$0xf]
    %v2727 = vld [vmem:[#allocation5 + $0x1bc8] sm:$0xf]
    %v2728 = vld [vmem:[#allocation5 + $0x1bcc] sm:$0xf]
    %v2729 = vld [vmem:[#allocation5 + $0x1bd0] sm:$0xf]
    %v2730 = vld [vmem:[#allocation5 + $0x1bd4] sm:$0xf]
    %v2731 = vld [vmem:[#allocation5 + $0x1bd8] sm:$0xf]
    %v2732 = vld [vmem:[#allocation5 + $0x1bdc] sm:$0xf]
    %v2733 = vld [vmem:[#allocation5 + $0x1be0] sm:$0xf]
    %v2734 = vld [vmem:[#allocation5 + $0x1be4] sm:$0xf]
    %v2735 = vld [vmem:[#allocation5 + $0x1be8] sm:$0xf]
    %v2736 = vld [vmem:[#allocation5 + $0x1bec] sm:$0xf]
    %v2737 = vld [vmem:[#allocation5 + $0x1bf0] sm:$0xf]
    %v2738 = vld [vmem:[#allocation5 + $0x1bf4] sm:$0xf]
    %v2739 = vld [vmem:[#allocation5 + $0x1bf8] sm:$0xf]
    %v2740 = vld [vmem:[#allocation5 + $0x1bfc] sm:$0xf]
    %v2741 = vld [vmem:[#allocation5 + $0x1c00] sm:$0xf]
    %v2742 = vld [vmem:[#allocation5 + $0x1c04] sm:$0xf]
    %v2743 = vld [vmem:[#allocation5 + $0x1c08] sm:$0xf]
    %v2744 = vld [vmem:[#allocation5 + $0x1c0c] sm:$0xf]
    %v2745 = vld [vmem:[#allocation5 + $0x1c10] sm:$0xf]
    %v2746 = vld [vmem:[#allocation5 + $0x1c14] sm:$0xf]
    %v2747 = vld [vmem:[#allocation5 + $0x1c18] sm:$0xf]
    %v2748 = vld [vmem:[#allocation5 + $0x1c1c] sm:$0xf]
    %v2749 = vld [vmem:[#allocation5 + $0x1c20] sm:$0xf]
    %v2750 = vld [vmem:[#allocation5 + $0x1c24] sm:$0xf]
    %v2751 = vld [vmem:[#allocation5 + $0x1c28] sm:$0xf]
    %v2752 = vld [vmem:[#allocation5 + $0x1c2c] sm:$0xf]
    %v2753 = vld [vmem:[#allocation5 + $0x1c30] sm:$0xf]
    %v2754 = vld [vmem:[#allocation5 + $0x1c34] sm:$0xf]
    %v2755 = vld [vmem:[#allocation5 + $0x1c38] sm:$0xf]
    %v2756 = vld [vmem:[#allocation5 + $0x1c3c] sm:$0xf]
    %v2757 = vld [vmem:[#allocation5 + $0x1c40] sm:$0xf]
    %v2758 = vld [vmem:[#allocation5 + $0x1c44] sm:$0xf]
    %v2759 = vld [vmem:[#allocation5 + $0x1c48] sm:$0xf]
    %v2760 = vld [vmem:[#allocation5 + $0x1c4c] sm:$0xf]
    %v2761 = vld [vmem:[#allocation5 + $0x1c50] sm:$0xf]
    %v2762 = vld [vmem:[#allocation5 + $0x1c54] sm:$0xf]
    %v2763 = vld [vmem:[#allocation5 + $0x1c58] sm:$0xf]
    %v2764 = vld [vmem:[#allocation5 + $0x1c5c] sm:$0xf]
    %v2765 = vld [vmem:[#allocation5 + $0x1c60] sm:$0xf]
    %v2766 = vld [vmem:[#allocation5 + $0x1c64] sm:$0xf]
    %v2767 = vld [vmem:[#allocation5 + $0x1c68] sm:$0xf]
    %v2768 = vld [vmem:[#allocation5 + $0x1c6c] sm:$0xf]
    %v2769 = vld [vmem:[#allocation5 + $0x1c70] sm:$0xf]
    %v2770 = vld [vmem:[#allocation5 + $0x1c74] sm:$0xf]
    %v2771 = vld [vmem:[#allocation5 + $0x1c78] sm:$0xf]
    %v2772 = vld [vmem:[#allocation5 + $0x1c7c] sm:$0xf]
    %v2773 = vld [vmem:[#allocation5 + $0x1c80] sm:$0xf]
    %v2774 = vld [vmem:[#allocation5 + $0x1c84] sm:$0xf]
    %v2775 = vld [vmem:[#allocation5 + $0x1c88] sm:$0xf]
    %v2776 = vld [vmem:[#allocation5 + $0x1c8c] sm:$0xf]
    %v2777 = vld [vmem:[#allocation5 + $0x1c90] sm:$0xf]
    %v2778 = vld [vmem:[#allocation5 + $0x1c94] sm:$0xf]
    %v2779 = vld [vmem:[#allocation5 + $0x1c98] sm:$0xf]
    %v2780 = vld [vmem:[#allocation5 + $0x1c9c] sm:$0xf]
    %v2781 = vld [vmem:[#allocation5 + $0x1ca0] sm:$0xf]
    %v2782 = vld [vmem:[#allocation5 + $0x1ca4] sm:$0xf]
    %v2783 = vld [vmem:[#allocation5 + $0x1ca8] sm:$0xf]
    %v2784 = vld [vmem:[#allocation5 + $0x1cac] sm:$0xf]
    %v2785 = vld [vmem:[#allocation5 + $0x1cb0] sm:$0xf]
    %v2786 = vld [vmem:[#allocation5 + $0x1cb4] sm:$0xf]
    %v2787 = vld [vmem:[#allocation5 + $0x1cb8] sm:$0xf]
    %v2788 = vld [vmem:[#allocation5 + $0x1cbc] sm:$0xf]
    %v2789 = vld [vmem:[#allocation5 + $0x1cc0] sm:$0xf]
    %v2790 = vld [vmem:[#allocation5 + $0x1cc4] sm:$0xf]
    %v2791 = vld [vmem:[#allocation5 + $0x1cc8] sm:$0xf]
    %v2792 = vld [vmem:[#allocation5 + $0x1ccc] sm:$0xf]
    %v2793 = vld [vmem:[#allocation5 + $0x1cd0] sm:$0xf]
    %v2794 = vld [vmem:[#allocation5 + $0x1cd4] sm:$0xf]
    %v2795 = vld [vmem:[#allocation5 + $0x1cd8] sm:$0xf]
    %v2796 = vld [vmem:[#allocation5 + $0x1cdc] sm:$0xf]
    %v2797 = vld [vmem:[#allocation5 + $0x1ce0] sm:$0xf]
    %v2798 = vld [vmem:[#allocation5 + $0x1ce4] sm:$0xf]
    %v2799 = vld [vmem:[#allocation5 + $0x1ce8] sm:$0xf]
    %v2800 = vld [vmem:[#allocation5 + $0x1cec] sm:$0xf]
    %v2801 = vld [vmem:[#allocation5 + $0x1cf0] sm:$0xf]
    %v2802 = vld [vmem:[#allocation5 + $0x1cf4] sm:$0xf]
    %v2803 = vld [vmem:[#allocation5 + $0x1cf8] sm:$0xf]
    %v2804 = vld [vmem:[#allocation5 + $0x1cfc] sm:$0xf]
    %v2805 = vld [vmem:[#allocation5 + $0x1d00] sm:$0xf]
    %v2806 = vld [vmem:[#allocation5 + $0x1d04] sm:$0xf]
    %v2807 = vld [vmem:[#allocation5 + $0x1d08] sm:$0xf]
    %v2808 = vld [vmem:[#allocation5 + $0x1d0c] sm:$0xf]
    %v2809 = vld [vmem:[#allocation5 + $0x1d10] sm:$0xf]
    %v2810 = vld [vmem:[#allocation5 + $0x1d14] sm:$0xf]
    %v2811 = vld [vmem:[#allocation5 + $0x1d18] sm:$0xf]
    %v2812 = vld [vmem:[#allocation5 + $0x1d1c] sm:$0xf]
    %v2813 = vld [vmem:[#allocation5 + $0x1d20] sm:$0xf]
    %v2814 = vld [vmem:[#allocation5 + $0x1d24] sm:$0xf]
    %v2815 = vld [vmem:[#allocation5 + $0x1d28] sm:$0xf]
    %v2816 = vld [vmem:[#allocation5 + $0x1d2c] sm:$0xf]
    %v2817 = vld [vmem:[#allocation5 + $0x1d30] sm:$0xf]
    %v2818 = vld [vmem:[#allocation5 + $0x1d34] sm:$0xf]
    %v2819 = vld [vmem:[#allocation5 + $0x1d38] sm:$0xf]
    %v2820 = vld [vmem:[#allocation5 + $0x1d3c] sm:$0xf]
    %v2821 = vld [vmem:[#allocation5 + $0x1d40] sm:$0xf]
    %v2822 = vld [vmem:[#allocation5 + $0x1d44] sm:$0xf]
    %v2823 = vld [vmem:[#allocation5 + $0x1d48] sm:$0xf]
    %v2824 = vld [vmem:[#allocation5 + $0x1d4c] sm:$0xf]
    %v2825 = vld [vmem:[#allocation5 + $0x1d50] sm:$0xf]
    %v2826 = vld [vmem:[#allocation5 + $0x1d54] sm:$0xf]
    %v2827 = vld [vmem:[#allocation5 + $0x1d58] sm:$0xf]
    %v2828 = vld [vmem:[#allocation5 + $0x1d5c] sm:$0xf]
    %v2829 = vld [vmem:[#allocation5 + $0x1d60] sm:$0xf]
    %v2830 = vld [vmem:[#allocation5 + $0x1d64] sm:$0xf]
    %v2831 = vld [vmem:[#allocation5 + $0x1d68] sm:$0xf]
    %v2832 = vld [vmem:[#allocation5 + $0x1d6c] sm:$0xf]
    %v2833 = vld [vmem:[#allocation5 + $0x1d70] sm:$0xf]
    %v2834 = vld [vmem:[#allocation5 + $0x1d74] sm:$0xf]
    %v2835 = vld [vmem:[#allocation5 + $0x1d78] sm:$0xf]
    %v2836 = vld [vmem:[#allocation5 + $0x1d7c] sm:$0xf]
    %v2837 = vld [vmem:[#allocation5 + $0x1d80] sm:$0xf]
    %v2838 = vld [vmem:[#allocation5 + $0x1d84] sm:$0xf]
    %v2839 = vld [vmem:[#allocation5 + $0x1d88] sm:$0xf]
    %v2840 = vld [vmem:[#allocation5 + $0x1d8c] sm:$0xf]
    %v2841 = vld [vmem:[#allocation5 + $0x1d90] sm:$0xf]
    %v2842 = vld [vmem:[#allocation5 + $0x1d94] sm:$0xf]
    %v2843 = vld [vmem:[#allocation5 + $0x1d98] sm:$0xf]
    %v2844 = vld [vmem:[#allocation5 + $0x1d9c] sm:$0xf]
    %v2845 = vld [vmem:[#allocation5 + $0x1da0] sm:$0xf]
    %v2846 = vld [vmem:[#allocation5 + $0x1da4] sm:$0xf]
    %v2847 = vld [vmem:[#allocation5 + $0x1da8] sm:$0xf]
    %v2848 = vld [vmem:[#allocation5 + $0x1dac] sm:$0xf]
    %v2849 = vld [vmem:[#allocation5 + $0x1db0] sm:$0xf]
    %v2850 = vld [vmem:[#allocation5 + $0x1db4] sm:$0xf]
    %v2851 = vld [vmem:[#allocation5 + $0x1db8] sm:$0xf]
    %v2852 = vld [vmem:[#allocation5 + $0x1dbc] sm:$0xf]
    %v2853 = vld [vmem:[#allocation5 + $0x1dc0] sm:$0xf]
    %v2854 = vld [vmem:[#allocation5 + $0x1dc4] sm:$0xf]
    %v2855 = vld [vmem:[#allocation5 + $0x1dc8] sm:$0xf]
    %v2856 = vld [vmem:[#allocation5 + $0x1dcc] sm:$0xf]
    %v2857 = vld [vmem:[#allocation5 + $0x1dd0] sm:$0xf]
    %v2858 = vld [vmem:[#allocation5 + $0x1dd4] sm:$0xf]
    %v2859 = vld [vmem:[#allocation5 + $0x1dd8] sm:$0xf]
    %v2860 = vld [vmem:[#allocation5 + $0x1ddc] sm:$0xf]
    %v2861 = vld [vmem:[#allocation5 + $0x1de0] sm:$0xf]
    %v2862 = vld [vmem:[#allocation5 + $0x1de4] sm:$0xf]
    %v2863 = vld [vmem:[#allocation5 + $0x1de8] sm:$0xf]
    %v2864 = vld [vmem:[#allocation5 + $0x1dec] sm:$0xf]
    %v2865 = vld [vmem:[#allocation5 + $0x1df0] sm:$0xf]
    %v2866 = vld [vmem:[#allocation5 + $0x1df4] sm:$0xf]
    %v2867 = vld [vmem:[#allocation5 + $0x1df8] sm:$0xf]
    %v2868 = vld [vmem:[#allocation5 + $0x1dfc] sm:$0xf]
    %v2869 = vld [vmem:[#allocation5 + $0x1e00] sm:$0xf]
    %v2870 = vld [vmem:[#allocation5 + $0x1e04] sm:$0xf]
    %v2871 = vld [vmem:[#allocation5 + $0x1e08] sm:$0xf]
    %v2872 = vld [vmem:[#allocation5 + $0x1e0c] sm:$0xf]
    %v2873 = vld [vmem:[#allocation5 + $0x1e10] sm:$0xf]
    %v2874 = vld [vmem:[#allocation5 + $0x1e14] sm:$0xf]
    %v2875 = vld [vmem:[#allocation5 + $0x1e18] sm:$0xf]
    %v2876 = vld [vmem:[#allocation5 + $0x1e1c] sm:$0xf]
    %v2877 = vld [vmem:[#allocation5 + $0x1e20] sm:$0xf]
    %v2878 = vld [vmem:[#allocation5 + $0x1e24] sm:$0xf]
    %v2879 = vld [vmem:[#allocation5 + $0x1e28] sm:$0xf]
    %v2880 = vld [vmem:[#allocation5 + $0x1e2c] sm:$0xf]
    %v2881 = vld [vmem:[#allocation5 + $0x1e30] sm:$0xf]
    %v2882 = vld [vmem:[#allocation5 + $0x1e34] sm:$0xf]
    %v2883 = vld [vmem:[#allocation5 + $0x1e38] sm:$0xf]
    %v2884 = vld [vmem:[#allocation5 + $0x1e3c] sm:$0xf]
    %v2885 = vld [vmem:[#allocation5 + $0x1e40] sm:$0xf]
    %v2886 = vld [vmem:[#allocation5 + $0x1e44] sm:$0xf]
    %v2887 = vld [vmem:[#allocation5 + $0x1e48] sm:$0xf]
    %v2888 = vld [vmem:[#allocation5 + $0x1e4c] sm:$0xf]
    %v2889 = vld [vmem:[#allocation5 + $0x1e50] sm:$0xf]
    %v2890 = vld [vmem:[#allocation5 + $0x1e54] sm:$0xf]
    %v2891 = vld [vmem:[#allocation5 + $0x1e58] sm:$0xf]
    %v2892 = vld [vmem:[#allocation5 + $0x1e5c] sm:$0xf]
    %v2893 = vld [vmem:[#allocation5 + $0x1e60] sm:$0xf]
    %v2894 = vld [vmem:[#allocation5 + $0x1e64] sm:$0xf]
    %v2895 = vld [vmem:[#allocation5 + $0x1e68] sm:$0xf]
    %v2896 = vld [vmem:[#allocation5 + $0x1e6c] sm:$0xf]
    %v2897 = vld [vmem:[#allocation5 + $0x1e70] sm:$0xf]
    %v2898 = vld [vmem:[#allocation5 + $0x1e74] sm:$0xf]
    %v2899 = vld [vmem:[#allocation5 + $0x1e78] sm:$0xf]
    %v2900 = vld [vmem:[#allocation5 + $0x1e7c] sm:$0xf]
    %v2901 = vld [vmem:[#allocation5 + $0x1e80] sm:$0xf]
    %v2902 = vld [vmem:[#allocation5 + $0x1e84] sm:$0xf]
    %v2903 = vld [vmem:[#allocation5 + $0x1e88] sm:$0xf]
    %v2904 = vld [vmem:[#allocation5 + $0x1e8c] sm:$0xf]
    %v2905 = vld [vmem:[#allocation5 + $0x1e90] sm:$0xf]
    %v2906 = vld [vmem:[#allocation5 + $0x1e94] sm:$0xf]
    %v2907 = vld [vmem:[#allocation5 + $0x1e98] sm:$0xf]
    %v2908 = vld [vmem:[#allocation5 + $0x1e9c] sm:$0xf]
    %v2909 = vld [vmem:[#allocation5 + $0x1ea0] sm:$0xf]
    %v2910 = vld [vmem:[#allocation5 + $0x1ea4] sm:$0xf]
    %v2911 = vld [vmem:[#allocation5 + $0x1ea8] sm:$0xf]
    %v2912 = vld [vmem:[#allocation5 + $0x1eac] sm:$0xf]
    %v2913 = vld [vmem:[#allocation5 + $0x1eb0] sm:$0xf]
    %v2914 = vld [vmem:[#allocation5 + $0x1eb4] sm:$0xf]
    %v2915 = vld [vmem:[#allocation5 + $0x1eb8] sm:$0xf]
    %v2916 = vld [vmem:[#allocation5 + $0x1ebc] sm:$0xf]
    %v2917 = vld [vmem:[#allocation5 + $0x1ec0] sm:$0xf]
    %v2918 = vld [vmem:[#allocation5 + $0x1ec4] sm:$0xf]
    %v2919 = vld [vmem:[#allocation5 + $0x1ec8] sm:$0xf]
    %v2920 = vld [vmem:[#allocation5 + $0x1ecc] sm:$0xf]
    %v2921 = vld [vmem:[#allocation5 + $0x1ed0] sm:$0xf]
    %v2922 = vld [vmem:[#allocation5 + $0x1ed4] sm:$0xf]
    %v2923 = vld [vmem:[#allocation5 + $0x1ed8] sm:$0xf]
    %v2924 = vld [vmem:[#allocation5 + $0x1edc] sm:$0xf]
    %v2925 = vld [vmem:[#allocation5 + $0x1ee0] sm:$0xf]
    %v2926 = vld [vmem:[#allocation5 + $0x1ee4] sm:$0xf]
    %v2927 = vld [vmem:[#allocation5 + $0x1ee8] sm:$0xf]
    %v2928 = vld [vmem:[#allocation5 + $0x1eec] sm:$0xf]
    %v2929 = vld [vmem:[#allocation5 + $0x1ef0] sm:$0xf]
    %v2930 = vld [vmem:[#allocation5 + $0x1ef4] sm:$0xf]
    %v2931 = vld [vmem:[#allocation5 + $0x1ef8] sm:$0xf]
    %v2932 = vld [vmem:[#allocation5 + $0x1efc] sm:$0xf]
    %v2933 = vld [vmem:[#allocation5 + $0x1f00] sm:$0xf]
    %v2934 = vld [vmem:[#allocation5 + $0x1f04] sm:$0xf]
    %v2935 = vld [vmem:[#allocation5 + $0x1f08] sm:$0xf]
    %v2936 = vld [vmem:[#allocation5 + $0x1f0c] sm:$0xf]
    %v2937 = vld [vmem:[#allocation5 + $0x1f10] sm:$0xf]
    %v2938 = vld [vmem:[#allocation5 + $0x1f14] sm:$0xf]
    %v2939 = vld [vmem:[#allocation5 + $0x1f18] sm:$0xf]
    %v2940 = vld [vmem:[#allocation5 + $0x1f1c] sm:$0xf]
    %v2941 = vld [vmem:[#allocation5 + $0x1f20] sm:$0xf]
    %v2942 = vld [vmem:[#allocation5 + $0x1f24] sm:$0xf]
    %v2943 = vld [vmem:[#allocation5 + $0x1f28] sm:$0xf]
    %v2944 = vld [vmem:[#allocation5 + $0x1f2c] sm:$0xf]
    %v2945 = vld [vmem:[#allocation5 + $0x1f30] sm:$0xf]
    %v2946 = vld [vmem:[#allocation5 + $0x1f34] sm:$0xf]
    %v2947 = vld [vmem:[#allocation5 + $0x1f38] sm:$0xf]
    %v2948 = vld [vmem:[#allocation5 + $0x1f3c] sm:$0xf]
    %v2949 = vld [vmem:[#allocation5 + $0x1f40] sm:$0xf]
    %v2950 = vld [vmem:[#allocation5 + $0x1f44] sm:$0xf]
    %v2951 = vld [vmem:[#allocation5 + $0x1f48] sm:$0xf]
    %v2952 = vld [vmem:[#allocation5 + $0x1f4c] sm:$0xf]
    %v2953 = vld [vmem:[#allocation5 + $0x1f50] sm:$0xf]
    %v2954 = vld [vmem:[#allocation5 + $0x1f54] sm:$0xf]
    %v2955 = vld [vmem:[#allocation5 + $0x1f58] sm:$0xf]
    %v2956 = vld [vmem:[#allocation5 + $0x1f5c] sm:$0xf]
    %v2957 = vld [vmem:[#allocation5 + $0x1f60] sm:$0xf]
    %v2958 = vld [vmem:[#allocation5 + $0x1f64] sm:$0xf]
    %v2959 = vld [vmem:[#allocation5 + $0x1f68] sm:$0xf]
    %v2960 = vld [vmem:[#allocation5 + $0x1f6c] sm:$0xf]
    %v2961 = vld [vmem:[#allocation5 + $0x1f70] sm:$0xf]
    %v2962 = vld [vmem:[#allocation5 + $0x1f74] sm:$0xf]
    %v2963 = vld [vmem:[#allocation5 + $0x1f78] sm:$0xf]
    %v2964 = vld [vmem:[#allocation5 + $0x1f7c] sm:$0xf]
    %v2965 = vld [vmem:[#allocation5 + $0x1f80] sm:$0xf]
    %v2966 = vld [vmem:[#allocation5 + $0x1f84] sm:$0xf]
    %v2967 = vld [vmem:[#allocation5 + $0x1f88] sm:$0xf]
    %v2968 = vld [vmem:[#allocation5 + $0x1f8c] sm:$0xf]
    %v2969 = vld [vmem:[#allocation5 + $0x1f90] sm:$0xf]
    %v2970 = vld [vmem:[#allocation5 + $0x1f94] sm:$0xf]
    %v2971 = vld [vmem:[#allocation5 + $0x1f98] sm:$0xf]
    %v2972 = vld [vmem:[#allocation5 + $0x1f9c] sm:$0xf]
    %v2973 = vld [vmem:[#allocation5 + $0x1fa0] sm:$0xf]
    %v2974 = vld [vmem:[#allocation5 + $0x1fa4] sm:$0xf]
    %v2975 = vld [vmem:[#allocation5 + $0x1fa8] sm:$0xf]
    %v2976 = vld [vmem:[#allocation5 + $0x1fac] sm:$0xf]
    %v2977 = vld [vmem:[#allocation5 + $0x1fb0] sm:$0xf]
    %v2978 = vld [vmem:[#allocation5 + $0x1fb4] sm:$0xf]
    %v2979 = vld [vmem:[#allocation5 + $0x1fb8] sm:$0xf]
    %v2980 = vld [vmem:[#allocation5 + $0x1fbc] sm:$0xf]
    %v2981 = vld [vmem:[#allocation5 + $0x1fc0] sm:$0xf]
    %v2982 = vld [vmem:[#allocation5 + $0x1fc4] sm:$0xf]
    %v2983 = vld [vmem:[#allocation5 + $0x1fc8] sm:$0xf]
    %v2984 = vld [vmem:[#allocation5 + $0x1fcc] sm:$0xf]
    %v2985 = vld [vmem:[#allocation5 + $0x1fd0] sm:$0xf]
    %v2986 = vld [vmem:[#allocation5 + $0x1fd4] sm:$0xf]
    %v2987 = vld [vmem:[#allocation5 + $0x1fd8] sm:$0xf]
    %v2988 = vld [vmem:[#allocation5 + $0x1fdc] sm:$0xf]
    %v2989 = vld [vmem:[#allocation5 + $0x1fe0] sm:$0xf]
    %v2990 = vld [vmem:[#allocation5 + $0x1fe4] sm:$0xf]
    %v2991 = vld [vmem:[#allocation5 + $0x1fe8] sm:$0xf]
    %v2992 = vld [vmem:[#allocation5 + $0x1fec] sm:$0xf]
    %v2993 = vld [vmem:[#allocation5 + $0x1ff0] sm:$0xf]
    %v2994 = vld [vmem:[#allocation5 + $0x1ff4] sm:$0xf]
    %v2995 = vld [vmem:[#allocation5 + $0x1ff8] sm:$0xf]
    %v2996 = vld [vmem:[#allocation5 + $0x1ffc] sm:$0xf]
    %v2997 = vld [vmem:[#allocation7] sm:$0x1]
    %v2999 = vlaneseq
    %v3000 = vshrl.u32 %v2999, 7
    %v3001 = vsub.s32 0, %v3000
    %v3002 = vrot.slane %v2997, %v3001
    %v5052 = vunpack.c.l.b16 %v949
    %v5053 = vunpack.c.l.b16 %v950
    %v5054 = vunpack.c.l.b16 %v951
    %v5055 = vunpack.c.l.b16 %v952
    %v5056 = vunpack.c.l.b16 %v953
    %v5057 = vunpack.c.l.b16 %v954
    %v5058 = vunpack.c.l.b16 %v955
    %v5059 = vunpack.c.l.b16 %v956
    %v5060 = vunpack.c.l.b16 %v957
    %v5061 = vunpack.c.l.b16 %v958
    %v5062 = vunpack.c.l.b16 %v959
    %v5063 = vunpack.c.l.b16 %v960
    %v5064 = vunpack.c.l.b16 %v961
    %v5065 = vunpack.c.l.b16 %v962
    %v5066 = vunpack.c.l.b16 %v963
    %v5067 = vunpack.c.l.b16 %v964
    %v5068 = vunpack.c.l.b16 %v965
    %v5069 = vunpack.c.l.b16 %v966
    %v5070 = vunpack.c.l.b16 %v967
    %v5071 = vunpack.c.l.b16 %v968
    %v5072 = vunpack.c.l.b16 %v969
    %v5073 = vunpack.c.l.b16 %v970
    %v5074 = vunpack.c.l.b16 %v971
    %v5075 = vunpack.c.l.b16 %v972
    %v5076 = vunpack.c.l.b16 %v973
    %v5077 = vunpack.c.l.b16 %v974
    %v5078 = vunpack.c.l.b16 %v975
    %v5079 = vunpack.c.l.b16 %v976
    %v5080 = vunpack.c.l.b16 %v977
    %v5081 = vunpack.c.l.b16 %v978
    %v5082 = vunpack.c.l.b16 %v979
    %v5083 = vunpack.c.l.b16 %v980
    %v5084 = vunpack.c.l.b16 %v981
    %v5085 = vunpack.c.l.b16 %v982
    %v5086 = vunpack.c.l.b16 %v983
    %v5087 = vunpack.c.l.b16 %v984
    %v5088 = vunpack.c.l.b16 %v985
    %v5089 = vunpack.c.l.b16 %v986
    %v5090 = vunpack.c.l.b16 %v987
    %v5091 = vunpack.c.l.b16 %v988
    %v5092 = vunpack.c.l.b16 %v989
    %v5093 = vunpack.c.l.b16 %v990
    %v5094 = vunpack.c.l.b16 %v991
    %v5095 = vunpack.c.l.b16 %v992
    %v5096 = vunpack.c.l.b16 %v993
    %v5097 = vunpack.c.l.b16 %v994
    %v5098 = vunpack.c.l.b16 %v995
    %v5099 = vunpack.c.l.b16 %v996
    %v5100 = vunpack.c.l.b16 %v997
    %v5101 = vunpack.c.l.b16 %v998
    %v5102 = vunpack.c.l.b16 %v999
    %v5103 = vunpack.c.l.b16 %v1000
    %v5104 = vunpack.c.l.b16 %v1001
    %v5105 = vunpack.c.l.b16 %v1002
    %v5106 = vunpack.c.l.b16 %v1003
    %v5107 = vunpack.c.l.b16 %v1004
    %v5108 = vunpack.c.l.b16 %v1005
    %v5109 = vunpack.c.l.b16 %v1006
    %v5110 = vunpack.c.l.b16 %v1007
    %v5111 = vunpack.c.l.b16 %v1008
    %v5112 = vunpack.c.l.b16 %v1009
    %v5113 = vunpack.c.l.b16 %v1010
    %v5114 = vunpack.c.l.b16 %v1011
    %v5115 = vunpack.c.l.b16 %v1012
    %v5116 = vunpack.c.l.b16 %v1013
    %v5117 = vunpack.c.l.b16 %v1014
    %v5118 = vunpack.c.l.b16 %v1015
    %v5119 = vunpack.c.l.b16 %v1016
    %v5120 = vunpack.c.l.b16 %v1017
    %v5121 = vunpack.c.l.b16 %v1018
    %v5122 = vunpack.c.l.b16 %v1019
    %v5123 = vunpack.c.l.b16 %v1020
    %v5124 = vunpack.c.l.b16 %v1021
    %v5125 = vunpack.c.l.b16 %v1022
    %v5126 = vunpack.c.l.b16 %v1023
    %v5127 = vunpack.c.l.b16 %v1024
    %v5128 = vunpack.c.l.b16 %v1025
    %v5129 = vunpack.c.l.b16 %v1026
    %v5130 = vunpack.c.l.b16 %v1027
    %v5131 = vunpack.c.l.b16 %v1028
    %v5132 = vunpack.c.l.b16 %v1029
    %v5133 = vunpack.c.l.b16 %v1030
    %v5134 = vunpack.c.l.b16 %v1031
    %v5135 = vunpack.c.l.b16 %v1032
    %v5136 = vunpack.c.l.b16 %v1033
    %v5137 = vunpack.c.l.b16 %v1034
    %v5138 = vunpack.c.l.b16 %v1035
    %v5139 = vunpack.c.l.b16 %v1036
    %v5140 = vunpack.c.l.b16 %v1037
    %v5141 = vunpack.c.l.b16 %v1038
    %v5142 = vunpack.c.l.b16 %v1039
    %v5143 = vunpack.c.l.b16 %v1040
    %v5144 = vunpack.c.l.b16 %v1041
    %v5145 = vunpack.c.l.b16 %v1042
    %v5146 = vunpack.c.l.b16 %v1043
    %v5147 = vunpack.c.l.b16 %v1044
    %v5148 = vunpack.c.l.b16 %v1045
    %v5149 = vunpack.c.l.b16 %v1046
    %v5150 = vunpack.c.l.b16 %v1047
    %v5151 = vunpack.c.l.b16 %v1048
    %v5152 = vunpack.c.l.b16 %v1049
    %v5153 = vunpack.c.l.b16 %v1050
    %v5154 = vunpack.c.l.b16 %v1051
    %v5155 = vunpack.c.l.b16 %v1052
    %v5156 = vunpack.c.l.b16 %v1053
    %v5157 = vunpack.c.l.b16 %v1054
    %v5158 = vunpack.c.l.b16 %v1055
    %v5159 = vunpack.c.l.b16 %v1056
    %v5160 = vunpack.c.l.b16 %v1057
    %v5161 = vunpack.c.l.b16 %v1058
    %v5162 = vunpack.c.l.b16 %v1059
    %v5163 = vunpack.c.l.b16 %v1060
    %v5164 = vunpack.c.l.b16 %v1061
    %v5165 = vunpack.c.l.b16 %v1062
    %v5166 = vunpack.c.l.b16 %v1063
    %v5167 = vunpack.c.l.b16 %v1064
    %v5168 = vunpack.c.l.b16 %v1065
    %v5169 = vunpack.c.l.b16 %v1066
    %v5170 = vunpack.c.l.b16 %v1067
    %v5171 = vunpack.c.l.b16 %v1068
    %v5172 = vunpack.c.l.b16 %v1069
    %v5173 = vunpack.c.l.b16 %v1070
    %v5174 = vunpack.c.l.b16 %v1071
    %v5175 = vunpack.c.l.b16 %v1072
    %v5176 = vunpack.c.l.b16 %v1073
    %v5177 = vunpack.c.l.b16 %v1074
    %v5178 = vunpack.c.l.b16 %v1075
    %v5179 = vunpack.c.l.b16 %v1076
    %v5180 = vunpack.c.l.b16 %v1077
    %v5181 = vunpack.c.l.b16 %v1078
    %v5182 = vunpack.c.l.b16 %v1079
    %v5183 = vunpack.c.l.b16 %v1080
    %v5184 = vunpack.c.l.b16 %v1081
    %v5185 = vunpack.c.l.b16 %v1082
    %v5186 = vunpack.c.l.b16 %v1083
    %v5187 = vunpack.c.l.b16 %v1084
    %v5188 = vunpack.c.l.b16 %v1085
    %v5189 = vunpack.c.l.b16 %v1086
    %v5190 = vunpack.c.l.b16 %v1087
    %v5191 = vunpack.c.l.b16 %v1088
    %v5192 = vunpack.c.l.b16 %v1089
    %v5193 = vunpack.c.l.b16 %v1090
    %v5194 = vunpack.c.l.b16 %v1091
    %v5195 = vunpack.c.l.b16 %v1092
    %v5196 = vunpack.c.l.b16 %v1093
    %v5197 = vunpack.c.l.b16 %v1094
    %v5198 = vunpack.c.l.b16 %v1095
    %v5199 = vunpack.c.l.b16 %v1096
    %v5200 = vunpack.c.l.b16 %v1097
    %v5201 = vunpack.c.l.b16 %v1098
    %v5202 = vunpack.c.l.b16 %v1099
    %v5203 = vunpack.c.l.b16 %v1100
    %v5204 = vunpack.c.l.b16 %v1101
    %v5205 = vunpack.c.l.b16 %v1102
    %v5206 = vunpack.c.l.b16 %v1103
    %v5207 = vunpack.c.l.b16 %v1104
    %v5208 = vunpack.c.l.b16 %v1105
    %v5209 = vunpack.c.l.b16 %v1106
    %v5210 = vunpack.c.l.b16 %v1107
    %v5211 = vunpack.c.l.b16 %v1108
    %v5212 = vunpack.c.l.b16 %v1109
    %v5213 = vunpack.c.l.b16 %v1110
    %v5214 = vunpack.c.l.b16 %v1111
    %v5215 = vunpack.c.l.b16 %v1112
    %v5216 = vunpack.c.l.b16 %v1113
    %v5217 = vunpack.c.l.b16 %v1114
    %v5218 = vunpack.c.l.b16 %v1115
    %v5219 = vunpack.c.l.b16 %v1116
    %v5220 = vunpack.c.l.b16 %v1117
    %v5221 = vunpack.c.l.b16 %v1118
    %v5222 = vunpack.c.l.b16 %v1119
    %v5223 = vunpack.c.l.b16 %v1120
    %v5224 = vunpack.c.l.b16 %v1121
    %v5225 = vunpack.c.l.b16 %v1122
    %v5226 = vunpack.c.l.b16 %v1123
    %v5227 = vunpack.c.l.b16 %v1124
    %v5228 = vunpack.c.l.b16 %v1125
    %v5229 = vunpack.c.l.b16 %v1126
    %v5230 = vunpack.c.l.b16 %v1127
    %v5231 = vunpack.c.l.b16 %v1128
    %v5232 = vunpack.c.l.b16 %v1129
    %v5233 = vunpack.c.l.b16 %v1130
    %v5234 = vunpack.c.l.b16 %v1131
    %v5235 = vunpack.c.l.b16 %v1132
    %v5236 = vunpack.c.l.b16 %v1133
    %v5237 = vunpack.c.l.b16 %v1134
    %v5238 = vunpack.c.l.b16 %v1135
    %v5239 = vunpack.c.l.b16 %v1136
    %v5240 = vunpack.c.l.b16 %v1137
    %v5241 = vunpack.c.l.b16 %v1138
    %v5242 = vunpack.c.l.b16 %v1139
    %v5243 = vunpack.c.l.b16 %v1140
    %v5244 = vunpack.c.l.b16 %v1141
    %v5245 = vunpack.c.l.b16 %v1142
    %v5246 = vunpack.c.l.b16 %v1143
    %v5247 = vunpack.c.l.b16 %v1144
    %v5248 = vunpack.c.l.b16 %v1145
    %v5249 = vunpack.c.l.b16 %v1146
    %v5250 = vunpack.c.l.b16 %v1147
    %v5251 = vunpack.c.l.b16 %v1148
    %v5252 = vunpack.c.l.b16 %v1149
    %v5253 = vunpack.c.l.b16 %v1150
    %v5254 = vunpack.c.l.b16 %v1151
    %v5255 = vunpack.c.l.b16 %v1152
    %v5256 = vunpack.c.l.b16 %v1153
    %v5257 = vunpack.c.l.b16 %v1154
    %v5258 = vunpack.c.l.b16 %v1155
    %v5259 = vunpack.c.l.b16 %v1156
    %v5260 = vunpack.c.l.b16 %v1157
    %v5261 = vunpack.c.l.b16 %v1158
    %v5262 = vunpack.c.l.b16 %v1159
    %v5263 = vunpack.c.l.b16 %v1160
    %v5264 = vunpack.c.l.b16 %v1161
    %v5265 = vunpack.c.l.b16 %v1162
    %v5266 = vunpack.c.l.b16 %v1163
    %v5267 = vunpack.c.l.b16 %v1164
    %v5268 = vunpack.c.l.b16 %v1165
    %v5269 = vunpack.c.l.b16 %v1166
    %v5270 = vunpack.c.l.b16 %v1167
    %v5271 = vunpack.c.l.b16 %v1168
    %v5272 = vunpack.c.l.b16 %v1169
    %v5273 = vunpack.c.l.b16 %v1170
    %v5274 = vunpack.c.l.b16 %v1171
    %v5275 = vunpack.c.l.b16 %v1172
    %v5276 = vunpack.c.l.b16 %v1173
    %v5277 = vunpack.c.l.b16 %v1174
    %v5278 = vunpack.c.l.b16 %v1175
    %v5279 = vunpack.c.l.b16 %v1176
    %v5280 = vunpack.c.l.b16 %v1177
    %v5281 = vunpack.c.l.b16 %v1178
    %v5282 = vunpack.c.l.b16 %v1179
    %v5283 = vunpack.c.l.b16 %v1180
    %v5284 = vunpack.c.l.b16 %v1181
    %v5285 = vunpack.c.l.b16 %v1182
    %v5286 = vunpack.c.l.b16 %v1183
    %v5287 = vunpack.c.l.b16 %v1184
    %v5288 = vunpack.c.l.b16 %v1185
    %v5289 = vunpack.c.l.b16 %v1186
    %v5290 = vunpack.c.l.b16 %v1187
    %v5291 = vunpack.c.l.b16 %v1188
    %v5292 = vunpack.c.l.b16 %v1189
    %v5293 = vunpack.c.l.b16 %v1190
    %v5294 = vunpack.c.l.b16 %v1191
    %v5295 = vunpack.c.l.b16 %v1192
    %v5296 = vunpack.c.l.b16 %v1193
    %v5297 = vunpack.c.l.b16 %v1194
    %v5298 = vunpack.c.l.b16 %v1195
    %v5299 = vunpack.c.l.b16 %v1196
    %v5300 = vunpack.c.l.b16 %v1197
    %v5301 = vunpack.c.l.b16 %v1198
    %v5302 = vunpack.c.l.b16 %v1199
    %v5303 = vunpack.c.l.b16 %v1200
    %v5304 = vunpack.c.l.b16 %v1201
    %v5305 = vunpack.c.l.b16 %v1202
    %v5306 = vunpack.c.l.b16 %v1203
    %v5307 = vunpack.c.l.b16 %v1204
    %v5308 = vunpack.c.l.b16 %v1205
    %v5309 = vunpack.c.l.b16 %v1206
    %v5310 = vunpack.c.l.b16 %v1207
    %v5311 = vunpack.c.l.b16 %v1208
    %v5312 = vunpack.c.l.b16 %v1209
    %v5313 = vunpack.c.l.b16 %v1210
    %v5314 = vunpack.c.l.b16 %v1211
    %v5315 = vunpack.c.l.b16 %v1212
    %v5316 = vunpack.c.l.b16 %v1213
    %v5317 = vunpack.c.l.b16 %v1214
    %v5318 = vunpack.c.l.b16 %v1215
    %v5319 = vunpack.c.l.b16 %v1216
    %v5320 = vunpack.c.l.b16 %v1217
    %v5321 = vunpack.c.l.b16 %v1218
    %v5322 = vunpack.c.l.b16 %v1219
    %v5323 = vunpack.c.l.b16 %v1220
    %v5324 = vunpack.c.l.b16 %v1221
    %v5325 = vunpack.c.l.b16 %v1222
    %v5326 = vunpack.c.l.b16 %v1223
    %v5327 = vunpack.c.l.b16 %v1224
    %v5328 = vunpack.c.l.b16 %v1225
    %v5329 = vunpack.c.l.b16 %v1226
    %v5330 = vunpack.c.l.b16 %v1227
    %v5331 = vunpack.c.l.b16 %v1228
    %v5332 = vunpack.c.l.b16 %v1229
    %v5333 = vunpack.c.l.b16 %v1230
    %v5334 = vunpack.c.l.b16 %v1231
    %v5335 = vunpack.c.l.b16 %v1232
    %v5336 = vunpack.c.l.b16 %v1233
    %v5337 = vunpack.c.l.b16 %v1234
    %v5338 = vunpack.c.l.b16 %v1235
    %v5339 = vunpack.c.l.b16 %v1236
    %v5340 = vunpack.c.l.b16 %v1237
    %v5341 = vunpack.c.l.b16 %v1238
    %v5342 = vunpack.c.l.b16 %v1239
    %v5343 = vunpack.c.l.b16 %v1240
    %v5344 = vunpack.c.l.b16 %v1241
    %v5345 = vunpack.c.l.b16 %v1242
    %v5346 = vunpack.c.l.b16 %v1243
    %v5347 = vunpack.c.l.b16 %v1244
    %v5348 = vunpack.c.l.b16 %v1245
    %v5349 = vunpack.c.l.b16 %v1246
    %v5350 = vunpack.c.l.b16 %v1247
    %v5351 = vunpack.c.l.b16 %v1248
    %v5352 = vunpack.c.l.b16 %v1249
    %v5353 = vunpack.c.l.b16 %v1250
    %v5354 = vunpack.c.l.b16 %v1251
    %v5355 = vunpack.c.l.b16 %v1252
    %v5356 = vunpack.c.l.b16 %v1253
    %v5357 = vunpack.c.l.b16 %v1254
    %v5358 = vunpack.c.l.b16 %v1255
    %v5359 = vunpack.c.l.b16 %v1256
    %v5360 = vunpack.c.l.b16 %v1257
    %v5361 = vunpack.c.l.b16 %v1258
    %v5362 = vunpack.c.l.b16 %v1259
    %v5363 = vunpack.c.l.b16 %v1260
    %v5364 = vunpack.c.l.b16 %v1261
    %v5365 = vunpack.c.l.b16 %v1262
    %v5366 = vunpack.c.l.b16 %v1263
    %v5367 = vunpack.c.l.b16 %v1264
    %v5368 = vunpack.c.l.b16 %v1265
    %v5369 = vunpack.c.l.b16 %v1266
    %v5370 = vunpack.c.l.b16 %v1267
    %v5371 = vunpack.c.l.b16 %v1268
    %v5372 = vunpack.c.l.b16 %v1269
    %v5373 = vunpack.c.l.b16 %v1270
    %v5374 = vunpack.c.l.b16 %v1271
    %v5375 = vunpack.c.l.b16 %v1272
    %v5376 = vunpack.c.l.b16 %v1273
    %v5377 = vunpack.c.l.b16 %v1274
    %v5378 = vunpack.c.l.b16 %v1275
    %v5379 = vunpack.c.l.b16 %v1276
    %v5380 = vunpack.c.l.b16 %v1277
    %v5381 = vunpack.c.l.b16 %v1278
    %v5382 = vunpack.c.l.b16 %v1279
    %v5383 = vunpack.c.l.b16 %v1280
    %v5384 = vunpack.c.l.b16 %v1281
    %v5385 = vunpack.c.l.b16 %v1282
    %v5386 = vunpack.c.l.b16 %v1283
    %v5387 = vunpack.c.l.b16 %v1284
    %v5388 = vunpack.c.l.b16 %v1285
    %v5389 = vunpack.c.l.b16 %v1286
    %v5390 = vunpack.c.l.b16 %v1287
    %v5391 = vunpack.c.l.b16 %v1288
    %v5392 = vunpack.c.l.b16 %v1289
    %v5393 = vunpack.c.l.b16 %v1290
    %v5394 = vunpack.c.l.b16 %v1291
    %v5395 = vunpack.c.l.b16 %v1292
    %v5396 = vunpack.c.l.b16 %v1293
    %v5397 = vunpack.c.l.b16 %v1294
    %v5398 = vunpack.c.l.b16 %v1295
    %v5399 = vunpack.c.l.b16 %v1296
    %v5400 = vunpack.c.l.b16 %v1297
    %v5401 = vunpack.c.l.b16 %v1298
    %v5402 = vunpack.c.l.b16 %v1299
    %v5403 = vunpack.c.l.b16 %v1300
    %v5404 = vunpack.c.l.b16 %v1301
    %v5405 = vunpack.c.l.b16 %v1302
    %v5406 = vunpack.c.l.b16 %v1303
    %v5407 = vunpack.c.l.b16 %v1304
    %v5408 = vunpack.c.l.b16 %v1305
    %v5409 = vunpack.c.l.b16 %v1306
    %v5410 = vunpack.c.l.b16 %v1307
    %v5411 = vunpack.c.l.b16 %v1308
    %v5412 = vunpack.c.l.b16 %v1309
    %v5413 = vunpack.c.l.b16 %v1310
    %v5414 = vunpack.c.l.b16 %v1311
    %v5415 = vunpack.c.l.b16 %v1312
    %v5416 = vunpack.c.l.b16 %v1313
    %v5417 = vunpack.c.l.b16 %v1314
    %v5418 = vunpack.c.l.b16 %v1315
    %v5419 = vunpack.c.l.b16 %v1316
    %v5420 = vunpack.c.l.b16 %v1317
    %v5421 = vunpack.c.l.b16 %v1318
    %v5422 = vunpack.c.l.b16 %v1319
    %v5423 = vunpack.c.l.b16 %v1320
    %v5424 = vunpack.c.l.b16 %v1321
    %v5425 = vunpack.c.l.b16 %v1322
    %v5426 = vunpack.c.l.b16 %v1323
    %v5427 = vunpack.c.l.b16 %v1324
    %v5428 = vunpack.c.l.b16 %v1325
    %v5429 = vunpack.c.l.b16 %v1326
    %v5430 = vunpack.c.l.b16 %v1327
    %v5431 = vunpack.c.l.b16 %v1328
    %v5432 = vunpack.c.l.b16 %v1329
    %v5433 = vunpack.c.l.b16 %v1330
    %v5434 = vunpack.c.l.b16 %v1331
    %v5435 = vunpack.c.l.b16 %v1332
    %v5436 = vunpack.c.l.b16 %v1333
    %v5437 = vunpack.c.l.b16 %v1334
    %v5438 = vunpack.c.l.b16 %v1335
    %v5439 = vunpack.c.l.b16 %v1336
    %v5440 = vunpack.c.l.b16 %v1337
    %v5441 = vunpack.c.l.b16 %v1338
    %v5442 = vunpack.c.l.b16 %v1339
    %v5443 = vunpack.c.l.b16 %v1340
    %v5444 = vunpack.c.l.b16 %v1341
    %v5445 = vunpack.c.l.b16 %v1342
    %v5446 = vunpack.c.l.b16 %v1343
    %v5447 = vunpack.c.l.b16 %v1344
    %v5448 = vunpack.c.l.b16 %v1345
    %v5449 = vunpack.c.l.b16 %v1346
    %v5450 = vunpack.c.l.b16 %v1347
    %v5451 = vunpack.c.l.b16 %v1348
    %v5452 = vunpack.c.l.b16 %v1349
    %v5453 = vunpack.c.l.b16 %v1350
    %v5454 = vunpack.c.l.b16 %v1351
    %v5455 = vunpack.c.l.b16 %v1352
    %v5456 = vunpack.c.l.b16 %v1353
    %v5457 = vunpack.c.l.b16 %v1354
    %v5458 = vunpack.c.l.b16 %v1355
    %v5459 = vunpack.c.l.b16 %v1356
    %v5460 = vunpack.c.l.b16 %v1357
    %v5461 = vunpack.c.l.b16 %v1358
    %v5462 = vunpack.c.l.b16 %v1359
    %v5463 = vunpack.c.l.b16 %v1360
    %v5464 = vunpack.c.l.b16 %v1361
    %v5465 = vunpack.c.l.b16 %v1362
    %v5466 = vunpack.c.l.b16 %v1363
    %v5467 = vunpack.c.l.b16 %v1364
    %v5468 = vunpack.c.l.b16 %v1365
    %v5469 = vunpack.c.l.b16 %v1366
    %v5470 = vunpack.c.l.b16 %v1367
    %v5471 = vunpack.c.l.b16 %v1368
    %v5472 = vunpack.c.l.b16 %v1369
    %v5473 = vunpack.c.l.b16 %v1370
    %v5474 = vunpack.c.l.b16 %v1371
    %v5475 = vunpack.c.l.b16 %v1372
    %v5476 = vunpack.c.l.b16 %v1373
    %v5477 = vunpack.c.l.b16 %v1374
    %v5478 = vunpack.c.l.b16 %v1375
    %v5479 = vunpack.c.l.b16 %v1376
    %v5480 = vunpack.c.l.b16 %v1377
    %v5481 = vunpack.c.l.b16 %v1378
    %v5482 = vunpack.c.l.b16 %v1379
    %v5483 = vunpack.c.l.b16 %v1380
    %v5484 = vunpack.c.l.b16 %v1381
    %v5485 = vunpack.c.l.b16 %v1382
    %v5486 = vunpack.c.l.b16 %v1383
    %v5487 = vunpack.c.l.b16 %v1384
    %v5488 = vunpack.c.l.b16 %v1385
    %v5489 = vunpack.c.l.b16 %v1386
    %v5490 = vunpack.c.l.b16 %v1387
    %v5491 = vunpack.c.l.b16 %v1388
    %v5492 = vunpack.c.l.b16 %v1389
    %v5493 = vunpack.c.l.b16 %v1390
    %v5494 = vunpack.c.l.b16 %v1391
    %v5495 = vunpack.c.l.b16 %v1392
    %v5496 = vunpack.c.l.b16 %v1393
    %v5497 = vunpack.c.l.b16 %v1394
    %v5498 = vunpack.c.l.b16 %v1395
    %v5499 = vunpack.c.l.b16 %v1396
    %v5500 = vunpack.c.l.b16 %v1397
    %v5501 = vunpack.c.l.b16 %v1398
    %v5502 = vunpack.c.l.b16 %v1399
    %v5503 = vunpack.c.l.b16 %v1400
    %v5504 = vunpack.c.l.b16 %v1401
    %v5505 = vunpack.c.l.b16 %v1402
    %v5506 = vunpack.c.l.b16 %v1403
    %v5507 = vunpack.c.l.b16 %v1404
    %v5508 = vunpack.c.l.b16 %v1405
    %v5509 = vunpack.c.l.b16 %v1406
    %v5510 = vunpack.c.l.b16 %v1407
    %v5511 = vunpack.c.l.b16 %v1408
    %v5512 = vunpack.c.l.b16 %v1409
    %v5513 = vunpack.c.l.b16 %v1410
    %v5514 = vunpack.c.l.b16 %v1411
    %v5515 = vunpack.c.l.b16 %v1412
    %v5516 = vunpack.c.l.b16 %v1413
    %v5517 = vunpack.c.l.b16 %v1414
    %v5518 = vunpack.c.l.b16 %v1415
    %v5519 = vunpack.c.l.b16 %v1416
    %v5520 = vunpack.c.l.b16 %v1417
    %v5521 = vunpack.c.l.b16 %v1418
    %v5522 = vunpack.c.l.b16 %v1419
    %v5523 = vunpack.c.l.b16 %v1420
    %v5524 = vunpack.c.l.b16 %v1421
    %v5525 = vunpack.c.l.b16 %v1422
    %v5526 = vunpack.c.l.b16 %v1423
    %v5527 = vunpack.c.l.b16 %v1424
    %v5528 = vunpack.c.l.b16 %v1425
    %v5529 = vunpack.c.l.b16 %v1426
    %v5530 = vunpack.c.l.b16 %v1427
    %v5531 = vunpack.c.l.b16 %v1428
    %v5532 = vunpack.c.l.b16 %v1429
    %v5533 = vunpack.c.l.b16 %v1430
    %v5534 = vunpack.c.l.b16 %v1431
    %v5535 = vunpack.c.l.b16 %v1432
    %v5536 = vunpack.c.l.b16 %v1433
    %v5537 = vunpack.c.l.b16 %v1434
    %v5538 = vunpack.c.l.b16 %v1435
    %v5539 = vunpack.c.l.b16 %v1436
    %v5540 = vunpack.c.l.b16 %v1437
    %v5541 = vunpack.c.l.b16 %v1438
    %v5542 = vunpack.c.l.b16 %v1439
    %v5543 = vunpack.c.l.b16 %v1440
    %v5544 = vunpack.c.l.b16 %v1441
    %v5545 = vunpack.c.l.b16 %v1442
    %v5546 = vunpack.c.l.b16 %v1443
    %v5547 = vunpack.c.l.b16 %v1444
    %v5548 = vunpack.c.l.b16 %v1445
    %v5549 = vunpack.c.l.b16 %v1446
    %v5550 = vunpack.c.l.b16 %v1447
    %v5551 = vunpack.c.l.b16 %v1448
    %v5552 = vunpack.c.l.b16 %v1449
    %v5553 = vunpack.c.l.b16 %v1450
    %v5554 = vunpack.c.l.b16 %v1451
    %v5555 = vunpack.c.l.b16 %v1452
    %v5556 = vunpack.c.l.b16 %v1453
    %v5557 = vunpack.c.l.b16 %v1454
    %v5558 = vunpack.c.l.b16 %v1455
    %v5559 = vunpack.c.l.b16 %v1456
    %v5560 = vunpack.c.l.b16 %v1457
    %v5561 = vunpack.c.l.b16 %v1458
    %v5562 = vunpack.c.l.b16 %v1459
    %v5563 = vunpack.c.l.b16 %v1460
    %v5564 = vunpack.c.l.b16 %v1461
    %v5565 = vunpack.c.l.b16 %v1462
    %v5566 = vunpack.c.l.b16 %v1463
    %v5567 = vunpack.c.l.b16 %v1464
    %v5568 = vunpack.c.l.b16 %v1465
    %v5569 = vunpack.c.l.b16 %v1466
    %v5570 = vunpack.c.l.b16 %v1467
    %v5571 = vunpack.c.l.b16 %v1468
    %v5572 = vunpack.c.l.b16 %v1469
    %v5573 = vunpack.c.l.b16 %v1470
    %v5574 = vunpack.c.l.b16 %v1471
    %v5575 = vunpack.c.l.b16 %v1472
    %v5576 = vunpack.c.l.b16 %v1473
    %v5577 = vunpack.c.l.b16 %v1474
    %v5578 = vunpack.c.l.b16 %v1475
    %v5579 = vunpack.c.l.b16 %v1476
    %v5580 = vunpack.c.l.b16 %v1477
    %v5581 = vunpack.c.l.b16 %v1478
    %v5582 = vunpack.c.l.b16 %v1479
    %v5583 = vunpack.c.l.b16 %v1480
    %v5584 = vunpack.c.l.b16 %v1481
    %v5585 = vunpack.c.l.b16 %v1482
    %v5586 = vunpack.c.l.b16 %v1483
    %v5587 = vunpack.c.l.b16 %v1484
    %v5588 = vunpack.c.l.b16 %v1485
    %v5589 = vunpack.c.l.b16 %v1486
    %v5590 = vunpack.c.l.b16 %v1487
    %v5591 = vunpack.c.l.b16 %v1488
    %v5592 = vunpack.c.l.b16 %v1489
    %v5593 = vunpack.c.l.b16 %v1490
    %v5594 = vunpack.c.l.b16 %v1491
    %v5595 = vunpack.c.l.b16 %v1492
    %v5596 = vunpack.c.l.b16 %v1493
    %v5597 = vunpack.c.l.b16 %v1494
    %v5598 = vunpack.c.l.b16 %v1495
    %v5599 = vunpack.c.l.b16 %v1496
    %v5600 = vunpack.c.l.b16 %v1497
    %v5601 = vunpack.c.l.b16 %v1498
    %v5602 = vunpack.c.l.b16 %v1499
    %v5603 = vunpack.c.l.b16 %v1500
    %v5604 = vunpack.c.l.b16 %v1501
    %v5605 = vunpack.c.l.b16 %v1502
    %v5606 = vunpack.c.l.b16 %v1503
    %v5607 = vunpack.c.l.b16 %v1504
    %v5608 = vunpack.c.l.b16 %v1505
    %v5609 = vunpack.c.l.b16 %v1506
    %v5610 = vunpack.c.l.b16 %v1507
    %v5611 = vunpack.c.l.b16 %v1508
    %v5612 = vunpack.c.l.b16 %v1509
    %v5613 = vunpack.c.l.b16 %v1510
    %v5614 = vunpack.c.l.b16 %v1511
    %v5615 = vunpack.c.l.b16 %v1512
    %v5616 = vunpack.c.l.b16 %v1513
    %v5617 = vunpack.c.l.b16 %v1514
    %v5618 = vunpack.c.l.b16 %v1515
    %v5619 = vunpack.c.l.b16 %v1516
    %v5620 = vunpack.c.l.b16 %v1517
    %v5621 = vunpack.c.l.b16 %v1518
    %v5622 = vunpack.c.l.b16 %v1519
    %v5623 = vunpack.c.l.b16 %v1520
    %v5624 = vunpack.c.l.b16 %v1521
    %v5625 = vunpack.c.l.b16 %v1522
    %v5626 = vunpack.c.l.b16 %v1523
    %v5627 = vunpack.c.l.b16 %v1524
    %v5628 = vunpack.c.l.b16 %v1525
    %v5629 = vunpack.c.l.b16 %v1526
    %v5630 = vunpack.c.l.b16 %v1527
    %v5631 = vunpack.c.l.b16 %v1528
    %v5632 = vunpack.c.l.b16 %v1529
    %v5633 = vunpack.c.l.b16 %v1530
    %v5634 = vunpack.c.l.b16 %v1531
    %v5635 = vunpack.c.l.b16 %v1532
    %v5636 = vunpack.c.l.b16 %v1533
    %v5637 = vunpack.c.l.b16 %v1534
    %v5638 = vunpack.c.l.b16 %v1535
    %v5639 = vunpack.c.l.b16 %v1536
    %v5640 = vunpack.c.l.b16 %v1537
    %v5641 = vunpack.c.l.b16 %v1538
    %v5642 = vunpack.c.l.b16 %v1539
    %v5643 = vunpack.c.l.b16 %v1540
    %v5644 = vunpack.c.l.b16 %v1541
    %v5645 = vunpack.c.l.b16 %v1542
    %v5646 = vunpack.c.l.b16 %v1543
    %v5647 = vunpack.c.l.b16 %v1544
    %v5648 = vunpack.c.l.b16 %v1545
    %v5649 = vunpack.c.l.b16 %v1546
    %v5650 = vunpack.c.l.b16 %v1547
    %v5651 = vunpack.c.l.b16 %v1548
    %v5652 = vunpack.c.l.b16 %v1549
    %v5653 = vunpack.c.l.b16 %v1550
    %v5654 = vunpack.c.l.b16 %v1551
    %v5655 = vunpack.c.l.b16 %v1552
    %v5656 = vunpack.c.l.b16 %v1553
    %v5657 = vunpack.c.l.b16 %v1554
    %v5658 = vunpack.c.l.b16 %v1555
    %v5659 = vunpack.c.l.b16 %v1556
    %v5660 = vunpack.c.l.b16 %v1557
    %v5661 = vunpack.c.l.b16 %v1558
    %v5662 = vunpack.c.l.b16 %v1559
    %v5663 = vunpack.c.l.b16 %v1560
    %v5664 = vunpack.c.l.b16 %v1561
    %v5665 = vunpack.c.l.b16 %v1562
    %v5666 = vunpack.c.l.b16 %v1563
    %v5667 = vunpack.c.l.b16 %v1564
    %v5668 = vunpack.c.l.b16 %v1565
    %v5669 = vunpack.c.l.b16 %v1566
    %v5670 = vunpack.c.l.b16 %v1567
    %v5671 = vunpack.c.l.b16 %v1568
    %v5672 = vunpack.c.l.b16 %v1569
    %v5673 = vunpack.c.l.b16 %v1570
    %v5674 = vunpack.c.l.b16 %v1571
    %v5675 = vunpack.c.l.b16 %v1572
    %v5676 = vunpack.c.l.b16 %v1573
    %v5677 = vunpack.c.l.b16 %v1574
    %v5678 = vunpack.c.l.b16 %v1575
    %v5679 = vunpack.c.l.b16 %v1576
    %v5680 = vunpack.c.l.b16 %v1577
    %v5681 = vunpack.c.l.b16 %v1578
    %v5682 = vunpack.c.l.b16 %v1579
    %v5683 = vunpack.c.l.b16 %v1580
    %v5684 = vunpack.c.l.b16 %v1581
    %v5685 = vunpack.c.l.b16 %v1582
    %v5686 = vunpack.c.l.b16 %v1583
    %v5687 = vunpack.c.l.b16 %v1584
    %v5688 = vunpack.c.l.b16 %v1585
    %v5689 = vunpack.c.l.b16 %v1586
    %v5690 = vunpack.c.l.b16 %v1587
    %v5691 = vunpack.c.l.b16 %v1588
    %v5692 = vunpack.c.l.b16 %v1589
    %v5693 = vunpack.c.l.b16 %v1590
    %v5694 = vunpack.c.l.b16 %v1591
    %v5695 = vunpack.c.l.b16 %v1592
    %v5696 = vunpack.c.l.b16 %v1593
    %v5697 = vunpack.c.l.b16 %v1594
    %v5698 = vunpack.c.l.b16 %v1595
    %v5699 = vunpack.c.l.b16 %v1596
    %v5700 = vunpack.c.l.b16 %v1597
    %v5701 = vunpack.c.l.b16 %v1598
    %v5702 = vunpack.c.l.b16 %v1599
    %v5703 = vunpack.c.l.b16 %v1600
    %v5704 = vunpack.c.l.b16 %v1601
    %v5705 = vunpack.c.l.b16 %v1602
    %v5706 = vunpack.c.l.b16 %v1603
    %v5707 = vunpack.c.l.b16 %v1604
    %v5708 = vunpack.c.l.b16 %v1605
    %v5709 = vunpack.c.l.b16 %v1606
    %v5710 = vunpack.c.l.b16 %v1607
    %v5711 = vunpack.c.l.b16 %v1608
    %v5712 = vunpack.c.l.b16 %v1609
    %v5713 = vunpack.c.l.b16 %v1610
    %v5714 = vunpack.c.l.b16 %v1611
    %v5715 = vunpack.c.l.b16 %v1612
    %v5716 = vunpack.c.l.b16 %v1613
    %v5717 = vunpack.c.l.b16 %v1614
    %v5718 = vunpack.c.l.b16 %v1615
    %v5719 = vunpack.c.l.b16 %v1616
    %v5720 = vunpack.c.l.b16 %v1617
    %v5721 = vunpack.c.l.b16 %v1618
    %v5722 = vunpack.c.l.b16 %v1619
    %v5723 = vunpack.c.l.b16 %v1620
    %v5724 = vunpack.c.l.b16 %v1621
    %v5725 = vunpack.c.l.b16 %v1622
    %v5726 = vunpack.c.l.b16 %v1623
    %v5727 = vunpack.c.l.b16 %v1624
    %v5728 = vunpack.c.l.b16 %v1625
    %v5729 = vunpack.c.l.b16 %v1626
    %v5730 = vunpack.c.l.b16 %v1627
    %v5731 = vunpack.c.l.b16 %v1628
    %v5732 = vunpack.c.l.b16 %v1629
    %v5733 = vunpack.c.l.b16 %v1630
    %v5734 = vunpack.c.l.b16 %v1631
    %v5735 = vunpack.c.l.b16 %v1632
    %v5736 = vunpack.c.l.b16 %v1633
    %v5737 = vunpack.c.l.b16 %v1634
    %v5738 = vunpack.c.l.b16 %v1635
    %v5739 = vunpack.c.l.b16 %v1636
    %v5740 = vunpack.c.l.b16 %v1637
    %v5741 = vunpack.c.l.b16 %v1638
    %v5742 = vunpack.c.l.b16 %v1639
    %v5743 = vunpack.c.l.b16 %v1640
    %v5744 = vunpack.c.l.b16 %v1641
    %v5745 = vunpack.c.l.b16 %v1642
    %v5746 = vunpack.c.l.b16 %v1643
    %v5747 = vunpack.c.l.b16 %v1644
    %v5748 = vunpack.c.l.b16 %v1645
    %v5749 = vunpack.c.l.b16 %v1646
    %v5750 = vunpack.c.l.b16 %v1647
    %v5751 = vunpack.c.l.b16 %v1648
    %v5752 = vunpack.c.l.b16 %v1649
    %v5753 = vunpack.c.l.b16 %v1650
    %v5754 = vunpack.c.l.b16 %v1651
    %v5755 = vunpack.c.l.b16 %v1652
    %v5756 = vunpack.c.l.b16 %v1653
    %v5757 = vunpack.c.l.b16 %v1654
    %v5758 = vunpack.c.l.b16 %v1655
    %v5759 = vunpack.c.l.b16 %v1656
    %v5760 = vunpack.c.l.b16 %v1657
    %v5761 = vunpack.c.l.b16 %v1658
    %v5762 = vunpack.c.l.b16 %v1659
    %v5763 = vunpack.c.l.b16 %v1660
    %v5764 = vunpack.c.l.b16 %v1661
    %v5765 = vunpack.c.l.b16 %v1662
    %v5766 = vunpack.c.l.b16 %v1663
    %v5767 = vunpack.c.l.b16 %v1664
    %v5768 = vunpack.c.l.b16 %v1665
    %v5769 = vunpack.c.l.b16 %v1666
    %v5770 = vunpack.c.l.b16 %v1667
    %v5771 = vunpack.c.l.b16 %v1668
    %v5772 = vunpack.c.l.b16 %v1669
    %v5773 = vunpack.c.l.b16 %v1670
    %v5774 = vunpack.c.l.b16 %v1671
    %v5775 = vunpack.c.l.b16 %v1672
    %v5776 = vunpack.c.l.b16 %v1673
    %v5777 = vunpack.c.l.b16 %v1674
    %v5778 = vunpack.c.l.b16 %v1675
    %v5779 = vunpack.c.l.b16 %v1676
    %v5780 = vunpack.c.l.b16 %v1677
    %v5781 = vunpack.c.l.b16 %v1678
    %v5782 = vunpack.c.l.b16 %v1679
    %v5783 = vunpack.c.l.b16 %v1680
    %v5784 = vunpack.c.l.b16 %v1681
    %v5785 = vunpack.c.l.b16 %v1682
    %v5786 = vunpack.c.l.b16 %v1683
    %v5787 = vunpack.c.l.b16 %v1684
    %v5788 = vunpack.c.l.b16 %v1685
    %v5789 = vunpack.c.l.b16 %v1686
    %v5790 = vunpack.c.l.b16 %v1687
    %v5791 = vunpack.c.l.b16 %v1688
    %v5792 = vunpack.c.l.b16 %v1689
    %v5793 = vunpack.c.l.b16 %v1690
    %v5794 = vunpack.c.l.b16 %v1691
    %v5795 = vunpack.c.l.b16 %v1692
    %v5796 = vunpack.c.l.b16 %v1693
    %v5797 = vunpack.c.l.b16 %v1694
    %v5798 = vunpack.c.l.b16 %v1695
    %v5799 = vunpack.c.l.b16 %v1696
    %v5800 = vunpack.c.l.b16 %v1697
    %v5801 = vunpack.c.l.b16 %v1698
    %v5802 = vunpack.c.l.b16 %v1699
    %v5803 = vunpack.c.l.b16 %v1700
    %v5804 = vunpack.c.l.b16 %v1701
    %v5805 = vunpack.c.l.b16 %v1702
    %v5806 = vunpack.c.l.b16 %v1703
    %v5807 = vunpack.c.l.b16 %v1704
    %v5808 = vunpack.c.l.b16 %v1705
    %v5809 = vunpack.c.l.b16 %v1706
    %v5810 = vunpack.c.l.b16 %v1707
    %v5811 = vunpack.c.l.b16 %v1708
    %v5812 = vunpack.c.l.b16 %v1709
    %v5813 = vunpack.c.l.b16 %v1710
    %v5814 = vunpack.c.l.b16 %v1711
    %v5815 = vunpack.c.l.b16 %v1712
    %v5816 = vunpack.c.l.b16 %v1713
    %v5817 = vunpack.c.l.b16 %v1714
    %v5818 = vunpack.c.l.b16 %v1715
    %v5819 = vunpack.c.l.b16 %v1716
    %v5820 = vunpack.c.l.b16 %v1717
    %v5821 = vunpack.c.l.b16 %v1718
    %v5822 = vunpack.c.l.b16 %v1719
    %v5823 = vunpack.c.l.b16 %v1720
    %v5824 = vunpack.c.l.b16 %v1721
    %v5825 = vunpack.c.l.b16 %v1722
    %v5826 = vunpack.c.l.b16 %v1723
    %v5827 = vunpack.c.l.b16 %v1724
    %v5828 = vunpack.c.l.b16 %v1725
    %v5829 = vunpack.c.l.b16 %v1726
    %v5830 = vunpack.c.l.b16 %v1727
    %v5831 = vunpack.c.l.b16 %v1728
    %v5832 = vunpack.c.l.b16 %v1729
    %v5833 = vunpack.c.l.b16 %v1730
    %v5834 = vunpack.c.l.b16 %v1731
    %v5835 = vunpack.c.l.b16 %v1732
    %v5836 = vunpack.c.l.b16 %v1733
    %v5837 = vunpack.c.l.b16 %v1734
    %v5838 = vunpack.c.l.b16 %v1735
    %v5839 = vunpack.c.l.b16 %v1736
    %v5840 = vunpack.c.l.b16 %v1737
    %v5841 = vunpack.c.l.b16 %v1738
    %v5842 = vunpack.c.l.b16 %v1739
    %v5843 = vunpack.c.l.b16 %v1740
    %v5844 = vunpack.c.l.b16 %v1741
    %v5845 = vunpack.c.l.b16 %v1742
    %v5846 = vunpack.c.l.b16 %v1743
    %v5847 = vunpack.c.l.b16 %v1744
    %v5848 = vunpack.c.l.b16 %v1745
    %v5849 = vunpack.c.l.b16 %v1746
    %v5850 = vunpack.c.l.b16 %v1747
    %v5851 = vunpack.c.l.b16 %v1748
    %v5852 = vunpack.c.l.b16 %v1749
    %v5853 = vunpack.c.l.b16 %v1750
    %v5854 = vunpack.c.l.b16 %v1751
    %v5855 = vunpack.c.l.b16 %v1752
    %v5856 = vunpack.c.l.b16 %v1753
    %v5857 = vunpack.c.l.b16 %v1754
    %v5858 = vunpack.c.l.b16 %v1755
    %v5859 = vunpack.c.l.b16 %v1756
    %v5860 = vunpack.c.l.b16 %v1757
    %v5861 = vunpack.c.l.b16 %v1758
    %v5862 = vunpack.c.l.b16 %v1759
    %v5863 = vunpack.c.l.b16 %v1760
    %v5864 = vunpack.c.l.b16 %v1761
    %v5865 = vunpack.c.l.b16 %v1762
    %v5866 = vunpack.c.l.b16 %v1763
    %v5867 = vunpack.c.l.b16 %v1764
    %v5868 = vunpack.c.l.b16 %v1765
    %v5869 = vunpack.c.l.b16 %v1766
    %v5870 = vunpack.c.l.b16 %v1767
    %v5871 = vunpack.c.l.b16 %v1768
    %v5872 = vunpack.c.l.b16 %v1769
    %v5873 = vunpack.c.l.b16 %v1770
    %v5874 = vunpack.c.l.b16 %v1771
    %v5875 = vunpack.c.l.b16 %v1772
    %v5876 = vunpack.c.l.b16 %v1773
    %v5877 = vunpack.c.l.b16 %v1774
    %v5878 = vunpack.c.l.b16 %v1775
    %v5879 = vunpack.c.l.b16 %v1776
    %v5880 = vunpack.c.l.b16 %v1777
    %v5881 = vunpack.c.l.b16 %v1778
    %v5882 = vunpack.c.l.b16 %v1779
    %v5883 = vunpack.c.l.b16 %v1780
    %v5884 = vunpack.c.l.b16 %v1781
    %v5885 = vunpack.c.l.b16 %v1782
    %v5886 = vunpack.c.l.b16 %v1783
    %v5887 = vunpack.c.l.b16 %v1784
    %v5888 = vunpack.c.l.b16 %v1785
    %v5889 = vunpack.c.l.b16 %v1786
    %v5890 = vunpack.c.l.b16 %v1787
    %v5891 = vunpack.c.l.b16 %v1788
    %v5892 = vunpack.c.l.b16 %v1789
    %v5893 = vunpack.c.l.b16 %v1790
    %v5894 = vunpack.c.l.b16 %v1791
    %v5895 = vunpack.c.l.b16 %v1792
    %v5896 = vunpack.c.l.b16 %v1793
    %v5897 = vunpack.c.l.b16 %v1794
    %v5898 = vunpack.c.l.b16 %v1795
    %v5899 = vunpack.c.l.b16 %v1796
    %v5900 = vunpack.c.l.b16 %v1797
    %v5901 = vunpack.c.l.b16 %v1798
    %v5902 = vunpack.c.l.b16 %v1799
    %v5903 = vunpack.c.l.b16 %v1800
    %v5904 = vunpack.c.l.b16 %v1801
    %v5905 = vunpack.c.l.b16 %v1802
    %v5906 = vunpack.c.l.b16 %v1803
    %v5907 = vunpack.c.l.b16 %v1804
    %v5908 = vunpack.c.l.b16 %v1805
    %v5909 = vunpack.c.l.b16 %v1806
    %v5910 = vunpack.c.l.b16 %v1807
    %v5911 = vunpack.c.l.b16 %v1808
    %v5912 = vunpack.c.l.b16 %v1809
    %v5913 = vunpack.c.l.b16 %v1810
    %v5914 = vunpack.c.l.b16 %v1811
    %v5915 = vunpack.c.l.b16 %v1812
    %v5916 = vunpack.c.l.b16 %v1813
    %v5917 = vunpack.c.l.b16 %v1814
    %v5918 = vunpack.c.l.b16 %v1815
    %v5919 = vunpack.c.l.b16 %v1816
    %v5920 = vunpack.c.l.b16 %v1817
    %v5921 = vunpack.c.l.b16 %v1818
    %v5922 = vunpack.c.l.b16 %v1819
    %v5923 = vunpack.c.l.b16 %v1820
    %v5924 = vunpack.c.l.b16 %v1821
    %v5925 = vunpack.c.l.b16 %v1822
    %v5926 = vunpack.c.l.b16 %v1823
    %v5927 = vunpack.c.l.b16 %v1824
    %v5928 = vunpack.c.l.b16 %v1825
    %v5929 = vunpack.c.l.b16 %v1826
    %v5930 = vunpack.c.l.b16 %v1827
    %v5931 = vunpack.c.l.b16 %v1828
    %v5932 = vunpack.c.l.b16 %v1829
    %v5933 = vunpack.c.l.b16 %v1830
    %v5934 = vunpack.c.l.b16 %v1831
    %v5935 = vunpack.c.l.b16 %v1832
    %v5936 = vunpack.c.l.b16 %v1833
    %v5937 = vunpack.c.l.b16 %v1834
    %v5938 = vunpack.c.l.b16 %v1835
    %v5939 = vunpack.c.l.b16 %v1836
    %v5940 = vunpack.c.l.b16 %v1837
    %v5941 = vunpack.c.l.b16 %v1838
    %v5942 = vunpack.c.l.b16 %v1839
    %v5943 = vunpack.c.l.b16 %v1840
    %v5944 = vunpack.c.l.b16 %v1841
    %v5945 = vunpack.c.l.b16 %v1842
    %v5946 = vunpack.c.l.b16 %v1843
    %v5947 = vunpack.c.l.b16 %v1844
    %v5948 = vunpack.c.l.b16 %v1845
    %v5949 = vunpack.c.l.b16 %v1846
    %v5950 = vunpack.c.l.b16 %v1847
    %v5951 = vunpack.c.l.b16 %v1848
    %v5952 = vunpack.c.l.b16 %v1849
    %v5953 = vunpack.c.l.b16 %v1850
    %v5954 = vunpack.c.l.b16 %v1851
    %v5955 = vunpack.c.l.b16 %v1852
    %v5956 = vunpack.c.l.b16 %v1853
    %v5957 = vunpack.c.l.b16 %v1854
    %v5958 = vunpack.c.l.b16 %v1855
    %v5959 = vunpack.c.l.b16 %v1856
    %v5960 = vunpack.c.l.b16 %v1857
    %v5961 = vunpack.c.l.b16 %v1858
    %v5962 = vunpack.c.l.b16 %v1859
    %v5963 = vunpack.c.l.b16 %v1860
    %v5964 = vunpack.c.l.b16 %v1861
    %v5965 = vunpack.c.l.b16 %v1862
    %v5966 = vunpack.c.l.b16 %v1863
    %v5967 = vunpack.c.l.b16 %v1864
    %v5968 = vunpack.c.l.b16 %v1865
    %v5969 = vunpack.c.l.b16 %v1866
    %v5970 = vunpack.c.l.b16 %v1867
    %v5971 = vunpack.c.l.b16 %v1868
    %v5972 = vunpack.c.l.b16 %v1869
    %v5973 = vunpack.c.l.b16 %v1870
    %v5974 = vunpack.c.l.b16 %v1871
    %v5975 = vunpack.c.l.b16 %v1872
    %v5976 = vunpack.c.l.b16 %v1873
    %v5977 = vunpack.c.l.b16 %v1874
    %v5978 = vunpack.c.l.b16 %v1875
    %v5979 = vunpack.c.l.b16 %v1876
    %v5980 = vunpack.c.l.b16 %v1877
    %v5981 = vunpack.c.l.b16 %v1878
    %v5982 = vunpack.c.l.b16 %v1879
    %v5983 = vunpack.c.l.b16 %v1880
    %v5984 = vunpack.c.l.b16 %v1881
    %v5985 = vunpack.c.l.b16 %v1882
    %v5986 = vunpack.c.l.b16 %v1883
    %v5987 = vunpack.c.l.b16 %v1884
    %v5988 = vunpack.c.l.b16 %v1885
    %v5989 = vunpack.c.l.b16 %v1886
    %v5990 = vunpack.c.l.b16 %v1887
    %v5991 = vunpack.c.l.b16 %v1888
    %v5992 = vunpack.c.l.b16 %v1889
    %v5993 = vunpack.c.l.b16 %v1890
    %v5994 = vunpack.c.l.b16 %v1891
    %v5995 = vunpack.c.l.b16 %v1892
    %v5996 = vunpack.c.l.b16 %v1893
    %v5997 = vunpack.c.l.b16 %v1894
    %v5998 = vunpack.c.l.b16 %v1895
    %v5999 = vunpack.c.l.b16 %v1896
    %v6000 = vunpack.c.l.b16 %v1897
    %v6001 = vunpack.c.l.b16 %v1898
    %v6002 = vunpack.c.l.b16 %v1899
    %v6003 = vunpack.c.l.b16 %v1900
    %v6004 = vunpack.c.l.b16 %v1901
    %v6005 = vunpack.c.l.b16 %v1902
    %v6006 = vunpack.c.l.b16 %v1903
    %v6007 = vunpack.c.l.b16 %v1904
    %v6008 = vunpack.c.l.b16 %v1905
    %v6009 = vunpack.c.l.b16 %v1906
    %v6010 = vunpack.c.l.b16 %v1907
    %v6011 = vunpack.c.l.b16 %v1908
    %v6012 = vunpack.c.l.b16 %v1909
    %v6013 = vunpack.c.l.b16 %v1910
    %v6014 = vunpack.c.l.b16 %v1911
    %v6015 = vunpack.c.l.b16 %v1912
    %v6016 = vunpack.c.l.b16 %v1913
    %v6017 = vunpack.c.l.b16 %v1914
    %v6018 = vunpack.c.l.b16 %v1915
    %v6019 = vunpack.c.l.b16 %v1916
    %v6020 = vunpack.c.l.b16 %v1917
    %v6021 = vunpack.c.l.b16 %v1918
    %v6022 = vunpack.c.l.b16 %v1919
    %v6023 = vunpack.c.l.b16 %v1920
    %v6024 = vunpack.c.l.b16 %v1921
    %v6025 = vunpack.c.l.b16 %v1922
    %v6026 = vunpack.c.l.b16 %v1923
    %v6027 = vunpack.c.l.b16 %v1924
    %v6028 = vunpack.c.l.b16 %v1925
    %v6029 = vunpack.c.l.b16 %v1926
    %v6030 = vunpack.c.l.b16 %v1927
    %v6031 = vunpack.c.l.b16 %v1928
    %v6032 = vunpack.c.l.b16 %v1929
    %v6033 = vunpack.c.l.b16 %v1930
    %v6034 = vunpack.c.l.b16 %v1931
    %v6035 = vunpack.c.l.b16 %v1932
    %v6036 = vunpack.c.l.b16 %v1933
    %v6037 = vunpack.c.l.b16 %v1934
    %v6038 = vunpack.c.l.b16 %v1935
    %v6039 = vunpack.c.l.b16 %v1936
    %v6040 = vunpack.c.l.b16 %v1937
    %v6041 = vunpack.c.l.b16 %v1938
    %v6042 = vunpack.c.l.b16 %v1939
    %v6043 = vunpack.c.l.b16 %v1940
    %v6044 = vunpack.c.l.b16 %v1941
    %v6045 = vunpack.c.l.b16 %v1942
    %v6046 = vunpack.c.l.b16 %v1943
    %v6047 = vunpack.c.l.b16 %v1944
    %v6048 = vunpack.c.l.b16 %v1945
    %v6049 = vunpack.c.l.b16 %v1946
    %v6050 = vunpack.c.l.b16 %v1947
    %v6051 = vunpack.c.l.b16 %v1948
    %v6052 = vunpack.c.l.b16 %v1949
    %v6053 = vunpack.c.l.b16 %v1950
    %v6054 = vunpack.c.l.b16 %v1951
    %v6055 = vunpack.c.l.b16 %v1952
    %v6056 = vunpack.c.l.b16 %v1953
    %v6057 = vunpack.c.l.b16 %v1954
    %v6058 = vunpack.c.l.b16 %v1955
    %v6059 = vunpack.c.l.b16 %v1956
    %v6060 = vunpack.c.l.b16 %v1957
    %v6061 = vunpack.c.l.b16 %v1958
    %v6062 = vunpack.c.l.b16 %v1959
    %v6063 = vunpack.c.l.b16 %v1960
    %v6064 = vunpack.c.l.b16 %v1961
    %v6065 = vunpack.c.l.b16 %v1962
    %v6066 = vunpack.c.l.b16 %v1963
    %v6067 = vunpack.c.l.b16 %v1964
    %v6068 = vunpack.c.l.b16 %v1965
    %v6069 = vunpack.c.l.b16 %v1966
    %v6070 = vunpack.c.l.b16 %v1967
    %v6071 = vunpack.c.l.b16 %v1968
    %v6072 = vunpack.c.l.b16 %v1969
    %v6073 = vunpack.c.l.b16 %v1970
    %v6074 = vunpack.c.l.b16 %v1971
    %v6075 = vunpack.c.l.b16 %v1972
    %v6076 = vunpack.c.l.b16 %v1973
    %v6077 = vunpack.c.l.b16 %v1974
    %v6078 = vunpack.c.l.b16 %v1975
    %v6079 = vunpack.c.l.b16 %v1976
    %v6080 = vunpack.c.l.b16 %v1977
    %v6081 = vunpack.c.l.b16 %v1978
    %v6082 = vunpack.c.l.b16 %v1979
    %v6083 = vunpack.c.l.b16 %v1980
    %v6084 = vunpack.c.l.b16 %v1981
    %v6085 = vunpack.c.l.b16 %v1982
    %v6086 = vunpack.c.l.b16 %v1983
    %v6087 = vunpack.c.l.b16 %v1984
    %v6088 = vunpack.c.l.b16 %v1985
    %v6089 = vunpack.c.l.b16 %v1986
    %v6090 = vunpack.c.l.b16 %v1987
    %v6091 = vunpack.c.l.b16 %v1988
    %v6092 = vunpack.c.l.b16 %v1989
    %v6093 = vunpack.c.l.b16 %v1990
    %v6094 = vunpack.c.l.b16 %v1991
    %v6095 = vunpack.c.l.b16 %v1992
    %v6096 = vunpack.c.l.b16 %v1993
    %v6097 = vunpack.c.l.b16 %v1994
    %v6098 = vunpack.c.l.b16 %v1995
    %v6099 = vunpack.c.l.b16 %v1996
    %v6100 = vunpack.c.l.b16 %v1997
    %v6101 = vunpack.c.l.b16 %v1998
    %v6102 = vunpack.c.l.b16 %v1999
    %v6103 = vunpack.c.l.b16 %v2000
    %v6104 = vunpack.c.l.b16 %v2001
    %v6105 = vunpack.c.l.b16 %v2002
    %v6106 = vunpack.c.l.b16 %v2003
    %v6107 = vunpack.c.l.b16 %v2004
    %v6108 = vunpack.c.l.b16 %v2005
    %v6109 = vunpack.c.l.b16 %v2006
    %v6110 = vunpack.c.l.b16 %v2007
    %v6111 = vunpack.c.l.b16 %v2008
    %v6112 = vunpack.c.l.b16 %v2009
    %v6113 = vunpack.c.l.b16 %v2010
    %v6114 = vunpack.c.l.b16 %v2011
    %v6115 = vunpack.c.l.b16 %v2012
    %v6116 = vunpack.c.l.b16 %v2013
    %v6117 = vunpack.c.l.b16 %v2014
    %v6118 = vunpack.c.l.b16 %v2015
    %v6119 = vunpack.c.l.b16 %v2016
    %v6120 = vunpack.c.l.b16 %v2017
    %v6121 = vunpack.c.l.b16 %v2018
    %v6122 = vunpack.c.l.b16 %v2019
    %v6123 = vunpack.c.l.b16 %v2020
    %v6124 = vunpack.c.l.b16 %v2021
    %v6125 = vunpack.c.l.b16 %v2022
    %v6126 = vunpack.c.l.b16 %v2023
    %v6127 = vunpack.c.l.b16 %v2024
    %v6128 = vunpack.c.l.b16 %v2025
    %v6129 = vunpack.c.l.b16 %v2026
    %v6130 = vunpack.c.l.b16 %v2027
    %v6131 = vunpack.c.l.b16 %v2028
    %v6132 = vunpack.c.l.b16 %v2029
    %v6133 = vunpack.c.l.b16 %v2030
    %v6134 = vunpack.c.l.b16 %v2031
    %v6135 = vunpack.c.l.b16 %v2032
    %v6136 = vunpack.c.l.b16 %v2033
    %v6137 = vunpack.c.l.b16 %v2034
    %v6138 = vunpack.c.l.b16 %v2035
    %v6139 = vunpack.c.l.b16 %v2036
    %v6140 = vunpack.c.l.b16 %v2037
    %v6141 = vunpack.c.l.b16 %v2038
    %v6142 = vunpack.c.l.b16 %v2039
    %v6143 = vunpack.c.l.b16 %v2040
    %v6144 = vunpack.c.l.b16 %v2041
    %v6145 = vunpack.c.l.b16 %v2042
    %v6146 = vunpack.c.l.b16 %v2043
    %v6147 = vunpack.c.l.b16 %v2044
    %v6148 = vunpack.c.l.b16 %v2045
    %v6149 = vunpack.c.l.b16 %v2046
    %v6150 = vunpack.c.l.b16 %v2047
    %v6151 = vunpack.c.l.b16 %v2048
    %v6152 = vunpack.c.l.b16 %v2049
    %v6153 = vunpack.c.l.b16 %v2050
    %v6154 = vunpack.c.l.b16 %v2051
    %v6155 = vunpack.c.l.b16 %v2052
    %v6156 = vunpack.c.l.b16 %v2053
    %v6157 = vunpack.c.l.b16 %v2054
    %v6158 = vunpack.c.l.b16 %v2055
    %v6159 = vunpack.c.l.b16 %v2056
    %v6160 = vunpack.c.l.b16 %v2057
    %v6161 = vunpack.c.l.b16 %v2058
    %v6162 = vunpack.c.l.b16 %v2059
    %v6163 = vunpack.c.l.b16 %v2060
    %v6164 = vunpack.c.l.b16 %v2061
    %v6165 = vunpack.c.l.b16 %v2062
    %v6166 = vunpack.c.l.b16 %v2063
    %v6167 = vunpack.c.l.b16 %v2064
    %v6168 = vunpack.c.l.b16 %v2065
    %v6169 = vunpack.c.l.b16 %v2066
    %v6170 = vunpack.c.l.b16 %v2067
    %v6171 = vunpack.c.l.b16 %v2068
    %v6172 = vunpack.c.l.b16 %v2069
    %v6173 = vunpack.c.l.b16 %v2070
    %v6174 = vunpack.c.l.b16 %v2071
    %v6175 = vunpack.c.l.b16 %v2072
    %v6176 = vunpack.c.l.b16 %v2073
    %v6177 = vunpack.c.l.b16 %v2074
    %v6178 = vunpack.c.l.b16 %v2075
    %v6179 = vunpack.c.l.b16 %v2076
    %v6180 = vunpack.c.l.b16 %v2077
    %v6181 = vunpack.c.l.b16 %v2078
    %v6182 = vunpack.c.l.b16 %v2079
    %v6183 = vunpack.c.l.b16 %v2080
    %v6184 = vunpack.c.l.b16 %v2081
    %v6185 = vunpack.c.l.b16 %v2082
    %v6186 = vunpack.c.l.b16 %v2083
    %v6187 = vunpack.c.l.b16 %v2084
    %v6188 = vunpack.c.l.b16 %v2085
    %v6189 = vunpack.c.l.b16 %v2086
    %v6190 = vunpack.c.l.b16 %v2087
    %v6191 = vunpack.c.l.b16 %v2088
    %v6192 = vunpack.c.l.b16 %v2089
    %v6193 = vunpack.c.l.b16 %v2090
    %v6194 = vunpack.c.l.b16 %v2091
    %v6195 = vunpack.c.l.b16 %v2092
    %v6196 = vunpack.c.l.b16 %v2093
    %v6197 = vunpack.c.l.b16 %v2094
    %v6198 = vunpack.c.l.b16 %v2095
    %v6199 = vunpack.c.l.b16 %v2096
    %v6200 = vunpack.c.l.b16 %v2097
    %v6201 = vunpack.c.l.b16 %v2098
    %v6202 = vunpack.c.l.b16 %v2099
    %v6203 = vunpack.c.l.b16 %v2100
    %v6204 = vunpack.c.l.b16 %v2101
    %v6205 = vunpack.c.l.b16 %v2102
    %v6206 = vunpack.c.l.b16 %v2103
    %v6207 = vunpack.c.l.b16 %v2104
    %v6208 = vunpack.c.l.b16 %v2105
    %v6209 = vunpack.c.l.b16 %v2106
    %v6210 = vunpack.c.l.b16 %v2107
    %v6211 = vunpack.c.l.b16 %v2108
    %v6212 = vunpack.c.l.b16 %v2109
    %v6213 = vunpack.c.l.b16 %v2110
    %v6214 = vunpack.c.l.b16 %v2111
    %v6215 = vunpack.c.l.b16 %v2112
    %v6216 = vunpack.c.l.b16 %v2113
    %v6217 = vunpack.c.l.b16 %v2114
    %v6218 = vunpack.c.l.b16 %v2115
    %v6219 = vunpack.c.l.b16 %v2116
    %v6220 = vunpack.c.l.b16 %v2117
    %v6221 = vunpack.c.l.b16 %v2118
    %v6222 = vunpack.c.l.b16 %v2119
    %v6223 = vunpack.c.l.b16 %v2120
    %v6224 = vunpack.c.l.b16 %v2121
    %v6225 = vunpack.c.l.b16 %v2122
    %v6226 = vunpack.c.l.b16 %v2123
    %v6227 = vunpack.c.l.b16 %v2124
    %v6228 = vunpack.c.l.b16 %v2125
    %v6229 = vunpack.c.l.b16 %v2126
    %v6230 = vunpack.c.l.b16 %v2127
    %v6231 = vunpack.c.l.b16 %v2128
    %v6232 = vunpack.c.l.b16 %v2129
    %v6233 = vunpack.c.l.b16 %v2130
    %v6234 = vunpack.c.l.b16 %v2131
    %v6235 = vunpack.c.l.b16 %v2132
    %v6236 = vunpack.c.l.b16 %v2133
    %v6237 = vunpack.c.l.b16 %v2134
    %v6238 = vunpack.c.l.b16 %v2135
    %v6239 = vunpack.c.l.b16 %v2136
    %v6240 = vunpack.c.l.b16 %v2137
    %v6241 = vunpack.c.l.b16 %v2138
    %v6242 = vunpack.c.l.b16 %v2139
    %v6243 = vunpack.c.l.b16 %v2140
    %v6244 = vunpack.c.l.b16 %v2141
    %v6245 = vunpack.c.l.b16 %v2142
    %v6246 = vunpack.c.l.b16 %v2143
    %v6247 = vunpack.c.l.b16 %v2144
    %v6248 = vunpack.c.l.b16 %v2145
    %v6249 = vunpack.c.l.b16 %v2146
    %v6250 = vunpack.c.l.b16 %v2147
    %v6251 = vunpack.c.l.b16 %v2148
    %v6252 = vunpack.c.l.b16 %v2149
    %v6253 = vunpack.c.l.b16 %v2150
    %v6254 = vunpack.c.l.b16 %v2151
    %v6255 = vunpack.c.l.b16 %v2152
    %v6256 = vunpack.c.l.b16 %v2153
    %v6257 = vunpack.c.l.b16 %v2154
    %v6258 = vunpack.c.l.b16 %v2155
    %v6259 = vunpack.c.l.b16 %v2156
    %v6260 = vunpack.c.l.b16 %v2157
    %v6261 = vunpack.c.l.b16 %v2158
    %v6262 = vunpack.c.l.b16 %v2159
    %v6263 = vunpack.c.l.b16 %v2160
    %v6264 = vunpack.c.l.b16 %v2161
    %v6265 = vunpack.c.l.b16 %v2162
    %v6266 = vunpack.c.l.b16 %v2163
    %v6267 = vunpack.c.l.b16 %v2164
    %v6268 = vunpack.c.l.b16 %v2165
    %v6269 = vunpack.c.l.b16 %v2166
    %v6270 = vunpack.c.l.b16 %v2167
    %v6271 = vunpack.c.l.b16 %v2168
    %v6272 = vunpack.c.l.b16 %v2169
    %v6273 = vunpack.c.l.b16 %v2170
    %v6274 = vunpack.c.l.b16 %v2171
    %v6275 = vunpack.c.l.b16 %v2172
    %v6276 = vunpack.c.l.b16 %v2173
    %v6277 = vunpack.c.l.b16 %v2174
    %v6278 = vunpack.c.l.b16 %v2175
    %v6279 = vunpack.c.l.b16 %v2176
    %v6280 = vunpack.c.l.b16 %v2177
    %v6281 = vunpack.c.l.b16 %v2178
    %v6282 = vunpack.c.l.b16 %v2179
    %v6283 = vunpack.c.l.b16 %v2180
    %v6284 = vunpack.c.l.b16 %v2181
    %v6285 = vunpack.c.l.b16 %v2182
    %v6286 = vunpack.c.l.b16 %v2183
    %v6287 = vunpack.c.l.b16 %v2184
    %v6288 = vunpack.c.l.b16 %v2185
    %v6289 = vunpack.c.l.b16 %v2186
    %v6290 = vunpack.c.l.b16 %v2187
    %v6291 = vunpack.c.l.b16 %v2188
    %v6292 = vunpack.c.l.b16 %v2189
    %v6293 = vunpack.c.l.b16 %v2190
    %v6294 = vunpack.c.l.b16 %v2191
    %v6295 = vunpack.c.l.b16 %v2192
    %v6296 = vunpack.c.l.b16 %v2193
    %v6297 = vunpack.c.l.b16 %v2194
    %v6298 = vunpack.c.l.b16 %v2195
    %v6299 = vunpack.c.l.b16 %v2196
    %v6300 = vunpack.c.l.b16 %v2197
    %v6301 = vunpack.c.l.b16 %v2198
    %v6302 = vunpack.c.l.b16 %v2199
    %v6303 = vunpack.c.l.b16 %v2200
    %v6304 = vunpack.c.l.b16 %v2201
    %v6305 = vunpack.c.l.b16 %v2202
    %v6306 = vunpack.c.l.b16 %v2203
    %v6307 = vunpack.c.l.b16 %v2204
    %v6308 = vunpack.c.l.b16 %v2205
    %v6309 = vunpack.c.l.b16 %v2206
    %v6310 = vunpack.c.l.b16 %v2207
    %v6311 = vunpack.c.l.b16 %v2208
    %v6312 = vunpack.c.l.b16 %v2209
    %v6313 = vunpack.c.l.b16 %v2210
    %v6314 = vunpack.c.l.b16 %v2211
    %v6315 = vunpack.c.l.b16 %v2212
    %v6316 = vunpack.c.l.b16 %v2213
    %v6317 = vunpack.c.l.b16 %v2214
    %v6318 = vunpack.c.l.b16 %v2215
    %v6319 = vunpack.c.l.b16 %v2216
    %v6320 = vunpack.c.l.b16 %v2217
    %v6321 = vunpack.c.l.b16 %v2218
    %v6322 = vunpack.c.l.b16 %v2219
    %v6323 = vunpack.c.l.b16 %v2220
    %v6324 = vunpack.c.l.b16 %v2221
    %v6325 = vunpack.c.l.b16 %v2222
    %v6326 = vunpack.c.l.b16 %v2223
    %v6327 = vunpack.c.l.b16 %v2224
    %v6328 = vunpack.c.l.b16 %v2225
    %v6329 = vunpack.c.l.b16 %v2226
    %v6330 = vunpack.c.l.b16 %v2227
    %v6331 = vunpack.c.l.b16 %v2228
    %v6332 = vunpack.c.l.b16 %v2229
    %v6333 = vunpack.c.l.b16 %v2230
    %v6334 = vunpack.c.l.b16 %v2231
    %v6335 = vunpack.c.l.b16 %v2232
    %v6336 = vunpack.c.l.b16 %v2233
    %v6337 = vunpack.c.l.b16 %v2234
    %v6338 = vunpack.c.l.b16 %v2235
    %v6339 = vunpack.c.l.b16 %v2236
    %v6340 = vunpack.c.l.b16 %v2237
    %v6341 = vunpack.c.l.b16 %v2238
    %v6342 = vunpack.c.l.b16 %v2239
    %v6343 = vunpack.c.l.b16 %v2240
    %v6344 = vunpack.c.l.b16 %v2241
    %v6345 = vunpack.c.l.b16 %v2242
    %v6346 = vunpack.c.l.b16 %v2243
    %v6347 = vunpack.c.l.b16 %v2244
    %v6348 = vunpack.c.l.b16 %v2245
    %v6349 = vunpack.c.l.b16 %v2246
    %v6350 = vunpack.c.l.b16 %v2247
    %v6351 = vunpack.c.l.b16 %v2248
    %v6352 = vunpack.c.l.b16 %v2249
    %v6353 = vunpack.c.l.b16 %v2250
    %v6354 = vunpack.c.l.b16 %v2251
    %v6355 = vunpack.c.l.b16 %v2252
    %v6356 = vunpack.c.l.b16 %v2253
    %v6357 = vunpack.c.l.b16 %v2254
    %v6358 = vunpack.c.l.b16 %v2255
    %v6359 = vunpack.c.l.b16 %v2256
    %v6360 = vunpack.c.l.b16 %v2257
    %v6361 = vunpack.c.l.b16 %v2258
    %v6362 = vunpack.c.l.b16 %v2259
    %v6363 = vunpack.c.l.b16 %v2260
    %v6364 = vunpack.c.l.b16 %v2261
    %v6365 = vunpack.c.l.b16 %v2262
    %v6366 = vunpack.c.l.b16 %v2263
    %v6367 = vunpack.c.l.b16 %v2264
    %v6368 = vunpack.c.l.b16 %v2265
    %v6369 = vunpack.c.l.b16 %v2266
    %v6370 = vunpack.c.l.b16 %v2267
    %v6371 = vunpack.c.l.b16 %v2268
    %v6372 = vunpack.c.l.b16 %v2269
    %v6373 = vunpack.c.l.b16 %v2270
    %v6374 = vunpack.c.l.b16 %v2271
    %v6375 = vunpack.c.l.b16 %v2272
    %v6376 = vunpack.c.l.b16 %v2273
    %v6377 = vunpack.c.l.b16 %v2274
    %v6378 = vunpack.c.l.b16 %v2275
    %v6379 = vunpack.c.l.b16 %v2276
    %v6380 = vunpack.c.l.b16 %v2277
    %v6381 = vunpack.c.l.b16 %v2278
    %v6382 = vunpack.c.l.b16 %v2279
    %v6383 = vunpack.c.l.b16 %v2280
    %v6384 = vunpack.c.l.b16 %v2281
    %v6385 = vunpack.c.l.b16 %v2282
    %v6386 = vunpack.c.l.b16 %v2283
    %v6387 = vunpack.c.l.b16 %v2284
    %v6388 = vunpack.c.l.b16 %v2285
    %v6389 = vunpack.c.l.b16 %v2286
    %v6390 = vunpack.c.l.b16 %v2287
    %v6391 = vunpack.c.l.b16 %v2288
    %v6392 = vunpack.c.l.b16 %v2289
    %v6393 = vunpack.c.l.b16 %v2290
    %v6394 = vunpack.c.l.b16 %v2291
    %v6395 = vunpack.c.l.b16 %v2292
    %v6396 = vunpack.c.l.b16 %v2293
    %v6397 = vunpack.c.l.b16 %v2294
    %v6398 = vunpack.c.l.b16 %v2295
    %v6399 = vunpack.c.l.b16 %v2296
    %v6400 = vunpack.c.l.b16 %v2297
    %v6401 = vunpack.c.l.b16 %v2298
    %v6402 = vunpack.c.l.b16 %v2299
    %v6403 = vunpack.c.l.b16 %v2300
    %v6404 = vunpack.c.l.b16 %v2301
    %v6405 = vunpack.c.l.b16 %v2302
    %v6406 = vunpack.c.l.b16 %v2303
    %v6407 = vunpack.c.l.b16 %v2304
    %v6408 = vunpack.c.l.b16 %v2305
    %v6409 = vunpack.c.l.b16 %v2306
    %v6410 = vunpack.c.l.b16 %v2307
    %v6411 = vunpack.c.l.b16 %v2308
    %v6412 = vunpack.c.l.b16 %v2309
    %v6413 = vunpack.c.l.b16 %v2310
    %v6414 = vunpack.c.l.b16 %v2311
    %v6415 = vunpack.c.l.b16 %v2312
    %v6416 = vunpack.c.l.b16 %v2313
    %v6417 = vunpack.c.l.b16 %v2314
    %v6418 = vunpack.c.l.b16 %v2315
    %v6419 = vunpack.c.l.b16 %v2316
    %v6420 = vunpack.c.l.b16 %v2317
    %v6421 = vunpack.c.l.b16 %v2318
    %v6422 = vunpack.c.l.b16 %v2319
    %v6423 = vunpack.c.l.b16 %v2320
    %v6424 = vunpack.c.l.b16 %v2321
    %v6425 = vunpack.c.l.b16 %v2322
    %v6426 = vunpack.c.l.b16 %v2323
    %v6427 = vunpack.c.l.b16 %v2324
    %v6428 = vunpack.c.l.b16 %v2325
    %v6429 = vunpack.c.l.b16 %v2326
    %v6430 = vunpack.c.l.b16 %v2327
    %v6431 = vunpack.c.l.b16 %v2328
    %v6432 = vunpack.c.l.b16 %v2329
    %v6433 = vunpack.c.l.b16 %v2330
    %v6434 = vunpack.c.l.b16 %v2331
    %v6435 = vunpack.c.l.b16 %v2332
    %v6436 = vunpack.c.l.b16 %v2333
    %v6437 = vunpack.c.l.b16 %v2334
    %v6438 = vunpack.c.l.b16 %v2335
    %v6439 = vunpack.c.l.b16 %v2336
    %v6440 = vunpack.c.l.b16 %v2337
    %v6441 = vunpack.c.l.b16 %v2338
    %v6442 = vunpack.c.l.b16 %v2339
    %v6443 = vunpack.c.l.b16 %v2340
    %v6444 = vunpack.c.l.b16 %v2341
    %v6445 = vunpack.c.l.b16 %v2342
    %v6446 = vunpack.c.l.b16 %v2343
    %v6447 = vunpack.c.l.b16 %v2344
    %v6448 = vunpack.c.l.b16 %v2345
    %v6449 = vunpack.c.l.b16 %v2346
    %v6450 = vunpack.c.l.b16 %v2347
    %v6451 = vunpack.c.l.b16 %v2348
    %v6452 = vunpack.c.l.b16 %v2349
    %v6453 = vunpack.c.l.b16 %v2350
    %v6454 = vunpack.c.l.b16 %v2351
    %v6455 = vunpack.c.l.b16 %v2352
    %v6456 = vunpack.c.l.b16 %v2353
    %v6457 = vunpack.c.l.b16 %v2354
    %v6458 = vunpack.c.l.b16 %v2355
    %v6459 = vunpack.c.l.b16 %v2356
    %v6460 = vunpack.c.l.b16 %v2357
    %v6461 = vunpack.c.l.b16 %v2358
    %v6462 = vunpack.c.l.b16 %v2359
    %v6463 = vunpack.c.l.b16 %v2360
    %v6464 = vunpack.c.l.b16 %v2361
    %v6465 = vunpack.c.l.b16 %v2362
    %v6466 = vunpack.c.l.b16 %v2363
    %v6467 = vunpack.c.l.b16 %v2364
    %v6468 = vunpack.c.l.b16 %v2365
    %v6469 = vunpack.c.l.b16 %v2366
    %v6470 = vunpack.c.l.b16 %v2367
    %v6471 = vunpack.c.l.b16 %v2368
    %v6472 = vunpack.c.l.b16 %v2369
    %v6473 = vunpack.c.l.b16 %v2370
    %v6474 = vunpack.c.l.b16 %v2371
    %v6475 = vunpack.c.l.b16 %v2372
    %v6476 = vunpack.c.l.b16 %v2373
    %v6477 = vunpack.c.l.b16 %v2374
    %v6478 = vunpack.c.l.b16 %v2375
    %v6479 = vunpack.c.l.b16 %v2376
    %v6480 = vunpack.c.l.b16 %v2377
    %v6481 = vunpack.c.l.b16 %v2378
    %v6482 = vunpack.c.l.b16 %v2379
    %v6483 = vunpack.c.l.b16 %v2380
    %v6484 = vunpack.c.l.b16 %v2381
    %v6485 = vunpack.c.l.b16 %v2382
    %v6486 = vunpack.c.l.b16 %v2383
    %v6487 = vunpack.c.l.b16 %v2384
    %v6488 = vunpack.c.l.b16 %v2385
    %v6489 = vunpack.c.l.b16 %v2386
    %v6490 = vunpack.c.l.b16 %v2387
    %v6491 = vunpack.c.l.b16 %v2388
    %v6492 = vunpack.c.l.b16 %v2389
    %v6493 = vunpack.c.l.b16 %v2390
    %v6494 = vunpack.c.l.b16 %v2391
    %v6495 = vunpack.c.l.b16 %v2392
    %v6496 = vunpack.c.l.b16 %v2393
    %v6497 = vunpack.c.l.b16 %v2394
    %v6498 = vunpack.c.l.b16 %v2395
    %v6499 = vunpack.c.l.b16 %v2396
    %v6500 = vunpack.c.l.b16 %v2397
    %v6501 = vunpack.c.l.b16 %v2398
    %v6502 = vunpack.c.l.b16 %v2399
    %v6503 = vunpack.c.l.b16 %v2400
    %v6504 = vunpack.c.l.b16 %v2401
    %v6505 = vunpack.c.l.b16 %v2402
    %v6506 = vunpack.c.l.b16 %v2403
    %v6507 = vunpack.c.l.b16 %v2404
    %v6508 = vunpack.c.l.b16 %v2405
    %v6509 = vunpack.c.l.b16 %v2406
    %v6510 = vunpack.c.l.b16 %v2407
    %v6511 = vunpack.c.l.b16 %v2408
    %v6512 = vunpack.c.l.b16 %v2409
    %v6513 = vunpack.c.l.b16 %v2410
    %v6514 = vunpack.c.l.b16 %v2411
    %v6515 = vunpack.c.l.b16 %v2412
    %v6516 = vunpack.c.l.b16 %v2413
    %v6517 = vunpack.c.l.b16 %v2414
    %v6518 = vunpack.c.l.b16 %v2415
    %v6519 = vunpack.c.l.b16 %v2416
    %v6520 = vunpack.c.l.b16 %v2417
    %v6521 = vunpack.c.l.b16 %v2418
    %v6522 = vunpack.c.l.b16 %v2419
    %v6523 = vunpack.c.l.b16 %v2420
    %v6524 = vunpack.c.l.b16 %v2421
    %v6525 = vunpack.c.l.b16 %v2422
    %v6526 = vunpack.c.l.b16 %v2423
    %v6527 = vunpack.c.l.b16 %v2424
    %v6528 = vunpack.c.l.b16 %v2425
    %v6529 = vunpack.c.l.b16 %v2426
    %v6530 = vunpack.c.l.b16 %v2427
    %v6531 = vunpack.c.l.b16 %v2428
    %v6532 = vunpack.c.l.b16 %v2429
    %v6533 = vunpack.c.l.b16 %v2430
    %v6534 = vunpack.c.l.b16 %v2431
    %v6535 = vunpack.c.l.b16 %v2432
    %v6536 = vunpack.c.l.b16 %v2433
    %v6537 = vunpack.c.l.b16 %v2434
    %v6538 = vunpack.c.l.b16 %v2435
    %v6539 = vunpack.c.l.b16 %v2436
    %v6540 = vunpack.c.l.b16 %v2437
    %v6541 = vunpack.c.l.b16 %v2438
    %v6542 = vunpack.c.l.b16 %v2439
    %v6543 = vunpack.c.l.b16 %v2440
    %v6544 = vunpack.c.l.b16 %v2441
    %v6545 = vunpack.c.l.b16 %v2442
    %v6546 = vunpack.c.l.b16 %v2443
    %v6547 = vunpack.c.l.b16 %v2444
    %v6548 = vunpack.c.l.b16 %v2445
    %v6549 = vunpack.c.l.b16 %v2446
    %v6550 = vunpack.c.l.b16 %v2447
    %v6551 = vunpack.c.l.b16 %v2448
    %v6552 = vunpack.c.l.b16 %v2449
    %v6553 = vunpack.c.l.b16 %v2450
    %v6554 = vunpack.c.l.b16 %v2451
    %v6555 = vunpack.c.l.b16 %v2452
    %v6556 = vunpack.c.l.b16 %v2453
    %v6557 = vunpack.c.l.b16 %v2454
    %v6558 = vunpack.c.l.b16 %v2455
    %v6559 = vunpack.c.l.b16 %v2456
    %v6560 = vunpack.c.l.b16 %v2457
    %v6561 = vunpack.c.l.b16 %v2458
    %v6562 = vunpack.c.l.b16 %v2459
    %v6563 = vunpack.c.l.b16 %v2460
    %v6564 = vunpack.c.l.b16 %v2461
    %v6565 = vunpack.c.l.b16 %v2462
    %v6566 = vunpack.c.l.b16 %v2463
    %v6567 = vunpack.c.l.b16 %v2464
    %v6568 = vunpack.c.l.b16 %v2465
    %v6569 = vunpack.c.l.b16 %v2466
    %v6570 = vunpack.c.l.b16 %v2467
    %v6571 = vunpack.c.l.b16 %v2468
    %v6572 = vunpack.c.l.b16 %v2469
    %v6573 = vunpack.c.l.b16 %v2470
    %v6574 = vunpack.c.l.b16 %v2471
    %v6575 = vunpack.c.l.b16 %v2472
    %v6576 = vunpack.c.l.b16 %v2473
    %v6577 = vunpack.c.l.b16 %v2474
    %v6578 = vunpack.c.l.b16 %v2475
    %v6579 = vunpack.c.l.b16 %v2476
    %v6580 = vunpack.c.l.b16 %v2477
    %v6581 = vunpack.c.l.b16 %v2478
    %v6582 = vunpack.c.l.b16 %v2479
    %v6583 = vunpack.c.l.b16 %v2480
    %v6584 = vunpack.c.l.b16 %v2481
    %v6585 = vunpack.c.l.b16 %v2482
    %v6586 = vunpack.c.l.b16 %v2483
    %v6587 = vunpack.c.l.b16 %v2484
    %v6588 = vunpack.c.l.b16 %v2485
    %v6589 = vunpack.c.l.b16 %v2486
    %v6590 = vunpack.c.l.b16 %v2487
    %v6591 = vunpack.c.l.b16 %v2488
    %v6592 = vunpack.c.l.b16 %v2489
    %v6593 = vunpack.c.l.b16 %v2490
    %v6594 = vunpack.c.l.b16 %v2491
    %v6595 = vunpack.c.l.b16 %v2492
    %v6596 = vunpack.c.l.b16 %v2493
    %v6597 = vunpack.c.l.b16 %v2494
    %v6598 = vunpack.c.l.b16 %v2495
    %v6599 = vunpack.c.l.b16 %v2496
    %v6600 = vunpack.c.l.b16 %v2497
    %v6601 = vunpack.c.l.b16 %v2498
    %v6602 = vunpack.c.l.b16 %v2499
    %v6603 = vunpack.c.l.b16 %v2500
    %v6604 = vunpack.c.l.b16 %v2501
    %v6605 = vunpack.c.l.b16 %v2502
    %v6606 = vunpack.c.l.b16 %v2503
    %v6607 = vunpack.c.l.b16 %v2504
    %v6608 = vunpack.c.l.b16 %v2505
    %v6609 = vunpack.c.l.b16 %v2506
    %v6610 = vunpack.c.l.b16 %v2507
    %v6611 = vunpack.c.l.b16 %v2508
    %v6612 = vunpack.c.l.b16 %v2509
    %v6613 = vunpack.c.l.b16 %v2510
    %v6614 = vunpack.c.l.b16 %v2511
    %v6615 = vunpack.c.l.b16 %v2512
    %v6616 = vunpack.c.l.b16 %v2513
    %v6617 = vunpack.c.l.b16 %v2514
    %v6618 = vunpack.c.l.b16 %v2515
    %v6619 = vunpack.c.l.b16 %v2516
    %v6620 = vunpack.c.l.b16 %v2517
    %v6621 = vunpack.c.l.b16 %v2518
    %v6622 = vunpack.c.l.b16 %v2519
    %v6623 = vunpack.c.l.b16 %v2520
    %v6624 = vunpack.c.l.b16 %v2521
    %v6625 = vunpack.c.l.b16 %v2522
    %v6626 = vunpack.c.l.b16 %v2523
    %v6627 = vunpack.c.l.b16 %v2524
    %v6628 = vunpack.c.l.b16 %v2525
    %v6629 = vunpack.c.l.b16 %v2526
    %v6630 = vunpack.c.l.b16 %v2527
    %v6631 = vunpack.c.l.b16 %v2528
    %v6632 = vunpack.c.l.b16 %v2529
    %v6633 = vunpack.c.l.b16 %v2530
    %v6634 = vunpack.c.l.b16 %v2531
    %v6635 = vunpack.c.l.b16 %v2532
    %v6636 = vunpack.c.l.b16 %v2533
    %v6637 = vunpack.c.l.b16 %v2534
    %v6638 = vunpack.c.l.b16 %v2535
    %v6639 = vunpack.c.l.b16 %v2536
    %v6640 = vunpack.c.l.b16 %v2537
    %v6641 = vunpack.c.l.b16 %v2538
    %v6642 = vunpack.c.l.b16 %v2539
    %v6643 = vunpack.c.l.b16 %v2540
    %v6644 = vunpack.c.l.b16 %v2541
    %v6645 = vunpack.c.l.b16 %v2542
    %v6646 = vunpack.c.l.b16 %v2543
    %v6647 = vunpack.c.l.b16 %v2544
    %v6648 = vunpack.c.l.b16 %v2545
    %v6649 = vunpack.c.l.b16 %v2546
    %v6650 = vunpack.c.l.b16 %v2547
    %v6651 = vunpack.c.l.b16 %v2548
    %v6652 = vunpack.c.l.b16 %v2549
    %v6653 = vunpack.c.l.b16 %v2550
    %v6654 = vunpack.c.l.b16 %v2551
    %v6655 = vunpack.c.l.b16 %v2552
    %v6656 = vunpack.c.l.b16 %v2553
    %v6657 = vunpack.c.l.b16 %v2554
    %v6658 = vunpack.c.l.b16 %v2555
    %v6659 = vunpack.c.l.b16 %v2556
    %v6660 = vunpack.c.l.b16 %v2557
    %v6661 = vunpack.c.l.b16 %v2558
    %v6662 = vunpack.c.l.b16 %v2559
    %v6663 = vunpack.c.l.b16 %v2560
    %v6664 = vunpack.c.l.b16 %v2561
    %v6665 = vunpack.c.l.b16 %v2562
    %v6666 = vunpack.c.l.b16 %v2563
    %v6667 = vunpack.c.l.b16 %v2564
    %v6668 = vunpack.c.l.b16 %v2565
    %v6669 = vunpack.c.l.b16 %v2566
    %v6670 = vunpack.c.l.b16 %v2567
    %v6671 = vunpack.c.l.b16 %v2568
    %v6672 = vunpack.c.l.b16 %v2569
    %v6673 = vunpack.c.l.b16 %v2570
    %v6674 = vunpack.c.l.b16 %v2571
    %v6675 = vunpack.c.l.b16 %v2572
    %v6676 = vunpack.c.l.b16 %v2573
    %v6677 = vunpack.c.l.b16 %v2574
    %v6678 = vunpack.c.l.b16 %v2575
    %v6679 = vunpack.c.l.b16 %v2576
    %v6680 = vunpack.c.l.b16 %v2577
    %v6681 = vunpack.c.l.b16 %v2578
    %v6682 = vunpack.c.l.b16 %v2579
    %v6683 = vunpack.c.l.b16 %v2580
    %v6684 = vunpack.c.l.b16 %v2581
    %v6685 = vunpack.c.l.b16 %v2582
    %v6686 = vunpack.c.l.b16 %v2583
    %v6687 = vunpack.c.l.b16 %v2584
    %v6688 = vunpack.c.l.b16 %v2585
    %v6689 = vunpack.c.l.b16 %v2586
    %v6690 = vunpack.c.l.b16 %v2587
    %v6691 = vunpack.c.l.b16 %v2588
    %v6692 = vunpack.c.l.b16 %v2589
    %v6693 = vunpack.c.l.b16 %v2590
    %v6694 = vunpack.c.l.b16 %v2591
    %v6695 = vunpack.c.l.b16 %v2592
    %v6696 = vunpack.c.l.b16 %v2593
    %v6697 = vunpack.c.l.b16 %v2594
    %v6698 = vunpack.c.l.b16 %v2595
    %v6699 = vunpack.c.l.b16 %v2596
    %v6700 = vunpack.c.l.b16 %v2597
    %v6701 = vunpack.c.l.b16 %v2598
    %v6702 = vunpack.c.l.b16 %v2599
    %v6703 = vunpack.c.l.b16 %v2600
    %v6704 = vunpack.c.l.b16 %v2601
    %v6705 = vunpack.c.l.b16 %v2602
    %v6706 = vunpack.c.l.b16 %v2603
    %v6707 = vunpack.c.l.b16 %v2604
    %v6708 = vunpack.c.l.b16 %v2605
    %v6709 = vunpack.c.l.b16 %v2606
    %v6710 = vunpack.c.l.b16 %v2607
    %v6711 = vunpack.c.l.b16 %v2608
    %v6712 = vunpack.c.l.b16 %v2609
    %v6713 = vunpack.c.l.b16 %v2610
    %v6714 = vunpack.c.l.b16 %v2611
    %v6715 = vunpack.c.l.b16 %v2612
    %v6716 = vunpack.c.l.b16 %v2613
    %v6717 = vunpack.c.l.b16 %v2614
    %v6718 = vunpack.c.l.b16 %v2615
    %v6719 = vunpack.c.l.b16 %v2616
    %v6720 = vunpack.c.l.b16 %v2617
    %v6721 = vunpack.c.l.b16 %v2618
    %v6722 = vunpack.c.l.b16 %v2619
    %v6723 = vunpack.c.l.b16 %v2620
    %v6724 = vunpack.c.l.b16 %v2621
    %v6725 = vunpack.c.l.b16 %v2622
    %v6726 = vunpack.c.l.b16 %v2623
    %v6727 = vunpack.c.l.b16 %v2624
    %v6728 = vunpack.c.l.b16 %v2625
    %v6729 = vunpack.c.l.b16 %v2626
    %v6730 = vunpack.c.l.b16 %v2627
    %v6731 = vunpack.c.l.b16 %v2628
    %v6732 = vunpack.c.l.b16 %v2629
    %v6733 = vunpack.c.l.b16 %v2630
    %v6734 = vunpack.c.l.b16 %v2631
    %v6735 = vunpack.c.l.b16 %v2632
    %v6736 = vunpack.c.l.b16 %v2633
    %v6737 = vunpack.c.l.b16 %v2634
    %v6738 = vunpack.c.l.b16 %v2635
    %v6739 = vunpack.c.l.b16 %v2636
    %v6740 = vunpack.c.l.b16 %v2637
    %v6741 = vunpack.c.l.b16 %v2638
    %v6742 = vunpack.c.l.b16 %v2639
    %v6743 = vunpack.c.l.b16 %v2640
    %v6744 = vunpack.c.l.b16 %v2641
    %v6745 = vunpack.c.l.b16 %v2642
    %v6746 = vunpack.c.l.b16 %v2643
    %v6747 = vunpack.c.l.b16 %v2644
    %v6748 = vunpack.c.l.b16 %v2645
    %v6749 = vunpack.c.l.b16 %v2646
    %v6750 = vunpack.c.l.b16 %v2647
    %v6751 = vunpack.c.l.b16 %v2648
    %v6752 = vunpack.c.l.b16 %v2649
    %v6753 = vunpack.c.l.b16 %v2650
    %v6754 = vunpack.c.l.b16 %v2651
    %v6755 = vunpack.c.l.b16 %v2652
    %v6756 = vunpack.c.l.b16 %v2653
    %v6757 = vunpack.c.l.b16 %v2654
    %v6758 = vunpack.c.l.b16 %v2655
    %v6759 = vunpack.c.l.b16 %v2656
    %v6760 = vunpack.c.l.b16 %v2657
    %v6761 = vunpack.c.l.b16 %v2658
    %v6762 = vunpack.c.l.b16 %v2659
    %v6763 = vunpack.c.l.b16 %v2660
    %v6764 = vunpack.c.l.b16 %v2661
    %v6765 = vunpack.c.l.b16 %v2662
    %v6766 = vunpack.c.l.b16 %v2663
    %v6767 = vunpack.c.l.b16 %v2664
    %v6768 = vunpack.c.l.b16 %v2665
    %v6769 = vunpack.c.l.b16 %v2666
    %v6770 = vunpack.c.l.b16 %v2667
    %v6771 = vunpack.c.l.b16 %v2668
    %v6772 = vunpack.c.l.b16 %v2669
    %v6773 = vunpack.c.l.b16 %v2670
    %v6774 = vunpack.c.l.b16 %v2671
    %v6775 = vunpack.c.l.b16 %v2672
    %v6776 = vunpack.c.l.b16 %v2673
    %v6777 = vunpack.c.l.b16 %v2674
    %v6778 = vunpack.c.l.b16 %v2675
    %v6779 = vunpack.c.l.b16 %v2676
    %v6780 = vunpack.c.l.b16 %v2677
    %v6781 = vunpack.c.l.b16 %v2678
    %v6782 = vunpack.c.l.b16 %v2679
    %v6783 = vunpack.c.l.b16 %v2680
    %v6784 = vunpack.c.l.b16 %v2681
    %v6785 = vunpack.c.l.b16 %v2682
    %v6786 = vunpack.c.l.b16 %v2683
    %v6787 = vunpack.c.l.b16 %v2684
    %v6788 = vunpack.c.l.b16 %v2685
    %v6789 = vunpack.c.l.b16 %v2686
    %v6790 = vunpack.c.l.b16 %v2687
    %v6791 = vunpack.c.l.b16 %v2688
    %v6792 = vunpack.c.l.b16 %v2689
    %v6793 = vunpack.c.l.b16 %v2690
    %v6794 = vunpack.c.l.b16 %v2691
    %v6795 = vunpack.c.l.b16 %v2692
    %v6796 = vunpack.c.l.b16 %v2693
    %v6797 = vunpack.c.l.b16 %v2694
    %v6798 = vunpack.c.l.b16 %v2695
    %v6799 = vunpack.c.l.b16 %v2696
    %v6800 = vunpack.c.l.b16 %v2697
    %v6801 = vunpack.c.l.b16 %v2698
    %v6802 = vunpack.c.l.b16 %v2699
    %v6803 = vunpack.c.l.b16 %v2700
    %v6804 = vunpack.c.l.b16 %v2701
    %v6805 = vunpack.c.l.b16 %v2702
    %v6806 = vunpack.c.l.b16 %v2703
    %v6807 = vunpack.c.l.b16 %v2704
    %v6808 = vunpack.c.l.b16 %v2705
    %v6809 = vunpack.c.l.b16 %v2706
    %v6810 = vunpack.c.l.b16 %v2707
    %v6811 = vunpack.c.l.b16 %v2708
    %v6812 = vunpack.c.l.b16 %v2709
    %v6813 = vunpack.c.l.b16 %v2710
    %v6814 = vunpack.c.l.b16 %v2711
    %v6815 = vunpack.c.l.b16 %v2712
    %v6816 = vunpack.c.l.b16 %v2713
    %v6817 = vunpack.c.l.b16 %v2714
    %v6818 = vunpack.c.l.b16 %v2715
    %v6819 = vunpack.c.l.b16 %v2716
    %v6820 = vunpack.c.l.b16 %v2717
    %v6821 = vunpack.c.l.b16 %v2718
    %v6822 = vunpack.c.l.b16 %v2719
    %v6823 = vunpack.c.l.b16 %v2720
    %v6824 = vunpack.c.l.b16 %v2721
    %v6825 = vunpack.c.l.b16 %v2722
    %v6826 = vunpack.c.l.b16 %v2723
    %v6827 = vunpack.c.l.b16 %v2724
    %v6828 = vunpack.c.l.b16 %v2725
    %v6829 = vunpack.c.l.b16 %v2726
    %v6830 = vunpack.c.l.b16 %v2727
    %v6831 = vunpack.c.l.b16 %v2728
    %v6832 = vunpack.c.l.b16 %v2729
    %v6833 = vunpack.c.l.b16 %v2730
    %v6834 = vunpack.c.l.b16 %v2731
    %v6835 = vunpack.c.l.b16 %v2732
    %v6836 = vunpack.c.l.b16 %v2733
    %v6837 = vunpack.c.l.b16 %v2734
    %v6838 = vunpack.c.l.b16 %v2735
    %v6839 = vunpack.c.l.b16 %v2736
    %v6840 = vunpack.c.l.b16 %v2737
    %v6841 = vunpack.c.l.b16 %v2738
    %v6842 = vunpack.c.l.b16 %v2739
    %v6843 = vunpack.c.l.b16 %v2740
    %v6844 = vunpack.c.l.b16 %v2741
    %v6845 = vunpack.c.l.b16 %v2742
    %v6846 = vunpack.c.l.b16 %v2743
    %v6847 = vunpack.c.l.b16 %v2744
    %v6848 = vunpack.c.l.b16 %v2745
    %v6849 = vunpack.c.l.b16 %v2746
    %v6850 = vunpack.c.l.b16 %v2747
    %v6851 = vunpack.c.l.b16 %v2748
    %v6852 = vunpack.c.l.b16 %v2749
    %v6853 = vunpack.c.l.b16 %v2750
    %v6854 = vunpack.c.l.b16 %v2751
    %v6855 = vunpack.c.l.b16 %v2752
    %v6856 = vunpack.c.l.b16 %v2753
    %v6857 = vunpack.c.l.b16 %v2754
    %v6858 = vunpack.c.l.b16 %v2755
    %v6859 = vunpack.c.l.b16 %v2756
    %v6860 = vunpack.c.l.b16 %v2757
    %v6861 = vunpack.c.l.b16 %v2758
    %v6862 = vunpack.c.l.b16 %v2759
    %v6863 = vunpack.c.l.b16 %v2760
    %v6864 = vunpack.c.l.b16 %v2761
    %v6865 = vunpack.c.l.b16 %v2762
    %v6866 = vunpack.c.l.b16 %v2763
    %v6867 = vunpack.c.l.b16 %v2764
    %v6868 = vunpack.c.l.b16 %v2765
    %v6869 = vunpack.c.l.b16 %v2766
    %v6870 = vunpack.c.l.b16 %v2767
    %v6871 = vunpack.c.l.b16 %v2768
    %v6872 = vunpack.c.l.b16 %v2769
    %v6873 = vunpack.c.l.b16 %v2770
    %v6874 = vunpack.c.l.b16 %v2771
    %v6875 = vunpack.c.l.b16 %v2772
    %v6876 = vunpack.c.l.b16 %v2773
    %v6877 = vunpack.c.l.b16 %v2774
    %v6878 = vunpack.c.l.b16 %v2775
    %v6879 = vunpack.c.l.b16 %v2776
    %v6880 = vunpack.c.l.b16 %v2777
    %v6881 = vunpack.c.l.b16 %v2778
    %v6882 = vunpack.c.l.b16 %v2779
    %v6883 = vunpack.c.l.b16 %v2780
    %v6884 = vunpack.c.l.b16 %v2781
    %v6885 = vunpack.c.l.b16 %v2782
    %v6886 = vunpack.c.l.b16 %v2783
    %v6887 = vunpack.c.l.b16 %v2784
    %v6888 = vunpack.c.l.b16 %v2785
    %v6889 = vunpack.c.l.b16 %v2786
    %v6890 = vunpack.c.l.b16 %v2787
    %v6891 = vunpack.c.l.b16 %v2788
    %v6892 = vunpack.c.l.b16 %v2789
    %v6893 = vunpack.c.l.b16 %v2790
    %v6894 = vunpack.c.l.b16 %v2791
    %v6895 = vunpack.c.l.b16 %v2792
    %v6896 = vunpack.c.l.b16 %v2793
    %v6897 = vunpack.c.l.b16 %v2794
    %v6898 = vunpack.c.l.b16 %v2795
    %v6899 = vunpack.c.l.b16 %v2796
    %v6900 = vunpack.c.l.b16 %v2797
    %v6901 = vunpack.c.l.b16 %v2798
    %v6902 = vunpack.c.l.b16 %v2799
    %v6903 = vunpack.c.l.b16 %v2800
    %v6904 = vunpack.c.l.b16 %v2801
    %v6905 = vunpack.c.l.b16 %v2802
    %v6906 = vunpack.c.l.b16 %v2803
    %v6907 = vunpack.c.l.b16 %v2804
    %v6908 = vunpack.c.l.b16 %v2805
    %v6909 = vunpack.c.l.b16 %v2806
    %v6910 = vunpack.c.l.b16 %v2807
    %v6911 = vunpack.c.l.b16 %v2808
    %v6912 = vunpack.c.l.b16 %v2809
    %v6913 = vunpack.c.l.b16 %v2810
    %v6914 = vunpack.c.l.b16 %v2811
    %v6915 = vunpack.c.l.b16 %v2812
    %v6916 = vunpack.c.l.b16 %v2813
    %v6917 = vunpack.c.l.b16 %v2814
    %v6918 = vunpack.c.l.b16 %v2815
    %v6919 = vunpack.c.l.b16 %v2816
    %v6920 = vunpack.c.l.b16 %v2817
    %v6921 = vunpack.c.l.b16 %v2818
    %v6922 = vunpack.c.l.b16 %v2819
    %v6923 = vunpack.c.l.b16 %v2820
    %v6924 = vunpack.c.l.b16 %v2821
    %v6925 = vunpack.c.l.b16 %v2822
    %v6926 = vunpack.c.l.b16 %v2823
    %v6927 = vunpack.c.l.b16 %v2824
    %v6928 = vunpack.c.l.b16 %v2825
    %v6929 = vunpack.c.l.b16 %v2826
    %v6930 = vunpack.c.l.b16 %v2827
    %v6931 = vunpack.c.l.b16 %v2828
    %v6932 = vunpack.c.l.b16 %v2829
    %v6933 = vunpack.c.l.b16 %v2830
    %v6934 = vunpack.c.l.b16 %v2831
    %v6935 = vunpack.c.l.b16 %v2832
    %v6936 = vunpack.c.l.b16 %v2833
    %v6937 = vunpack.c.l.b16 %v2834
    %v6938 = vunpack.c.l.b16 %v2835
    %v6939 = vunpack.c.l.b16 %v2836
    %v6940 = vunpack.c.l.b16 %v2837
    %v6941 = vunpack.c.l.b16 %v2838
    %v6942 = vunpack.c.l.b16 %v2839
    %v6943 = vunpack.c.l.b16 %v2840
    %v6944 = vunpack.c.l.b16 %v2841
    %v6945 = vunpack.c.l.b16 %v2842
    %v6946 = vunpack.c.l.b16 %v2843
    %v6947 = vunpack.c.l.b16 %v2844
    %v6948 = vunpack.c.l.b16 %v2845
    %v6949 = vunpack.c.l.b16 %v2846
    %v6950 = vunpack.c.l.b16 %v2847
    %v6951 = vunpack.c.l.b16 %v2848
    %v6952 = vunpack.c.l.b16 %v2849
    %v6953 = vunpack.c.l.b16 %v2850
    %v6954 = vunpack.c.l.b16 %v2851
    %v6955 = vunpack.c.l.b16 %v2852
    %v6956 = vunpack.c.l.b16 %v2853
    %v6957 = vunpack.c.l.b16 %v2854
    %v6958 = vunpack.c.l.b16 %v2855
    %v6959 = vunpack.c.l.b16 %v2856
    %v6960 = vunpack.c.l.b16 %v2857
    %v6961 = vunpack.c.l.b16 %v2858
    %v6962 = vunpack.c.l.b16 %v2859
    %v6963 = vunpack.c.l.b16 %v2860
    %v6964 = vunpack.c.l.b16 %v2861
    %v6965 = vunpack.c.l.b16 %v2862
    %v6966 = vunpack.c.l.b16 %v2863
    %v6967 = vunpack.c.l.b16 %v2864
    %v6968 = vunpack.c.l.b16 %v2865
    %v6969 = vunpack.c.l.b16 %v2866
    %v6970 = vunpack.c.l.b16 %v2867
    %v6971 = vunpack.c.l.b16 %v2868
    %v6972 = vunpack.c.l.b16 %v2869
    %v6973 = vunpack.c.l.b16 %v2870
    %v6974 = vunpack.c.l.b16 %v2871
    %v6975 = vunpack.c.l.b16 %v2872
    %v6976 = vunpack.c.l.b16 %v2873
    %v6977 = vunpack.c.l.b16 %v2874
    %v6978 = vunpack.c.l.b16 %v2875
    %v6979 = vunpack.c.l.b16 %v2876
    %v6980 = vunpack.c.l.b16 %v2877
    %v6981 = vunpack.c.l.b16 %v2878
    %v6982 = vunpack.c.l.b16 %v2879
    %v6983 = vunpack.c.l.b16 %v2880
    %v6984 = vunpack.c.l.b16 %v2881
    %v6985 = vunpack.c.l.b16 %v2882
    %v6986 = vunpack.c.l.b16 %v2883
    %v6987 = vunpack.c.l.b16 %v2884
    %v6988 = vunpack.c.l.b16 %v2885
    %v6989 = vunpack.c.l.b16 %v2886
    %v6990 = vunpack.c.l.b16 %v2887
    %v6991 = vunpack.c.l.b16 %v2888
    %v6992 = vunpack.c.l.b16 %v2889
    %v6993 = vunpack.c.l.b16 %v2890
    %v6994 = vunpack.c.l.b16 %v2891
    %v6995 = vunpack.c.l.b16 %v2892
    %v6996 = vunpack.c.l.b16 %v2893
    %v6997 = vunpack.c.l.b16 %v2894
    %v6998 = vunpack.c.l.b16 %v2895
    %v6999 = vunpack.c.l.b16 %v2896
    %v7000 = vunpack.c.l.b16 %v2897
    %v7001 = vunpack.c.l.b16 %v2898
    %v7002 = vunpack.c.l.b16 %v2899
    %v7003 = vunpack.c.l.b16 %v2900
    %v7004 = vunpack.c.l.b16 %v2901
    %v7005 = vunpack.c.l.b16 %v2902
    %v7006 = vunpack.c.l.b16 %v2903
    %v7007 = vunpack.c.l.b16 %v2904
    %v7008 = vunpack.c.l.b16 %v2905
    %v7009 = vunpack.c.l.b16 %v2906
    %v7010 = vunpack.c.l.b16 %v2907
    %v7011 = vunpack.c.l.b16 %v2908
    %v7012 = vunpack.c.l.b16 %v2909
    %v7013 = vunpack.c.l.b16 %v2910
    %v7014 = vunpack.c.l.b16 %v2911
    %v7015 = vunpack.c.l.b16 %v2912
    %v7016 = vunpack.c.l.b16 %v2913
    %v7017 = vunpack.c.l.b16 %v2914
    %v7018 = vunpack.c.l.b16 %v2915
    %v7019 = vunpack.c.l.b16 %v2916
    %v7020 = vunpack.c.l.b16 %v2917
    %v7021 = vunpack.c.l.b16 %v2918
    %v7022 = vunpack.c.l.b16 %v2919
    %v7023 = vunpack.c.l.b16 %v2920
    %v7024 = vunpack.c.l.b16 %v2921
    %v7025 = vunpack.c.l.b16 %v2922
    %v7026 = vunpack.c.l.b16 %v2923
    %v7027 = vunpack.c.l.b16 %v2924
    %v7028 = vunpack.c.l.b16 %v2925
    %v7029 = vunpack.c.l.b16 %v2926
    %v7030 = vunpack.c.l.b16 %v2927
    %v7031 = vunpack.c.l.b16 %v2928
    %v7032 = vunpack.c.l.b16 %v2929
    %v7033 = vunpack.c.l.b16 %v2930
    %v7034 = vunpack.c.l.b16 %v2931
    %v7035 = vunpack.c.l.b16 %v2932
    %v7036 = vunpack.c.l.b16 %v2933
    %v7037 = vunpack.c.l.b16 %v2934
    %v7038 = vunpack.c.l.b16 %v2935
    %v7039 = vunpack.c.l.b16 %v2936
    %v7040 = vunpack.c.l.b16 %v2937
    %v7041 = vunpack.c.l.b16 %v2938
    %v7042 = vunpack.c.l.b16 %v2939
    %v7043 = vunpack.c.l.b16 %v2940
    %v7044 = vunpack.c.l.b16 %v2941
    %v7045 = vunpack.c.l.b16 %v2942
    %v7046 = vunpack.c.l.b16 %v2943
    %v7047 = vunpack.c.l.b16 %v2944
    %v7048 = vunpack.c.l.b16 %v2945
    %v7049 = vunpack.c.l.b16 %v2946
    %v7050 = vunpack.c.l.b16 %v2947
    %v7051 = vunpack.c.l.b16 %v2948
    %v7052 = vunpack.c.l.b16 %v2949
    %v7053 = vunpack.c.l.b16 %v2950
    %v7054 = vunpack.c.l.b16 %v2951
    %v7055 = vunpack.c.l.b16 %v2952
    %v7056 = vunpack.c.l.b16 %v2953
    %v7057 = vunpack.c.l.b16 %v2954
    %v7058 = vunpack.c.l.b16 %v2955
    %v7059 = vunpack.c.l.b16 %v2956
    %v7060 = vunpack.c.l.b16 %v2957
    %v7061 = vunpack.c.l.b16 %v2958
    %v7062 = vunpack.c.l.b16 %v2959
    %v7063 = vunpack.c.l.b16 %v2960
    %v7064 = vunpack.c.l.b16 %v2961
    %v7065 = vunpack.c.l.b16 %v2962
    %v7066 = vunpack.c.l.b16 %v2963
    %v7067 = vunpack.c.l.b16 %v2964
    %v7068 = vunpack.c.l.b16 %v2965
    %v7069 = vunpack.c.l.b16 %v2966
    %v7070 = vunpack.c.l.b16 %v2967
    %v7071 = vunpack.c.l.b16 %v2968
    %v7072 = vunpack.c.l.b16 %v2969
    %v7073 = vunpack.c.l.b16 %v2970
    %v7074 = vunpack.c.l.b16 %v2971
    %v7075 = vunpack.c.l.b16 %v2972
    %v7076 = vunpack.c.l.b16 %v2973
    %v7077 = vunpack.c.l.b16 %v2974
    %v7078 = vunpack.c.l.b16 %v2975
    %v7079 = vunpack.c.l.b16 %v2976
    %v7080 = vunpack.c.l.b16 %v2977
    %v7081 = vunpack.c.l.b16 %v2978
    %v7082 = vunpack.c.l.b16 %v2979
    %v7083 = vunpack.c.l.b16 %v2980
    %v7084 = vunpack.c.l.b16 %v2981
    %v7085 = vunpack.c.l.b16 %v2982
    %v7086 = vunpack.c.l.b16 %v2983
    %v7087 = vunpack.c.l.b16 %v2984
    %v7088 = vunpack.c.l.b16 %v2985
    %v7089 = vunpack.c.l.b16 %v2986
    %v7090 = vunpack.c.l.b16 %v2987
    %v7091 = vunpack.c.l.b16 %v2988
    %v7092 = vunpack.c.l.b16 %v2989
    %v7093 = vunpack.c.l.b16 %v2990
    %v7094 = vunpack.c.l.b16 %v2991
    %v7095 = vunpack.c.l.b16 %v2992
    %v7096 = vunpack.c.l.b16 %v2993
    %v7097 = vunpack.c.l.b16 %v2994
    %v7098 = vunpack.c.l.b16 %v2995
    %v7099 = vunpack.c.l.b16 %v2996
    %v7100 = vpack.c.b16 %v5053, %v5052
    %v7101 = vpack.c.b16 %v5055, %v5054
    %v7102 = vpack.c.b16 %v5057, %v5056
    %v7103 = vpack.c.b16 %v5059, %v5058
    %v7104 = vpack.c.b16 %v5061, %v5060
    %v7105 = vpack.c.b16 %v5063, %v5062
    %v7106 = vpack.c.b16 %v5065, %v5064
    %v7107 = vpack.c.b16 %v5067, %v5066
    %v7108 = vpack.c.b16 %v5069, %v5068
    %v7109 = vpack.c.b16 %v5071, %v5070
    %v7110 = vpack.c.b16 %v5073, %v5072
    %v7111 = vpack.c.b16 %v5075, %v5074
    %v7112 = vpack.c.b16 %v5077, %v5076
    %v7113 = vpack.c.b16 %v5079, %v5078
    %v7114 = vpack.c.b16 %v5081, %v5080
    %v7115 = vpack.c.b16 %v5083, %v5082
    %v7116 = vpack.c.b16 %v5085, %v5084
    %v7117 = vpack.c.b16 %v5087, %v5086
    %v7118 = vpack.c.b16 %v5089, %v5088
    %v7119 = vpack.c.b16 %v5091, %v5090
    %v7120 = vpack.c.b16 %v5093, %v5092
    %v7121 = vpack.c.b16 %v5095, %v5094
    %v7122 = vpack.c.b16 %v5097, %v5096
    %v7123 = vpack.c.b16 %v5099, %v5098
    %v7124 = vpack.c.b16 %v5101, %v5100
    %v7125 = vpack.c.b16 %v5103, %v5102
    %v7126 = vpack.c.b16 %v5105, %v5104
    %v7127 = vpack.c.b16 %v5107, %v5106
    %v7128 = vpack.c.b16 %v5109, %v5108
    %v7129 = vpack.c.b16 %v5111, %v5110
    %v7130 = vpack.c.b16 %v5113, %v5112
    %v7131 = vpack.c.b16 %v5115, %v5114
    %v7132 = vpack.c.b16 %v5117, %v5116
    %v7133 = vpack.c.b16 %v5119, %v5118
    %v7134 = vpack.c.b16 %v5121, %v5120
    %v7135 = vpack.c.b16 %v5123, %v5122
    %v7136 = vpack.c.b16 %v5125, %v5124
    %v7137 = vpack.c.b16 %v5127, %v5126
    %v7138 = vpack.c.b16 %v5129, %v5128
    %v7139 = vpack.c.b16 %v5131, %v5130
    %v7140 = vpack.c.b16 %v5133, %v5132
    %v7141 = vpack.c.b16 %v5135, %v5134
    %v7142 = vpack.c.b16 %v5137, %v5136
    %v7143 = vpack.c.b16 %v5139, %v5138
    %v7144 = vpack.c.b16 %v5141, %v5140
    %v7145 = vpack.c.b16 %v5143, %v5142
    %v7146 = vpack.c.b16 %v5145, %v5144
    %v7147 = vpack.c.b16 %v5147, %v5146
    %v7148 = vpack.c.b16 %v5149, %v5148
    %v7149 = vpack.c.b16 %v5151, %v5150
    %v7150 = vpack.c.b16 %v5153, %v5152
    %v7151 = vpack.c.b16 %v5155, %v5154
    %v7152 = vpack.c.b16 %v5157, %v5156
    %v7153 = vpack.c.b16 %v5159, %v5158
    %v7154 = vpack.c.b16 %v5161, %v5160
    %v7155 = vpack.c.b16 %v5163, %v5162
    %v7156 = vpack.c.b16 %v5165, %v5164
    %v7157 = vpack.c.b16 %v5167, %v5166
    %v7158 = vpack.c.b16 %v5169, %v5168
    %v7159 = vpack.c.b16 %v5171, %v5170
    %v7160 = vpack.c.b16 %v5173, %v5172
    %v7161 = vpack.c.b16 %v5175, %v5174
    %v7162 = vpack.c.b16 %v5177, %v5176
    %v7163 = vpack.c.b16 %v5179, %v5178
    %v7164 = vpack.c.b16 %v5181, %v5180
    %v7165 = vpack.c.b16 %v5183, %v5182
    %v7166 = vpack.c.b16 %v5185, %v5184
    %v7167 = vpack.c.b16 %v5187, %v5186
    %v7168 = vpack.c.b16 %v5189, %v5188
    %v7169 = vpack.c.b16 %v5191, %v5190
    %v7170 = vpack.c.b16 %v5193, %v5192
    %v7171 = vpack.c.b16 %v5195, %v5194
    %v7172 = vpack.c.b16 %v5197, %v5196
    %v7173 = vpack.c.b16 %v5199, %v5198
    %v7174 = vpack.c.b16 %v5201, %v5200
    %v7175 = vpack.c.b16 %v5203, %v5202
    %v7176 = vpack.c.b16 %v5205, %v5204
    %v7177 = vpack.c.b16 %v5207, %v5206
    %v7178 = vpack.c.b16 %v5209, %v5208
    %v7179 = vpack.c.b16 %v5211, %v5210
    %v7180 = vpack.c.b16 %v5213, %v5212
    %v7181 = vpack.c.b16 %v5215, %v5214
    %v7182 = vpack.c.b16 %v5217, %v5216
    %v7183 = vpack.c.b16 %v5219, %v5218
    %v7184 = vpack.c.b16 %v5221, %v5220
    %v7185 = vpack.c.b16 %v5223, %v5222
    %v7186 = vpack.c.b16 %v5225, %v5224
    %v7187 = vpack.c.b16 %v5227, %v5226
    %v7188 = vpack.c.b16 %v5229, %v5228
    %v7189 = vpack.c.b16 %v5231, %v5230
    %v7190 = vpack.c.b16 %v5233, %v5232
    %v7191 = vpack.c.b16 %v5235, %v5234
    %v7192 = vpack.c.b16 %v5237, %v5236
    %v7193 = vpack.c.b16 %v5239, %v5238
    %v7194 = vpack.c.b16 %v5241, %v5240
    %v7195 = vpack.c.b16 %v5243, %v5242
    %v7196 = vpack.c.b16 %v5245, %v5244
    %v7197 = vpack.c.b16 %v5247, %v5246
    %v7198 = vpack.c.b16 %v5249, %v5248
    %v7199 = vpack.c.b16 %v5251, %v5250
    %v7200 = vpack.c.b16 %v5253, %v5252
    %v7201 = vpack.c.b16 %v5255, %v5254
    %v7202 = vpack.c.b16 %v5257, %v5256
    %v7203 = vpack.c.b16 %v5259, %v5258
    %v7204 = vpack.c.b16 %v5261, %v5260
    %v7205 = vpack.c.b16 %v5263, %v5262
    %v7206 = vpack.c.b16 %v5265, %v5264
    %v7207 = vpack.c.b16 %v5267, %v5266
    %v7208 = vpack.c.b16 %v5269, %v5268
    %v7209 = vpack.c.b16 %v5271, %v5270
    %v7210 = vpack.c.b16 %v5273, %v5272
    %v7211 = vpack.c.b16 %v5275, %v5274
    %v7212 = vpack.c.b16 %v5277, %v5276
    %v7213 = vpack.c.b16 %v5279, %v5278
    %v7214 = vpack.c.b16 %v5281, %v5280
    %v7215 = vpack.c.b16 %v5283, %v5282
    %v7216 = vpack.c.b16 %v5285, %v5284
    %v7217 = vpack.c.b16 %v5287, %v5286
    %v7218 = vpack.c.b16 %v5289, %v5288
    %v7219 = vpack.c.b16 %v5291, %v5290
    %v7220 = vpack.c.b16 %v5293, %v5292
    %v7221 = vpack.c.b16 %v5295, %v5294
    %v7222 = vpack.c.b16 %v5297, %v5296
    %v7223 = vpack.c.b16 %v5299, %v5298
    %v7224 = vpack.c.b16 %v5301, %v5300
    %v7225 = vpack.c.b16 %v5303, %v5302
    %v7226 = vpack.c.b16 %v5305, %v5304
    %v7227 = vpack.c.b16 %v5307, %v5306
    %v7228 = vpack.c.b16 %v5309, %v5308
    %v7229 = vpack.c.b16 %v5311, %v5310
    %v7230 = vpack.c.b16 %v5313, %v5312
    %v7231 = vpack.c.b16 %v5315, %v5314
    %v7232 = vpack.c.b16 %v5317, %v5316
    %v7233 = vpack.c.b16 %v5319, %v5318
    %v7234 = vpack.c.b16 %v5321, %v5320
    %v7235 = vpack.c.b16 %v5323, %v5322
    %v7236 = vpack.c.b16 %v5325, %v5324
    %v7237 = vpack.c.b16 %v5327, %v5326
    %v7238 = vpack.c.b16 %v5329, %v5328
    %v7239 = vpack.c.b16 %v5331, %v5330
    %v7240 = vpack.c.b16 %v5333, %v5332
    %v7241 = vpack.c.b16 %v5335, %v5334
    %v7242 = vpack.c.b16 %v5337, %v5336
    %v7243 = vpack.c.b16 %v5339, %v5338
    %v7244 = vpack.c.b16 %v5341, %v5340
    %v7245 = vpack.c.b16 %v5343, %v5342
    %v7246 = vpack.c.b16 %v5345, %v5344
    %v7247 = vpack.c.b16 %v5347, %v5346
    %v7248 = vpack.c.b16 %v5349, %v5348
    %v7249 = vpack.c.b16 %v5351, %v5350
    %v7250 = vpack.c.b16 %v5353, %v5352
    %v7251 = vpack.c.b16 %v5355, %v5354
    %v7252 = vpack.c.b16 %v5357, %v5356
    %v7253 = vpack.c.b16 %v5359, %v5358
    %v7254 = vpack.c.b16 %v5361, %v5360
    %v7255 = vpack.c.b16 %v5363, %v5362
    %v7256 = vpack.c.b16 %v5365, %v5364
    %v7257 = vpack.c.b16 %v5367, %v5366
    %v7258 = vpack.c.b16 %v5369, %v5368
    %v7259 = vpack.c.b16 %v5371, %v5370
    %v7260 = vpack.c.b16 %v5373, %v5372
    %v7261 = vpack.c.b16 %v5375, %v5374
    %v7262 = vpack.c.b16 %v5377, %v5376
    %v7263 = vpack.c.b16 %v5379, %v5378
    %v7264 = vpack.c.b16 %v5381, %v5380
    %v7265 = vpack.c.b16 %v5383, %v5382
    %v7266 = vpack.c.b16 %v5385, %v5384
    %v7267 = vpack.c.b16 %v5387, %v5386
    %v7268 = vpack.c.b16 %v5389, %v5388
    %v7269 = vpack.c.b16 %v5391, %v5390
    %v7270 = vpack.c.b16 %v5393, %v5392
    %v7271 = vpack.c.b16 %v5395, %v5394
    %v7272 = vpack.c.b16 %v5397, %v5396
    %v7273 = vpack.c.b16 %v5399, %v5398
    %v7274 = vpack.c.b16 %v5401, %v5400
    %v7275 = vpack.c.b16 %v5403, %v5402
    %v7276 = vpack.c.b16 %v5405, %v5404
    %v7277 = vpack.c.b16 %v5407, %v5406
    %v7278 = vpack.c.b16 %v5409, %v5408
    %v7279 = vpack.c.b16 %v5411, %v5410
    %v7280 = vpack.c.b16 %v5413, %v5412
    %v7281 = vpack.c.b16 %v5415, %v5414
    %v7282 = vpack.c.b16 %v5417, %v5416
    %v7283 = vpack.c.b16 %v5419, %v5418
    %v7284 = vpack.c.b16 %v5421, %v5420
    %v7285 = vpack.c.b16 %v5423, %v5422
    %v7286 = vpack.c.b16 %v5425, %v5424
    %v7287 = vpack.c.b16 %v5427, %v5426
    %v7288 = vpack.c.b16 %v5429, %v5428
    %v7289 = vpack.c.b16 %v5431, %v5430
    %v7290 = vpack.c.b16 %v5433, %v5432
    %v7291 = vpack.c.b16 %v5435, %v5434
    %v7292 = vpack.c.b16 %v5437, %v5436
    %v7293 = vpack.c.b16 %v5439, %v5438
    %v7294 = vpack.c.b16 %v5441, %v5440
    %v7295 = vpack.c.b16 %v5443, %v5442
    %v7296 = vpack.c.b16 %v5445, %v5444
    %v7297 = vpack.c.b16 %v5447, %v5446
    %v7298 = vpack.c.b16 %v5449, %v5448
    %v7299 = vpack.c.b16 %v5451, %v5450
    %v7300 = vpack.c.b16 %v5453, %v5452
    %v7301 = vpack.c.b16 %v5455, %v5454
    %v7302 = vpack.c.b16 %v5457, %v5456
    %v7303 = vpack.c.b16 %v5459, %v5458
    %v7304 = vpack.c.b16 %v5461, %v5460
    %v7305 = vpack.c.b16 %v5463, %v5462
    %v7306 = vpack.c.b16 %v5465, %v5464
    %v7307 = vpack.c.b16 %v5467, %v5466
    %v7308 = vpack.c.b16 %v5469, %v5468
    %v7309 = vpack.c.b16 %v5471, %v5470
    %v7310 = vpack.c.b16 %v5473, %v5472
    %v7311 = vpack.c.b16 %v5475, %v5474
    %v7312 = vpack.c.b16 %v5477, %v5476
    %v7313 = vpack.c.b16 %v5479, %v5478
    %v7314 = vpack.c.b16 %v5481, %v5480
    %v7315 = vpack.c.b16 %v5483, %v5482
    %v7316 = vpack.c.b16 %v5485, %v5484
    %v7317 = vpack.c.b16 %v5487, %v5486
    %v7318 = vpack.c.b16 %v5489, %v5488
    %v7319 = vpack.c.b16 %v5491, %v5490
    %v7320 = vpack.c.b16 %v5493, %v5492
    %v7321 = vpack.c.b16 %v5495, %v5494
    %v7322 = vpack.c.b16 %v5497, %v5496
    %v7323 = vpack.c.b16 %v5499, %v5498
    %v7324 = vpack.c.b16 %v5501, %v5500
    %v7325 = vpack.c.b16 %v5503, %v5502
    %v7326 = vpack.c.b16 %v5505, %v5504
    %v7327 = vpack.c.b16 %v5507, %v5506
    %v7328 = vpack.c.b16 %v5509, %v5508
    %v7329 = vpack.c.b16 %v5511, %v5510
    %v7330 = vpack.c.b16 %v5513, %v5512
    %v7331 = vpack.c.b16 %v5515, %v5514
    %v7332 = vpack.c.b16 %v5517, %v5516
    %v7333 = vpack.c.b16 %v5519, %v5518
    %v7334 = vpack.c.b16 %v5521, %v5520
    %v7335 = vpack.c.b16 %v5523, %v5522
    %v7336 = vpack.c.b16 %v5525, %v5524
    %v7337 = vpack.c.b16 %v5527, %v5526
    %v7338 = vpack.c.b16 %v5529, %v5528
    %v7339 = vpack.c.b16 %v5531, %v5530
    %v7340 = vpack.c.b16 %v5533, %v5532
    %v7341 = vpack.c.b16 %v5535, %v5534
    %v7342 = vpack.c.b16 %v5537, %v5536
    %v7343 = vpack.c.b16 %v5539, %v5538
    %v7344 = vpack.c.b16 %v5541, %v5540
    %v7345 = vpack.c.b16 %v5543, %v5542
    %v7346 = vpack.c.b16 %v5545, %v5544
    %v7347 = vpack.c.b16 %v5547, %v5546
    %v7348 = vpack.c.b16 %v5549, %v5548
    %v7349 = vpack.c.b16 %v5551, %v5550
    %v7350 = vpack.c.b16 %v5553, %v5552
    %v7351 = vpack.c.b16 %v5555, %v5554
    %v7352 = vpack.c.b16 %v5557, %v5556
    %v7353 = vpack.c.b16 %v5559, %v5558
    %v7354 = vpack.c.b16 %v5561, %v5560
    %v7355 = vpack.c.b16 %v5563, %v5562
    %v7356 = vpack.c.b16 %v5565, %v5564
    %v7357 = vpack.c.b16 %v5567, %v5566
    %v7358 = vpack.c.b16 %v5569, %v5568
    %v7359 = vpack.c.b16 %v5571, %v5570
    %v7360 = vpack.c.b16 %v5573, %v5572
    %v7361 = vpack.c.b16 %v5575, %v5574
    %v7362 = vpack.c.b16 %v5577, %v5576
    %v7363 = vpack.c.b16 %v5579, %v5578
    %v7364 = vpack.c.b16 %v5581, %v5580
    %v7365 = vpack.c.b16 %v5583, %v5582
    %v7366 = vpack.c.b16 %v5585, %v5584
    %v7367 = vpack.c.b16 %v5587, %v5586
    %v7368 = vpack.c.b16 %v5589, %v5588
    %v7369 = vpack.c.b16 %v5591, %v5590
    %v7370 = vpack.c.b16 %v5593, %v5592
    %v7371 = vpack.c.b16 %v5595, %v5594
    %v7372 = vpack.c.b16 %v5597, %v5596
    %v7373 = vpack.c.b16 %v5599, %v5598
    %v7374 = vpack.c.b16 %v5601, %v5600
    %v7375 = vpack.c.b16 %v5603, %v5602
    %v7376 = vpack.c.b16 %v5605, %v5604
    %v7377 = vpack.c.b16 %v5607, %v5606
    %v7378 = vpack.c.b16 %v5609, %v5608
    %v7379 = vpack.c.b16 %v5611, %v5610
    %v7380 = vpack.c.b16 %v5613, %v5612
    %v7381 = vpack.c.b16 %v5615, %v5614
    %v7382 = vpack.c.b16 %v5617, %v5616
    %v7383 = vpack.c.b16 %v5619, %v5618
    %v7384 = vpack.c.b16 %v5621, %v5620
    %v7385 = vpack.c.b16 %v5623, %v5622
    %v7386 = vpack.c.b16 %v5625, %v5624
    %v7387 = vpack.c.b16 %v5627, %v5626
    %v7388 = vpack.c.b16 %v5629, %v5628
    %v7389 = vpack.c.b16 %v5631, %v5630
    %v7390 = vpack.c.b16 %v5633, %v5632
    %v7391 = vpack.c.b16 %v5635, %v5634
    %v7392 = vpack.c.b16 %v5637, %v5636
    %v7393 = vpack.c.b16 %v5639, %v5638
    %v7394 = vpack.c.b16 %v5641, %v5640
    %v7395 = vpack.c.b16 %v5643, %v5642
    %v7396 = vpack.c.b16 %v5645, %v5644
    %v7397 = vpack.c.b16 %v5647, %v5646
    %v7398 = vpack.c.b16 %v5649, %v5648
    %v7399 = vpack.c.b16 %v5651, %v5650
    %v7400 = vpack.c.b16 %v5653, %v5652
    %v7401 = vpack.c.b16 %v5655, %v5654
    %v7402 = vpack.c.b16 %v5657, %v5656
    %v7403 = vpack.c.b16 %v5659, %v5658
    %v7404 = vpack.c.b16 %v5661, %v5660
    %v7405 = vpack.c.b16 %v5663, %v5662
    %v7406 = vpack.c.b16 %v5665, %v5664
    %v7407 = vpack.c.b16 %v5667, %v5666
    %v7408 = vpack.c.b16 %v5669, %v5668
    %v7409 = vpack.c.b16 %v5671, %v5670
    %v7410 = vpack.c.b16 %v5673, %v5672
    %v7411 = vpack.c.b16 %v5675, %v5674
    %v7412 = vpack.c.b16 %v5677, %v5676
    %v7413 = vpack.c.b16 %v5679, %v5678
    %v7414 = vpack.c.b16 %v5681, %v5680
    %v7415 = vpack.c.b16 %v5683, %v5682
    %v7416 = vpack.c.b16 %v5685, %v5684
    %v7417 = vpack.c.b16 %v5687, %v5686
    %v7418 = vpack.c.b16 %v5689, %v5688
    %v7419 = vpack.c.b16 %v5691, %v5690
    %v7420 = vpack.c.b16 %v5693, %v5692
    %v7421 = vpack.c.b16 %v5695, %v5694
    %v7422 = vpack.c.b16 %v5697, %v5696
    %v7423 = vpack.c.b16 %v5699, %v5698
    %v7424 = vpack.c.b16 %v5701, %v5700
    %v7425 = vpack.c.b16 %v5703, %v5702
    %v7426 = vpack.c.b16 %v5705, %v5704
    %v7427 = vpack.c.b16 %v5707, %v5706
    %v7428 = vpack.c.b16 %v5709, %v5708
    %v7429 = vpack.c.b16 %v5711, %v5710
    %v7430 = vpack.c.b16 %v5713, %v5712
    %v7431 = vpack.c.b16 %v5715, %v5714
    %v7432 = vpack.c.b16 %v5717, %v5716
    %v7433 = vpack.c.b16 %v5719, %v5718
    %v7434 = vpack.c.b16 %v5721, %v5720
    %v7435 = vpack.c.b16 %v5723, %v5722
    %v7436 = vpack.c.b16 %v5725, %v5724
    %v7437 = vpack.c.b16 %v5727, %v5726
    %v7438 = vpack.c.b16 %v5729, %v5728
    %v7439 = vpack.c.b16 %v5731, %v5730
    %v7440 = vpack.c.b16 %v5733, %v5732
    %v7441 = vpack.c.b16 %v5735, %v5734
    %v7442 = vpack.c.b16 %v5737, %v5736
    %v7443 = vpack.c.b16 %v5739, %v5738
    %v7444 = vpack.c.b16 %v5741, %v5740
    %v7445 = vpack.c.b16 %v5743, %v5742
    %v7446 = vpack.c.b16 %v5745, %v5744
    %v7447 = vpack.c.b16 %v5747, %v5746
    %v7448 = vpack.c.b16 %v5749, %v5748
    %v7449 = vpack.c.b16 %v5751, %v5750
    %v7450 = vpack.c.b16 %v5753, %v5752
    %v7451 = vpack.c.b16 %v5755, %v5754
    %v7452 = vpack.c.b16 %v5757, %v5756
    %v7453 = vpack.c.b16 %v5759, %v5758
    %v7454 = vpack.c.b16 %v5761, %v5760
    %v7455 = vpack.c.b16 %v5763, %v5762
    %v7456 = vpack.c.b16 %v5765, %v5764
    %v7457 = vpack.c.b16 %v5767, %v5766
    %v7458 = vpack.c.b16 %v5769, %v5768
    %v7459 = vpack.c.b16 %v5771, %v5770
    %v7460 = vpack.c.b16 %v5773, %v5772
    %v7461 = vpack.c.b16 %v5775, %v5774
    %v7462 = vpack.c.b16 %v5777, %v5776
    %v7463 = vpack.c.b16 %v5779, %v5778
    %v7464 = vpack.c.b16 %v5781, %v5780
    %v7465 = vpack.c.b16 %v5783, %v5782
    %v7466 = vpack.c.b16 %v5785, %v5784
    %v7467 = vpack.c.b16 %v5787, %v5786
    %v7468 = vpack.c.b16 %v5789, %v5788
    %v7469 = vpack.c.b16 %v5791, %v5790
    %v7470 = vpack.c.b16 %v5793, %v5792
    %v7471 = vpack.c.b16 %v5795, %v5794
    %v7472 = vpack.c.b16 %v5797, %v5796
    %v7473 = vpack.c.b16 %v5799, %v5798
    %v7474 = vpack.c.b16 %v5801, %v5800
    %v7475 = vpack.c.b16 %v5803, %v5802
    %v7476 = vpack.c.b16 %v5805, %v5804
    %v7477 = vpack.c.b16 %v5807, %v5806
    %v7478 = vpack.c.b16 %v5809, %v5808
    %v7479 = vpack.c.b16 %v5811, %v5810
    %v7480 = vpack.c.b16 %v5813, %v5812
    %v7481 = vpack.c.b16 %v5815, %v5814
    %v7482 = vpack.c.b16 %v5817, %v5816
    %v7483 = vpack.c.b16 %v5819, %v5818
    %v7484 = vpack.c.b16 %v5821, %v5820
    %v7485 = vpack.c.b16 %v5823, %v5822
    %v7486 = vpack.c.b16 %v5825, %v5824
    %v7487 = vpack.c.b16 %v5827, %v5826
    %v7488 = vpack.c.b16 %v5829, %v5828
    %v7489 = vpack.c.b16 %v5831, %v5830
    %v7490 = vpack.c.b16 %v5833, %v5832
    %v7491 = vpack.c.b16 %v5835, %v5834
    %v7492 = vpack.c.b16 %v5837, %v5836
    %v7493 = vpack.c.b16 %v5839, %v5838
    %v7494 = vpack.c.b16 %v5841, %v5840
    %v7495 = vpack.c.b16 %v5843, %v5842
    %v7496 = vpack.c.b16 %v5845, %v5844
    %v7497 = vpack.c.b16 %v5847, %v5846
    %v7498 = vpack.c.b16 %v5849, %v5848
    %v7499 = vpack.c.b16 %v5851, %v5850
    %v7500 = vpack.c.b16 %v5853, %v5852
    %v7501 = vpack.c.b16 %v5855, %v5854
    %v7502 = vpack.c.b16 %v5857, %v5856
    %v7503 = vpack.c.b16 %v5859, %v5858
    %v7504 = vpack.c.b16 %v5861, %v5860
    %v7505 = vpack.c.b16 %v5863, %v5862
    %v7506 = vpack.c.b16 %v5865, %v5864
    %v7507 = vpack.c.b16 %v5867, %v5866
    %v7508 = vpack.c.b16 %v5869, %v5868
    %v7509 = vpack.c.b16 %v5871, %v5870
    %v7510 = vpack.c.b16 %v5873, %v5872
    %v7511 = vpack.c.b16 %v5875, %v5874
    %v7512 = vpack.c.b16 %v5877, %v5876
    %v7513 = vpack.c.b16 %v5879, %v5878
    %v7514 = vpack.c.b16 %v5881, %v5880
    %v7515 = vpack.c.b16 %v5883, %v5882
    %v7516 = vpack.c.b16 %v5885, %v5884
    %v7517 = vpack.c.b16 %v5887, %v5886
    %v7518 = vpack.c.b16 %v5889, %v5888
    %v7519 = vpack.c.b16 %v5891, %v5890
    %v7520 = vpack.c.b16 %v5893, %v5892
    %v7521 = vpack.c.b16 %v5895, %v5894
    %v7522 = vpack.c.b16 %v5897, %v5896
    %v7523 = vpack.c.b16 %v5899, %v5898
    %v7524 = vpack.c.b16 %v5901, %v5900
    %v7525 = vpack.c.b16 %v5903, %v5902
    %v7526 = vpack.c.b16 %v5905, %v5904
    %v7527 = vpack.c.b16 %v5907, %v5906
    %v7528 = vpack.c.b16 %v5909, %v5908
    %v7529 = vpack.c.b16 %v5911, %v5910
    %v7530 = vpack.c.b16 %v5913, %v5912
    %v7531 = vpack.c.b16 %v5915, %v5914
    %v7532 = vpack.c.b16 %v5917, %v5916
    %v7533 = vpack.c.b16 %v5919, %v5918
    %v7534 = vpack.c.b16 %v5921, %v5920
    %v7535 = vpack.c.b16 %v5923, %v5922
    %v7536 = vpack.c.b16 %v5925, %v5924
    %v7537 = vpack.c.b16 %v5927, %v5926
    %v7538 = vpack.c.b16 %v5929, %v5928
    %v7539 = vpack.c.b16 %v5931, %v5930
    %v7540 = vpack.c.b16 %v5933, %v5932
    %v7541 = vpack.c.b16 %v5935, %v5934
    %v7542 = vpack.c.b16 %v5937, %v5936
    %v7543 = vpack.c.b16 %v5939, %v5938
    %v7544 = vpack.c.b16 %v5941, %v5940
    %v7545 = vpack.c.b16 %v5943, %v5942
    %v7546 = vpack.c.b16 %v5945, %v5944
    %v7547 = vpack.c.b16 %v5947, %v5946
    %v7548 = vpack.c.b16 %v5949, %v5948
    %v7549 = vpack.c.b16 %v5951, %v5950
    %v7550 = vpack.c.b16 %v5953, %v5952
    %v7551 = vpack.c.b16 %v5955, %v5954
    %v7552 = vpack.c.b16 %v5957, %v5956
    %v7553 = vpack.c.b16 %v5959, %v5958
    %v7554 = vpack.c.b16 %v5961, %v5960
    %v7555 = vpack.c.b16 %v5963, %v5962
    %v7556 = vpack.c.b16 %v5965, %v5964
    %v7557 = vpack.c.b16 %v5967, %v5966
    %v7558 = vpack.c.b16 %v5969, %v5968
    %v7559 = vpack.c.b16 %v5971, %v5970
    %v7560 = vpack.c.b16 %v5973, %v5972
    %v7561 = vpack.c.b16 %v5975, %v5974
    %v7562 = vpack.c.b16 %v5977, %v5976
    %v7563 = vpack.c.b16 %v5979, %v5978
    %v7564 = vpack.c.b16 %v5981, %v5980
    %v7565 = vpack.c.b16 %v5983, %v5982
    %v7566 = vpack.c.b16 %v5985, %v5984
    %v7567 = vpack.c.b16 %v5987, %v5986
    %v7568 = vpack.c.b16 %v5989, %v5988
    %v7569 = vpack.c.b16 %v5991, %v5990
    %v7570 = vpack.c.b16 %v5993, %v5992
    %v7571 = vpack.c.b16 %v5995, %v5994
    %v7572 = vpack.c.b16 %v5997, %v5996
    %v7573 = vpack.c.b16 %v5999, %v5998
    %v7574 = vpack.c.b16 %v6001, %v6000
    %v7575 = vpack.c.b16 %v6003, %v6002
    %v7576 = vpack.c.b16 %v6005, %v6004
    %v7577 = vpack.c.b16 %v6007, %v6006
    %v7578 = vpack.c.b16 %v6009, %v6008
    %v7579 = vpack.c.b16 %v6011, %v6010
    %v7580 = vpack.c.b16 %v6013, %v6012
    %v7581 = vpack.c.b16 %v6015, %v6014
    %v7582 = vpack.c.b16 %v6017, %v6016
    %v7583 = vpack.c.b16 %v6019, %v6018
    %v7584 = vpack.c.b16 %v6021, %v6020
    %v7585 = vpack.c.b16 %v6023, %v6022
    %v7586 = vpack.c.b16 %v6025, %v6024
    %v7587 = vpack.c.b16 %v6027, %v6026
    %v7588 = vpack.c.b16 %v6029, %v6028
    %v7589 = vpack.c.b16 %v6031, %v6030
    %v7590 = vpack.c.b16 %v6033, %v6032
    %v7591 = vpack.c.b16 %v6035, %v6034
    %v7592 = vpack.c.b16 %v6037, %v6036
    %v7593 = vpack.c.b16 %v6039, %v6038
    %v7594 = vpack.c.b16 %v6041, %v6040
    %v7595 = vpack.c.b16 %v6043, %v6042
    %v7596 = vpack.c.b16 %v6045, %v6044
    %v7597 = vpack.c.b16 %v6047, %v6046
    %v7598 = vpack.c.b16 %v6049, %v6048
    %v7599 = vpack.c.b16 %v6051, %v6050
    %v7600 = vpack.c.b16 %v6053, %v6052
    %v7601 = vpack.c.b16 %v6055, %v6054
    %v7602 = vpack.c.b16 %v6057, %v6056
    %v7603 = vpack.c.b16 %v6059, %v6058
    %v7604 = vpack.c.b16 %v6061, %v6060
    %v7605 = vpack.c.b16 %v6063, %v6062
    %v7606 = vpack.c.b16 %v6065, %v6064
    %v7607 = vpack.c.b16 %v6067, %v6066
    %v7608 = vpack.c.b16 %v6069, %v6068
    %v7609 = vpack.c.b16 %v6071, %v6070
    %v7610 = vpack.c.b16 %v6073, %v6072
    %v7611 = vpack.c.b16 %v6075, %v6074
    %v7612 = vpack.c.b16 %v6077, %v6076
    %v7613 = vpack.c.b16 %v6079, %v6078
    %v7614 = vpack.c.b16 %v6081, %v6080
    %v7615 = vpack.c.b16 %v6083, %v6082
    %v7616 = vpack.c.b16 %v6085, %v6084
    %v7617 = vpack.c.b16 %v6087, %v6086
    %v7618 = vpack.c.b16 %v6089, %v6088
    %v7619 = vpack.c.b16 %v6091, %v6090
    %v7620 = vpack.c.b16 %v6093, %v6092
    %v7621 = vpack.c.b16 %v6095, %v6094
    %v7622 = vpack.c.b16 %v6097, %v6096
    %v7623 = vpack.c.b16 %v6099, %v6098
    %v7624 = vpack.c.b16 %v6101, %v6100
    %v7625 = vpack.c.b16 %v6103, %v6102
    %v7626 = vpack.c.b16 %v6105, %v6104
    %v7627 = vpack.c.b16 %v6107, %v6106
    %v7628 = vpack.c.b16 %v6109, %v6108
    %v7629 = vpack.c.b16 %v6111, %v6110
    %v7630 = vpack.c.b16 %v6113, %v6112
    %v7631 = vpack.c.b16 %v6115, %v6114
    %v7632 = vpack.c.b16 %v6117, %v6116
    %v7633 = vpack.c.b16 %v6119, %v6118
    %v7634 = vpack.c.b16 %v6121, %v6120
    %v7635 = vpack.c.b16 %v6123, %v6122
    %v7636 = vpack.c.b16 %v6125, %v6124
    %v7637 = vpack.c.b16 %v6127, %v6126
    %v7638 = vpack.c.b16 %v6129, %v6128
    %v7639 = vpack.c.b16 %v6131, %v6130
    %v7640 = vpack.c.b16 %v6133, %v6132
    %v7641 = vpack.c.b16 %v6135, %v6134
    %v7642 = vpack.c.b16 %v6137, %v6136
    %v7643 = vpack.c.b16 %v6139, %v6138
    %v7644 = vpack.c.b16 %v6141, %v6140
    %v7645 = vpack.c.b16 %v6143, %v6142
    %v7646 = vpack.c.b16 %v6145, %v6144
    %v7647 = vpack.c.b16 %v6147, %v6146
    %v7648 = vpack.c.b16 %v6149, %v6148
    %v7649 = vpack.c.b16 %v6151, %v6150
    %v7650 = vpack.c.b16 %v6153, %v6152
    %v7651 = vpack.c.b16 %v6155, %v6154
    %v7652 = vpack.c.b16 %v6157, %v6156
    %v7653 = vpack.c.b16 %v6159, %v6158
    %v7654 = vpack.c.b16 %v6161, %v6160
    %v7655 = vpack.c.b16 %v6163, %v6162
    %v7656 = vpack.c.b16 %v6165, %v6164
    %v7657 = vpack.c.b16 %v6167, %v6166
    %v7658 = vpack.c.b16 %v6169, %v6168
    %v7659 = vpack.c.b16 %v6171, %v6170
    %v7660 = vpack.c.b16 %v6173, %v6172
    %v7661 = vpack.c.b16 %v6175, %v6174
    %v7662 = vpack.c.b16 %v6177, %v6176
    %v7663 = vpack.c.b16 %v6179, %v6178
    %v7664 = vpack.c.b16 %v6181, %v6180
    %v7665 = vpack.c.b16 %v6183, %v6182
    %v7666 = vpack.c.b16 %v6185, %v6184
    %v7667 = vpack.c.b16 %v6187, %v6186
    %v7668 = vpack.c.b16 %v6189, %v6188
    %v7669 = vpack.c.b16 %v6191, %v6190
    %v7670 = vpack.c.b16 %v6193, %v6192
    %v7671 = vpack.c.b16 %v6195, %v6194
    %v7672 = vpack.c.b16 %v6197, %v6196
    %v7673 = vpack.c.b16 %v6199, %v6198
    %v7674 = vpack.c.b16 %v6201, %v6200
    %v7675 = vpack.c.b16 %v6203, %v6202
    %v7676 = vpack.c.b16 %v6205, %v6204
    %v7677 = vpack.c.b16 %v6207, %v6206
    %v7678 = vpack.c.b16 %v6209, %v6208
    %v7679 = vpack.c.b16 %v6211, %v6210
    %v7680 = vpack.c.b16 %v6213, %v6212
    %v7681 = vpack.c.b16 %v6215, %v6214
    %v7682 = vpack.c.b16 %v6217, %v6216
    %v7683 = vpack.c.b16 %v6219, %v6218
    %v7684 = vpack.c.b16 %v6221, %v6220
    %v7685 = vpack.c.b16 %v6223, %v6222
    %v7686 = vpack.c.b16 %v6225, %v6224
    %v7687 = vpack.c.b16 %v6227, %v6226
    %v7688 = vpack.c.b16 %v6229, %v6228
    %v7689 = vpack.c.b16 %v6231, %v6230
    %v7690 = vpack.c.b16 %v6233, %v6232
    %v7691 = vpack.c.b16 %v6235, %v6234
    %v7692 = vpack.c.b16 %v6237, %v6236
    %v7693 = vpack.c.b16 %v6239, %v6238
    %v7694 = vpack.c.b16 %v6241, %v6240
    %v7695 = vpack.c.b16 %v6243, %v6242
    %v7696 = vpack.c.b16 %v6245, %v6244
    %v7697 = vpack.c.b16 %v6247, %v6246
    %v7698 = vpack.c.b16 %v6249, %v6248
    %v7699 = vpack.c.b16 %v6251, %v6250
    %v7700 = vpack.c.b16 %v6253, %v6252
    %v7701 = vpack.c.b16 %v6255, %v6254
    %v7702 = vpack.c.b16 %v6257, %v6256
    %v7703 = vpack.c.b16 %v6259, %v6258
    %v7704 = vpack.c.b16 %v6261, %v6260
    %v7705 = vpack.c.b16 %v6263, %v6262
    %v7706 = vpack.c.b16 %v6265, %v6264
    %v7707 = vpack.c.b16 %v6267, %v6266
    %v7708 = vpack.c.b16 %v6269, %v6268
    %v7709 = vpack.c.b16 %v6271, %v6270
    %v7710 = vpack.c.b16 %v6273, %v6272
    %v7711 = vpack.c.b16 %v6275, %v6274
    %v7712 = vpack.c.b16 %v6277, %v6276
    %v7713 = vpack.c.b16 %v6279, %v6278
    %v7714 = vpack.c.b16 %v6281, %v6280
    %v7715 = vpack.c.b16 %v6283, %v6282
    %v7716 = vpack.c.b16 %v6285, %v6284
    %v7717 = vpack.c.b16 %v6287, %v6286
    %v7718 = vpack.c.b16 %v6289, %v6288
    %v7719 = vpack.c.b16 %v6291, %v6290
    %v7720 = vpack.c.b16 %v6293, %v6292
    %v7721 = vpack.c.b16 %v6295, %v6294
    %v7722 = vpack.c.b16 %v6297, %v6296
    %v7723 = vpack.c.b16 %v6299, %v6298
    %v7724 = vpack.c.b16 %v6301, %v6300
    %v7725 = vpack.c.b16 %v6303, %v6302
    %v7726 = vpack.c.b16 %v6305, %v6304
    %v7727 = vpack.c.b16 %v6307, %v6306
    %v7728 = vpack.c.b16 %v6309, %v6308
    %v7729 = vpack.c.b16 %v6311, %v6310
    %v7730 = vpack.c.b16 %v6313, %v6312
    %v7731 = vpack.c.b16 %v6315, %v6314
    %v7732 = vpack.c.b16 %v6317, %v6316
    %v7733 = vpack.c.b16 %v6319, %v6318
    %v7734 = vpack.c.b16 %v6321, %v6320
    %v7735 = vpack.c.b16 %v6323, %v6322
    %v7736 = vpack.c.b16 %v6325, %v6324
    %v7737 = vpack.c.b16 %v6327, %v6326
    %v7738 = vpack.c.b16 %v6329, %v6328
    %v7739 = vpack.c.b16 %v6331, %v6330
    %v7740 = vpack.c.b16 %v6333, %v6332
    %v7741 = vpack.c.b16 %v6335, %v6334
    %v7742 = vpack.c.b16 %v6337, %v6336
    %v7743 = vpack.c.b16 %v6339, %v6338
    %v7744 = vpack.c.b16 %v6341, %v6340
    %v7745 = vpack.c.b16 %v6343, %v6342
    %v7746 = vpack.c.b16 %v6345, %v6344
    %v7747 = vpack.c.b16 %v6347, %v6346
    %v7748 = vpack.c.b16 %v6349, %v6348
    %v7749 = vpack.c.b16 %v6351, %v6350
    %v7750 = vpack.c.b16 %v6353, %v6352
    %v7751 = vpack.c.b16 %v6355, %v6354
    %v7752 = vpack.c.b16 %v6357, %v6356
    %v7753 = vpack.c.b16 %v6359, %v6358
    %v7754 = vpack.c.b16 %v6361, %v6360
    %v7755 = vpack.c.b16 %v6363, %v6362
    %v7756 = vpack.c.b16 %v6365, %v6364
    %v7757 = vpack.c.b16 %v6367, %v6366
    %v7758 = vpack.c.b16 %v6369, %v6368
    %v7759 = vpack.c.b16 %v6371, %v6370
    %v7760 = vpack.c.b16 %v6373, %v6372
    %v7761 = vpack.c.b16 %v6375, %v6374
    %v7762 = vpack.c.b16 %v6377, %v6376
    %v7763 = vpack.c.b16 %v6379, %v6378
    %v7764 = vpack.c.b16 %v6381, %v6380
    %v7765 = vpack.c.b16 %v6383, %v6382
    %v7766 = vpack.c.b16 %v6385, %v6384
    %v7767 = vpack.c.b16 %v6387, %v6386
    %v7768 = vpack.c.b16 %v6389, %v6388
    %v7769 = vpack.c.b16 %v6391, %v6390
    %v7770 = vpack.c.b16 %v6393, %v6392
    %v7771 = vpack.c.b16 %v6395, %v6394
    %v7772 = vpack.c.b16 %v6397, %v6396
    %v7773 = vpack.c.b16 %v6399, %v6398
    %v7774 = vpack.c.b16 %v6401, %v6400
    %v7775 = vpack.c.b16 %v6403, %v6402
    %v7776 = vpack.c.b16 %v6405, %v6404
    %v7777 = vpack.c.b16 %v6407, %v6406
    %v7778 = vpack.c.b16 %v6409, %v6408
    %v7779 = vpack.c.b16 %v6411, %v6410
    %v7780 = vpack.c.b16 %v6413, %v6412
    %v7781 = vpack.c.b16 %v6415, %v6414
    %v7782 = vpack.c.b16 %v6417, %v6416
    %v7783 = vpack.c.b16 %v6419, %v6418
    %v7784 = vpack.c.b16 %v6421, %v6420
    %v7785 = vpack.c.b16 %v6423, %v6422
    %v7786 = vpack.c.b16 %v6425, %v6424
    %v7787 = vpack.c.b16 %v6427, %v6426
    %v7788 = vpack.c.b16 %v6429, %v6428
    %v7789 = vpack.c.b16 %v6431, %v6430
    %v7790 = vpack.c.b16 %v6433, %v6432
    %v7791 = vpack.c.b16 %v6435, %v6434
    %v7792 = vpack.c.b16 %v6437, %v6436
    %v7793 = vpack.c.b16 %v6439, %v6438
    %v7794 = vpack.c.b16 %v6441, %v6440
    %v7795 = vpack.c.b16 %v6443, %v6442
    %v7796 = vpack.c.b16 %v6445, %v6444
    %v7797 = vpack.c.b16 %v6447, %v6446
    %v7798 = vpack.c.b16 %v6449, %v6448
    %v7799 = vpack.c.b16 %v6451, %v6450
    %v7800 = vpack.c.b16 %v6453, %v6452
    %v7801 = vpack.c.b16 %v6455, %v6454
    %v7802 = vpack.c.b16 %v6457, %v6456
    %v7803 = vpack.c.b16 %v6459, %v6458
    %v7804 = vpack.c.b16 %v6461, %v6460
    %v7805 = vpack.c.b16 %v6463, %v6462
    %v7806 = vpack.c.b16 %v6465, %v6464
    %v7807 = vpack.c.b16 %v6467, %v6466
    %v7808 = vpack.c.b16 %v6469, %v6468
    %v7809 = vpack.c.b16 %v6471, %v6470
    %v7810 = vpack.c.b16 %v6473, %v6472
    %v7811 = vpack.c.b16 %v6475, %v6474
    %v7812 = vpack.c.b16 %v6477, %v6476
    %v7813 = vpack.c.b16 %v6479, %v6478
    %v7814 = vpack.c.b16 %v6481, %v6480
    %v7815 = vpack.c.b16 %v6483, %v6482
    %v7816 = vpack.c.b16 %v6485, %v6484
    %v7817 = vpack.c.b16 %v6487, %v6486
    %v7818 = vpack.c.b16 %v6489, %v6488
    %v7819 = vpack.c.b16 %v6491, %v6490
    %v7820 = vpack.c.b16 %v6493, %v6492
    %v7821 = vpack.c.b16 %v6495, %v6494
    %v7822 = vpack.c.b16 %v6497, %v6496
    %v7823 = vpack.c.b16 %v6499, %v6498
    %v7824 = vpack.c.b16 %v6501, %v6500
    %v7825 = vpack.c.b16 %v6503, %v6502
    %v7826 = vpack.c.b16 %v6505, %v6504
    %v7827 = vpack.c.b16 %v6507, %v6506
    %v7828 = vpack.c.b16 %v6509, %v6508
    %v7829 = vpack.c.b16 %v6511, %v6510
    %v7830 = vpack.c.b16 %v6513, %v6512
    %v7831 = vpack.c.b16 %v6515, %v6514
    %v7832 = vpack.c.b16 %v6517, %v6516
    %v7833 = vpack.c.b16 %v6519, %v6518
    %v7834 = vpack.c.b16 %v6521, %v6520
    %v7835 = vpack.c.b16 %v6523, %v6522
    %v7836 = vpack.c.b16 %v6525, %v6524
    %v7837 = vpack.c.b16 %v6527, %v6526
    %v7838 = vpack.c.b16 %v6529, %v6528
    %v7839 = vpack.c.b16 %v6531, %v6530
    %v7840 = vpack.c.b16 %v6533, %v6532
    %v7841 = vpack.c.b16 %v6535, %v6534
    %v7842 = vpack.c.b16 %v6537, %v6536
    %v7843 = vpack.c.b16 %v6539, %v6538
    %v7844 = vpack.c.b16 %v6541, %v6540
    %v7845 = vpack.c.b16 %v6543, %v6542
    %v7846 = vpack.c.b16 %v6545, %v6544
    %v7847 = vpack.c.b16 %v6547, %v6546
    %v7848 = vpack.c.b16 %v6549, %v6548
    %v7849 = vpack.c.b16 %v6551, %v6550
    %v7850 = vpack.c.b16 %v6553, %v6552
    %v7851 = vpack.c.b16 %v6555, %v6554
    %v7852 = vpack.c.b16 %v6557, %v6556
    %v7853 = vpack.c.b16 %v6559, %v6558
    %v7854 = vpack.c.b16 %v6561, %v6560
    %v7855 = vpack.c.b16 %v6563, %v6562
    %v7856 = vpack.c.b16 %v6565, %v6564
    %v7857 = vpack.c.b16 %v6567, %v6566
    %v7858 = vpack.c.b16 %v6569, %v6568
    %v7859 = vpack.c.b16 %v6571, %v6570
    %v7860 = vpack.c.b16 %v6573, %v6572
    %v7861 = vpack.c.b16 %v6575, %v6574
    %v7862 = vpack.c.b16 %v6577, %v6576
    %v7863 = vpack.c.b16 %v6579, %v6578
    %v7864 = vpack.c.b16 %v6581, %v6580
    %v7865 = vpack.c.b16 %v6583, %v6582
    %v7866 = vpack.c.b16 %v6585, %v6584
    %v7867 = vpack.c.b16 %v6587, %v6586
    %v7868 = vpack.c.b16 %v6589, %v6588
    %v7869 = vpack.c.b16 %v6591, %v6590
    %v7870 = vpack.c.b16 %v6593, %v6592
    %v7871 = vpack.c.b16 %v6595, %v6594
    %v7872 = vpack.c.b16 %v6597, %v6596
    %v7873 = vpack.c.b16 %v6599, %v6598
    %v7874 = vpack.c.b16 %v6601, %v6600
    %v7875 = vpack.c.b16 %v6603, %v6602
    %v7876 = vpack.c.b16 %v6605, %v6604
    %v7877 = vpack.c.b16 %v6607, %v6606
    %v7878 = vpack.c.b16 %v6609, %v6608
    %v7879 = vpack.c.b16 %v6611, %v6610
    %v7880 = vpack.c.b16 %v6613, %v6612
    %v7881 = vpack.c.b16 %v6615, %v6614
    %v7882 = vpack.c.b16 %v6617, %v6616
    %v7883 = vpack.c.b16 %v6619, %v6618
    %v7884 = vpack.c.b16 %v6621, %v6620
    %v7885 = vpack.c.b16 %v6623, %v6622
    %v7886 = vpack.c.b16 %v6625, %v6624
    %v7887 = vpack.c.b16 %v6627, %v6626
    %v7888 = vpack.c.b16 %v6629, %v6628
    %v7889 = vpack.c.b16 %v6631, %v6630
    %v7890 = vpack.c.b16 %v6633, %v6632
    %v7891 = vpack.c.b16 %v6635, %v6634
    %v7892 = vpack.c.b16 %v6637, %v6636
    %v7893 = vpack.c.b16 %v6639, %v6638
    %v7894 = vpack.c.b16 %v6641, %v6640
    %v7895 = vpack.c.b16 %v6643, %v6642
    %v7896 = vpack.c.b16 %v6645, %v6644
    %v7897 = vpack.c.b16 %v6647, %v6646
    %v7898 = vpack.c.b16 %v6649, %v6648
    %v7899 = vpack.c.b16 %v6651, %v6650
    %v7900 = vpack.c.b16 %v6653, %v6652
    %v7901 = vpack.c.b16 %v6655, %v6654
    %v7902 = vpack.c.b16 %v6657, %v6656
    %v7903 = vpack.c.b16 %v6659, %v6658
    %v7904 = vpack.c.b16 %v6661, %v6660
    %v7905 = vpack.c.b16 %v6663, %v6662
    %v7906 = vpack.c.b16 %v6665, %v6664
    %v7907 = vpack.c.b16 %v6667, %v6666
    %v7908 = vpack.c.b16 %v6669, %v6668
    %v7909 = vpack.c.b16 %v6671, %v6670
    %v7910 = vpack.c.b16 %v6673, %v6672
    %v7911 = vpack.c.b16 %v6675, %v6674
    %v7912 = vpack.c.b16 %v6677, %v6676
    %v7913 = vpack.c.b16 %v6679, %v6678
    %v7914 = vpack.c.b16 %v6681, %v6680
    %v7915 = vpack.c.b16 %v6683, %v6682
    %v7916 = vpack.c.b16 %v6685, %v6684
    %v7917 = vpack.c.b16 %v6687, %v6686
    %v7918 = vpack.c.b16 %v6689, %v6688
    %v7919 = vpack.c.b16 %v6691, %v6690
    %v7920 = vpack.c.b16 %v6693, %v6692
    %v7921 = vpack.c.b16 %v6695, %v6694
    %v7922 = vpack.c.b16 %v6697, %v6696
    %v7923 = vpack.c.b16 %v6699, %v6698
    %v7924 = vpack.c.b16 %v6701, %v6700
    %v7925 = vpack.c.b16 %v6703, %v6702
    %v7926 = vpack.c.b16 %v6705, %v6704
    %v7927 = vpack.c.b16 %v6707, %v6706
    %v7928 = vpack.c.b16 %v6709, %v6708
    %v7929 = vpack.c.b16 %v6711, %v6710
    %v7930 = vpack.c.b16 %v6713, %v6712
    %v7931 = vpack.c.b16 %v6715, %v6714
    %v7932 = vpack.c.b16 %v6717, %v6716
    %v7933 = vpack.c.b16 %v6719, %v6718
    %v7934 = vpack.c.b16 %v6721, %v6720
    %v7935 = vpack.c.b16 %v6723, %v6722
    %v7936 = vpack.c.b16 %v6725, %v6724
    %v7937 = vpack.c.b16 %v6727, %v6726
    %v7938 = vpack.c.b16 %v6729, %v6728
    %v7939 = vpack.c.b16 %v6731, %v6730
    %v7940 = vpack.c.b16 %v6733, %v6732
    %v7941 = vpack.c.b16 %v6735, %v6734
    %v7942 = vpack.c.b16 %v6737, %v6736
    %v7943 = vpack.c.b16 %v6739, %v6738
    %v7944 = vpack.c.b16 %v6741, %v6740
    %v7945 = vpack.c.b16 %v6743, %v6742
    %v7946 = vpack.c.b16 %v6745, %v6744
    %v7947 = vpack.c.b16 %v6747, %v6746
    %v7948 = vpack.c.b16 %v6749, %v6748
    %v7949 = vpack.c.b16 %v6751, %v6750
    %v7950 = vpack.c.b16 %v6753, %v6752
    %v7951 = vpack.c.b16 %v6755, %v6754
    %v7952 = vpack.c.b16 %v6757, %v6756
    %v7953 = vpack.c.b16 %v6759, %v6758
    %v7954 = vpack.c.b16 %v6761, %v6760
    %v7955 = vpack.c.b16 %v6763, %v6762
    %v7956 = vpack.c.b16 %v6765, %v6764
    %v7957 = vpack.c.b16 %v6767, %v6766
    %v7958 = vpack.c.b16 %v6769, %v6768
    %v7959 = vpack.c.b16 %v6771, %v6770
    %v7960 = vpack.c.b16 %v6773, %v6772
    %v7961 = vpack.c.b16 %v6775, %v6774
    %v7962 = vpack.c.b16 %v6777, %v6776
    %v7963 = vpack.c.b16 %v6779, %v6778
    %v7964 = vpack.c.b16 %v6781, %v6780
    %v7965 = vpack.c.b16 %v6783, %v6782
    %v7966 = vpack.c.b16 %v6785, %v6784
    %v7967 = vpack.c.b16 %v6787, %v6786
    %v7968 = vpack.c.b16 %v6789, %v6788
    %v7969 = vpack.c.b16 %v6791, %v6790
    %v7970 = vpack.c.b16 %v6793, %v6792
    %v7971 = vpack.c.b16 %v6795, %v6794
    %v7972 = vpack.c.b16 %v6797, %v6796
    %v7973 = vpack.c.b16 %v6799, %v6798
    %v7974 = vpack.c.b16 %v6801, %v6800
    %v7975 = vpack.c.b16 %v6803, %v6802
    %v7976 = vpack.c.b16 %v6805, %v6804
    %v7977 = vpack.c.b16 %v6807, %v6806
    %v7978 = vpack.c.b16 %v6809, %v6808
    %v7979 = vpack.c.b16 %v6811, %v6810
    %v7980 = vpack.c.b16 %v6813, %v6812
    %v7981 = vpack.c.b16 %v6815, %v6814
    %v7982 = vpack.c.b16 %v6817, %v6816
    %v7983 = vpack.c.b16 %v6819, %v6818
    %v7984 = vpack.c.b16 %v6821, %v6820
    %v7985 = vpack.c.b16 %v6823, %v6822
    %v7986 = vpack.c.b16 %v6825, %v6824
    %v7987 = vpack.c.b16 %v6827, %v6826
    %v7988 = vpack.c.b16 %v6829, %v6828
    %v7989 = vpack.c.b16 %v6831, %v6830
    %v7990 = vpack.c.b16 %v6833, %v6832
    %v7991 = vpack.c.b16 %v6835, %v6834
    %v7992 = vpack.c.b16 %v6837, %v6836
    %v7993 = vpack.c.b16 %v6839, %v6838
    %v7994 = vpack.c.b16 %v6841, %v6840
    %v7995 = vpack.c.b16 %v6843, %v6842
    %v7996 = vpack.c.b16 %v6845, %v6844
    %v7997 = vpack.c.b16 %v6847, %v6846
    %v7998 = vpack.c.b16 %v6849, %v6848
    %v7999 = vpack.c.b16 %v6851, %v6850
    %v8000 = vpack.c.b16 %v6853, %v6852
    %v8001 = vpack.c.b16 %v6855, %v6854
    %v8002 = vpack.c.b16 %v6857, %v6856
    %v8003 = vpack.c.b16 %v6859, %v6858
    %v8004 = vpack.c.b16 %v6861, %v6860
    %v8005 = vpack.c.b16 %v6863, %v6862
    %v8006 = vpack.c.b16 %v6865, %v6864
    %v8007 = vpack.c.b16 %v6867, %v6866
    %v8008 = vpack.c.b16 %v6869, %v6868
    %v8009 = vpack.c.b16 %v6871, %v6870
    %v8010 = vpack.c.b16 %v6873, %v6872
    %v8011 = vpack.c.b16 %v6875, %v6874
    %v8012 = vpack.c.b16 %v6877, %v6876
    %v8013 = vpack.c.b16 %v6879, %v6878
    %v8014 = vpack.c.b16 %v6881, %v6880
    %v8015 = vpack.c.b16 %v6883, %v6882
    %v8016 = vpack.c.b16 %v6885, %v6884
    %v8017 = vpack.c.b16 %v6887, %v6886
    %v8018 = vpack.c.b16 %v6889, %v6888
    %v8019 = vpack.c.b16 %v6891, %v6890
    %v8020 = vpack.c.b16 %v6893, %v6892
    %v8021 = vpack.c.b16 %v6895, %v6894
    %v8022 = vpack.c.b16 %v6897, %v6896
    %v8023 = vpack.c.b16 %v6899, %v6898
    %v8024 = vpack.c.b16 %v6901, %v6900
    %v8025 = vpack.c.b16 %v6903, %v6902
    %v8026 = vpack.c.b16 %v6905, %v6904
    %v8027 = vpack.c.b16 %v6907, %v6906
    %v8028 = vpack.c.b16 %v6909, %v6908
    %v8029 = vpack.c.b16 %v6911, %v6910
    %v8030 = vpack.c.b16 %v6913, %v6912
    %v8031 = vpack.c.b16 %v6915, %v6914
    %v8032 = vpack.c.b16 %v6917, %v6916
    %v8033 = vpack.c.b16 %v6919, %v6918
    %v8034 = vpack.c.b16 %v6921, %v6920
    %v8035 = vpack.c.b16 %v6923, %v6922
    %v8036 = vpack.c.b16 %v6925, %v6924
    %v8037 = vpack.c.b16 %v6927, %v6926
    %v8038 = vpack.c.b16 %v6929, %v6928
    %v8039 = vpack.c.b16 %v6931, %v6930
    %v8040 = vpack.c.b16 %v6933, %v6932
    %v8041 = vpack.c.b16 %v6935, %v6934
    %v8042 = vpack.c.b16 %v6937, %v6936
    %v8043 = vpack.c.b16 %v6939, %v6938
    %v8044 = vpack.c.b16 %v6941, %v6940
    %v8045 = vpack.c.b16 %v6943, %v6942
    %v8046 = vpack.c.b16 %v6945, %v6944
    %v8047 = vpack.c.b16 %v6947, %v6946
    %v8048 = vpack.c.b16 %v6949, %v6948
    %v8049 = vpack.c.b16 %v6951, %v6950
    %v8050 = vpack.c.b16 %v6953, %v6952
    %v8051 = vpack.c.b16 %v6955, %v6954
    %v8052 = vpack.c.b16 %v6957, %v6956
    %v8053 = vpack.c.b16 %v6959, %v6958
    %v8054 = vpack.c.b16 %v6961, %v6960
    %v8055 = vpack.c.b16 %v6963, %v6962
    %v8056 = vpack.c.b16 %v6965, %v6964
    %v8057 = vpack.c.b16 %v6967, %v6966
    %v8058 = vpack.c.b16 %v6969, %v6968
    %v8059 = vpack.c.b16 %v6971, %v6970
    %v8060 = vpack.c.b16 %v6973, %v6972
    %v8061 = vpack.c.b16 %v6975, %v6974
    %v8062 = vpack.c.b16 %v6977, %v6976
    %v8063 = vpack.c.b16 %v6979, %v6978
    %v8064 = vpack.c.b16 %v6981, %v6980
    %v8065 = vpack.c.b16 %v6983, %v6982
    %v8066 = vpack.c.b16 %v6985, %v6984
    %v8067 = vpack.c.b16 %v6987, %v6986
    %v8068 = vpack.c.b16 %v6989, %v6988
    %v8069 = vpack.c.b16 %v6991, %v6990
    %v8070 = vpack.c.b16 %v6993, %v6992
    %v8071 = vpack.c.b16 %v6995, %v6994
    %v8072 = vpack.c.b16 %v6997, %v6996
    %v8073 = vpack.c.b16 %v6999, %v6998
    %v8074 = vpack.c.b16 %v7001, %v7000
    %v8075 = vpack.c.b16 %v7003, %v7002
    %v8076 = vpack.c.b16 %v7005, %v7004
    %v8077 = vpack.c.b16 %v7007, %v7006
    %v8078 = vpack.c.b16 %v7009, %v7008
    %v8079 = vpack.c.b16 %v7011, %v7010
    %v8080 = vpack.c.b16 %v7013, %v7012
    %v8081 = vpack.c.b16 %v7015, %v7014
    %v8082 = vpack.c.b16 %v7017, %v7016
    %v8083 = vpack.c.b16 %v7019, %v7018
    %v8084 = vpack.c.b16 %v7021, %v7020
    %v8085 = vpack.c.b16 %v7023, %v7022
    %v8086 = vpack.c.b16 %v7025, %v7024
    %v8087 = vpack.c.b16 %v7027, %v7026
    %v8088 = vpack.c.b16 %v7029, %v7028
    %v8089 = vpack.c.b16 %v7031, %v7030
    %v8090 = vpack.c.b16 %v7033, %v7032
    %v8091 = vpack.c.b16 %v7035, %v7034
    %v8092 = vpack.c.b16 %v7037, %v7036
    %v8093 = vpack.c.b16 %v7039, %v7038
    %v8094 = vpack.c.b16 %v7041, %v7040
    %v8095 = vpack.c.b16 %v7043, %v7042
    %v8096 = vpack.c.b16 %v7045, %v7044
    %v8097 = vpack.c.b16 %v7047, %v7046
    %v8098 = vpack.c.b16 %v7049, %v7048
    %v8099 = vpack.c.b16 %v7051, %v7050
    %v8100 = vpack.c.b16 %v7053, %v7052
    %v8101 = vpack.c.b16 %v7055, %v7054
    %v8102 = vpack.c.b16 %v7057, %v7056
    %v8103 = vpack.c.b16 %v7059, %v7058
    %v8104 = vpack.c.b16 %v7061, %v7060
    %v8105 = vpack.c.b16 %v7063, %v7062
    %v8106 = vpack.c.b16 %v7065, %v7064
    %v8107 = vpack.c.b16 %v7067, %v7066
    %v8108 = vpack.c.b16 %v7069, %v7068
    %v8109 = vpack.c.b16 %v7071, %v7070
    %v8110 = vpack.c.b16 %v7073, %v7072
    %v8111 = vpack.c.b16 %v7075, %v7074
    %v8112 = vpack.c.b16 %v7077, %v7076
    %v8113 = vpack.c.b16 %v7079, %v7078
    %v8114 = vpack.c.b16 %v7081, %v7080
    %v8115 = vpack.c.b16 %v7083, %v7082
    %v8116 = vpack.c.b16 %v7085, %v7084
    %v8117 = vpack.c.b16 %v7087, %v7086
    %v8118 = vpack.c.b16 %v7089, %v7088
    %v8119 = vpack.c.b16 %v7091, %v7090
    %v8120 = vpack.c.b16 %v7093, %v7092
    %v8121 = vpack.c.b16 %v7095, %v7094
    %v8122 = vpack.c.b16 %v7097, %v7096
    %v8123 = vpack.c.b16 %v7099, %v7098
    %9148 = vmatprep.subr.bf16.mxu0 0
    %9149 = vmatpush1.bf16.msra.mxu0 %v7100
    %9150 = vmatprep.subr.bf16.mxu0 0
    %9151 = vmatpush1.bf16.msra.mxu0 %v7101
    %9152 = vmatprep.subr.bf16.mxu0 0
    %9153 = vmatpush1.bf16.msra.mxu0 %v7102
    %9154 = vmatprep.subr.bf16.mxu0 0
    %9155 = vmatpush1.bf16.msra.mxu0 %v7103
    %9156 = vmatprep.subr.bf16.mxu0 0
    %9157 = vmatpush1.bf16.msra.mxu0 %v7104
    %9158 = vmatprep.subr.bf16.mxu0 0
    %9159 = vmatpush1.bf16.msra.mxu0 %v7105
    %9160 = vmatprep.subr.bf16.mxu0 0
    %9161 = vmatpush1.bf16.msra.mxu0 %v7106
    %9162 = vmatprep.subr.bf16.mxu0 0
    %9163 = vmatpush1.bf16.msra.mxu0 %v7107
    %9164 = vmatprep.subr.bf16.mxu0 0
    %9165 = vmatpush1.bf16.msra.mxu0 %v7108
    %9166 = vmatprep.subr.bf16.mxu0 0
    %9167 = vmatpush1.bf16.msra.mxu0 %v7109
    %9168 = vmatprep.subr.bf16.mxu0 0
    %9169 = vmatpush1.bf16.msra.mxu0 %v7110
    %9170 = vmatprep.subr.bf16.mxu0 0
    %9171 = vmatpush1.bf16.msra.mxu0 %v7111
    %9172 = vmatprep.subr.bf16.mxu0 0
    %9173 = vmatpush1.bf16.msra.mxu0 %v7112
    %9174 = vmatprep.subr.bf16.mxu0 0
    %9175 = vmatpush1.bf16.msra.mxu0 %v7113
    %9176 = vmatprep.subr.bf16.mxu0 0
    %9177 = vmatpush1.bf16.msra.mxu0 %v7114
    %9178 = vmatprep.subr.bf16.mxu0 0
    %9179 = vmatpush1.bf16.msra.mxu0 %v7115
    %9180 = vmatprep.mubr.bf16.mxu0 %v822
    %9181 = vmatmul.mubr.bf16.gmra.mrb[0].mxu0 %v821
    %v9182 = vpop.f32.mrb[0].mxu0
    %v9183 = vadd.f32 %v3002, %v9182
    %v9184 = vpop.f32.mrb[0].mxu0
    %v9185 = vpop.f32.mrb[0].mxu0
    %v9186 = vpop.f32.mrb[0].mxu0
    %9187 = vdwg.mxu0
    %9188 = vmatprep.subr.bf16.mxu0 0
    %9189 = vmatpush1.bf16.msra.mxu0 %v7116
    %9190 = vmatprep.subr.bf16.mxu0 0
    %9191 = vmatpush1.bf16.msra.mxu0 %v7117
    %9192 = vmatprep.subr.bf16.mxu0 0
    %9193 = vmatpush1.bf16.msra.mxu0 %v7118
    %9194 = vmatprep.subr.bf16.mxu0 0
    %9195 = vmatpush1.bf16.msra.mxu0 %v7119
    %9196 = vmatprep.subr.bf16.mxu0 0
    %9197 = vmatpush1.bf16.msra.mxu0 %v7120
    %9198 = vmatprep.subr.bf16.mxu0 0
    %9199 = vmatpush1.bf16.msra.mxu0 %v7121
    %9200 = vmatprep.subr.bf16.mxu0 0
    %9201 = vmatpush1.bf16.msra.mxu0 %v7122
    %9202 = vmatprep.subr.bf16.mxu0 0
    %9203 = vmatpush1.bf16.msra.mxu0 %v7123
    %9204 = vmatprep.subr.bf16.mxu0 0
    %9205 = vmatpush1.bf16.msra.mxu0 %v7124
    %9206 = vmatprep.subr.bf16.mxu0 0
    %9207 = vmatpush1.bf16.msra.mxu0 %v7125
    %9208 = vmatprep.subr.bf16.mxu0 0
    %9209 = vmatpush1.bf16.msra.mxu0 %v7126
    %9210 = vmatprep.subr.bf16.mxu0 0
    %9211 = vmatpush1.bf16.msra.mxu0 %v7127
    %9212 = vmatprep.subr.bf16.mxu0 0
    %9213 = vmatpush1.bf16.msra.mxu0 %v7128
    %9214 = vmatprep.subr.bf16.mxu0 0
    %9215 = vmatpush1.bf16.msra.mxu0 %v7129
    %9216 = vmatprep.subr.bf16.mxu0 0
    %9217 = vmatpush1.bf16.msra.mxu0 %v7130
    %9218 = vmatprep.subr.bf16.mxu0 0
    %9219 = vmatpush1.bf16.msra.mxu0 %v7131
    %9220 = vmatprep.mubr.bf16.mxu0 %v824
    %9221 = vmatmul.mubr.bf16.gmra.mrb[0].mxu0 %v823
    %v9222 = vpop.f32.mrb[0].mxu0
    %v9223 = vadd.f32 %v9183, %v9222
    %v9224 = vpop.f32.mrb[0].mxu0
    %v9225 = vpop.f32.mrb[0].mxu0
    %v9226 = vpop.f32.mrb[0].mxu0
    %9227 = vdwg.mxu0
    %9228 = vmatprep.subr.bf16.mxu0 0
    %9229 = vmatpush1.bf16.msra.mxu0 %v7132
    %9230 = vmatprep.subr.bf16.mxu0 0
    %9231 = vmatpush1.bf16.msra.mxu0 %v7133
    %9232 = vmatprep.subr.bf16.mxu0 0
    %9233 = vmatpush1.bf16.msra.mxu0 %v7134
    %9234 = vmatprep.subr.bf16.mxu0 0
    %9235 = vmatpush1.bf16.msra.mxu0 %v7135
    %9236 = vmatprep.subr.bf16.mxu0 0
    %9237 = vmatpush1.bf16.msra.mxu0 %v7136
    %9238 = vmatprep.subr.bf16.mxu0 0
    %9239 = vmatpush1.bf16.msra.mxu0 %v7137
    %9240 = vmatprep.subr.bf16.mxu0 0
    %9241 = vmatpush1.bf16.msra.mxu0 %v7138
    %9242 = vmatprep.subr.bf16.mxu0 0
    %9243 = vmatpush1.bf16.msra.mxu0 %v7139
    %9244 = vmatprep.subr.bf16.mxu0 0
    %9245 = vmatpush1.bf16.msra.mxu0 %v7140
    %9246 = vmatprep.subr.bf16.mxu0 0
    %9247 = vmatpush1.bf16.msra.mxu0 %v7141
    %9248 = vmatprep.subr.bf16.mxu0 0
    %9249 = vmatpush1.bf16.msra.mxu0 %v7142
    %9250 = vmatprep.subr.bf16.mxu0 0
    %9251 = vmatpush1.bf16.msra.mxu0 %v7143
    %9252 = vmatprep.subr.bf16.mxu0 0
    %9253 = vmatpush1.bf16.msra.mxu0 %v7144
    %9254 = vmatprep.subr.bf16.mxu0 0
    %9255 = vmatpush1.bf16.msra.mxu0 %v7145
    %9256 = vmatprep.subr.bf16.mxu0 0
    %9257 = vmatpush1.bf16.msra.mxu0 %v7146
    %9258 = vmatprep.subr.bf16.mxu0 0
    %9259 = vmatpush1.bf16.msra.mxu0 %v7147
    %9260 = vmatprep.mubr.bf16.mxu0 %v826
    %9261 = vmatmul.mubr.bf16.gmra.mrb[0].mxu0 %v825
    %v9262 = vpop.f32.mrb[0].mxu0
    %v9263 = vadd.f32 %v9223, %v9262
    %v9264 = vpop.f32.mrb[0].mxu0
    %v9265 = vpop.f32.mrb[0].mxu0
    %v9266 = vpop.f32.mrb[0].mxu0
    %9267 = vdwg.mxu0
    %9268 = vmatprep.subr.bf16.mxu0 0
    %9269 = vmatpush1.bf16.msra.mxu0 %v7148
    %9270 = vmatprep.subr.bf16.mxu0 0
    %9271 = vmatpush1.bf16.msra.mxu0 %v7149
    %9272 = vmatprep.subr.bf16.mxu0 0
    %9273 = vmatpush1.bf16.msra.mxu0 %v7150
    %9274 = vmatprep.subr.bf16.mxu0 0
    %9275 = vmatpush1.bf16.msra.mxu0 %v7151
    %9276 = vmatprep.subr.bf16.mxu0 0
    %9277 = vmatpush1.bf16.msra.mxu0 %v7152
    %9278 = vmatprep.subr.bf16.mxu0 0
    %9279 = vmatpush1.bf16.msra.mxu0 %v7153
    %9280 = vmatprep.subr.bf16.mxu0 0
    %9281 = vmatpush1.bf16.msra.mxu0 %v7154
    %9282 = vmatprep.subr.bf16.mxu0 0
    %9283 = vmatpush1.bf16.msra.mxu0 %v7155
    %9284 = vmatprep.subr.bf16.mxu0 0
    %9285 = vmatpush1.bf16.msra.mxu0 %v7156
    %9286 = vmatprep.subr.bf16.mxu0 0
    %9287 = vmatpush1.bf16.msra.mxu0 %v7157
    %9288 = vmatprep.subr.bf16.mxu0 0
    %9289 = vmatpush1.bf16.msra.mxu0 %v7158
    %9290 = vmatprep.subr.bf16.mxu0 0
    %9291 = vmatpush1.bf16.msra.mxu0 %v7159
    %9292 = vmatprep.subr.bf16.mxu0 0
    %9293 = vmatpush1.bf16.msra.mxu0 %v7160
    %9294 = vmatprep.subr.bf16.mxu0 0
    %9295 = vmatpush1.bf16.msra.mxu0 %v7161
    %9296 = vmatprep.subr.bf16.mxu0 0
    %9297 = vmatpush1.bf16.msra.mxu0 %v7162
    %9298 = vmatprep.subr.bf16.mxu0 0
    %9299 = vmatpush1.bf16.msra.mxu0 %v7163
    %9300 = vmatprep.mubr.bf16.mxu0 %v828
    %9301 = vmatmul.mubr.bf16.gmra.mrb[0].mxu0 %v827
    %v9302 = vpop.f32.mrb[0].mxu0
    %v9303 = vadd.f32 %v9263, %v9302
    %v9304 = vpop.f32.mrb[0].mxu0
    %v9305 = vpop.f32.mrb[0].mxu0
    %v9306 = vpop.f32.mrb[0].mxu0
    %9307 = vdwg.mxu0
    %9308 = vmatprep.subr.bf16.mxu0 0
    %9309 = vmatpush1.bf16.msra.mxu0 %v7164
    %9310 = vmatprep.subr.bf16.mxu0 0
    %9311 = vmatpush1.bf16.msra.mxu0 %v7165
    %9312 = vmatprep.subr.bf16.mxu0 0
    %9313 = vmatpush1.bf16.msra.mxu0 %v7166
    %9314 = vmatprep.subr.bf16.mxu0 0
    %9315 = vmatpush1.bf16.msra.mxu0 %v7167
    %9316 = vmatprep.subr.bf16.mxu0 0
    %9317 = vmatpush1.bf16.msra.mxu0 %v7168
    %9318 = vmatprep.subr.bf16.mxu0 0
    %9319 = vmatpush1.bf16.msra.mxu0 %v7169
    %9320 = vmatprep.subr.bf16.mxu0 0
    %9321 = vmatpush1.bf16.msra.mxu0 %v7170
    %9322 = vmatprep.subr.bf16.mxu0 0
    %9323 = vmatpush1.bf16.msra.mxu0 %v7171
    %9324 = vmatprep.subr.bf16.mxu0 0
    %9325 = vmatpush1.bf16.msra.mxu0 %v7172
    %9326 = vmatprep.subr.bf16.mxu0 0
    %9327 = vmatpush1.bf16.msra.mxu0 %v7173
    %9328 = vmatprep.subr.bf16.mxu0 0
    %9329 = vmatpush1.bf16.msra.mxu0 %v7174
    %9330 = vmatprep.subr.bf16.mxu0 0
    %9331 = vmatpush1.bf16.msra.mxu0 %v7175
    %9332 = vmatprep.subr.bf16.mxu0 0
    %9333 = vmatpush1.bf16.msra.mxu0 %v7176
    %9334 = vmatprep.subr.bf16.mxu0 0
    %9335 = vmatpush1.bf16.msra.mxu0 %v7177
    %9336 = vmatprep.subr.bf16.mxu0 0
    %9337 = vmatpush1.bf16.msra.mxu0 %v7178
    %9338 = vmatprep.subr.bf16.mxu0 0
    %9339 = vmatpush1.bf16.msra.mxu0 %v7179
    %9340 = vmatprep.mubr.bf16.mxu0 %v830
    %9341 = vmatmul.mubr.bf16.gmra.mrb[0].mxu0 %v829
    %v9342 = vpop.f32.mrb[0].mxu0
    %v9343 = vadd.f32 %v9303, %v9342
    %v9344 = vpop.f32.mrb[0].mxu0
    %v9345 = vpop.f32.mrb[0].mxu0
    %v9346 = vpop.f32.mrb[0].mxu0
    %9347 = vdwg.mxu0
    %9348 = vmatprep.subr.bf16.mxu0 0
    %9349 = vmatpush1.bf16.msra.mxu0 %v7180
    %9350 = vmatprep.subr.bf16.mxu0 0
    %9351 = vmatpush1.bf16.msra.mxu0 %v7181
    %9352 = vmatprep.subr.bf16.mxu0 0
    %9353 = vmatpush1.bf16.msra.mxu0 %v7182
    %9354 = vmatprep.subr.bf16.mxu0 0
    %9355 = vmatpush1.bf16.msra.mxu0 %v7183
    %9356 = vmatprep.subr.bf16.mxu0 0
    %9357 = vmatpush1.bf16.msra.mxu0 %v7184
    %9358 = vmatprep.subr.bf16.mxu0 0
    %9359 = vmatpush1.bf16.msra.mxu0 %v7185
    %9360 = vmatprep.subr.bf16.mxu0 0
    %9361 = vmatpush1.bf16.msra.mxu0 %v7186
    %9362 = vmatprep.subr.bf16.mxu0 0
    %9363 = vmatpush1.bf16.msra.mxu0 %v7187
    %9364 = vmatprep.subr.bf16.mxu0 0
    %9365 = vmatpush1.bf16.msra.mxu0 %v7188
    %9366 = vmatprep.subr.bf16.mxu0 0
    %9367 = vmatpush1.bf16.msra.mxu0 %v7189
    %9368 = vmatprep.subr.bf16.mxu0 0
    %9369 = vmatpush1.bf16.msra.mxu0 %v7190
    %9370 = vmatprep.subr.bf16.mxu0 0
    %9371 = vmatpush1.bf16.msra.mxu0 %v7191
    %9372 = vmatprep.subr.bf16.mxu0 0
    %9373 = vmatpush1.bf16.msra.mxu0 %v7192
    %9374 = vmatprep.subr.bf16.mxu0 0
    %9375 = vmatpush1.bf16.msra.mxu0 %v7193
    %9376 = vmatprep.subr.bf16.mxu0 0
    %9377 = vmatpush1.bf16.msra.mxu0 %v7194
    %9378 = vmatprep.subr.bf16.mxu0 0
    %9379 = vmatpush1.bf16.msra.mxu0 %v7195
    %9380 = vmatprep.mubr.bf16.mxu0 %v832
    %9381 = vmatmul.mubr.bf16.gmra.mrb[0].mxu0 %v831
    %v9382 = vpop.f32.mrb[0].mxu0
    %v9383 = vadd.f32 %v9343, %v9382
    %v9384 = vpop.f32.mrb[0].mxu0
    %v9385 = vpop.f32.mrb[0].mxu0
    %v9386 = vpop.f32.mrb[0].mxu0
    %9387 = vdwg.mxu0
    %9388 = vmatprep.subr.bf16.mxu0 0
    %9389 = vmatpush1.bf16.msra.mxu0 %v7196
    %9390 = vmatprep.subr.bf16.mxu0 0
    %9391 = vmatpush1.bf16.msra.mxu0 %v7197
    %9392 = vmatprep.subr.bf16.mxu0 0
    %9393 = vmatpush1.bf16.msra.mxu0 %v7198
    %9394 = vmatprep.subr.bf16.mxu0 0
    %9395 = vmatpush1.bf16.msra.mxu0 %v7199
    %9396 = vmatprep.subr.bf16.mxu0 0
    %9397 = vmatpush1.bf16.msra.mxu0 %v7200
    %9398 = vmatprep.subr.bf16.mxu0 0
    %9399 = vmatpush1.bf16.msra.mxu0 %v7201
    %9400 = vmatprep.subr.bf16.mxu0 0
    %9401 = vmatpush1.bf16.msra.mxu0 %v7202
    %9402 = vmatprep.subr.bf16.mxu0 0
    %9403 = vmatpush1.bf16.msra.mxu0 %v7203
    %9404 = vmatprep.subr.bf16.mxu0 0
    %9405 = vmatpush1.bf16.msra.mxu0 %v7204
    %9406 = vmatprep.subr.bf16.mxu0 0
    %9407 = vmatpush1.bf16.msra.mxu0 %v7205
    %9408 = vmatprep.subr.bf16.mxu0 0
    %9409 = vmatpush1.bf16.msra.mxu0 %v7206
    %9410 = vmatprep.subr.bf16.mxu0 0
    %9411 = vmatpush1.bf16.msra.mxu0 %v7207
    %9412 = vmatprep.subr.bf16.mxu0 0
    %9413 = vmatpush1.bf16.msra.mxu0 %v7208
    %9414 = vmatprep.subr.bf16.mxu0 0
    %9415 = vmatpush1.bf16.msra.mxu0 %v7209
    %9416 = vmatprep.subr.bf16.mxu0 0
    %9417 = vmatpush1.bf16.msra.mxu0 %v7210
    %9418 = vmatprep.subr.bf16.mxu0 0
    %9419 = vmatpush1.bf16.msra.mxu0 %v7211
    %9420 = vmatprep.mubr.bf16.mxu0 %v834
    %9421 = vmatmul.mubr.bf16.gmra.mrb[0].mxu0 %v833
    %v9422 = vpop.f32.mrb[0].mxu0
    %v9423 = vadd.f32 %v9383, %v9422
    %v9424 = vpop.f32.mrb[0].mxu0
    %v9425 = vpop.f32.mrb[0].mxu0
    %v9426 = vpop.f32.mrb[0].mxu0
    %9427 = vdwg.mxu0
    %9428 = vmatprep.subr.bf16.mxu0 0
    %9429 = vmatpush1.bf16.msra.mxu0 %v7212
    %9430 = vmatprep.subr.bf16.mxu0 0
    %9431 = vmatpush1.bf16.msra.mxu0 %v7213
    %9432 = vmatprep.subr.bf16.mxu0 0
    %9433 = vmatpush1.bf16.msra.mxu0 %v7214
    %9434 = vmatprep.subr.bf16.mxu0 0
    %9435 = vmatpush1.bf16.msra.mxu0 %v7215
    %9436 = vmatprep.subr.bf16.mxu0 0
    %9437 = vmatpush1.bf16.msra.mxu0 %v7216
    %9438 = vmatprep.subr.bf16.mxu0 0
    %9439 = vmatpush1.bf16.msra.mxu0 %v7217
    %9440 = vmatprep.subr.bf16.mxu0 0
    %9441 = vmatpush1.bf16.msra.mxu0 %v7218
    %9442 = vmatprep.subr.bf16.mxu0 0
    %9443 = vmatpush1.bf16.msra.mxu0 %v7219
    %9444 = vmatprep.subr.bf16.mxu0 0
    %9445 = vmatpush1.bf16.msra.mxu0 %v7220
    %9446 = vmatprep.subr.bf16.mxu0 0
    %9447 = vmatpush1.bf16.msra.mxu0 %v7221
    %9448 = vmatprep.subr.bf16.mxu0 0
    %9449 = vmatpush1.bf16.msra.mxu0 %v7222
    %9450 = vmatprep.subr.bf16.mxu0 0
    %9451 = vmatpush1.bf16.msra.mxu0 %v7223
    %9452 = vmatprep.subr.bf16.mxu0 0
    %9453 = vmatpush1.bf16.msra.mxu0 %v7224
    %9454 = vmatprep.subr.bf16.mxu0 0
    %9455 = vmatpush1.bf16.msra.mxu0 %v7225
    %9456 = vmatprep.subr.bf16.mxu0 0
    %9457 = vmatpush1.bf16.msra.mxu0 %v7226
    %9458 = vmatprep.subr.bf16.mxu0 0
    %9459 = vmatpush1.bf16.msra.mxu0 %v7227
    %9460 = vmatprep.mubr.bf16.mxu0 %v836
    %9461 = vmatmul.mubr.bf16.gmra.mrb[0].mxu0 %v835
    %v9462 = vpop.f32.mrb[0].mxu0
    %v9463 = vadd.f32 %v9423, %v9462
    %v9464 = vpop.f32.mrb[0].mxu0
    %v9465 = vpop.f32.mrb[0].mxu0
    %v9466 = vpop.f32.mrb[0].mxu0
    %9467 = vdwg.mxu0
    %9468 = vmatprep.subr.bf16.mxu0 0
    %9469 = vmatpush1.bf16.msra.mxu0 %v7228
    %9470 = vmatprep.subr.bf16.mxu0 0
    %9471 = vmatpush1.bf16.msra.mxu0 %v7229
    %9472 = vmatprep.subr.bf16.mxu0 0
    %9473 = vmatpush1.bf16.msra.mxu0 %v7230
    %9474 = vmatprep.subr.bf16.mxu0 0
    %9475 = vmatpush1.bf16.msra.mxu0 %v7231
    %9476 = vmatprep.subr.bf16.mxu0 0
    %9477 = vmatpush1.bf16.msra.mxu0 %v7232
    %9478 = vmatprep.subr.bf16.mxu0 0
    %9479 = vmatpush1.bf16.msra.mxu0 %v7233
    %9480 = vmatprep.subr.bf16.mxu0 0
    %9481 = vmatpush1.bf16.msra.mxu0 %v7234
    %9482 = vmatprep.subr.bf16.mxu0 0
    %9483 = vmatpush1.bf16.msra.mxu0 %v7235
    %9484 = vmatprep.subr.bf16.mxu0 0
    %9485 = vmatpush1.bf16.msra.mxu0 %v7236
    %9486 = vmatprep.subr.bf16.mxu0 0
    %9487 = vmatpush1.bf16.msra.mxu0 %v7237
    %9488 = vmatprep.subr.bf16.mxu0 0
    %9489 = vmatpush1.bf16.msra.mxu0 %v7238
    %9490 = vmatprep.subr.bf16.mxu0 0
    %9491 = vmatpush1.bf16.msra.mxu0 %v7239
    %9492 = vmatprep.subr.bf16.mxu0 0
    %9493 = vmatpush1.bf16.msra.mxu0 %v7240
    %9494 = vmatprep.subr.bf16.mxu0 0
    %9495 = vmatpush1.bf16.msra.mxu0 %v7241
    %9496 = vmatprep.subr.bf16.mxu0 0
    %9497 = vmatpush1.bf16.msra.mxu0 %v7242
    %9498 = vmatprep.subr.bf16.mxu0 0
    %9499 = vmatpush1.bf16.msra.mxu0 %v7243
    %9500 = vmatprep.mubr.bf16.mxu0 %v838
    %9501 = vmatmul.mubr.bf16.gmra.mrb[0].mxu0 %v837
    %v9502 = vpop.f32.mrb[0].mxu0
    %v9503 = vadd.f32 %v9463, %v9502
    %v9504 = vpop.f32.mrb[0].mxu0
    %v9505 = vpop.f32.mrb[0].mxu0
    %v9506 = vpop.f32.mrb[0].mxu0
    %9507 = vdwg.mxu0
    %9508 = vmatprep.subr.bf16.mxu0 0
    %9509 = vmatpush1.bf16.msra.mxu0 %v7244
    %9510 = vmatprep.subr.bf16.mxu0 0
    %9511 = vmatpush1.bf16.msra.mxu0 %v7245
    %9512 = vmatprep.subr.bf16.mxu0 0
    %9513 = vmatpush1.bf16.msra.mxu0 %v7246
    %9514 = vmatprep.subr.bf16.mxu0 0
    %9515 = vmatpush1.bf16.msra.mxu0 %v7247
    %9516 = vmatprep.subr.bf16.mxu0 0
    %9517 = vmatpush1.bf16.msra.mxu0 %v7248
    %9518 = vmatprep.subr.bf16.mxu0 0
    %9519 = vmatpush1.bf16.msra.mxu0 %v7249
    %9520 = vmatprep.subr.bf16.mxu0 0
    %9521 = vmatpush1.bf16.msra.mxu0 %v7250
    %9522 = vmatprep.subr.bf16.mxu0 0
    %9523 = vmatpush1.bf16.msra.mxu0 %v7251
    %9524 = vmatprep.subr.bf16.mxu0 0
    %9525 = vmatpush1.bf16.msra.mxu0 %v7252
    %9526 = vmatprep.subr.bf16.mxu0 0
    %9527 = vmatpush1.bf16.msra.mxu0 %v7253
    %9528 = vmatprep.subr.bf16.mxu0 0
    %9529 = vmatpush1.bf16.msra.mxu0 %v7254
    %9530 = vmatprep.subr.bf16.mxu0 0
    %9531 = vmatpush1.bf16.msra.mxu0 %v7255
    %9532 = vmatprep.subr.bf16.mxu0 0
    %9533 = vmatpush1.bf16.msra.mxu0 %v7256
    %9534 = vmatprep.subr.bf16.mxu0 0
    %9535 = vmatpush1.bf16.msra.mxu0 %v7257
    %9536 = vmatprep.subr.bf16.mxu0 0
    %9537 = vmatpush1.bf16.msra.mxu0 %v7258
    %9538 = vmatprep.subr.bf16.mxu0 0
    %9539 = vmatpush1.bf16.msra.mxu0 %v7259
    %9540 = vmatprep.mubr.bf16.mxu0 %v840
    %9541 = vmatmul.mubr.bf16.gmra.mrb[0].mxu0 %v839
    %v9542 = vpop.f32.mrb[0].mxu0
    %v9543 = vadd.f32 %v9503, %v9542
    %v9544 = vpop.f32.mrb[0].mxu0
    %v9545 = vpop.f32.mrb[0].mxu0
    %v9546 = vpop.f32.mrb[0].mxu0
    %9547 = vdwg.mxu0
    %9548 = vmatprep.subr.bf16.mxu0 0
    %9549 = vmatpush1.bf16.msra.mxu0 %v7260
    %9550 = vmatprep.subr.bf16.mxu0 0
    %9551 = vmatpush1.bf16.msra.mxu0 %v7261
    %9552 = vmatprep.subr.bf16.mxu0 0
    %9553 = vmatpush1.bf16.msra.mxu0 %v7262
    %9554 = vmatprep.subr.bf16.mxu0 0
    %9555 = vmatpush1.bf16.msra.mxu0 %v7263
    %9556 = vmatprep.subr.bf16.mxu0 0
    %9557 = vmatpush1.bf16.msra.mxu0 %v7264
    %9558 = vmatprep.subr.bf16.mxu0 0
    %9559 = vmatpush1.bf16.msra.mxu0 %v7265
    %9560 = vmatprep.subr.bf16.mxu0 0
    %9561 = vmatpush1.bf16.msra.mxu0 %v7266
    %9562 = vmatprep.subr.bf16.mxu0 0
    %9563 = vmatpush1.bf16.msra.mxu0 %v7267
    %9564 = vmatprep.subr.bf16.mxu0 0
    %9565 = vmatpush1.bf16.msra.mxu0 %v7268
    %9566 = vmatprep.subr.bf16.mxu0 0
    %9567 = vmatpush1.bf16.msra.mxu0 %v7269
    %9568 = vmatprep.subr.bf16.mxu0 0
    %9569 = vmatpush1.bf16.msra.mxu0 %v7270
    %9570 = vmatprep.subr.bf16.mxu0 0
    %9571 = vmatpush1.bf16.msra.mxu0 %v7271
    %9572 = vmatprep.subr.bf16.mxu0 0
    %9573 = vmatpush1.bf16.msra.mxu0 %v7272
    %9574 = vmatprep.subr.bf16.mxu0 0
    %9575 = vmatpush1.bf16.msra.mxu0 %v7273
    %9576 = vmatprep.subr.bf16.mxu0 0
    %9577 = vmatpush1.bf16.msra.mxu0 %v7274
    %9578 = vmatprep.subr.bf16.mxu0 0
    %9579 = vmatpush1.bf16.msra.mxu0 %v7275
    %9580 = vmatprep.mubr.bf16.mxu0 %v842
    %9581 = vmatmul.mubr.bf16.gmra.mrb[0].mxu0 %v841
    %v9582 = vpop.f32.mrb[0].mxu0
    %v9583 = vadd.f32 %v9543, %v9582
    %v9584 = vpop.f32.mrb[0].mxu0
    %v9585 = vpop.f32.mrb[0].mxu0
    %v9586 = vpop.f32.mrb[0].mxu0
    %9587 = vdwg.mxu0
    %9588 = vmatprep.subr.bf16.mxu0 0
    %9589 = vmatpush1.bf16.msra.mxu0 %v7276
    %9590 = vmatprep.subr.bf16.mxu0 0
    %9591 = vmatpush1.bf16.msra.mxu0 %v7277
    %9592 = vmatprep.subr.bf16.mxu0 0
    %9593 = vmatpush1.bf16.msra.mxu0 %v7278
    %9594 = vmatprep.subr.bf16.mxu0 0
    %9595 = vmatpush1.bf16.msra.mxu0 %v7279
    %9596 = vmatprep.subr.bf16.mxu0 0
    %9597 = vmatpush1.bf16.msra.mxu0 %v7280
    %9598 = vmatprep.subr.bf16.mxu0 0
    %9599 = vmatpush1.bf16.msra.mxu0 %v7281
    %9600 = vmatprep.subr.bf16.mxu0 0
    %9601 = vmatpush1.bf16.msra.mxu0 %v7282
    %9602 = vmatprep.subr.bf16.mxu0 0
    %9603 = vmatpush1.bf16.msra.mxu0 %v7283
    %9604 = vmatprep.subr.bf16.mxu0 0
    %9605 = vmatpush1.bf16.msra.mxu0 %v7284
    %9606 = vmatprep.subr.bf16.mxu0 0
    %9607 = vmatpush1.bf16.msra.mxu0 %v7285
    %9608 = vmatprep.subr.bf16.mxu0 0
    %9609 = vmatpush1.bf16.msra.mxu0 %v7286
    %9610 = vmatprep.subr.bf16.mxu0 0
    %9611 = vmatpush1.bf16.msra.mxu0 %v7287
    %9612 = vmatprep.subr.bf16.mxu0 0
    %9613 = vmatpush1.bf16.msra.mxu0 %v7288
    %9614 = vmatprep.subr.bf16.mxu0 0
    %9615 = vmatpush1.bf16.msra.mxu0 %v7289
    %9616 = vmatprep.subr.bf16.mxu0 0
    %9617 = vmatpush1.bf16.msra.mxu0 %v7290
    %9618 = vmatprep.subr.bf16.mxu0 0
    %9619 = vmatpush1.bf16.msra.mxu0 %v7291
    %9620 = vmatprep.mubr.bf16.mxu0 %v844
    %9621 = vmatmul.mubr.bf16.gmra.mrb[0].mxu0 %v843
    %v9622 = vpop.f32.mrb[0].mxu0
    %v9623 = vadd.f32 %v9583, %v9622
    %v9624 = vpop.f32.mrb[0].mxu0
    %v9625 = vpop.f32.mrb[0].mxu0
    %v9626 = vpop.f32.mrb[0].mxu0
    %9627 = vdwg.mxu0
    %9628 = vmatprep.subr.bf16.mxu0 0
    %9629 = vmatpush1.bf16.msra.mxu0 %v7292
    %9630 = vmatprep.subr.bf16.mxu0 0
    %9631 = vmatpush1.bf16.msra.mxu0 %v7293
    %9632 = vmatprep.subr.bf16.mxu0 0
    %9633 = vmatpush1.bf16.msra.mxu0 %v7294
    %9634 = vmatprep.subr.bf16.mxu0 0
    %9635 = vmatpush1.bf16.msra.mxu0 %v7295
    %9636 = vmatprep.subr.bf16.mxu0 0
    %9637 = vmatpush1.bf16.msra.mxu0 %v7296
    %9638 = vmatprep.subr.bf16.mxu0 0
    %9639 = vmatpush1.bf16.msra.mxu0 %v7297
    %9640 = vmatprep.subr.bf16.mxu0 0
    %9641 = vmatpush1.bf16.msra.mxu0 %v7298
    %9642 = vmatprep.subr.bf16.mxu0 0
    %9643 = vmatpush1.bf16.msra.mxu0 %v7299
    %9644 = vmatprep.subr.bf16.mxu0 0
    %9645 = vmatpush1.bf16.msra.mxu0 %v7300
    %9646 = vmatprep.subr.bf16.mxu0 0
    %9647 = vmatpush1.bf16.msra.mxu0 %v7301
    %9648 = vmatprep.subr.bf16.mxu0 0
    %9649 = vmatpush1.bf16.msra.mxu0 %v7302
    %9650 = vmatprep.subr.bf16.mxu0 0
    %9651 = vmatpush1.bf16.msra.mxu0 %v7303
    %9652 = vmatprep.subr.bf16.mxu0 0
    %9653 = vmatpush1.bf16.msra.mxu0 %v7304
    %9654 = vmatprep.subr.bf16.mxu0 0
    %9655 = vmatpush1.bf16.msra.mxu0 %v7305
    %9656 = vmatprep.subr.bf16.mxu0 0
    %9657 = vmatpush1.bf16.msra.mxu0 %v7306
    %9658 = vmatprep.subr.bf16.mxu0 0
    %9659 = vmatpush1.bf16.msra.mxu0 %v7307
    %9660 = vmatprep.mubr.bf16.mxu0 %v846
    %9661 = vmatmul.mubr.bf16.gmra.mrb[0].mxu0 %v845
    %v9662 = vpop.f32.mrb[0].mxu0
    %v9663 = vadd.f32 %v9623, %v9662
    %v9664 = vpop.f32.mrb[0].mxu0
    %v9665 = vpop.f32.mrb[0].mxu0
    %v9666 = vpop.f32.mrb[0].mxu0
    %9667 = vdwg.mxu0
    %9668 = vmatprep.subr.bf16.mxu0 0
    %9669 = vmatpush1.bf16.msra.mxu0 %v7308
    %9670 = vmatprep.subr.bf16.mxu0 0
    %9671 = vmatpush1.bf16.msra.mxu0 %v7309
    %9672 = vmatprep.subr.bf16.mxu0 0
    %9673 = vmatpush1.bf16.msra.mxu0 %v7310
    %9674 = vmatprep.subr.bf16.mxu0 0
    %9675 = vmatpush1.bf16.msra.mxu0 %v7311
    %9676 = vmatprep.subr.bf16.mxu0 0
    %9677 = vmatpush1.bf16.msra.mxu0 %v7312
    %9678 = vmatprep.subr.bf16.mxu0 0
    %9679 = vmatpush1.bf16.msra.mxu0 %v7313
    %9680 = vmatprep.subr.bf16.mxu0 0
    %9681 = vmatpush1.bf16.msra.mxu0 %v7314
    %9682 = vmatprep.subr.bf16.mxu0 0
    %9683 = vmatpush1.bf16.msra.mxu0 %v7315
    %9684 = vmatprep.subr.bf16.mxu0 0
    %9685 = vmatpush1.bf16.msra.mxu0 %v7316
    %9686 = vmatprep.subr.bf16.mxu0 0
    %9687 = vmatpush1.bf16.msra.mxu0 %v7317
    %9688 = vmatprep.subr.bf16.mxu0 0
    %9689 = vmatpush1.bf16.msra.mxu0 %v7318
    %9690 = vmatprep.subr.bf16.mxu0 0
    %9691 = vmatpush1.bf16.msra.mxu0 %v7319
    %9692 = vmatprep.subr.bf16.mxu0 0
    %9693 = vmatpush1.bf16.msra.mxu0 %v7320
    %9694 = vmatprep.subr.bf16.mxu0 0
    %9695 = vmatpush1.bf16.msra.mxu0 %v7321
    %9696 = vmatprep.subr.bf16.mxu0 0
    %9697 = vmatpush1.bf16.msra.mxu0 %v7322
    %9698 = vmatprep.subr.bf16.mxu0 0
    %9699 = vmatpush1.bf16.msra.mxu0 %v7323
    %9700 = vmatprep.mubr.bf16.mxu0 %v848
    %9701 = vmatmul.mubr.bf16.gmra.mrb[0].mxu0 %v847
    %v9702 = vpop.f32.mrb[0].mxu0
    %v9703 = vadd.f32 %v9663, %v9702
    %v9704 = vpop.f32.mrb[0].mxu0
    %v9705 = vpop.f32.mrb[0].mxu0
    %v9706 = vpop.f32.mrb[0].mxu0
    %9707 = vdwg.mxu0
    %9708 = vmatprep.subr.bf16.mxu0 0
    %9709 = vmatpush1.bf16.msra.mxu0 %v7324
    %9710 = vmatprep.subr.bf16.mxu0 0
    %9711 = vmatpush1.bf16.msra.mxu0 %v7325
    %9712 = vmatprep.subr.bf16.mxu0 0
    %9713 = vmatpush1.bf16.msra.mxu0 %v7326
    %9714 = vmatprep.subr.bf16.mxu0 0
    %9715 = vmatpush1.bf16.msra.mxu0 %v7327
    %9716 = vmatprep.subr.bf16.mxu0 0
    %9717 = vmatpush1.bf16.msra.mxu0 %v7328
    %9718 = vmatprep.subr.bf16.mxu0 0
    %9719 = vmatpush1.bf16.msra.mxu0 %v7329
    %9720 = vmatprep.subr.bf16.mxu0 0
    %9721 = vmatpush1.bf16.msra.mxu0 %v7330
    %9722 = vmatprep.subr.bf16.mxu0 0
    %9723 = vmatpush1.bf16.msra.mxu0 %v7331
    %9724 = vmatprep.subr.bf16.mxu0 0
    %9725 = vmatpush1.bf16.msra.mxu0 %v7332
    %9726 = vmatprep.subr.bf16.mxu0 0
    %9727 = vmatpush1.bf16.msra.mxu0 %v7333
    %9728 = vmatprep.subr.bf16.mxu0 0
    %9729 = vmatpush1.bf16.msra.mxu0 %v7334
    %9730 = vmatprep.subr.bf16.mxu0 0
    %9731 = vmatpush1.bf16.msra.mxu0 %v7335
    %9732 = vmatprep.subr.bf16.mxu0 0
    %9733 = vmatpush1.bf16.msra.mxu0 %v7336
    %9734 = vmatprep.subr.bf16.mxu0 0
    %9735 = vmatpush1.bf16.msra.mxu0 %v7337
    %9736 = vmatprep.subr.bf16.mxu0 0
    %9737 = vmatpush1.bf16.msra.mxu0 %v7338
    %9738 = vmatprep.subr.bf16.mxu0 0
    %9739 = vmatpush1.bf16.msra.mxu0 %v7339
    %9740 = vmatprep.mubr.bf16.mxu0 %v850
    %9741 = vmatmul.mubr.bf16.gmra.mrb[0].mxu0 %v849
    %v9742 = vpop.f32.mrb[0].mxu0
    %v9743 = vadd.f32 %v9703, %v9742
    %v9744 = vpop.f32.mrb[0].mxu0
    %v9745 = vpop.f32.mrb[0].mxu0
    %v9746 = vpop.f32.mrb[0].mxu0
    %9747 = vdwg.mxu0
    %9748 = vmatprep.subr.bf16.mxu0 0
    %9749 = vmatpush1.bf16.msra.mxu0 %v7340
    %9750 = vmatprep.subr.bf16.mxu0 0
    %9751 = vmatpush1.bf16.msra.mxu0 %v7341
    %9752 = vmatprep.subr.bf16.mxu0 0
    %9753 = vmatpush1.bf16.msra.mxu0 %v7342
    %9754 = vmatprep.subr.bf16.mxu0 0
    %9755 = vmatpush1.bf16.msra.mxu0 %v7343
    %9756 = vmatprep.subr.bf16.mxu0 0
    %9757 = vmatpush1.bf16.msra.mxu0 %v7344
    %9758 = vmatprep.subr.bf16.mxu0 0
    %9759 = vmatpush1.bf16.msra.mxu0 %v7345
    %9760 = vmatprep.subr.bf16.mxu0 0
    %9761 = vmatpush1.bf16.msra.mxu0 %v7346
    %9762 = vmatprep.subr.bf16.mxu0 0
    %9763 = vmatpush1.bf16.msra.mxu0 %v7347
    %9764 = vmatprep.subr.bf16.mxu0 0
    %9765 = vmatpush1.bf16.msra.mxu0 %v7348
    %9766 = vmatprep.subr.bf16.mxu0 0
    %9767 = vmatpush1.bf16.msra.mxu0 %v7349
    %9768 = vmatprep.subr.bf16.mxu0 0
    %9769 = vmatpush1.bf16.msra.mxu0 %v7350
    %9770 = vmatprep.subr.bf16.mxu0 0
    %9771 = vmatpush1.bf16.msra.mxu0 %v7351
    %9772 = vmatprep.subr.bf16.mxu0 0
    %9773 = vmatpush1.bf16.msra.mxu0 %v7352
    %9774 = vmatprep.subr.bf16.mxu0 0
    %9775 = vmatpush1.bf16.msra.mxu0 %v7353
    %9776 = vmatprep.subr.bf16.mxu0 0
    %9777 = vmatpush1.bf16.msra.mxu0 %v7354
    %9778 = vmatprep.subr.bf16.mxu0 0
    %9779 = vmatpush1.bf16.msra.mxu0 %v7355
    %9780 = vmatprep.mubr.bf16.mxu0 %v852
    %9781 = vmatmul.mubr.bf16.gmra.mrb[0].mxu0 %v851
    %v9782 = vpop.f32.mrb[0].mxu0
    %v9783 = vadd.f32 %v9743, %v9782
    %v9784 = vpop.f32.mrb[0].mxu0
    %v9785 = vpop.f32.mrb[0].mxu0
    %v9786 = vpop.f32.mrb[0].mxu0
    %9787 = vdwg.mxu0
    %9788 = vmatprep.subr.bf16.mxu0 0
    %9789 = vmatpush1.bf16.msra.mxu0 %v7356
    %9790 = vmatprep.subr.bf16.mxu0 0
    %9791 = vmatpush1.bf16.msra.mxu0 %v7357
    %9792 = vmatprep.subr.bf16.mxu0 0
    %9793 = vmatpush1.bf16.msra.mxu0 %v7358
    %9794 = vmatprep.subr.bf16.mxu0 0
    %9795 = vmatpush1.bf16.msra.mxu0 %v7359
    %9796 = vmatprep.subr.bf16.mxu0 0
    %9797 = vmatpush1.bf16.msra.mxu0 %v7360
    %9798 = vmatprep.subr.bf16.mxu0 0
    %9799 = vmatpush1.bf16.msra.mxu0 %v7361
    %9800 = vmatprep.subr.bf16.mxu0 0
    %9801 = vmatpush1.bf16.msra.mxu0 %v7362
    %9802 = vmatprep.subr.bf16.mxu0 0
    %9803 = vmatpush1.bf16.msra.mxu0 %v7363
    %9804 = vmatprep.subr.bf16.mxu0 0
    %9805 = vmatpush1.bf16.msra.mxu0 %v7364
    %9806 = vmatprep.subr.bf16.mxu0 0
    %9807 = vmatpush1.bf16.msra.mxu0 %v7365
    %9808 = vmatprep.subr.bf16.mxu0 0
    %9809 = vmatpush1.bf16.msra.mxu0 %v7366
    %9810 = vmatprep.subr.bf16.mxu0 0
    %9811 = vmatpush1.bf16.msra.mxu0 %v7367
    %9812 = vmatprep.subr.bf16.mxu0 0
    %9813 = vmatpush1.bf16.msra.mxu0 %v7368
    %9814 = vmatprep.subr.bf16.mxu0 0
    %9815 = vmatpush1.bf16.msra.mxu0 %v7369
    %9816 = vmatprep.subr.bf16.mxu0 0
    %9817 = vmatpush1.bf16.msra.mxu0 %v7370
    %9818 = vmatprep.subr.bf16.mxu0 0
    %9819 = vmatpush1.bf16.msra.mxu0 %v7371
    %9820 = vmatprep.mubr.bf16.mxu0 %v854
    %9821 = vmatmul.mubr.bf16.gmra.mrb[0].mxu0 %v853
    %v9822 = vpop.f32.mrb[0].mxu0
    %v9823 = vadd.f32 %v9783, %v9822
    %v9824 = vpop.f32.mrb[0].mxu0
    %v9825 = vpop.f32.mrb[0].mxu0
    %v9826 = vpop.f32.mrb[0].mxu0
    %9827 = vdwg.mxu0
    %9828 = vmatprep.subr.bf16.mxu0 0
    %9829 = vmatpush1.bf16.msra.mxu0 %v7372
    %9830 = vmatprep.subr.bf16.mxu0 0
    %9831 = vmatpush1.bf16.msra.mxu0 %v7373
    %9832 = vmatprep.subr.bf16.mxu0 0
    %9833 = vmatpush1.bf16.msra.mxu0 %v7374
    %9834 = vmatprep.subr.bf16.mxu0 0
    %9835 = vmatpush1.bf16.msra.mxu0 %v7375
    %9836 = vmatprep.subr.bf16.mxu0 0
    %9837 = vmatpush1.bf16.msra.mxu0 %v7376
    %9838 = vmatprep.subr.bf16.mxu0 0
    %9839 = vmatpush1.bf16.msra.mxu0 %v7377
    %9840 = vmatprep.subr.bf16.mxu0 0
    %9841 = vmatpush1.bf16.msra.mxu0 %v7378
    %9842 = vmatprep.subr.bf16.mxu0 0
    %9843 = vmatpush1.bf16.msra.mxu0 %v7379
    %9844 = vmatprep.subr.bf16.mxu0 0
    %9845 = vmatpush1.bf16.msra.mxu0 %v7380
    %9846 = vmatprep.subr.bf16.mxu0 0
    %9847 = vmatpush1.bf16.msra.mxu0 %v7381
    %9848 = vmatprep.subr.bf16.mxu0 0
    %9849 = vmatpush1.bf16.msra.mxu0 %v7382
    %9850 = vmatprep.subr.bf16.mxu0 0
    %9851 = vmatpush1.bf16.msra.mxu0 %v7383
    %9852 = vmatprep.subr.bf16.mxu0 0
    %9853 = vmatpush1.bf16.msra.mxu0 %v7384
    %9854 = vmatprep.subr.bf16.mxu0 0
    %9855 = vmatpush1.bf16.msra.mxu0 %v7385
    %9856 = vmatprep.subr.bf16.mxu0 0
    %9857 = vmatpush1.bf16.msra.mxu0 %v7386
    %9858 = vmatprep.subr.bf16.mxu0 0
    %9859 = vmatpush1.bf16.msra.mxu0 %v7387
    %9860 = vmatprep.mubr.bf16.mxu0 %v856
    %9861 = vmatmul.mubr.bf16.gmra.mrb[0].mxu0 %v855
    %v9862 = vpop.f32.mrb[0].mxu0
    %v9863 = vadd.f32 %v9823, %v9862
    %v9864 = vpop.f32.mrb[0].mxu0
    %v9865 = vpop.f32.mrb[0].mxu0
    %v9866 = vpop.f32.mrb[0].mxu0
    %9867 = vdwg.mxu0
    %9868 = vmatprep.subr.bf16.mxu0 0
    %9869 = vmatpush1.bf16.msra.mxu0 %v7388
    %9870 = vmatprep.subr.bf16.mxu0 0
    %9871 = vmatpush1.bf16.msra.mxu0 %v7389
    %9872 = vmatprep.subr.bf16.mxu0 0
    %9873 = vmatpush1.bf16.msra.mxu0 %v7390
    %9874 = vmatprep.subr.bf16.mxu0 0
    %9875 = vmatpush1.bf16.msra.mxu0 %v7391
    %9876 = vmatprep.subr.bf16.mxu0 0
    %9877 = vmatpush1.bf16.msra.mxu0 %v7392
    %9878 = vmatprep.subr.bf16.mxu0 0
    %9879 = vmatpush1.bf16.msra.mxu0 %v7393
    %9880 = vmatprep.subr.bf16.mxu0 0
    %9881 = vmatpush1.bf16.msra.mxu0 %v7394
    %9882 = vmatprep.subr.bf16.mxu0 0
    %9883 = vmatpush1.bf16.msra.mxu0 %v7395
    %9884 = vmatprep.subr.bf16.mxu0 0
    %9885 = vmatpush1.bf16.msra.mxu0 %v7396
    %9886 = vmatprep.subr.bf16.mxu0 0
    %9887 = vmatpush1.bf16.msra.mxu0 %v7397
    %9888 = vmatprep.subr.bf16.mxu0 0
    %9889 = vmatpush1.bf16.msra.mxu0 %v7398
    %9890 = vmatprep.subr.bf16.mxu0 0
    %9891 = vmatpush1.bf16.msra.mxu0 %v7399
    %9892 = vmatprep.subr.bf16.mxu0 0
    %9893 = vmatpush1.bf16.msra.mxu0 %v7400
    %9894 = vmatprep.subr.bf16.mxu0 0
    %9895 = vmatpush1.bf16.msra.mxu0 %v7401
    %9896 = vmatprep.subr.bf16.mxu0 0
    %9897 = vmatpush1.bf16.msra.mxu0 %v7402
    %9898 = vmatprep.subr.bf16.mxu0 0
    %9899 = vmatpush1.bf16.msra.mxu0 %v7403
    %9900 = vmatprep.mubr.bf16.mxu0 %v858
    %9901 = vmatmul.mubr.bf16.gmra.mrb[0].mxu0 %v857
    %v9902 = vpop.f32.mrb[0].mxu0
    %v9903 = vadd.f32 %v9863, %v9902
    %v9904 = vpop.f32.mrb[0].mxu0
    %v9905 = vpop.f32.mrb[0].mxu0
    %v9906 = vpop.f32.mrb[0].mxu0
    %9907 = vdwg.mxu0
    %9908 = vmatprep.subr.bf16.mxu0 0
    %9909 = vmatpush1.bf16.msra.mxu0 %v7404
    %9910 = vmatprep.subr.bf16.mxu0 0
    %9911 = vmatpush1.bf16.msra.mxu0 %v7405
    %9912 = vmatprep.subr.bf16.mxu0 0
    %9913 = vmatpush1.bf16.msra.mxu0 %v7406
    %9914 = vmatprep.subr.bf16.mxu0 0
    %9915 = vmatpush1.bf16.msra.mxu0 %v7407
    %9916 = vmatprep.subr.bf16.mxu0 0
    %9917 = vmatpush1.bf16.msra.mxu0 %v7408
    %9918 = vmatprep.subr.bf16.mxu0 0
    %9919 = vmatpush1.bf16.msra.mxu0 %v7409
    %9920 = vmatprep.subr.bf16.mxu0 0
    %9921 = vmatpush1.bf16.msra.mxu0 %v7410
    %9922 = vmatprep.subr.bf16.mxu0 0
    %9923 = vmatpush1.bf16.msra.mxu0 %v7411
    %9924 = vmatprep.subr.bf16.mxu0 0
    %9925 = vmatpush1.bf16.msra.mxu0 %v7412
    %9926 = vmatprep.subr.bf16.mxu0 0
    %9927 = vmatpush1.bf16.msra.mxu0 %v7413
    %9928 = vmatprep.subr.bf16.mxu0 0
    %9929 = vmatpush1.bf16.msra.mxu0 %v7414
    %9930 = vmatprep.subr.bf16.mxu0 0
    %9931 = vmatpush1.bf16.msra.mxu0 %v7415
    %9932 = vmatprep.subr.bf16.mxu0 0
    %9933 = vmatpush1.bf16.msra.mxu0 %v7416
    %9934 = vmatprep.subr.bf16.mxu0 0
    %9935 = vmatpush1.bf16.msra.mxu0 %v7417
    %9936 = vmatprep.subr.bf16.mxu0 0
    %9937 = vmatpush1.bf16.msra.mxu0 %v7418
    %9938 = vmatprep.subr.bf16.mxu0 0
    %9939 = vmatpush1.bf16.msra.mxu0 %v7419
    %9940 = vmatprep.mubr.bf16.mxu0 %v860
    %9941 = vmatmul.mubr.bf16.gmra.mrb[0].mxu0 %v859
    %v9942 = vpop.f32.mrb[0].mxu0
    %v9943 = vadd.f32 %v9903, %v9942
    %v9944 = vpop.f32.mrb[0].mxu0
    %v9945 = vpop.f32.mrb[0].mxu0
    %v9946 = vpop.f32.mrb[0].mxu0
    %9947 = vdwg.mxu0
    %9948 = vmatprep.subr.bf16.mxu0 0
    %9949 = vmatpush1.bf16.msra.mxu0 %v7420
    %9950 = vmatprep.subr.bf16.mxu0 0
    %9951 = vmatpush1.bf16.msra.mxu0 %v7421
    %9952 = vmatprep.subr.bf16.mxu0 0
    %9953 = vmatpush1.bf16.msra.mxu0 %v7422
    %9954 = vmatprep.subr.bf16.mxu0 0
    %9955 = vmatpush1.bf16.msra.mxu0 %v7423
    %9956 = vmatprep.subr.bf16.mxu0 0
    %9957 = vmatpush1.bf16.msra.mxu0 %v7424
    %9958 = vmatprep.subr.bf16.mxu0 0
    %9959 = vmatpush1.bf16.msra.mxu0 %v7425
    %9960 = vmatprep.subr.bf16.mxu0 0
    %9961 = vmatpush1.bf16.msra.mxu0 %v7426
    %9962 = vmatprep.subr.bf16.mxu0 0
    %9963 = vmatpush1.bf16.msra.mxu0 %v7427
    %9964 = vmatprep.subr.bf16.mxu0 0
    %9965 = vmatpush1.bf16.msra.mxu0 %v7428
    %9966 = vmatprep.subr.bf16.mxu0 0
    %9967 = vmatpush1.bf16.msra.mxu0 %v7429
    %9968 = vmatprep.subr.bf16.mxu0 0
    %9969 = vmatpush1.bf16.msra.mxu0 %v7430
    %9970 = vmatprep.subr.bf16.mxu0 0
    %9971 = vmatpush1.bf16.msra.mxu0 %v7431
    %9972 = vmatprep.subr.bf16.mxu0 0
    %9973 = vmatpush1.bf16.msra.mxu0 %v7432
    %9974 = vmatprep.subr.bf16.mxu0 0
    %9975 = vmatpush1.bf16.msra.mxu0 %v7433
    %9976 = vmatprep.subr.bf16.mxu0 0
    %9977 = vmatpush1.bf16.msra.mxu0 %v7434
    %9978 = vmatprep.subr.bf16.mxu0 0
    %9979 = vmatpush1.bf16.msra.mxu0 %v7435
    %9980 = vmatprep.mubr.bf16.mxu0 %v862
    %9981 = vmatmul.mubr.bf16.gmra.mrb[0].mxu0 %v861
    %v9982 = vpop.f32.mrb[0].mxu0
    %v9983 = vadd.f32 %v9943, %v9982
    %v9984 = vpop.f32.mrb[0].mxu0
    %v9985 = vpop.f32.mrb[0].mxu0
    %v9986 = vpop.f32.mrb[0].mxu0
    %9987 = vdwg.mxu0
    %9988 = vmatprep.subr.bf16.mxu0 0
    %9989 = vmatpush1.bf16.msra.mxu0 %v7436
    %9990 = vmatprep.subr.bf16.mxu0 0
    %9991 = vmatpush1.bf16.msra.mxu0 %v7437
    %9992 = vmatprep.subr.bf16.mxu0 0
    %9993 = vmatpush1.bf16.msra.mxu0 %v7438
    %9994 = vmatprep.subr.bf16.mxu0 0
    %9995 = vmatpush1.bf16.msra.mxu0 %v7439
    %9996 = vmatprep.subr.bf16.mxu0 0
    %9997 = vmatpush1.bf16.msra.mxu0 %v7440
    %9998 = vmatprep.subr.bf16.mxu0 0
    %9999 = vmatpush1.bf16.msra.mxu0 %v7441
    %10000 = vmatprep.subr.bf16.mxu0 0
    %10001 = vmatpush1.bf16.msra.mxu0 %v7442
    %10002 = vmatprep.subr.bf16.mxu0 0
    %10003 = vmatpush1.bf16.msra.mxu0 %v7443
    %10004 = vmatprep.subr.bf16.mxu0 0
    %10005 = vmatpush1.bf16.msra.mxu0 %v7444
    %10006 = vmatprep.subr.bf16.mxu0 0
    %10007 = vmatpush1.bf16.msra.mxu0 %v7445
    %10008 = vmatprep.subr.bf16.mxu0 0
    %10009 = vmatpush1.bf16.msra.mxu0 %v7446
    %10010 = vmatprep.subr.bf16.mxu0 0
    %10011 = vmatpush1.bf16.msra.mxu0 %v7447
    %10012 = vmatprep.subr.bf16.mxu0 0
    %10013 = vmatpush1.bf16.msra.mxu0 %v7448
    %10014 = vmatprep.subr.bf16.mxu0 0
    %10015 = vmatpush1.bf16.msra.mxu0 %v7449
    %10016 = vmatprep.subr.bf16.mxu0 0
    %10017 = vmatpush1.bf16.msra.mxu0 %v7450
    %10018 = vmatprep.subr.bf16.mxu0 0
    %10019 = vmatpush1.bf16.msra.mxu0 %v7451
    %10020 = vmatprep.mubr.bf16.mxu0 %v864
    %10021 = vmatmul.mubr.bf16.gmra.mrb[0].mxu0 %v863
    %v10022 = vpop.f32.mrb[0].mxu0
    %v10023 = vadd.f32 %v9983, %v10022
    %v10024 = vpop.f32.mrb[0].mxu0
    %v10025 = vpop.f32.mrb[0].mxu0
    %v10026 = vpop.f32.mrb[0].mxu0
    %10027 = vdwg.mxu0
    %10028 = vmatprep.subr.bf16.mxu0 0
    %10029 = vmatpush1.bf16.msra.mxu0 %v7452
    %10030 = vmatprep.subr.bf16.mxu0 0
    %10031 = vmatpush1.bf16.msra.mxu0 %v7453
    %10032 = vmatprep.subr.bf16.mxu0 0
    %10033 = vmatpush1.bf16.msra.mxu0 %v7454
    %10034 = vmatprep.subr.bf16.mxu0 0
    %10035 = vmatpush1.bf16.msra.mxu0 %v7455
    %10036 = vmatprep.subr.bf16.mxu0 0
    %10037 = vmatpush1.bf16.msra.mxu0 %v7456
    %10038 = vmatprep.subr.bf16.mxu0 0
    %10039 = vmatpush1.bf16.msra.mxu0 %v7457
    %10040 = vmatprep.subr.bf16.mxu0 0
    %10041 = vmatpush1.bf16.msra.mxu0 %v7458
    %10042 = vmatprep.subr.bf16.mxu0 0
    %10043 = vmatpush1.bf16.msra.mxu0 %v7459
    %10044 = vmatprep.subr.bf16.mxu0 0
    %10045 = vmatpush1.bf16.msra.mxu0 %v7460
    %10046 = vmatprep.subr.bf16.mxu0 0
    %10047 = vmatpush1.bf16.msra.mxu0 %v7461
    %10048 = vmatprep.subr.bf16.mxu0 0
    %10049 = vmatpush1.bf16.msra.mxu0 %v7462
    %10050 = vmatprep.subr.bf16.mxu0 0
    %10051 = vmatpush1.bf16.msra.mxu0 %v7463
    %10052 = vmatprep.subr.bf16.mxu0 0
    %10053 = vmatpush1.bf16.msra.mxu0 %v7464
    %10054 = vmatprep.subr.bf16.mxu0 0
    %10055 = vmatpush1.bf16.msra.mxu0 %v7465
    %10056 = vmatprep.subr.bf16.mxu0 0
    %10057 = vmatpush1.bf16.msra.mxu0 %v7466
    %10058 = vmatprep.subr.bf16.mxu0 0
    %10059 = vmatpush1.bf16.msra.mxu0 %v7467
    %10060 = vmatprep.mubr.bf16.mxu0 %v866
    %10061 = vmatmul.mubr.bf16.gmra.mrb[0].mxu0 %v865
    %v10062 = vpop.f32.mrb[0].mxu0
    %v10063 = vadd.f32 %v10023, %v10062
    %v10064 = vpop.f32.mrb[0].mxu0
    %v10065 = vpop.f32.mrb[0].mxu0
    %v10066 = vpop.f32.mrb[0].mxu0
    %10067 = vdwg.mxu0
    %10068 = vmatprep.subr.bf16.mxu0 0
    %10069 = vmatpush1.bf16.msra.mxu0 %v7468
    %10070 = vmatprep.subr.bf16.mxu0 0
    %10071 = vmatpush1.bf16.msra.mxu0 %v7469
    %10072 = vmatprep.subr.bf16.mxu0 0
    %10073 = vmatpush1.bf16.msra.mxu0 %v7470
    %10074 = vmatprep.subr.bf16.mxu0 0
    %10075 = vmatpush1.bf16.msra.mxu0 %v7471
    %10076 = vmatprep.subr.bf16.mxu0 0
    %10077 = vmatpush1.bf16.msra.mxu0 %v7472
    %10078 = vmatprep.subr.bf16.mxu0 0
    %10079 = vmatpush1.bf16.msra.mxu0 %v7473
    %10080 = vmatprep.subr.bf16.mxu0 0
    %10081 = vmatpush1.bf16.msra.mxu0 %v7474
    %10082 = vmatprep.subr.bf16.mxu0 0
    %10083 = vmatpush1.bf16.msra.mxu0 %v7475
    %10084 = vmatprep.subr.bf16.mxu0 0
    %10085 = vmatpush1.bf16.msra.mxu0 %v7476
    %10086 = vmatprep.subr.bf16.mxu0 0
    %10087 = vmatpush1.bf16.msra.mxu0 %v7477
    %10088 = vmatprep.subr.bf16.mxu0 0
    %10089 = vmatpush1.bf16.msra.mxu0 %v7478
    %10090 = vmatprep.subr.bf16.mxu0 0
    %10091 = vmatpush1.bf16.msra.mxu0 %v7479
    %10092 = vmatprep.subr.bf16.mxu0 0
    %10093 = vmatpush1.bf16.msra.mxu0 %v7480
    %10094 = vmatprep.subr.bf16.mxu0 0
    %10095 = vmatpush1.bf16.msra.mxu0 %v7481
    %10096 = vmatprep.subr.bf16.mxu0 0
    %10097 = vmatpush1.bf16.msra.mxu0 %v7482
    %10098 = vmatprep.subr.bf16.mxu0 0
    %10099 = vmatpush1.bf16.msra.mxu0 %v7483
    %10100 = vmatprep.mubr.bf16.mxu0 %v868
    %10101 = vmatmul.mubr.bf16.gmra.mrb[0].mxu0 %v867
    %v10102 = vpop.f32.mrb[0].mxu0
    %v10103 = vadd.f32 %v10063, %v10102
    %v10104 = vpop.f32.mrb[0].mxu0
    %v10105 = vpop.f32.mrb[0].mxu0
    %v10106 = vpop.f32.mrb[0].mxu0
    %10107 = vdwg.mxu0
    %10108 = vmatprep.subr.bf16.mxu0 0
    %10109 = vmatpush1.bf16.msra.mxu0 %v7484
    %10110 = vmatprep.subr.bf16.mxu0 0
    %10111 = vmatpush1.bf16.msra.mxu0 %v7485
    %10112 = vmatprep.subr.bf16.mxu0 0
    %10113 = vmatpush1.bf16.msra.mxu0 %v7486
    %10114 = vmatprep.subr.bf16.mxu0 0
    %10115 = vmatpush1.bf16.msra.mxu0 %v7487
    %10116 = vmatprep.subr.bf16.mxu0 0
    %10117 = vmatpush1.bf16.msra.mxu0 %v7488
    %10118 = vmatprep.subr.bf16.mxu0 0
    %10119 = vmatpush1.bf16.msra.mxu0 %v7489
    %10120 = vmatprep.subr.bf16.mxu0 0
    %10121 = vmatpush1.bf16.msra.mxu0 %v7490
    %10122 = vmatprep.subr.bf16.mxu0 0
    %10123 = vmatpush1.bf16.msra.mxu0 %v7491
    %10124 = vmatprep.subr.bf16.mxu0 0
    %10125 = vmatpush1.bf16.msra.mxu0 %v7492
    %10126 = vmatprep.subr.bf16.mxu0 0
    %10127 = vmatpush1.bf16.msra.mxu0 %v7493
    %10128 = vmatprep.subr.bf16.mxu0 0
    %10129 = vmatpush1.bf16.msra.mxu0 %v7494
    %10130 = vmatprep.subr.bf16.mxu0 0
    %10131 = vmatpush1.bf16.msra.mxu0 %v7495
    %10132 = vmatprep.subr.bf16.mxu0 0
    %10133 = vmatpush1.bf16.msra.mxu0 %v7496
    %10134 = vmatprep.subr.bf16.mxu0 0
    %10135 = vmatpush1.bf16.msra.mxu0 %v7497
    %10136 = vmatprep.subr.bf16.mxu0 0
    %10137 = vmatpush1.bf16.msra.mxu0 %v7498
    %10138 = vmatprep.subr.bf16.mxu0 0
    %10139 = vmatpush1.bf16.msra.mxu0 %v7499
    %10140 = vmatprep.mubr.bf16.mxu0 %v870
    %10141 = vmatmul.mubr.bf16.gmra.mrb[0].mxu0 %v869
    %v10142 = vpop.f32.mrb[0].mxu0
    %v10143 = vadd.f32 %v10103, %v10142
    %v10144 = vpop.f32.mrb[0].mxu0
    %v10145 = vpop.f32.mrb[0].mxu0
    %v10146 = vpop.f32.mrb[0].mxu0
    %10147 = vdwg.mxu0
    %10148 = vmatprep.subr.bf16.mxu0 0
    %10149 = vmatpush1.bf16.msra.mxu0 %v7500
    %10150 = vmatprep.subr.bf16.mxu0 0
    %10151 = vmatpush1.bf16.msra.mxu0 %v7501
    %10152 = vmatprep.subr.bf16.mxu0 0
    %10153 = vmatpush1.bf16.msra.mxu0 %v7502
    %10154 = vmatprep.subr.bf16.mxu0 0
    %10155 = vmatpush1.bf16.msra.mxu0 %v7503
    %10156 = vmatprep.subr.bf16.mxu0 0
    %10157 = vmatpush1.bf16.msra.mxu0 %v7504
    %10158 = vmatprep.subr.bf16.mxu0 0
    %10159 = vmatpush1.bf16.msra.mxu0 %v7505
    %10160 = vmatprep.subr.bf16.mxu0 0
    %10161 = vmatpush1.bf16.msra.mxu0 %v7506
    %10162 = vmatprep.subr.bf16.mxu0 0
    %10163 = vmatpush1.bf16.msra.mxu0 %v7507
    %10164 = vmatprep.subr.bf16.mxu0 0
    %10165 = vmatpush1.bf16.msra.mxu0 %v7508
    %10166 = vmatprep.subr.bf16.mxu0 0
    %10167 = vmatpush1.bf16.msra.mxu0 %v7509
    %10168 = vmatprep.subr.bf16.mxu0 0
    %10169 = vmatpush1.bf16.msra.mxu0 %v7510
    %10170 = vmatprep.subr.bf16.mxu0 0
    %10171 = vmatpush1.bf16.msra.mxu0 %v7511
    %10172 = vmatprep.subr.bf16.mxu0 0
    %10173 = vmatpush1.bf16.msra.mxu0 %v7512
    %10174 = vmatprep.subr.bf16.mxu0 0
    %10175 = vmatpush1.bf16.msra.mxu0 %v7513
    %10176 = vmatprep.subr.bf16.mxu0 0
    %10177 = vmatpush1.bf16.msra.mxu0 %v7514
    %10178 = vmatprep.subr.bf16.mxu0 0
    %10179 = vmatpush1.bf16.msra.mxu0 %v7515
    %10180 = vmatprep.mubr.bf16.mxu0 %v872
    %10181 = vmatmul.mubr.bf16.gmra.mrb[0].mxu0 %v871
    %v10182 = vpop.f32.mrb[0].mxu0
    %v10183 = vadd.f32 %v10143, %v10182
    %v10184 = vpop.f32.mrb[0].mxu0
    %v10185 = vpop.f32.mrb[0].mxu0
    %v10186 = vpop.f32.mrb[0].mxu0
    %10187 = vdwg.mxu0
    %10188 = vmatprep.subr.bf16.mxu0 0
    %10189 = vmatpush1.bf16.msra.mxu0 %v7516
    %10190 = vmatprep.subr.bf16.mxu0 0
    %10191 = vmatpush1.bf16.msra.mxu0 %v7517
    %10192 = vmatprep.subr.bf16.mxu0 0
    %10193 = vmatpush1.bf16.msra.mxu0 %v7518
    %10194 = vmatprep.subr.bf16.mxu0 0
    %10195 = vmatpush1.bf16.msra.mxu0 %v7519
    %10196 = vmatprep.subr.bf16.mxu0 0
    %10197 = vmatpush1.bf16.msra.mxu0 %v7520
    %10198 = vmatprep.subr.bf16.mxu0 0
    %10199 = vmatpush1.bf16.msra.mxu0 %v7521
    %10200 = vmatprep.subr.bf16.mxu0 0
    %10201 = vmatpush1.bf16.msra.mxu0 %v7522
    %10202 = vmatprep.subr.bf16.mxu0 0
    %10203 = vmatpush1.bf16.msra.mxu0 %v7523
    %10204 = vmatprep.subr.bf16.mxu0 0
    %10205 = vmatpush1.bf16.msra.mxu0 %v7524
    %10206 = vmatprep.subr.bf16.mxu0 0
    %10207 = vmatpush1.bf16.msra.mxu0 %v7525
    %10208 = vmatprep.subr.bf16.mxu0 0
    %10209 = vmatpush1.bf16.msra.mxu0 %v7526
    %10210 = vmatprep.subr.bf16.mxu0 0
    %10211 = vmatpush1.bf16.msra.mxu0 %v7527
    %10212 = vmatprep.subr.bf16.mxu0 0
    %10213 = vmatpush1.bf16.msra.mxu0 %v7528
    %10214 = vmatprep.subr.bf16.mxu0 0
    %10215 = vmatpush1.bf16.msra.mxu0 %v7529
    %10216 = vmatprep.subr.bf16.mxu0 0
    %10217 = vmatpush1.bf16.msra.mxu0 %v7530
    %10218 = vmatprep.subr.bf16.mxu0 0
    %10219 = vmatpush1.bf16.msra.mxu0 %v7531
    %10220 = vmatprep.mubr.bf16.mxu0 %v874
    %10221 = vmatmul.mubr.bf16.gmra.mrb[0].mxu0 %v873
    %v10222 = vpop.f32.mrb[0].mxu0
    %v10223 = vadd.f32 %v10183, %v10222
    %v10224 = vpop.f32.mrb[0].mxu0
    %v10225 = vpop.f32.mrb[0].mxu0
    %v10226 = vpop.f32.mrb[0].mxu0
    %10227 = vdwg.mxu0
    %10228 = vmatprep.subr.bf16.mxu0 0
    %10229 = vmatpush1.bf16.msra.mxu0 %v7532
    %10230 = vmatprep.subr.bf16.mxu0 0
    %10231 = vmatpush1.bf16.msra.mxu0 %v7533
    %10232 = vmatprep.subr.bf16.mxu0 0
    %10233 = vmatpush1.bf16.msra.mxu0 %v7534
    %10234 = vmatprep.subr.bf16.mxu0 0
    %10235 = vmatpush1.bf16.msra.mxu0 %v7535
    %10236 = vmatprep.subr.bf16.mxu0 0
    %10237 = vmatpush1.bf16.msra.mxu0 %v7536
    %10238 = vmatprep.subr.bf16.mxu0 0
    %10239 = vmatpush1.bf16.msra.mxu0 %v7537
    %10240 = vmatprep.subr.bf16.mxu0 0
    %10241 = vmatpush1.bf16.msra.mxu0 %v7538
    %10242 = vmatprep.subr.bf16.mxu0 0
    %10243 = vmatpush1.bf16.msra.mxu0 %v7539
    %10244 = vmatprep.subr.bf16.mxu0 0
    %10245 = vmatpush1.bf16.msra.mxu0 %v7540
    %10246 = vmatprep.subr.bf16.mxu0 0
    %10247 = vmatpush1.bf16.msra.mxu0 %v7541
    %10248 = vmatprep.subr.bf16.mxu0 0
    %10249 = vmatpush1.bf16.msra.mxu0 %v7542
    %10250 = vmatprep.subr.bf16.mxu0 0
    %10251 = vmatpush1.bf16.msra.mxu0 %v7543
    %10252 = vmatprep.subr.bf16.mxu0 0
    %10253 = vmatpush1.bf16.msra.mxu0 %v7544
    %10254 = vmatprep.subr.bf16.mxu0 0
    %10255 = vmatpush1.bf16.msra.mxu0 %v7545
    %10256 = vmatprep.subr.bf16.mxu0 0
    %10257 = vmatpush1.bf16.msra.mxu0 %v7546
    %10258 = vmatprep.subr.bf16.mxu0 0
    %10259 = vmatpush1.bf16.msra.mxu0 %v7547
    %10260 = vmatprep.mubr.bf16.mxu0 %v876
    %10261 = vmatmul.mubr.bf16.gmra.mrb[0].mxu0 %v875
    %v10262 = vpop.f32.mrb[0].mxu0
    %v10263 = vadd.f32 %v10223, %v10262
    %v10264 = vpop.f32.mrb[0].mxu0
    %v10265 = vpop.f32.mrb[0].mxu0
    %v10266 = vpop.f32.mrb[0].mxu0
    %10267 = vdwg.mxu0
    %10268 = vmatprep.subr.bf16.mxu0 0
    %10269 = vmatpush1.bf16.msra.mxu0 %v7548
    %10270 = vmatprep.subr.bf16.mxu0 0
    %10271 = vmatpush1.bf16.msra.mxu0 %v7549
    %10272 = vmatprep.subr.bf16.mxu0 0
    %10273 = vmatpush1.bf16.msra.mxu0 %v7550
    %10274 = vmatprep.subr.bf16.mxu0 0
    %10275 = vmatpush1.bf16.msra.mxu0 %v7551
    %10276 = vmatprep.subr.bf16.mxu0 0
    %10277 = vmatpush1.bf16.msra.mxu0 %v7552
    %10278 = vmatprep.subr.bf16.mxu0 0
    %10279 = vmatpush1.bf16.msra.mxu0 %v7553
    %10280 = vmatprep.subr.bf16.mxu0 0
    %10281 = vmatpush1.bf16.msra.mxu0 %v7554
    %10282 = vmatprep.subr.bf16.mxu0 0
    %10283 = vmatpush1.bf16.msra.mxu0 %v7555
    %10284 = vmatprep.subr.bf16.mxu0 0
    %10285 = vmatpush1.bf16.msra.mxu0 %v7556
    %10286 = vmatprep.subr.bf16.mxu0 0
    %10287 = vmatpush1.bf16.msra.mxu0 %v7557
    %10288 = vmatprep.subr.bf16.mxu0 0
    %10289 = vmatpush1.bf16.msra.mxu0 %v7558
    %10290 = vmatprep.subr.bf16.mxu0 0
    %10291 = vmatpush1.bf16.msra.mxu0 %v7559
    %10292 = vmatprep.subr.bf16.mxu0 0
    %10293 = vmatpush1.bf16.msra.mxu0 %v7560
    %10294 = vmatprep.subr.bf16.mxu0 0
    %10295 = vmatpush1.bf16.msra.mxu0 %v7561
    %10296 = vmatprep.subr.bf16.mxu0 0
    %10297 = vmatpush1.bf16.msra.mxu0 %v7562
    %10298 = vmatprep.subr.bf16.mxu0 0
    %10299 = vmatpush1.bf16.msra.mxu0 %v7563
    %10300 = vmatprep.mubr.bf16.mxu0 %v878
    %10301 = vmatmul.mubr.bf16.gmra.mrb[0].mxu0 %v877
    %v10302 = vpop.f32.mrb[0].mxu0
    %v10303 = vadd.f32 %v10263, %v10302
    %v10304 = vpop.f32.mrb[0].mxu0
    %v10305 = vpop.f32.mrb[0].mxu0
    %v10306 = vpop.f32.mrb[0].mxu0
    %10307 = vdwg.mxu0
    %10308 = vmatprep.subr.bf16.mxu0 0
    %10309 = vmatpush1.bf16.msra.mxu0 %v7564
    %10310 = vmatprep.subr.bf16.mxu0 0
    %10311 = vmatpush1.bf16.msra.mxu0 %v7565
    %10312 = vmatprep.subr.bf16.mxu0 0
    %10313 = vmatpush1.bf16.msra.mxu0 %v7566
    %10314 = vmatprep.subr.bf16.mxu0 0
    %10315 = vmatpush1.bf16.msra.mxu0 %v7567
    %10316 = vmatprep.subr.bf16.mxu0 0
    %10317 = vmatpush1.bf16.msra.mxu0 %v7568
    %10318 = vmatprep.subr.bf16.mxu0 0
    %10319 = vmatpush1.bf16.msra.mxu0 %v7569
    %10320 = vmatprep.subr.bf16.mxu0 0
    %10321 = vmatpush1.bf16.msra.mxu0 %v7570
    %10322 = vmatprep.subr.bf16.mxu0 0
    %10323 = vmatpush1.bf16.msra.mxu0 %v7571
    %10324 = vmatprep.subr.bf16.mxu0 0
    %10325 = vmatpush1.bf16.msra.mxu0 %v7572
    %10326 = vmatprep.subr.bf16.mxu0 0
    %10327 = vmatpush1.bf16.msra.mxu0 %v7573
    %10328 = vmatprep.subr.bf16.mxu0 0
    %10329 = vmatpush1.bf16.msra.mxu0 %v7574
    %10330 = vmatprep.subr.bf16.mxu0 0
    %10331 = vmatpush1.bf16.msra.mxu0 %v7575
    %10332 = vmatprep.subr.bf16.mxu0 0
    %10333 = vmatpush1.bf16.msra.mxu0 %v7576
    %10334 = vmatprep.subr.bf16.mxu0 0
    %10335 = vmatpush1.bf16.msra.mxu0 %v7577
    %10336 = vmatprep.subr.bf16.mxu0 0
    %10337 = vmatpush1.bf16.msra.mxu0 %v7578
    %10338 = vmatprep.subr.bf16.mxu0 0
    %10339 = vmatpush1.bf16.msra.mxu0 %v7579
    %10340 = vmatprep.mubr.bf16.mxu0 %v880
    %10341 = vmatmul.mubr.bf16.gmra.mrb[0].mxu0 %v879
    %v10342 = vpop.f32.mrb[0].mxu0
    %v10343 = vadd.f32 %v10303, %v10342
    %v10344 = vpop.f32.mrb[0].mxu0
    %v10345 = vpop.f32.mrb[0].mxu0
    %v10346 = vpop.f32.mrb[0].mxu0
    %10347 = vdwg.mxu0
    %10348 = vmatprep.subr.bf16.mxu0 0
    %10349 = vmatpush1.bf16.msra.mxu0 %v7580
    %10350 = vmatprep.subr.bf16.mxu0 0
    %10351 = vmatpush1.bf16.msra.mxu0 %v7581
    %10352 = vmatprep.subr.bf16.mxu0 0
    %10353 = vmatpush1.bf16.msra.mxu0 %v7582
    %10354 = vmatprep.subr.bf16.mxu0 0
    %10355 = vmatpush1.bf16.msra.mxu0 %v7583
    %10356 = vmatprep.subr.bf16.mxu0 0
    %10357 = vmatpush1.bf16.msra.mxu0 %v7584
    %10358 = vmatprep.subr.bf16.mxu0 0
    %10359 = vmatpush1.bf16.msra.mxu0 %v7585
    %10360 = vmatprep.subr.bf16.mxu0 0
    %10361 = vmatpush1.bf16.msra.mxu0 %v7586
    %10362 = vmatprep.subr.bf16.mxu0 0
    %10363 = vmatpush1.bf16.msra.mxu0 %v7587
    %10364 = vmatprep.subr.bf16.mxu0 0
    %10365 = vmatpush1.bf16.msra.mxu0 %v7588
    %10366 = vmatprep.subr.bf16.mxu0 0
    %10367 = vmatpush1.bf16.msra.mxu0 %v7589
    %10368 = vmatprep.subr.bf16.mxu0 0
    %10369 = vmatpush1.bf16.msra.mxu0 %v7590
    %10370 = vmatprep.subr.bf16.mxu0 0
    %10371 = vmatpush1.bf16.msra.mxu0 %v7591
    %10372 = vmatprep.subr.bf16.mxu0 0
    %10373 = vmatpush1.bf16.msra.mxu0 %v7592
    %10374 = vmatprep.subr.bf16.mxu0 0
    %10375 = vmatpush1.bf16.msra.mxu0 %v7593
    %10376 = vmatprep.subr.bf16.mxu0 0
    %10377 = vmatpush1.bf16.msra.mxu0 %v7594
    %10378 = vmatprep.subr.bf16.mxu0 0
    %10379 = vmatpush1.bf16.msra.mxu0 %v7595
    %10380 = vmatprep.mubr.bf16.mxu0 %v882
    %10381 = vmatmul.mubr.bf16.gmra.mrb[0].mxu0 %v881
    %v10382 = vpop.f32.mrb[0].mxu0
    %v10383 = vadd.f32 %v10343, %v10382
    %v10384 = vpop.f32.mrb[0].mxu0
    %v10385 = vpop.f32.mrb[0].mxu0
    %v10386 = vpop.f32.mrb[0].mxu0
    %10387 = vdwg.mxu0
    %10388 = vmatprep.subr.bf16.mxu0 0
    %10389 = vmatpush1.bf16.msra.mxu0 %v7596
    %10390 = vmatprep.subr.bf16.mxu0 0
    %10391 = vmatpush1.bf16.msra.mxu0 %v7597
    %10392 = vmatprep.subr.bf16.mxu0 0
    %10393 = vmatpush1.bf16.msra.mxu0 %v7598
    %10394 = vmatprep.subr.bf16.mxu0 0
    %10395 = vmatpush1.bf16.msra.mxu0 %v7599
    %10396 = vmatprep.subr.bf16.mxu0 0
    %10397 = vmatpush1.bf16.msra.mxu0 %v7600
    %10398 = vmatprep.subr.bf16.mxu0 0
    %10399 = vmatpush1.bf16.msra.mxu0 %v7601
    %10400 = vmatprep.subr.bf16.mxu0 0
    %10401 = vmatpush1.bf16.msra.mxu0 %v7602
    %10402 = vmatprep.subr.bf16.mxu0 0
    %10403 = vmatpush1.bf16.msra.mxu0 %v7603
    %10404 = vmatprep.subr.bf16.mxu0 0
    %10405 = vmatpush1.bf16.msra.mxu0 %v7604
    %10406 = vmatprep.subr.bf16.mxu0 0
    %10407 = vmatpush1.bf16.msra.mxu0 %v7605
    %10408 = vmatprep.subr.bf16.mxu0 0
    %10409 = vmatpush1.bf16.msra.mxu0 %v7606
    %10410 = vmatprep.subr.bf16.mxu0 0
    %10411 = vmatpush1.bf16.msra.mxu0 %v7607
    %10412 = vmatprep.subr.bf16.mxu0 0
    %10413 = vmatpush1.bf16.msra.mxu0 %v7608
    %10414 = vmatprep.subr.bf16.mxu0 0
    %10415 = vmatpush1.bf16.msra.mxu0 %v7609
    %10416 = vmatprep.subr.bf16.mxu0 0
    %10417 = vmatpush1.bf16.msra.mxu0 %v7610
    %10418 = vmatprep.subr.bf16.mxu0 0
    %10419 = vmatpush1.bf16.msra.mxu0 %v7611
    %10420 = vmatprep.mubr.bf16.mxu0 %v884
    %10421 = vmatmul.mubr.bf16.gmra.mrb[0].mxu0 %v883
    %v10422 = vpop.f32.mrb[0].mxu0
    %v10423 = vadd.f32 %v10383, %v10422
    %v10424 = vpop.f32.mrb[0].mxu0
    %v10425 = vpop.f32.mrb[0].mxu0
    %v10426 = vpop.f32.mrb[0].mxu0
    %10427 = vdwg.mxu0
    %10428 = vmatprep.subr.bf16.mxu0 0
    %10429 = vmatpush1.bf16.msra.mxu0 %v7612
    %10430 = vmatprep.subr.bf16.mxu0 0
    %10431 = vmatpush1.bf16.msra.mxu0 %v7613
    %10432 = vmatprep.subr.bf16.mxu0 0
    %10433 = vmatpush1.bf16.msra.mxu0 %v7614
    %10434 = vmatprep.subr.bf16.mxu0 0
    %10435 = vmatpush1.bf16.msra.mxu0 %v7615
    %10436 = vmatprep.subr.bf16.mxu0 0
    %10437 = vmatpush1.bf16.msra.mxu0 %v7616
    %10438 = vmatprep.subr.bf16.mxu0 0
    %10439 = vmatpush1.bf16.msra.mxu0 %v7617
    %10440 = vmatprep.subr.bf16.mxu0 0
    %10441 = vmatpush1.bf16.msra.mxu0 %v7618
    %10442 = vmatprep.subr.bf16.mxu0 0
    %10443 = vmatpush1.bf16.msra.mxu0 %v7619
    %10444 = vmatprep.subr.bf16.mxu0 0
    %10445 = vmatpush1.bf16.msra.mxu0 %v7620
    %10446 = vmatprep.subr.bf16.mxu0 0
    %10447 = vmatpush1.bf16.msra.mxu0 %v7621
    %10448 = vmatprep.subr.bf16.mxu0 0
    %10449 = vmatpush1.bf16.msra.mxu0 %v7622
    %10450 = vmatprep.subr.bf16.mxu0 0
    %10451 = vmatpush1.bf16.msra.mxu0 %v7623
    %10452 = vmatprep.subr.bf16.mxu0 0
    %10453 = vmatpush1.bf16.msra.mxu0 %v7624
    %10454 = vmatprep.subr.bf16.mxu0 0
    %10455 = vmatpush1.bf16.msra.mxu0 %v7625
    %10456 = vmatprep.subr.bf16.mxu0 0
    %10457 = vmatpush1.bf16.msra.mxu0 %v7626
    %10458 = vmatprep.subr.bf16.mxu0 0
    %10459 = vmatpush1.bf16.msra.mxu0 %v7627
    %10460 = vmatprep.mubr.bf16.mxu0 %v886
    %10461 = vmatmul.mubr.bf16.gmra.mrb[0].mxu0 %v885
    %v10462 = vpop.f32.mrb[0].mxu0
    %v10463 = vadd.f32 %v10423, %v10462
    %v10464 = vpop.f32.mrb[0].mxu0
    %v10465 = vpop.f32.mrb[0].mxu0
    %v10466 = vpop.f32.mrb[0].mxu0
    %10467 = vdwg.mxu0
    %10468 = vmatprep.subr.bf16.mxu0 0
    %10469 = vmatpush1.bf16.msra.mxu0 %v7628
    %10470 = vmatprep.subr.bf16.mxu0 0
    %10471 = vmatpush1.bf16.msra.mxu0 %v7629
    %10472 = vmatprep.subr.bf16.mxu0 0
    %10473 = vmatpush1.bf16.msra.mxu0 %v7630
    %10474 = vmatprep.subr.bf16.mxu0 0
    %10475 = vmatpush1.bf16.msra.mxu0 %v7631
    %10476 = vmatprep.subr.bf16.mxu0 0
    %10477 = vmatpush1.bf16.msra.mxu0 %v7632
    %10478 = vmatprep.subr.bf16.mxu0 0
    %10479 = vmatpush1.bf16.msra.mxu0 %v7633
    %10480 = vmatprep.subr.bf16.mxu0 0
    %10481 = vmatpush1.bf16.msra.mxu0 %v7634
    %10482 = vmatprep.subr.bf16.mxu0 0
    %10483 = vmatpush1.bf16.msra.mxu0 %v7635
    %10484 = vmatprep.subr.bf16.mxu0 0
    %10485 = vmatpush1.bf16.msra.mxu0 %v7636
    %10486 = vmatprep.subr.bf16.mxu0 0
    %10487 = vmatpush1.bf16.msra.mxu0 %v7637
    %10488 = vmatprep.subr.bf16.mxu0 0
    %10489 = vmatpush1.bf16.msra.mxu0 %v7638
    %10490 = vmatprep.subr.bf16.mxu0 0
    %10491 = vmatpush1.bf16.msra.mxu0 %v7639
    %10492 = vmatprep.subr.bf16.mxu0 0
    %10493 = vmatpush1.bf16.msra.mxu0 %v7640
    %10494 = vmatprep.subr.bf16.mxu0 0
    %10495 = vmatpush1.bf16.msra.mxu0 %v7641
    %10496 = vmatprep.subr.bf16.mxu0 0
    %10497 = vmatpush1.bf16.msra.mxu0 %v7642
    %10498 = vmatprep.subr.bf16.mxu0 0
    %10499 = vmatpush1.bf16.msra.mxu0 %v7643
    %10500 = vmatprep.mubr.bf16.mxu0 %v888
    %10501 = vmatmul.mubr.bf16.gmra.mrb[0].mxu0 %v887
    %v10502 = vpop.f32.mrb[0].mxu0
    %v10503 = vadd.f32 %v10463, %v10502
    %v10504 = vpop.f32.mrb[0].mxu0
    %v10505 = vpop.f32.mrb[0].mxu0
    %v10506 = vpop.f32.mrb[0].mxu0
    %10507 = vdwg.mxu0
    %10508 = vmatprep.subr.bf16.mxu0 0
    %10509 = vmatpush1.bf16.msra.mxu0 %v7644
    %10510 = vmatprep.subr.bf16.mxu0 0
    %10511 = vmatpush1.bf16.msra.mxu0 %v7645
    %10512 = vmatprep.subr.bf16.mxu0 0
    %10513 = vmatpush1.bf16.msra.mxu0 %v7646
    %10514 = vmatprep.subr.bf16.mxu0 0
    %10515 = vmatpush1.bf16.msra.mxu0 %v7647
    %10516 = vmatprep.subr.bf16.mxu0 0
    %10517 = vmatpush1.bf16.msra.mxu0 %v7648
    %10518 = vmatprep.subr.bf16.mxu0 0
    %10519 = vmatpush1.bf16.msra.mxu0 %v7649
    %10520 = vmatprep.subr.bf16.mxu0 0
    %10521 = vmatpush1.bf16.msra.mxu0 %v7650
    %10522 = vmatprep.subr.bf16.mxu0 0
    %10523 = vmatpush1.bf16.msra.mxu0 %v7651
    %10524 = vmatprep.subr.bf16.mxu0 0
    %10525 = vmatpush1.bf16.msra.mxu0 %v7652
    %10526 = vmatprep.subr.bf16.mxu0 0
    %10527 = vmatpush1.bf16.msra.mxu0 %v7653
    %10528 = vmatprep.subr.bf16.mxu0 0
    %10529 = vmatpush1.bf16.msra.mxu0 %v7654
    %10530 = vmatprep.subr.bf16.mxu0 0
    %10531 = vmatpush1.bf16.msra.mxu0 %v7655
    %10532 = vmatprep.subr.bf16.mxu0 0
    %10533 = vmatpush1.bf16.msra.mxu0 %v7656
    %10534 = vmatprep.subr.bf16.mxu0 0
    %10535 = vmatpush1.bf16.msra.mxu0 %v7657
    %10536 = vmatprep.subr.bf16.mxu0 0
    %10537 = vmatpush1.bf16.msra.mxu0 %v7658
    %10538 = vmatprep.subr.bf16.mxu0 0
    %10539 = vmatpush1.bf16.msra.mxu0 %v7659
    %10540 = vmatprep.mubr.bf16.mxu0 %v890
    %10541 = vmatmul.mubr.bf16.gmra.mrb[0].mxu0 %v889
    %v10542 = vpop.f32.mrb[0].mxu0
    %v10543 = vadd.f32 %v10503, %v10542
    %v10544 = vpop.f32.mrb[0].mxu0
    %v10545 = vpop.f32.mrb[0].mxu0
    %v10546 = vpop.f32.mrb[0].mxu0
    %10547 = vdwg.mxu0
    %10548 = vmatprep.subr.bf16.mxu0 0
    %10549 = vmatpush1.bf16.msra.mxu0 %v7660
    %10550 = vmatprep.subr.bf16.mxu0 0
    %10551 = vmatpush1.bf16.msra.mxu0 %v7661
    %10552 = vmatprep.subr.bf16.mxu0 0
    %10553 = vmatpush1.bf16.msra.mxu0 %v7662
    %10554 = vmatprep.subr.bf16.mxu0 0
    %10555 = vmatpush1.bf16.msra.mxu0 %v7663
    %10556 = vmatprep.subr.bf16.mxu0 0
    %10557 = vmatpush1.bf16.msra.mxu0 %v7664
    %10558 = vmatprep.subr.bf16.mxu0 0
    %10559 = vmatpush1.bf16.msra.mxu0 %v7665
    %10560 = vmatprep.subr.bf16.mxu0 0
    %10561 = vmatpush1.bf16.msra.mxu0 %v7666
    %10562 = vmatprep.subr.bf16.mxu0 0
    %10563 = vmatpush1.bf16.msra.mxu0 %v7667
    %10564 = vmatprep.subr.bf16.mxu0 0
    %10565 = vmatpush1.bf16.msra.mxu0 %v7668
    %10566 = vmatprep.subr.bf16.mxu0 0
    %10567 = vmatpush1.bf16.msra.mxu0 %v7669
    %10568 = vmatprep.subr.bf16.mxu0 0
    %10569 = vmatpush1.bf16.msra.mxu0 %v7670
    %10570 = vmatprep.subr.bf16.mxu0 0
    %10571 = vmatpush1.bf16.msra.mxu0 %v7671
    %10572 = vmatprep.subr.bf16.mxu0 0
    %10573 = vmatpush1.bf16.msra.mxu0 %v7672
    %10574 = vmatprep.subr.bf16.mxu0 0
    %10575 = vmatpush1.bf16.msra.mxu0 %v7673
    %10576 = vmatprep.subr.bf16.mxu0 0
    %10577 = vmatpush1.bf16.msra.mxu0 %v7674
    %10578 = vmatprep.subr.bf16.mxu0 0
    %10579 = vmatpush1.bf16.msra.mxu0 %v7675
    %10580 = vmatprep.mubr.bf16.mxu0 %v892
    %10581 = vmatmul.mubr.bf16.gmra.mrb[0].mxu0 %v891
    %v10582 = vpop.f32.mrb[0].mxu0
    %v10583 = vadd.f32 %v10543, %v10582
    %v10584 = vpop.f32.mrb[0].mxu0
    %v10585 = vpop.f32.mrb[0].mxu0
    %v10586 = vpop.f32.mrb[0].mxu0
    %10587 = vdwg.mxu0
    %10588 = vmatprep.subr.bf16.mxu0 0
    %10589 = vmatpush1.bf16.msra.mxu0 %v7676
    %10590 = vmatprep.subr.bf16.mxu0 0
    %10591 = vmatpush1.bf16.msra.mxu0 %v7677
    %10592 = vmatprep.subr.bf16.mxu0 0
    %10593 = vmatpush1.bf16.msra.mxu0 %v7678
    %10594 = vmatprep.subr.bf16.mxu0 0
    %10595 = vmatpush1.bf16.msra.mxu0 %v7679
    %10596 = vmatprep.subr.bf16.mxu0 0
    %10597 = vmatpush1.bf16.msra.mxu0 %v7680
    %10598 = vmatprep.subr.bf16.mxu0 0
    %10599 = vmatpush1.bf16.msra.mxu0 %v7681
    %10600 = vmatprep.subr.bf16.mxu0 0
    %10601 = vmatpush1.bf16.msra.mxu0 %v7682
    %10602 = vmatprep.subr.bf16.mxu0 0
    %10603 = vmatpush1.bf16.msra.mxu0 %v7683
    %10604 = vmatprep.subr.bf16.mxu0 0
    %10605 = vmatpush1.bf16.msra.mxu0 %v7684
    %10606 = vmatprep.subr.bf16.mxu0 0
    %10607 = vmatpush1.bf16.msra.mxu0 %v7685
    %10608 = vmatprep.subr.bf16.mxu0 0
    %10609 = vmatpush1.bf16.msra.mxu0 %v7686
    %10610 = vmatprep.subr.bf16.mxu0 0
    %10611 = vmatpush1.bf16.msra.mxu0 %v7687
    %10612 = vmatprep.subr.bf16.mxu0 0
    %10613 = vmatpush1.bf16.msra.mxu0 %v7688
    %10614 = vmatprep.subr.bf16.mxu0 0
    %10615 = vmatpush1.bf16.msra.mxu0 %v7689
    %10616 = vmatprep.subr.bf16.mxu0 0
    %10617 = vmatpush1.bf16.msra.mxu0 %v7690
    %10618 = vmatprep.subr.bf16.mxu0 0
    %10619 = vmatpush1.bf16.msra.mxu0 %v7691
    %10620 = vmatprep.mubr.bf16.mxu0 %v894
    %10621 = vmatmul.mubr.bf16.gmra.mrb[0].mxu0 %v893
    %v10622 = vpop.f32.mrb[0].mxu0
    %v10623 = vadd.f32 %v10583, %v10622
    %v10624 = vpop.f32.mrb[0].mxu0
    %v10625 = vpop.f32.mrb[0].mxu0
    %v10626 = vpop.f32.mrb[0].mxu0
    %10627 = vdwg.mxu0
    %10628 = vmatprep.subr.bf16.mxu0 0
    %10629 = vmatpush1.bf16.msra.mxu0 %v7692
    %10630 = vmatprep.subr.bf16.mxu0 0
    %10631 = vmatpush1.bf16.msra.mxu0 %v7693
    %10632 = vmatprep.subr.bf16.mxu0 0
    %10633 = vmatpush1.bf16.msra.mxu0 %v7694
    %10634 = vmatprep.subr.bf16.mxu0 0
    %10635 = vmatpush1.bf16.msra.mxu0 %v7695
    %10636 = vmatprep.subr.bf16.mxu0 0
    %10637 = vmatpush1.bf16.msra.mxu0 %v7696
    %10638 = vmatprep.subr.bf16.mxu0 0
    %10639 = vmatpush1.bf16.msra.mxu0 %v7697
    %10640 = vmatprep.subr.bf16.mxu0 0
    %10641 = vmatpush1.bf16.msra.mxu0 %v7698
    %10642 = vmatprep.subr.bf16.mxu0 0
    %10643 = vmatpush1.bf16.msra.mxu0 %v7699
    %10644 = vmatprep.subr.bf16.mxu0 0
    %10645 = vmatpush1.bf16.msra.mxu0 %v7700
    %10646 = vmatprep.subr.bf16.mxu0 0
    %10647 = vmatpush1.bf16.msra.mxu0 %v7701
    %10648 = vmatprep.subr.bf16.mxu0 0
    %10649 = vmatpush1.bf16.msra.mxu0 %v7702
    %10650 = vmatprep.subr.bf16.mxu0 0
    %10651 = vmatpush1.bf16.msra.mxu0 %v7703
    %10652 = vmatprep.subr.bf16.mxu0 0
    %10653 = vmatpush1.bf16.msra.mxu0 %v7704
    %10654 = vmatprep.subr.bf16.mxu0 0
    %10655 = vmatpush1.bf16.msra.mxu0 %v7705
    %10656 = vmatprep.subr.bf16.mxu0 0
    %10657 = vmatpush1.bf16.msra.mxu0 %v7706
    %10658 = vmatprep.subr.bf16.mxu0 0
    %10659 = vmatpush1.bf16.msra.mxu0 %v7707
    %10660 = vmatprep.mubr.bf16.mxu0 %v896
    %10661 = vmatmul.mubr.bf16.gmra.mrb[0].mxu0 %v895
    %v10662 = vpop.f32.mrb[0].mxu0
    %v10663 = vadd.f32 %v10623, %v10662
    %v10664 = vpop.f32.mrb[0].mxu0
    %v10665 = vpop.f32.mrb[0].mxu0
    %v10666 = vpop.f32.mrb[0].mxu0
    %10667 = vdwg.mxu0
    %10668 = vmatprep.subr.bf16.mxu0 0
    %10669 = vmatpush1.bf16.msra.mxu0 %v7708
    %10670 = vmatprep.subr.bf16.mxu0 0
    %10671 = vmatpush1.bf16.msra.mxu0 %v7709
    %10672 = vmatprep.subr.bf16.mxu0 0
    %10673 = vmatpush1.bf16.msra.mxu0 %v7710
    %10674 = vmatprep.subr.bf16.mxu0 0
    %10675 = vmatpush1.bf16.msra.mxu0 %v7711
    %10676 = vmatprep.subr.bf16.mxu0 0
    %10677 = vmatpush1.bf16.msra.mxu0 %v7712
    %10678 = vmatprep.subr.bf16.mxu0 0
    %10679 = vmatpush1.bf16.msra.mxu0 %v7713
    %10680 = vmatprep.subr.bf16.mxu0 0
    %10681 = vmatpush1.bf16.msra.mxu0 %v7714
    %10682 = vmatprep.subr.bf16.mxu0 0
    %10683 = vmatpush1.bf16.msra.mxu0 %v7715
    %10684 = vmatprep.subr.bf16.mxu0 0
    %10685 = vmatpush1.bf16.msra.mxu0 %v7716
    %10686 = vmatprep.subr.bf16.mxu0 0
    %10687 = vmatpush1.bf16.msra.mxu0 %v7717
    %10688 = vmatprep.subr.bf16.mxu0 0
    %10689 = vmatpush1.bf16.msra.mxu0 %v7718
    %10690 = vmatprep.subr.bf16.mxu0 0
    %10691 = vmatpush1.bf16.msra.mxu0 %v7719
    %10692 = vmatprep.subr.bf16.mxu0 0
    %10693 = vmatpush1.bf16.msra.mxu0 %v7720
    %10694 = vmatprep.subr.bf16.mxu0 0
    %10695 = vmatpush1.bf16.msra.mxu0 %v7721
    %10696 = vmatprep.subr.bf16.mxu0 0
    %10697 = vmatpush1.bf16.msra.mxu0 %v7722
    %10698 = vmatprep.subr.bf16.mxu0 0
    %10699 = vmatpush1.bf16.msra.mxu0 %v7723
    %10700 = vmatprep.mubr.bf16.mxu0 %v898
    %10701 = vmatmul.mubr.bf16.gmra.mrb[0].mxu0 %v897
    %v10702 = vpop.f32.mrb[0].mxu0
    %v10703 = vadd.f32 %v10663, %v10702
    %v10704 = vpop.f32.mrb[0].mxu0
    %v10705 = vpop.f32.mrb[0].mxu0
    %v10706 = vpop.f32.mrb[0].mxu0
    %10707 = vdwg.mxu0
    %10708 = vmatprep.subr.bf16.mxu0 0
    %10709 = vmatpush1.bf16.msra.mxu0 %v7724
    %10710 = vmatprep.subr.bf16.mxu0 0
    %10711 = vmatpush1.bf16.msra.mxu0 %v7725
    %10712 = vmatprep.subr.bf16.mxu0 0
    %10713 = vmatpush1.bf16.msra.mxu0 %v7726
    %10714 = vmatprep.subr.bf16.mxu0 0
    %10715 = vmatpush1.bf16.msra.mxu0 %v7727
    %10716 = vmatprep.subr.bf16.mxu0 0
    %10717 = vmatpush1.bf16.msra.mxu0 %v7728
    %10718 = vmatprep.subr.bf16.mxu0 0
    %10719 = vmatpush1.bf16.msra.mxu0 %v7729
    %10720 = vmatprep.subr.bf16.mxu0 0
    %10721 = vmatpush1.bf16.msra.mxu0 %v7730
    %10722 = vmatprep.subr.bf16.mxu0 0
    %10723 = vmatpush1.bf16.msra.mxu0 %v7731
    %10724 = vmatprep.subr.bf16.mxu0 0
    %10725 = vmatpush1.bf16.msra.mxu0 %v7732
    %10726 = vmatprep.subr.bf16.mxu0 0
    %10727 = vmatpush1.bf16.msra.mxu0 %v7733
    %10728 = vmatprep.subr.bf16.mxu0 0
    %10729 = vmatpush1.bf16.msra.mxu0 %v7734
    %10730 = vmatprep.subr.bf16.mxu0 0
    %10731 = vmatpush1.bf16.msra.mxu0 %v7735
    %10732 = vmatprep.subr.bf16.mxu0 0
    %10733 = vmatpush1.bf16.msra.mxu0 %v7736
    %10734 = vmatprep.subr.bf16.mxu0 0
    %10735 = vmatpush1.bf16.msra.mxu0 %v7737
    %10736 = vmatprep.subr.bf16.mxu0 0
    %10737 = vmatpush1.bf16.msra.mxu0 %v7738
    %10738 = vmatprep.subr.bf16.mxu0 0
    %10739 = vmatpush1.bf16.msra.mxu0 %v7739
    %10740 = vmatprep.mubr.bf16.mxu0 %v900
    %10741 = vmatmul.mubr.bf16.gmra.mrb[0].mxu0 %v899
    %v10742 = vpop.f32.mrb[0].mxu0
    %v10743 = vadd.f32 %v10703, %v10742
    %v10744 = vpop.f32.mrb[0].mxu0
    %v10745 = vpop.f32.mrb[0].mxu0
    %v10746 = vpop.f32.mrb[0].mxu0
    %10747 = vdwg.mxu0
    %10748 = vmatprep.subr.bf16.mxu0 0
    %10749 = vmatpush1.bf16.msra.mxu0 %v7740
    %10750 = vmatprep.subr.bf16.mxu0 0
    %10751 = vmatpush1.bf16.msra.mxu0 %v7741
    %10752 = vmatprep.subr.bf16.mxu0 0
    %10753 = vmatpush1.bf16.msra.mxu0 %v7742
    %10754 = vmatprep.subr.bf16.mxu0 0
    %10755 = vmatpush1.bf16.msra.mxu0 %v7743
    %10756 = vmatprep.subr.bf16.mxu0 0
    %10757 = vmatpush1.bf16.msra.mxu0 %v7744
    %10758 = vmatprep.subr.bf16.mxu0 0
    %10759 = vmatpush1.bf16.msra.mxu0 %v7745
    %10760 = vmatprep.subr.bf16.mxu0 0
    %10761 = vmatpush1.bf16.msra.mxu0 %v7746
    %10762 = vmatprep.subr.bf16.mxu0 0
    %10763 = vmatpush1.bf16.msra.mxu0 %v7747
    %10764 = vmatprep.subr.bf16.mxu0 0
    %10765 = vmatpush1.bf16.msra.mxu0 %v7748
    %10766 = vmatprep.subr.bf16.mxu0 0
    %10767 = vmatpush1.bf16.msra.mxu0 %v7749
    %10768 = vmatprep.subr.bf16.mxu0 0
    %10769 = vmatpush1.bf16.msra.mxu0 %v7750
    %10770 = vmatprep.subr.bf16.mxu0 0
    %10771 = vmatpush1.bf16.msra.mxu0 %v7751
    %10772 = vmatprep.subr.bf16.mxu0 0
    %10773 = vmatpush1.bf16.msra.mxu0 %v7752
    %10774 = vmatprep.subr.bf16.mxu0 0
    %10775 = vmatpush1.bf16.msra.mxu0 %v7753
    %10776 = vmatprep.subr.bf16.mxu0 0
    %10777 = vmatpush1.bf16.msra.mxu0 %v7754
    %10778 = vmatprep.subr.bf16.mxu0 0
    %10779 = vmatpush1.bf16.msra.mxu0 %v7755
    %10780 = vmatprep.mubr.bf16.mxu0 %v902
    %10781 = vmatmul.mubr.bf16.gmra.mrb[0].mxu0 %v901
    %v10782 = vpop.f32.mrb[0].mxu0
    %v10783 = vadd.f32 %v10743, %v10782
    %v10784 = vpop.f32.mrb[0].mxu0
    %v10785 = vpop.f32.mrb[0].mxu0
    %v10786 = vpop.f32.mrb[0].mxu0
    %10787 = vdwg.mxu0
    %10788 = vmatprep.subr.bf16.mxu0 0
    %10789 = vmatpush1.bf16.msra.mxu0 %v7756
    %10790 = vmatprep.subr.bf16.mxu0 0
    %10791 = vmatpush1.bf16.msra.mxu0 %v7757
    %10792 = vmatprep.subr.bf16.mxu0 0
    %10793 = vmatpush1.bf16.msra.mxu0 %v7758
    %10794 = vmatprep.subr.bf16.mxu0 0
    %10795 = vmatpush1.bf16.msra.mxu0 %v7759
    %10796 = vmatprep.subr.bf16.mxu0 0
    %10797 = vmatpush1.bf16.msra.mxu0 %v7760
    %10798 = vmatprep.subr.bf16.mxu0 0
    %10799 = vmatpush1.bf16.msra.mxu0 %v7761
    %10800 = vmatprep.subr.bf16.mxu0 0
    %10801 = vmatpush1.bf16.msra.mxu0 %v7762
    %10802 = vmatprep.subr.bf16.mxu0 0
    %10803 = vmatpush1.bf16.msra.mxu0 %v7763
    %10804 = vmatprep.subr.bf16.mxu0 0
    %10805 = vmatpush1.bf16.msra.mxu0 %v7764
    %10806 = vmatprep.subr.bf16.mxu0 0
    %10807 = vmatpush1.bf16.msra.mxu0 %v7765
    %10808 = vmatprep.subr.bf16.mxu0 0
    %10809 = vmatpush1.bf16.msra.mxu0 %v7766
    %10810 = vmatprep.subr.bf16.mxu0 0
    %10811 = vmatpush1.bf16.msra.mxu0 %v7767
    %10812 = vmatprep.subr.bf16.mxu0 0
    %10813 = vmatpush1.bf16.msra.mxu0 %v7768
    %10814 = vmatprep.subr.bf16.mxu0 0
    %10815 = vmatpush1.bf16.msra.mxu0 %v7769
    %10816 = vmatprep.subr.bf16.mxu0 0
    %10817 = vmatpush1.bf16.msra.mxu0 %v7770
    %10818 = vmatprep.subr.bf16.mxu0 0
    %10819 = vmatpush1.bf16.msra.mxu0 %v7771
    %10820 = vmatprep.mubr.bf16.mxu0 %v904
    %10821 = vmatmul.mubr.bf16.gmra.mrb[0].mxu0 %v903
    %v10822 = vpop.f32.mrb[0].mxu0
    %v10823 = vadd.f32 %v10783, %v10822
    %v10824 = vpop.f32.mrb[0].mxu0
    %v10825 = vpop.f32.mrb[0].mxu0
    %v10826 = vpop.f32.mrb[0].mxu0
    %10827 = vdwg.mxu0
    %10828 = vmatprep.subr.bf16.mxu0 0
    %10829 = vmatpush1.bf16.msra.mxu0 %v7772
    %10830 = vmatprep.subr.bf16.mxu0 0
    %10831 = vmatpush1.bf16.msra.mxu0 %v7773
    %10832 = vmatprep.subr.bf16.mxu0 0
    %10833 = vmatpush1.bf16.msra.mxu0 %v7774
    %10834 = vmatprep.subr.bf16.mxu0 0
    %10835 = vmatpush1.bf16.msra.mxu0 %v7775
    %10836 = vmatprep.subr.bf16.mxu0 0
    %10837 = vmatpush1.bf16.msra.mxu0 %v7776
    %10838 = vmatprep.subr.bf16.mxu0 0
    %10839 = vmatpush1.bf16.msra.mxu0 %v7777
    %10840 = vmatprep.subr.bf16.mxu0 0
    %10841 = vmatpush1.bf16.msra.mxu0 %v7778
    %10842 = vmatprep.subr.bf16.mxu0 0
    %10843 = vmatpush1.bf16.msra.mxu0 %v7779
    %10844 = vmatprep.subr.bf16.mxu0 0
    %10845 = vmatpush1.bf16.msra.mxu0 %v7780
    %10846 = vmatprep.subr.bf16.mxu0 0
    %10847 = vmatpush1.bf16.msra.mxu0 %v7781
    %10848 = vmatprep.subr.bf16.mxu0 0
    %10849 = vmatpush1.bf16.msra.mxu0 %v7782
    %10850 = vmatprep.subr.bf16.mxu0 0
    %10851 = vmatpush1.bf16.msra.mxu0 %v7783
    %10852 = vmatprep.subr.bf16.mxu0 0
    %10853 = vmatpush1.bf16.msra.mxu0 %v7784
    %10854 = vmatprep.subr.bf16.mxu0 0
    %10855 = vmatpush1.bf16.msra.mxu0 %v7785
    %10856 = vmatprep.subr.bf16.mxu0 0
    %10857 = vmatpush1.bf16.msra.mxu0 %v7786
    %10858 = vmatprep.subr.bf16.mxu0 0
    %10859 = vmatpush1.bf16.msra.mxu0 %v7787
    %10860 = vmatprep.mubr.bf16.mxu0 %v906
    %10861 = vmatmul.mubr.bf16.gmra.mrb[0].mxu0 %v905
    %v10862 = vpop.f32.mrb[0].mxu0
    %v10863 = vadd.f32 %v10823, %v10862
    %v10864 = vpop.f32.mrb[0].mxu0
    %v10865 = vpop.f32.mrb[0].mxu0
    %v10866 = vpop.f32.mrb[0].mxu0
    %10867 = vdwg.mxu0
    %10868 = vmatprep.subr.bf16.mxu0 0
    %10869 = vmatpush1.bf16.msra.mxu0 %v7788
    %10870 = vmatprep.subr.bf16.mxu0 0
    %10871 = vmatpush1.bf16.msra.mxu0 %v7789
    %10872 = vmatprep.subr.bf16.mxu0 0
    %10873 = vmatpush1.bf16.msra.mxu0 %v7790
    %10874 = vmatprep.subr.bf16.mxu0 0
    %10875 = vmatpush1.bf16.msra.mxu0 %v7791
    %10876 = vmatprep.subr.bf16.mxu0 0
    %10877 = vmatpush1.bf16.msra.mxu0 %v7792
    %10878 = vmatprep.subr.bf16.mxu0 0
    %10879 = vmatpush1.bf16.msra.mxu0 %v7793
    %10880 = vmatprep.subr.bf16.mxu0 0
    %10881 = vmatpush1.bf16.msra.mxu0 %v7794
    %10882 = vmatprep.subr.bf16.mxu0 0
    %10883 = vmatpush1.bf16.msra.mxu0 %v7795
    %10884 = vmatprep.subr.bf16.mxu0 0
    %10885 = vmatpush1.bf16.msra.mxu0 %v7796
    %10886 = vmatprep.subr.bf16.mxu0 0
    %10887 = vmatpush1.bf16.msra.mxu0 %v7797
    %10888 = vmatprep.subr.bf16.mxu0 0
    %10889 = vmatpush1.bf16.msra.mxu0 %v7798
    %10890 = vmatprep.subr.bf16.mxu0 0
    %10891 = vmatpush1.bf16.msra.mxu0 %v7799
    %10892 = vmatprep.subr.bf16.mxu0 0
    %10893 = vmatpush1.bf16.msra.mxu0 %v7800
    %10894 = vmatprep.subr.bf16.mxu0 0
    %10895 = vmatpush1.bf16.msra.mxu0 %v7801
    %10896 = vmatprep.subr.bf16.mxu0 0
    %10897 = vmatpush1.bf16.msra.mxu0 %v7802
    %10898 = vmatprep.subr.bf16.mxu0 0
    %10899 = vmatpush1.bf16.msra.mxu0 %v7803
    %10900 = vmatprep.mubr.bf16.mxu0 %v908
    %10901 = vmatmul.mubr.bf16.gmra.mrb[0].mxu0 %v907
    %v10902 = vpop.f32.mrb[0].mxu0
    %v10903 = vadd.f32 %v10863, %v10902
    %v10904 = vpop.f32.mrb[0].mxu0
    %v10905 = vpop.f32.mrb[0].mxu0
    %v10906 = vpop.f32.mrb[0].mxu0
    %10907 = vdwg.mxu0
    %10908 = vmatprep.subr.bf16.mxu0 0
    %10909 = vmatpush1.bf16.msra.mxu0 %v7804
    %10910 = vmatprep.subr.bf16.mxu0 0
    %10911 = vmatpush1.bf16.msra.mxu0 %v7805
    %10912 = vmatprep.subr.bf16.mxu0 0
    %10913 = vmatpush1.bf16.msra.mxu0 %v7806
    %10914 = vmatprep.subr.bf16.mxu0 0
    %10915 = vmatpush1.bf16.msra.mxu0 %v7807
    %10916 = vmatprep.subr.bf16.mxu0 0
    %10917 = vmatpush1.bf16.msra.mxu0 %v7808
    %10918 = vmatprep.subr.bf16.mxu0 0
    %10919 = vmatpush1.bf16.msra.mxu0 %v7809
    %10920 = vmatprep.subr.bf16.mxu0 0
    %10921 = vmatpush1.bf16.msra.mxu0 %v7810
    %10922 = vmatprep.subr.bf16.mxu0 0
    %10923 = vmatpush1.bf16.msra.mxu0 %v7811
    %10924 = vmatprep.subr.bf16.mxu0 0
    %10925 = vmatpush1.bf16.msra.mxu0 %v7812
    %10926 = vmatprep.subr.bf16.mxu0 0
    %10927 = vmatpush1.bf16.msra.mxu0 %v7813
    %10928 = vmatprep.subr.bf16.mxu0 0
    %10929 = vmatpush1.bf16.msra.mxu0 %v7814
    %10930 = vmatprep.subr.bf16.mxu0 0
    %10931 = vmatpush1.bf16.msra.mxu0 %v7815
    %10932 = vmatprep.subr.bf16.mxu0 0
    %10933 = vmatpush1.bf16.msra.mxu0 %v7816
    %10934 = vmatprep.subr.bf16.mxu0 0
    %10935 = vmatpush1.bf16.msra.mxu0 %v7817
    %10936 = vmatprep.subr.bf16.mxu0 0
    %10937 = vmatpush1.bf16.msra.mxu0 %v7818
    %10938 = vmatprep.subr.bf16.mxu0 0
    %10939 = vmatpush1.bf16.msra.mxu0 %v7819
    %10940 = vmatprep.mubr.bf16.mxu0 %v910
    %10941 = vmatmul.mubr.bf16.gmra.mrb[0].mxu0 %v909
    %v10942 = vpop.f32.mrb[0].mxu0
    %v10943 = vadd.f32 %v10903, %v10942
    %v10944 = vpop.f32.mrb[0].mxu0
    %v10945 = vpop.f32.mrb[0].mxu0
    %v10946 = vpop.f32.mrb[0].mxu0
    %10947 = vdwg.mxu0
    %10948 = vmatprep.subr.bf16.mxu0 0
    %10949 = vmatpush1.bf16.msra.mxu0 %v7820
    %10950 = vmatprep.subr.bf16.mxu0 0
    %10951 = vmatpush1.bf16.msra.mxu0 %v7821
    %10952 = vmatprep.subr.bf16.mxu0 0
    %10953 = vmatpush1.bf16.msra.mxu0 %v7822
    %10954 = vmatprep.subr.bf16.mxu0 0
    %10955 = vmatpush1.bf16.msra.mxu0 %v7823
    %10956 = vmatprep.subr.bf16.mxu0 0
    %10957 = vmatpush1.bf16.msra.mxu0 %v7824
    %10958 = vmatprep.subr.bf16.mxu0 0
    %10959 = vmatpush1.bf16.msra.mxu0 %v7825
    %10960 = vmatprep.subr.bf16.mxu0 0
    %10961 = vmatpush1.bf16.msra.mxu0 %v7826
    %10962 = vmatprep.subr.bf16.mxu0 0
    %10963 = vmatpush1.bf16.msra.mxu0 %v7827
    %10964 = vmatprep.subr.bf16.mxu0 0
    %10965 = vmatpush1.bf16.msra.mxu0 %v7828
    %10966 = vmatprep.subr.bf16.mxu0 0
    %10967 = vmatpush1.bf16.msra.mxu0 %v7829
    %10968 = vmatprep.subr.bf16.mxu0 0
    %10969 = vmatpush1.bf16.msra.mxu0 %v7830
    %10970 = vmatprep.subr.bf16.mxu0 0
    %10971 = vmatpush1.bf16.msra.mxu0 %v7831
    %10972 = vmatprep.subr.bf16.mxu0 0
    %10973 = vmatpush1.bf16.msra.mxu0 %v7832
    %10974 = vmatprep.subr.bf16.mxu0 0
    %10975 = vmatpush1.bf16.msra.mxu0 %v7833
    %10976 = vmatprep.subr.bf16.mxu0 0
    %10977 = vmatpush1.bf16.msra.mxu0 %v7834
    %10978 = vmatprep.subr.bf16.mxu0 0
    %10979 = vmatpush1.bf16.msra.mxu0 %v7835
    %10980 = vmatprep.mubr.bf16.mxu0 %v912
    %10981 = vmatmul.mubr.bf16.gmra.mrb[0].mxu0 %v911
    %v10982 = vpop.f32.mrb[0].mxu0
    %v10983 = vadd.f32 %v10943, %v10982
    %v10984 = vpop.f32.mrb[0].mxu0
    %v10985 = vpop.f32.mrb[0].mxu0
    %v10986 = vpop.f32.mrb[0].mxu0
    %10987 = vdwg.mxu0
    %10988 = vmatprep.subr.bf16.mxu0 0
    %10989 = vmatpush1.bf16.msra.mxu0 %v7836
    %10990 = vmatprep.subr.bf16.mxu0 0
    %10991 = vmatpush1.bf16.msra.mxu0 %v7837
    %10992 = vmatprep.subr.bf16.mxu0 0
    %10993 = vmatpush1.bf16.msra.mxu0 %v7838
    %10994 = vmatprep.subr.bf16.mxu0 0
    %10995 = vmatpush1.bf16.msra.mxu0 %v7839
    %10996 = vmatprep.subr.bf16.mxu0 0
    %10997 = vmatpush1.bf16.msra.mxu0 %v7840
    %10998 = vmatprep.subr.bf16.mxu0 0
    %10999 = vmatpush1.bf16.msra.mxu0 %v7841
    %11000 = vmatprep.subr.bf16.mxu0 0
    %11001 = vmatpush1.bf16.msra.mxu0 %v7842
    %11002 = vmatprep.subr.bf16.mxu0 0
    %11003 = vmatpush1.bf16.msra.mxu0 %v7843
    %11004 = vmatprep.subr.bf16.mxu0 0
    %11005 = vmatpush1.bf16.msra.mxu0 %v7844
    %11006 = vmatprep.subr.bf16.mxu0 0
    %11007 = vmatpush1.bf16.msra.mxu0 %v7845
    %11008 = vmatprep.subr.bf16.mxu0 0
    %11009 = vmatpush1.bf16.msra.mxu0 %v7846
    %11010 = vmatprep.subr.bf16.mxu0 0
    %11011 = vmatpush1.bf16.msra.mxu0 %v7847
    %11012 = vmatprep.subr.bf16.mxu0 0
    %11013 = vmatpush1.bf16.msra.mxu0 %v7848
    %11014 = vmatprep.subr.bf16.mxu0 0
    %11015 = vmatpush1.bf16.msra.mxu0 %v7849
    %11016 = vmatprep.subr.bf16.mxu0 0
    %11017 = vmatpush1.bf16.msra.mxu0 %v7850
    %11018 = vmatprep.subr.bf16.mxu0 0
    %11019 = vmatpush1.bf16.msra.mxu0 %v7851
    %11020 = vmatprep.mubr.bf16.mxu0 %v914
    %11021 = vmatmul.mubr.bf16.gmra.mrb[0].mxu0 %v913
    %v11022 = vpop.f32.mrb[0].mxu0
    %v11023 = vadd.f32 %v10983, %v11022
    %v11024 = vpop.f32.mrb[0].mxu0
    %v11025 = vpop.f32.mrb[0].mxu0
    %v11026 = vpop.f32.mrb[0].mxu0
    %11027 = vdwg.mxu0
    %11028 = vmatprep.subr.bf16.mxu0 0
    %11029 = vmatpush1.bf16.msra.mxu0 %v7852
    %11030 = vmatprep.subr.bf16.mxu0 0
    %11031 = vmatpush1.bf16.msra.mxu0 %v7853
    %11032 = vmatprep.subr.bf16.mxu0 0
    %11033 = vmatpush1.bf16.msra.mxu0 %v7854
    %11034 = vmatprep.subr.bf16.mxu0 0
    %11035 = vmatpush1.bf16.msra.mxu0 %v7855
    %11036 = vmatprep.subr.bf16.mxu0 0
    %11037 = vmatpush1.bf16.msra.mxu0 %v7856
    %11038 = vmatprep.subr.bf16.mxu0 0
    %11039 = vmatpush1.bf16.msra.mxu0 %v7857
    %11040 = vmatprep.subr.bf16.mxu0 0
    %11041 = vmatpush1.bf16.msra.mxu0 %v7858
    %11042 = vmatprep.subr.bf16.mxu0 0
    %11043 = vmatpush1.bf16.msra.mxu0 %v7859
    %11044 = vmatprep.subr.bf16.mxu0 0
    %11045 = vmatpush1.bf16.msra.mxu0 %v7860
    %11046 = vmatprep.subr.bf16.mxu0 0
    %11047 = vmatpush1.bf16.msra.mxu0 %v7861
    %11048 = vmatprep.subr.bf16.mxu0 0
    %11049 = vmatpush1.bf16.msra.mxu0 %v7862
    %11050 = vmatprep.subr.bf16.mxu0 0
    %11051 = vmatpush1.bf16.msra.mxu0 %v7863
    %11052 = vmatprep.subr.bf16.mxu0 0
    %11053 = vmatpush1.bf16.msra.mxu0 %v7864
    %11054 = vmatprep.subr.bf16.mxu0 0
    %11055 = vmatpush1.bf16.msra.mxu0 %v7865
    %11056 = vmatprep.subr.bf16.mxu0 0
    %11057 = vmatpush1.bf16.msra.mxu0 %v7866
    %11058 = vmatprep.subr.bf16.mxu0 0
    %11059 = vmatpush1.bf16.msra.mxu0 %v7867
    %11060 = vmatprep.mubr.bf16.mxu0 %v916
    %11061 = vmatmul.mubr.bf16.gmra.mrb[0].mxu0 %v915
    %v11062 = vpop.f32.mrb[0].mxu0
    %v11063 = vadd.f32 %v11023, %v11062
    %v11064 = vpop.f32.mrb[0].mxu0
    %v11065 = vpop.f32.mrb[0].mxu0
    %v11066 = vpop.f32.mrb[0].mxu0
    %11067 = vdwg.mxu0
    %11068 = vmatprep.subr.bf16.mxu0 0
    %11069 = vmatpush1.bf16.msra.mxu0 %v7868
    %11070 = vmatprep.subr.bf16.mxu0 0
    %11071 = vmatpush1.bf16.msra.mxu0 %v7869
    %11072 = vmatprep.subr.bf16.mxu0 0
    %11073 = vmatpush1.bf16.msra.mxu0 %v7870
    %11074 = vmatprep.subr.bf16.mxu0 0
    %11075 = vmatpush1.bf16.msra.mxu0 %v7871
    %11076 = vmatprep.subr.bf16.mxu0 0
    %11077 = vmatpush1.bf16.msra.mxu0 %v7872
    %11078 = vmatprep.subr.bf16.mxu0 0
    %11079 = vmatpush1.bf16.msra.mxu0 %v7873
    %11080 = vmatprep.subr.bf16.mxu0 0
    %11081 = vmatpush1.bf16.msra.mxu0 %v7874
    %11082 = vmatprep.subr.bf16.mxu0 0
    %11083 = vmatpush1.bf16.msra.mxu0 %v7875
    %11084 = vmatprep.subr.bf16.mxu0 0
    %11085 = vmatpush1.bf16.msra.mxu0 %v7876
    %11086 = vmatprep.subr.bf16.mxu0 0
    %11087 = vmatpush1.bf16.msra.mxu0 %v7877
    %11088 = vmatprep.subr.bf16.mxu0 0
    %11089 = vmatpush1.bf16.msra.mxu0 %v7878
    %11090 = vmatprep.subr.bf16.mxu0 0
    %11091 = vmatpush1.bf16.msra.mxu0 %v7879
    %11092 = vmatprep.subr.bf16.mxu0 0
    %11093 = vmatpush1.bf16.msra.mxu0 %v7880
    %11094 = vmatprep.subr.bf16.mxu0 0
    %11095 = vmatpush1.bf16.msra.mxu0 %v7881
    %11096 = vmatprep.subr.bf16.mxu0 0
    %11097 = vmatpush1.bf16.msra.mxu0 %v7882
    %11098 = vmatprep.subr.bf16.mxu0 0
    %11099 = vmatpush1.bf16.msra.mxu0 %v7883
    %11100 = vmatprep.mubr.bf16.mxu0 %v918
    %11101 = vmatmul.mubr.bf16.gmra.mrb[0].mxu0 %v917
    %v11102 = vpop.f32.mrb[0].mxu0
    %v11103 = vadd.f32 %v11063, %v11102
    %v11104 = vpop.f32.mrb[0].mxu0
    %v11105 = vpop.f32.mrb[0].mxu0
    %v11106 = vpop.f32.mrb[0].mxu0
    %11107 = vdwg.mxu0
    %11108 = vmatprep.subr.bf16.mxu0 0
    %11109 = vmatpush1.bf16.msra.mxu0 %v7884
    %11110 = vmatprep.subr.bf16.mxu0 0
    %11111 = vmatpush1.bf16.msra.mxu0 %v7885
    %11112 = vmatprep.subr.bf16.mxu0 0
    %11113 = vmatpush1.bf16.msra.mxu0 %v7886
    %11114 = vmatprep.subr.bf16.mxu0 0
    %11115 = vmatpush1.bf16.msra.mxu0 %v7887
    %11116 = vmatprep.subr.bf16.mxu0 0
    %11117 = vmatpush1.bf16.msra.mxu0 %v7888
    %11118 = vmatprep.subr.bf16.mxu0 0
    %11119 = vmatpush1.bf16.msra.mxu0 %v7889
    %11120 = vmatprep.subr.bf16.mxu0 0
    %11121 = vmatpush1.bf16.msra.mxu0 %v7890
    %11122 = vmatprep.subr.bf16.mxu0 0
    %11123 = vmatpush1.bf16.msra.mxu0 %v7891
    %11124 = vmatprep.subr.bf16.mxu0 0
    %11125 = vmatpush1.bf16.msra.mxu0 %v7892
    %11126 = vmatprep.subr.bf16.mxu0 0
    %11127 = vmatpush1.bf16.msra.mxu0 %v7893
    %11128 = vmatprep.subr.bf16.mxu0 0
    %11129 = vmatpush1.bf16.msra.mxu0 %v7894
    %11130 = vmatprep.subr.bf16.mxu0 0
    %11131 = vmatpush1.bf16.msra.mxu0 %v7895
    %11132 = vmatprep.subr.bf16.mxu0 0
    %11133 = vmatpush1.bf16.msra.mxu0 %v7896
    %11134 = vmatprep.subr.bf16.mxu0 0
    %11135 = vmatpush1.bf16.msra.mxu0 %v7897
    %11136 = vmatprep.subr.bf16.mxu0 0
    %11137 = vmatpush1.bf16.msra.mxu0 %v7898
    %11138 = vmatprep.subr.bf16.mxu0 0
    %11139 = vmatpush1.bf16.msra.mxu0 %v7899
    %11140 = vmatprep.mubr.bf16.mxu0 %v920
    %11141 = vmatmul.mubr.bf16.gmra.mrb[0].mxu0 %v919
    %v11142 = vpop.f32.mrb[0].mxu0
    %v11143 = vadd.f32 %v11103, %v11142
    %v11144 = vpop.f32.mrb[0].mxu0
    %v11145 = vpop.f32.mrb[0].mxu0
    %v11146 = vpop.f32.mrb[0].mxu0
    %11147 = vdwg.mxu0
    %11148 = vmatprep.subr.bf16.mxu0 0
    %11149 = vmatpush1.bf16.msra.mxu0 %v7900
    %11150 = vmatprep.subr.bf16.mxu0 0
    %11151 = vmatpush1.bf16.msra.mxu0 %v7901
    %11152 = vmatprep.subr.bf16.mxu0 0
    %11153 = vmatpush1.bf16.msra.mxu0 %v7902
    %11154 = vmatprep.subr.bf16.mxu0 0
    %11155 = vmatpush1.bf16.msra.mxu0 %v7903
    %11156 = vmatprep.subr.bf16.mxu0 0
    %11157 = vmatpush1.bf16.msra.mxu0 %v7904
    %11158 = vmatprep.subr.bf16.mxu0 0
    %11159 = vmatpush1.bf16.msra.mxu0 %v7905
    %11160 = vmatprep.subr.bf16.mxu0 0
    %11161 = vmatpush1.bf16.msra.mxu0 %v7906
    %11162 = vmatprep.subr.bf16.mxu0 0
    %11163 = vmatpush1.bf16.msra.mxu0 %v7907
    %11164 = vmatprep.subr.bf16.mxu0 0
    %11165 = vmatpush1.bf16.msra.mxu0 %v7908
    %11166 = vmatprep.subr.bf16.mxu0 0
    %11167 = vmatpush1.bf16.msra.mxu0 %v7909
    %11168 = vmatprep.subr.bf16.mxu0 0
    %11169 = vmatpush1.bf16.msra.mxu0 %v7910
    %11170 = vmatprep.subr.bf16.mxu0 0
    %11171 = vmatpush1.bf16.msra.mxu0 %v7911
    %11172 = vmatprep.subr.bf16.mxu0 0
    %11173 = vmatpush1.bf16.msra.mxu0 %v7912
    %11174 = vmatprep.subr.bf16.mxu0 0
    %11175 = vmatpush1.bf16.msra.mxu0 %v7913
    %11176 = vmatprep.subr.bf16.mxu0 0
    %11177 = vmatpush1.bf16.msra.mxu0 %v7914
    %11178 = vmatprep.subr.bf16.mxu0 0
    %11179 = vmatpush1.bf16.msra.mxu0 %v7915
    %11180 = vmatprep.mubr.bf16.mxu0 %v922
    %11181 = vmatmul.mubr.bf16.gmra.mrb[0].mxu0 %v921
    %v11182 = vpop.f32.mrb[0].mxu0
    %v11183 = vadd.f32 %v11143, %v11182
    %v11184 = vpop.f32.mrb[0].mxu0
    %v11185 = vpop.f32.mrb[0].mxu0
    %v11186 = vpop.f32.mrb[0].mxu0
    %11187 = vdwg.mxu0
    %11188 = vmatprep.subr.bf16.mxu0 0
    %11189 = vmatpush1.bf16.msra.mxu0 %v7916
    %11190 = vmatprep.subr.bf16.mxu0 0
    %11191 = vmatpush1.bf16.msra.mxu0 %v7917
    %11192 = vmatprep.subr.bf16.mxu0 0
    %11193 = vmatpush1.bf16.msra.mxu0 %v7918
    %11194 = vmatprep.subr.bf16.mxu0 0
    %11195 = vmatpush1.bf16.msra.mxu0 %v7919
    %11196 = vmatprep.subr.bf16.mxu0 0
    %11197 = vmatpush1.bf16.msra.mxu0 %v7920
    %11198 = vmatprep.subr.bf16.mxu0 0
    %11199 = vmatpush1.bf16.msra.mxu0 %v7921
    %11200 = vmatprep.subr.bf16.mxu0 0
    %11201 = vmatpush1.bf16.msra.mxu0 %v7922
    %11202 = vmatprep.subr.bf16.mxu0 0
    %11203 = vmatpush1.bf16.msra.mxu0 %v7923
    %11204 = vmatprep.subr.bf16.mxu0 0
    %11205 = vmatpush1.bf16.msra.mxu0 %v7924
    %11206 = vmatprep.subr.bf16.mxu0 0
    %11207 = vmatpush1.bf16.msra.mxu0 %v7925
    %11208 = vmatprep.subr.bf16.mxu0 0
    %11209 = vmatpush1.bf16.msra.mxu0 %v7926
    %11210 = vmatprep.subr.bf16.mxu0 0
    %11211 = vmatpush1.bf16.msra.mxu0 %v7927
    %11212 = vmatprep.subr.bf16.mxu0 0
    %11213 = vmatpush1.bf16.msra.mxu0 %v7928
    %11214 = vmatprep.subr.bf16.mxu0 0
    %11215 = vmatpush1.bf16.msra.mxu0 %v7929
    %11216 = vmatprep.subr.bf16.mxu0 0
    %11217 = vmatpush1.bf16.msra.mxu0 %v7930
    %11218 = vmatprep.subr.bf16.mxu0 0
    %11219 = vmatpush1.bf16.msra.mxu0 %v7931
    %11220 = vmatprep.mubr.bf16.mxu0 %v924
    %11221 = vmatmul.mubr.bf16.gmra.mrb[0].mxu0 %v923
    %v11222 = vpop.f32.mrb[0].mxu0
    %v11223 = vadd.f32 %v11183, %v11222
    %v11224 = vpop.f32.mrb[0].mxu0
    %v11225 = vpop.f32.mrb[0].mxu0
    %v11226 = vpop.f32.mrb[0].mxu0
    %11227 = vdwg.mxu0
    %11228 = vmatprep.subr.bf16.mxu0 0
    %11229 = vmatpush1.bf16.msra.mxu0 %v7932
    %11230 = vmatprep.subr.bf16.mxu0 0
    %11231 = vmatpush1.bf16.msra.mxu0 %v7933
    %11232 = vmatprep.subr.bf16.mxu0 0
    %11233 = vmatpush1.bf16.msra.mxu0 %v7934
    %11234 = vmatprep.subr.bf16.mxu0 0
    %11235 = vmatpush1.bf16.msra.mxu0 %v7935
    %11236 = vmatprep.subr.bf16.mxu0 0
    %11237 = vmatpush1.bf16.msra.mxu0 %v7936
    %11238 = vmatprep.subr.bf16.mxu0 0
    %11239 = vmatpush1.bf16.msra.mxu0 %v7937
    %11240 = vmatprep.subr.bf16.mxu0 0
    %11241 = vmatpush1.bf16.msra.mxu0 %v7938
    %11242 = vmatprep.subr.bf16.mxu0 0
    %11243 = vmatpush1.bf16.msra.mxu0 %v7939
    %11244 = vmatprep.subr.bf16.mxu0 0
    %11245 = vmatpush1.bf16.msra.mxu0 %v7940
    %11246 = vmatprep.subr.bf16.mxu0 0
    %11247 = vmatpush1.bf16.msra.mxu0 %v7941
    %11248 = vmatprep.subr.bf16.mxu0 0
    %11249 = vmatpush1.bf16.msra.mxu0 %v7942
    %11250 = vmatprep.subr.bf16.mxu0 0
    %11251 = vmatpush1.bf16.msra.mxu0 %v7943
    %11252 = vmatprep.subr.bf16.mxu0 0
    %11253 = vmatpush1.bf16.msra.mxu0 %v7944
    %11254 = vmatprep.subr.bf16.mxu0 0
    %11255 = vmatpush1.bf16.msra.mxu0 %v7945
    %11256 = vmatprep.subr.bf16.mxu0 0
    %11257 = vmatpush1.bf16.msra.mxu0 %v7946
    %11258 = vmatprep.subr.bf16.mxu0 0
    %11259 = vmatpush1.bf16.msra.mxu0 %v7947
    %11260 = vmatprep.mubr.bf16.mxu0 %v926
    %11261 = vmatmul.mubr.bf16.gmra.mrb[0].mxu0 %v925
    %v11262 = vpop.f32.mrb[0].mxu0
    %v11263 = vadd.f32 %v11223, %v11262
    %v11264 = vpop.f32.mrb[0].mxu0
    %v11265 = vpop.f32.mrb[0].mxu0
    %v11266 = vpop.f32.mrb[0].mxu0
    %11267 = vdwg.mxu0
    %11268 = vmatprep.subr.bf16.mxu0 0
    %11269 = vmatpush1.bf16.msra.mxu0 %v7948
    %11270 = vmatprep.subr.bf16.mxu0 0
    %11271 = vmatpush1.bf16.msra.mxu0 %v7949
    %11272 = vmatprep.subr.bf16.mxu0 0
    %11273 = vmatpush1.bf16.msra.mxu0 %v7950
    %11274 = vmatprep.subr.bf16.mxu0 0
    %11275 = vmatpush1.bf16.msra.mxu0 %v7951
    %11276 = vmatprep.subr.bf16.mxu0 0
    %11277 = vmatpush1.bf16.msra.mxu0 %v7952
    %11278 = vmatprep.subr.bf16.mxu0 0
    %11279 = vmatpush1.bf16.msra.mxu0 %v7953
    %11280 = vmatprep.subr.bf16.mxu0 0
    %11281 = vmatpush1.bf16.msra.mxu0 %v7954
    %11282 = vmatprep.subr.bf16.mxu0 0
    %11283 = vmatpush1.bf16.msra.mxu0 %v7955
    %11284 = vmatprep.subr.bf16.mxu0 0
    %11285 = vmatpush1.bf16.msra.mxu0 %v7956
    %11286 = vmatprep.subr.bf16.mxu0 0
    %11287 = vmatpush1.bf16.msra.mxu0 %v7957
    %11288 = vmatprep.subr.bf16.mxu0 0
    %11289 = vmatpush1.bf16.msra.mxu0 %v7958
    %11290 = vmatprep.subr.bf16.mxu0 0
    %11291 = vmatpush1.bf16.msra.mxu0 %v7959
    %11292 = vmatprep.subr.bf16.mxu0 0
    %11293 = vmatpush1.bf16.msra.mxu0 %v7960
    %11294 = vmatprep.subr.bf16.mxu0 0
    %11295 = vmatpush1.bf16.msra.mxu0 %v7961
    %11296 = vmatprep.subr.bf16.mxu0 0
    %11297 = vmatpush1.bf16.msra.mxu0 %v7962
    %11298 = vmatprep.subr.bf16.mxu0 0
    %11299 = vmatpush1.bf16.msra.mxu0 %v7963
    %11300 = vmatprep.mubr.bf16.mxu0 %v928
    %11301 = vmatmul.mubr.bf16.gmra.mrb[0].mxu0 %v927
    %v11302 = vpop.f32.mrb[0].mxu0
    %v11303 = vadd.f32 %v11263, %v11302
    %v11304 = vpop.f32.mrb[0].mxu0
    %v11305 = vpop.f32.mrb[0].mxu0
    %v11306 = vpop.f32.mrb[0].mxu0
    %11307 = vdwg.mxu0
    %11308 = vmatprep.subr.bf16.mxu0 0
    %11309 = vmatpush1.bf16.msra.mxu0 %v7964
    %11310 = vmatprep.subr.bf16.mxu0 0
    %11311 = vmatpush1.bf16.msra.mxu0 %v7965
    %11312 = vmatprep.subr.bf16.mxu0 0
    %11313 = vmatpush1.bf16.msra.mxu0 %v7966
    %11314 = vmatprep.subr.bf16.mxu0 0
    %11315 = vmatpush1.bf16.msra.mxu0 %v7967
    %11316 = vmatprep.subr.bf16.mxu0 0
    %11317 = vmatpush1.bf16.msra.mxu0 %v7968
    %11318 = vmatprep.subr.bf16.mxu0 0
    %11319 = vmatpush1.bf16.msra.mxu0 %v7969
    %11320 = vmatprep.subr.bf16.mxu0 0
    %11321 = vmatpush1.bf16.msra.mxu0 %v7970
    %11322 = vmatprep.subr.bf16.mxu0 0
    %11323 = vmatpush1.bf16.msra.mxu0 %v7971
    %11324 = vmatprep.subr.bf16.mxu0 0
    %11325 = vmatpush1.bf16.msra.mxu0 %v7972
    %11326 = vmatprep.subr.bf16.mxu0 0
    %11327 = vmatpush1.bf16.msra.mxu0 %v7973
    %11328 = vmatprep.subr.bf16.mxu0 0
    %11329 = vmatpush1.bf16.msra.mxu0 %v7974
    %11330 = vmatprep.subr.bf16.mxu0 0
    %11331 = vmatpush1.bf16.msra.mxu0 %v7975
    %11332 = vmatprep.subr.bf16.mxu0 0
    %11333 = vmatpush1.bf16.msra.mxu0 %v7976
    %11334 = vmatprep.subr.bf16.mxu0 0
    %11335 = vmatpush1.bf16.msra.mxu0 %v7977
    %11336 = vmatprep.subr.bf16.mxu0 0
    %11337 = vmatpush1.bf16.msra.mxu0 %v7978
    %11338 = vmatprep.subr.bf16.mxu0 0
    %11339 = vmatpush1.bf16.msra.mxu0 %v7979
    %11340 = vmatprep.mubr.bf16.mxu0 %v930
    %11341 = vmatmul.mubr.bf16.gmra.mrb[0].mxu0 %v929
    %v11342 = vpop.f32.mrb[0].mxu0
    %v11343 = vadd.f32 %v11303, %v11342
    %v11344 = vpop.f32.mrb[0].mxu0
    %v11345 = vpop.f32.mrb[0].mxu0
    %v11346 = vpop.f32.mrb[0].mxu0
    %11347 = vdwg.mxu0
    %11348 = vmatprep.subr.bf16.mxu0 0
    %11349 = vmatpush1.bf16.msra.mxu0 %v7980
    %11350 = vmatprep.subr.bf16.mxu0 0
    %11351 = vmatpush1.bf16.msra.mxu0 %v7981
    %11352 = vmatprep.subr.bf16.mxu0 0
    %11353 = vmatpush1.bf16.msra.mxu0 %v7982
    %11354 = vmatprep.subr.bf16.mxu0 0
    %11355 = vmatpush1.bf16.msra.mxu0 %v7983
    %11356 = vmatprep.subr.bf16.mxu0 0
    %11357 = vmatpush1.bf16.msra.mxu0 %v7984
    %11358 = vmatprep.subr.bf16.mxu0 0
    %11359 = vmatpush1.bf16.msra.mxu0 %v7985
    %11360 = vmatprep.subr.bf16.mxu0 0
    %11361 = vmatpush1.bf16.msra.mxu0 %v7986
    %11362 = vmatprep.subr.bf16.mxu0 0
    %11363 = vmatpush1.bf16.msra.mxu0 %v7987
    %11364 = vmatprep.subr.bf16.mxu0 0
    %11365 = vmatpush1.bf16.msra.mxu0 %v7988
    %11366 = vmatprep.subr.bf16.mxu0 0
    %11367 = vmatpush1.bf16.msra.mxu0 %v7989
    %11368 = vmatprep.subr.bf16.mxu0 0
    %11369 = vmatpush1.bf16.msra.mxu0 %v7990
    %11370 = vmatprep.subr.bf16.mxu0 0
    %11371 = vmatpush1.bf16.msra.mxu0 %v7991
    %11372 = vmatprep.subr.bf16.mxu0 0
    %11373 = vmatpush1.bf16.msra.mxu0 %v7992
    %11374 = vmatprep.subr.bf16.mxu0 0
    %11375 = vmatpush1.bf16.msra.mxu0 %v7993
    %11376 = vmatprep.subr.bf16.mxu0 0
    %11377 = vmatpush1.bf16.msra.mxu0 %v7994
    %11378 = vmatprep.subr.bf16.mxu0 0
    %11379 = vmatpush1.bf16.msra.mxu0 %v7995
    %11380 = vmatprep.mubr.bf16.mxu0 %v932
    %11381 = vmatmul.mubr.bf16.gmra.mrb[0].mxu0 %v931
    %v11382 = vpop.f32.mrb[0].mxu0
    %v11383 = vadd.f32 %v11343, %v11382
    %v11384 = vpop.f32.mrb[0].mxu0
    %v11385 = vpop.f32.mrb[0].mxu0
    %v11386 = vpop.f32.mrb[0].mxu0
    %11387 = vdwg.mxu0
    %11388 = vmatprep.subr.bf16.mxu0 0
    %11389 = vmatpush1.bf16.msra.mxu0 %v7996
    %11390 = vmatprep.subr.bf16.mxu0 0
    %11391 = vmatpush1.bf16.msra.mxu0 %v7997
    %11392 = vmatprep.subr.bf16.mxu0 0
    %11393 = vmatpush1.bf16.msra.mxu0 %v7998
    %11394 = vmatprep.subr.bf16.mxu0 0
    %11395 = vmatpush1.bf16.msra.mxu0 %v7999
    %11396 = vmatprep.subr.bf16.mxu0 0
    %11397 = vmatpush1.bf16.msra.mxu0 %v8000
    %11398 = vmatprep.subr.bf16.mxu0 0
    %11399 = vmatpush1.bf16.msra.mxu0 %v8001
    %11400 = vmatprep.subr.bf16.mxu0 0
    %11401 = vmatpush1.bf16.msra.mxu0 %v8002
    %11402 = vmatprep.subr.bf16.mxu0 0
    %11403 = vmatpush1.bf16.msra.mxu0 %v8003
    %11404 = vmatprep.subr.bf16.mxu0 0
    %11405 = vmatpush1.bf16.msra.mxu0 %v8004
    %11406 = vmatprep.subr.bf16.mxu0 0
    %11407 = vmatpush1.bf16.msra.mxu0 %v8005
    %11408 = vmatprep.subr.bf16.mxu0 0
    %11409 = vmatpush1.bf16.msra.mxu0 %v8006
    %11410 = vmatprep.subr.bf16.mxu0 0
    %11411 = vmatpush1.bf16.msra.mxu0 %v8007
    %11412 = vmatprep.subr.bf16.mxu0 0
    %11413 = vmatpush1.bf16.msra.mxu0 %v8008
    %11414 = vmatprep.subr.bf16.mxu0 0
    %11415 = vmatpush1.bf16.msra.mxu0 %v8009
    %11416 = vmatprep.subr.bf16.mxu0 0
    %11417 = vmatpush1.bf16.msra.mxu0 %v8010
    %11418 = vmatprep.subr.bf16.mxu0 0
    %11419 = vmatpush1.bf16.msra.mxu0 %v8011
    %11420 = vmatprep.mubr.bf16.mxu0 %v934
    %11421 = vmatmul.mubr.bf16.gmra.mrb[0].mxu0 %v933
    %v11422 = vpop.f32.mrb[0].mxu0
    %v11423 = vadd.f32 %v11383, %v11422
    %v11424 = vpop.f32.mrb[0].mxu0
    %v11425 = vpop.f32.mrb[0].mxu0
    %v11426 = vpop.f32.mrb[0].mxu0
    %11427 = vdwg.mxu0
    %11428 = vmatprep.subr.bf16.mxu0 0
    %11429 = vmatpush1.bf16.msra.mxu0 %v8012
    %11430 = vmatprep.subr.bf16.mxu0 0
    %11431 = vmatpush1.bf16.msra.mxu0 %v8013
    %11432 = vmatprep.subr.bf16.mxu0 0
    %11433 = vmatpush1.bf16.msra.mxu0 %v8014
    %11434 = vmatprep.subr.bf16.mxu0 0
    %11435 = vmatpush1.bf16.msra.mxu0 %v8015
    %11436 = vmatprep.subr.bf16.mxu0 0
    %11437 = vmatpush1.bf16.msra.mxu0 %v8016
    %11438 = vmatprep.subr.bf16.mxu0 0
    %11439 = vmatpush1.bf16.msra.mxu0 %v8017
    %11440 = vmatprep.subr.bf16.mxu0 0
    %11441 = vmatpush1.bf16.msra.mxu0 %v8018
    %11442 = vmatprep.subr.bf16.mxu0 0
    %11443 = vmatpush1.bf16.msra.mxu0 %v8019
    %11444 = vmatprep.subr.bf16.mxu0 0
    %11445 = vmatpush1.bf16.msra.mxu0 %v8020
    %11446 = vmatprep.subr.bf16.mxu0 0
    %11447 = vmatpush1.bf16.msra.mxu0 %v8021
    %11448 = vmatprep.subr.bf16.mxu0 0
    %11449 = vmatpush1.bf16.msra.mxu0 %v8022
    %11450 = vmatprep.subr.bf16.mxu0 0
    %11451 = vmatpush1.bf16.msra.mxu0 %v8023
    %11452 = vmatprep.subr.bf16.mxu0 0
    %11453 = vmatpush1.bf16.msra.mxu0 %v8024
    %11454 = vmatprep.subr.bf16.mxu0 0
    %11455 = vmatpush1.bf16.msra.mxu0 %v8025
    %11456 = vmatprep.subr.bf16.mxu0 0
    %11457 = vmatpush1.bf16.msra.mxu0 %v8026
    %11458 = vmatprep.subr.bf16.mxu0 0
    %11459 = vmatpush1.bf16.msra.mxu0 %v8027
    %11460 = vmatprep.mubr.bf16.mxu0 %v936
    %11461 = vmatmul.mubr.bf16.gmra.mrb[0].mxu0 %v935
    %v11462 = vpop.f32.mrb[0].mxu0
    %v11463 = vadd.f32 %v11423, %v11462
    %v11464 = vpop.f32.mrb[0].mxu0
    %v11465 = vpop.f32.mrb[0].mxu0
    %v11466 = vpop.f32.mrb[0].mxu0
    %11467 = vdwg.mxu0
    %11468 = vmatprep.subr.bf16.mxu0 0
    %11469 = vmatpush1.bf16.msra.mxu0 %v8028
    %11470 = vmatprep.subr.bf16.mxu0 0
    %11471 = vmatpush1.bf16.msra.mxu0 %v8029
    %11472 = vmatprep.subr.bf16.mxu0 0
    %11473 = vmatpush1.bf16.msra.mxu0 %v8030
    %11474 = vmatprep.subr.bf16.mxu0 0
    %11475 = vmatpush1.bf16.msra.mxu0 %v8031
    %11476 = vmatprep.subr.bf16.mxu0 0
    %11477 = vmatpush1.bf16.msra.mxu0 %v8032
    %11478 = vmatprep.subr.bf16.mxu0 0
    %11479 = vmatpush1.bf16.msra.mxu0 %v8033
    %11480 = vmatprep.subr.bf16.mxu0 0
    %11481 = vmatpush1.bf16.msra.mxu0 %v8034
    %11482 = vmatprep.subr.bf16.mxu0 0
    %11483 = vmatpush1.bf16.msra.mxu0 %v8035
    %11484 = vmatprep.subr.bf16.mxu0 0
    %11485 = vmatpush1.bf16.msra.mxu0 %v8036
    %11486 = vmatprep.subr.bf16.mxu0 0
    %11487 = vmatpush1.bf16.msra.mxu0 %v8037
    %11488 = vmatprep.subr.bf16.mxu0 0
    %11489 = vmatpush1.bf16.msra.mxu0 %v8038
    %11490 = vmatprep.subr.bf16.mxu0 0
    %11491 = vmatpush1.bf16.msra.mxu0 %v8039
    %11492 = vmatprep.subr.bf16.mxu0 0
    %11493 = vmatpush1.bf16.msra.mxu0 %v8040
    %11494 = vmatprep.subr.bf16.mxu0 0
    %11495 = vmatpush1.bf16.msra.mxu0 %v8041
    %11496 = vmatprep.subr.bf16.mxu0 0
    %11497 = vmatpush1.bf16.msra.mxu0 %v8042
    %11498 = vmatprep.subr.bf16.mxu0 0
    %11499 = vmatpush1.bf16.msra.mxu0 %v8043
    %11500 = vmatprep.mubr.bf16.mxu0 %v938
    %11501 = vmatmul.mubr.bf16.gmra.mrb[0].mxu0 %v937
    %v11502 = vpop.f32.mrb[0].mxu0
    %v11503 = vadd.f32 %v11463, %v11502
    %v11504 = vpop.f32.mrb[0].mxu0
    %v11505 = vpop.f32.mrb[0].mxu0
    %v11506 = vpop.f32.mrb[0].mxu0
    %11507 = vdwg.mxu0
    %11508 = vmatprep.subr.bf16.mxu0 0
    %11509 = vmatpush1.bf16.msra.mxu0 %v8044
    %11510 = vmatprep.subr.bf16.mxu0 0
    %11511 = vmatpush1.bf16.msra.mxu0 %v8045
    %11512 = vmatprep.subr.bf16.mxu0 0
    %11513 = vmatpush1.bf16.msra.mxu0 %v8046
    %11514 = vmatprep.subr.bf16.mxu0 0
    %11515 = vmatpush1.bf16.msra.mxu0 %v8047
    %11516 = vmatprep.subr.bf16.mxu0 0
    %11517 = vmatpush1.bf16.msra.mxu0 %v8048
    %11518 = vmatprep.subr.bf16.mxu0 0
    %11519 = vmatpush1.bf16.msra.mxu0 %v8049
    %11520 = vmatprep.subr.bf16.mxu0 0
    %11521 = vmatpush1.bf16.msra.mxu0 %v8050
    %11522 = vmatprep.subr.bf16.mxu0 0
    %11523 = vmatpush1.bf16.msra.mxu0 %v8051
    %11524 = vmatprep.subr.bf16.mxu0 0
    %11525 = vmatpush1.bf16.msra.mxu0 %v8052
    %11526 = vmatprep.subr.bf16.mxu0 0
    %11527 = vmatpush1.bf16.msra.mxu0 %v8053
    %11528 = vmatprep.subr.bf16.mxu0 0
    %11529 = vmatpush1.bf16.msra.mxu0 %v8054
    %11530 = vmatprep.subr.bf16.mxu0 0
    %11531 = vmatpush1.bf16.msra.mxu0 %v8055
    %11532 = vmatprep.subr.bf16.mxu0 0
    %11533 = vmatpush1.bf16.msra.mxu0 %v8056
    %11534 = vmatprep.subr.bf16.mxu0 0
    %11535 = vmatpush1.bf16.msra.mxu0 %v8057
    %11536 = vmatprep.subr.bf16.mxu0 0
    %11537 = vmatpush1.bf16.msra.mxu0 %v8058
    %11538 = vmatprep.subr.bf16.mxu0 0
    %11539 = vmatpush1.bf16.msra.mxu0 %v8059
    %11540 = vmatprep.mubr.bf16.mxu0 %v940
    %11541 = vmatmul.mubr.bf16.gmra.mrb[0].mxu0 %v939
    %v11542 = vpop.f32.mrb[0].mxu0
    %v11543 = vadd.f32 %v11503, %v11542
    %v11544 = vpop.f32.mrb[0].mxu0
    %v11545 = vpop.f32.mrb[0].mxu0
    %v11546 = vpop.f32.mrb[0].mxu0
    %11547 = vdwg.mxu0
    %11548 = vmatprep.subr.bf16.mxu0 0
    %11549 = vmatpush1.bf16.msra.mxu0 %v8060
    %11550 = vmatprep.subr.bf16.mxu0 0
    %11551 = vmatpush1.bf16.msra.mxu0 %v8061
    %11552 = vmatprep.subr.bf16.mxu0 0
    %11553 = vmatpush1.bf16.msra.mxu0 %v8062
    %11554 = vmatprep.subr.bf16.mxu0 0
    %11555 = vmatpush1.bf16.msra.mxu0 %v8063
    %11556 = vmatprep.subr.bf16.mxu0 0
    %11557 = vmatpush1.bf16.msra.mxu0 %v8064
    %11558 = vmatprep.subr.bf16.mxu0 0
    %11559 = vmatpush1.bf16.msra.mxu0 %v8065
    %11560 = vmatprep.subr.bf16.mxu0 0
    %11561 = vmatpush1.bf16.msra.mxu0 %v8066
    %11562 = vmatprep.subr.bf16.mxu0 0
    %11563 = vmatpush1.bf16.msra.mxu0 %v8067
    %11564 = vmatprep.subr.bf16.mxu0 0
    %11565 = vmatpush1.bf16.msra.mxu0 %v8068
    %11566 = vmatprep.subr.bf16.mxu0 0
    %11567 = vmatpush1.bf16.msra.mxu0 %v8069
    %11568 = vmatprep.subr.bf16.mxu0 0
    %11569 = vmatpush1.bf16.msra.mxu0 %v8070
    %11570 = vmatprep.subr.bf16.mxu0 0
    %11571 = vmatpush1.bf16.msra.mxu0 %v8071
    %11572 = vmatprep.subr.bf16.mxu0 0
    %11573 = vmatpush1.bf16.msra.mxu0 %v8072
    %11574 = vmatprep.subr.bf16.mxu0 0
    %11575 = vmatpush1.bf16.msra.mxu0 %v8073
    %11576 = vmatprep.subr.bf16.mxu0 0
    %11577 = vmatpush1.bf16.msra.mxu0 %v8074
    %11578 = vmatprep.subr.bf16.mxu0 0
    %11579 = vmatpush1.bf16.msra.mxu0 %v8075
    %11580 = vmatprep.mubr.bf16.mxu0 %v942
    %11581 = vmatmul.mubr.bf16.gmra.mrb[0].mxu0 %v941
    %v11582 = vpop.f32.mrb[0].mxu0
    %v11583 = vadd.f32 %v11543, %v11582
    %v11584 = vpop.f32.mrb[0].mxu0
    %v11585 = vpop.f32.mrb[0].mxu0
    %v11586 = vpop.f32.mrb[0].mxu0
    %11587 = vdwg.mxu0
    %11588 = vmatprep.subr.bf16.mxu0 0
    %11589 = vmatpush1.bf16.msra.mxu0 %v8076
    %11590 = vmatprep.subr.bf16.mxu0 0
    %11591 = vmatpush1.bf16.msra.mxu0 %v8077
    %11592 = vmatprep.subr.bf16.mxu0 0
    %11593 = vmatpush1.bf16.msra.mxu0 %v8078
    %11594 = vmatprep.subr.bf16.mxu0 0
    %11595 = vmatpush1.bf16.msra.mxu0 %v8079
    %11596 = vmatprep.subr.bf16.mxu0 0
    %11597 = vmatpush1.bf16.msra.mxu0 %v8080
    %11598 = vmatprep.subr.bf16.mxu0 0
    %11599 = vmatpush1.bf16.msra.mxu0 %v8081
    %11600 = vmatprep.subr.bf16.mxu0 0
    %11601 = vmatpush1.bf16.msra.mxu0 %v8082
    %11602 = vmatprep.subr.bf16.mxu0 0
    %11603 = vmatpush1.bf16.msra.mxu0 %v8083
    %11604 = vmatprep.subr.bf16.mxu0 0
    %11605 = vmatpush1.bf16.msra.mxu0 %v8084
    %11606 = vmatprep.subr.bf16.mxu0 0
    %11607 = vmatpush1.bf16.msra.mxu0 %v8085
    %11608 = vmatprep.subr.bf16.mxu0 0
    %11609 = vmatpush1.bf16.msra.mxu0 %v8086
    %11610 = vmatprep.subr.bf16.mxu0 0
    %11611 = vmatpush1.bf16.msra.mxu0 %v8087
    %11612 = vmatprep.subr.bf16.mxu0 0
    %11613 = vmatpush1.bf16.msra.mxu0 %v8088
    %11614 = vmatprep.subr.bf16.mxu0 0
    %11615 = vmatpush1.bf16.msra.mxu0 %v8089
    %11616 = vmatprep.subr.bf16.mxu0 0
    %11617 = vmatpush1.bf16.msra.mxu0 %v8090
    %11618 = vmatprep.subr.bf16.mxu0 0
    %11619 = vmatpush1.bf16.msra.mxu0 %v8091
    %11620 = vmatprep.mubr.bf16.mxu0 %v944
    %11621 = vmatmul.mubr.bf16.gmra.mrb[0].mxu0 %v943
    %v11622 = vpop.f32.mrb[0].mxu0
    %v11623 = vadd.f32 %v11583, %v11622
    %v11624 = vpop.f32.mrb[0].mxu0
    %v11625 = vpop.f32.mrb[0].mxu0
    %v11626 = vpop.f32.mrb[0].mxu0
    %11627 = vdwg.mxu0
    %11628 = vmatprep.subr.bf16.mxu0 0
    %11629 = vmatpush1.bf16.msra.mxu0 %v8092
    %11630 = vmatprep.subr.bf16.mxu0 0
    %11631 = vmatpush1.bf16.msra.mxu0 %v8093
    %11632 = vmatprep.subr.bf16.mxu0 0
    %11633 = vmatpush1.bf16.msra.mxu0 %v8094
    %11634 = vmatprep.subr.bf16.mxu0 0
    %11635 = vmatpush1.bf16.msra.mxu0 %v8095
    %11636 = vmatprep.subr.bf16.mxu0 0
    %11637 = vmatpush1.bf16.msra.mxu0 %v8096
    %11638 = vmatprep.subr.bf16.mxu0 0
    %11639 = vmatpush1.bf16.msra.mxu0 %v8097
    %11640 = vmatprep.subr.bf16.mxu0 0
    %11641 = vmatpush1.bf16.msra.mxu0 %v8098
    %11642 = vmatprep.subr.bf16.mxu0 0
    %11643 = vmatpush1.bf16.msra.mxu0 %v8099
    %11644 = vmatprep.subr.bf16.mxu0 0
    %11645 = vmatpush1.bf16.msra.mxu0 %v8100
    %11646 = vmatprep.subr.bf16.mxu0 0
    %11647 = vmatpush1.bf16.msra.mxu0 %v8101
    %11648 = vmatprep.subr.bf16.mxu0 0
    %11649 = vmatpush1.bf16.msra.mxu0 %v8102
    %11650 = vmatprep.subr.bf16.mxu0 0
    %11651 = vmatpush1.bf16.msra.mxu0 %v8103
    %11652 = vmatprep.subr.bf16.mxu0 0
    %11653 = vmatpush1.bf16.msra.mxu0 %v8104
    %11654 = vmatprep.subr.bf16.mxu0 0
    %11655 = vmatpush1.bf16.msra.mxu0 %v8105
    %11656 = vmatprep.subr.bf16.mxu0 0
    %11657 = vmatpush1.bf16.msra.mxu0 %v8106
    %11658 = vmatprep.subr.bf16.mxu0 0
    %11659 = vmatpush1.bf16.msra.mxu0 %v8107
    %11660 = vmatprep.mubr.bf16.mxu0 %v946
    %11661 = vmatmul.mubr.bf16.gmra.mrb[0].mxu0 %v945
    %v11662 = vpop.f32.mrb[0].mxu0
    %v11663 = vadd.f32 %v11623, %v11662
    %v11664 = vpop.f32.mrb[0].mxu0
    %v11665 = vpop.f32.mrb[0].mxu0
    %v11666 = vpop.f32.mrb[0].mxu0
    %11667 = vdwg.mxu0
    %11668 = vmatprep.subr.bf16.mxu0 0
    %11669 = vmatpush1.bf16.msra.mxu0 %v8108
    %11670 = vmatprep.subr.bf16.mxu0 0
    %11671 = vmatpush1.bf16.msra.mxu0 %v8109
    %11672 = vmatprep.subr.bf16.mxu0 0
    %11673 = vmatpush1.bf16.msra.mxu0 %v8110
    %11674 = vmatprep.subr.bf16.mxu0 0
    %11675 = vmatpush1.bf16.msra.mxu0 %v8111
    %11676 = vmatprep.subr.bf16.mxu0 0
    %11677 = vmatpush1.bf16.msra.mxu0 %v8112
    %11678 = vmatprep.subr.bf16.mxu0 0
    %11679 = vmatpush1.bf16.msra.mxu0 %v8113
    %11680 = vmatprep.subr.bf16.mxu0 0
    %11681 = vmatpush1.bf16.msra.mxu0 %v8114
    %11682 = vmatprep.subr.bf16.mxu0 0
    %11683 = vmatpush1.bf16.msra.mxu0 %v8115
    %11684 = vmatprep.subr.bf16.mxu0 0
    %11685 = vmatpush1.bf16.msra.mxu0 %v8116
    %11686 = vmatprep.subr.bf16.mxu0 0
    %11687 = vmatpush1.bf16.msra.mxu0 %v8117
    %11688 = vmatprep.subr.bf16.mxu0 0
    %11689 = vmatpush1.bf16.msra.mxu0 %v8118
    %11690 = vmatprep.subr.bf16.mxu0 0
    %11691 = vmatpush1.bf16.msra.mxu0 %v8119
    %11692 = vmatprep.subr.bf16.mxu0 0
    %11693 = vmatpush1.bf16.msra.mxu0 %v8120
    %11694 = vmatprep.subr.bf16.mxu0 0
    %11695 = vmatpush1.bf16.msra.mxu0 %v8121
    %11696 = vmatprep.subr.bf16.mxu0 0
    %11697 = vmatpush1.bf16.msra.mxu0 %v8122
    %11698 = vmatprep.subr.bf16.mxu0 0
    %11699 = vmatpush1.bf16.msra.mxu0 %v8123
    %11700 = vmatprep.mubr.bf16.mxu0 %v948
    %11701 = vmatmul.mubr.bf16.gmra.mrb[0].mxu0 %v947
    %v11702 = vpop.f32.mrb[0].mxu0
    %v11703 = vadd.f32 %v11663, %v11702
    %v11704 = vpop.f32.mrb[0].mxu0
    %v11705 = vpop.f32.mrb[0].mxu0
    %v11706 = vpop.f32.mrb[0].mxu0
    %11707 = vdwg.mxu0
    %11708 = vst [vmem:[#allocation8] sm:$0x3] %v11703
    // Predicated region
    $region26: #{tpu_custom_call.1} parent=1 // pred_check
      _
    $region27: #{tpu_custom_call.1} parent=1 // pred_check_branch
      %11710 = sbr.rel (0) target = $region29
    $region28: #{tpu_custom_call.1} parent=1 // pred_region
      %s11712 = ssub.s32 32, 32
      %11713 = vsyncadd [#allocation4], %s11712
      %s11715 = sshll.u32 [#allocation8], 4
      %s11716 = int_to_ptr.vmem [resolvable:$true] %s11715
      %11718 = dma.vmem_to_hbm [thread:$0]  %s11716, 32, %s3, [#allocation4]
    $region29: #{tpu_custom_call.1} parent=1 // pred_fallthru
      _
    // Predicated region
    $region30: #{tpu_custom_call.1} parent=1 // pred_check
      _
    $region31: #{tpu_custom_call.1} parent=1 // pred_check_branch
      %11720 = sbr.rel (0) target = $region33
    $region32: #{tpu_custom_call.1} parent=1 // pred_region
      %11721 = dma.done [#allocation4], 32
    $region33: #{tpu_custom_call.1} parent=1 // pred_fallthru
      _
    %11722 = vsyncpa [#allocation3], 1
    %11723 = vsyncpa [#allocation6], 1
    %11724 = vsyncpa [#allocation4], 1

</llo_original>
